<compile_context>
chip_gen: v7x
topology: tpu7x:2x2x1
jax: 0.10.0
libtpu: 0.0.40
codegen_flags: <defaults>
</compile_context>

<pallas_src>
import math
from functools import partial

import jax
import jax.numpy as jnp
from jax.experimental import pallas as pl
from jax.experimental.pallas import tpu as pltpu


# ---------------------------------------------------------------------------
# In-kernel math helpers (pure jnp, traced inside the Pallas kernel)
# ---------------------------------------------------------------------------
def _layernorm(x, g, b, eps=1e-5):
    # matches torch.nn.LayerNorm (biased variance, eps inside sqrt)
    mu = jnp.mean(x, axis=-1, keepdims=True)
    var = jnp.mean((x - mu) * (x - mu), axis=-1, keepdims=True)
    return (x - mu) * jax.lax.rsqrt(var + eps) * g + b


def _erf(x):
    # Abramowitz & Stegun 7.1.26 polynomial erf (|err| < 1.5e-7) -- keeps the
    # GELU numerically equivalent (to f32 precision) to torch.nn.GELU()'s exact erf.
    a1, a2, a3, a4, a5 = 0.254829592, -0.284496736, 1.421413741, -1.453152027, 1.061405429
    p = 0.3275911
    s = jnp.where(x >= 0.0, 1.0, -1.0)
    ax = jnp.abs(x)
    t = 1.0 / (1.0 + p * ax)      # exact divide kept for fidelity to torch GELU
    poly = ((((a5 * t + a4) * t + a3) * t + a2) * t + a1) * t
    return s * (1.0 - poly * jnp.exp(-ax * ax))


def _gelu(x):
    return 0.5 * x * (1.0 + _erf(x * (1.0 / math.sqrt(2.0))))


# ---------------------------------------------------------------------------
# Fused per-layer kernel:  x -> attn(LN(x)) + x -> ff(LN(.)) + .
# Block layout: rows = batch_block * seq token rows, feature dim D on lanes.
# ---------------------------------------------------------------------------
def _layer_kernel(x_ref,
                  ln1g_ref, ln1b_ref, wq_ref, wk_ref, wv_ref, wo_ref, bo_ref,
                  ln2g_ref, ln2b_ref, w1_ref, b1_ref, w2_ref, b2_ref,
                  y_ref,
                  *, heads, dim_head, bblk, seq, mm_dtype):
    rows = bblk * seq
    x = x_ref[...].astype(jnp.float32)                      # (rows, D)
    dim = x.shape[-1]

    # ----------------------------- Attention -----------------------------
    xn = _layernorm(x, ln1g_ref[...], ln1b_ref[...]).astype(mm_dtype)

    attn_out = jnp.zeros((rows, dim), jnp.float32)
    for h in range(heads):  # static unroll; per-head weight stacks -> no column
        #                     slicing and no concatenate (out-proj is accumulated).
        qh = jnp.dot(xn, wq_ref[h].astype(mm_dtype),
                     preferred_element_type=jnp.float32)    # (rows, dh); scale folded in wq
        kh = jnp.dot(xn, wk_ref[h].astype(mm_dtype),
                     preferred_element_type=jnp.float32)
        vh = jnp.dot(xn, wv_ref[h].astype(mm_dtype),
                     preferred_element_type=jnp.float32)
        q3 = qh.reshape(bblk, seq, dim_head).astype(mm_dtype)
        k3 = kh.reshape(bblk, seq, dim_head).astype(mm_dtype)
        v3 = vh.reshape(bblk, seq, dim_head).astype(mm_dtype)

        dots = jnp.einsum('bqd,bkd->bqk', q3, k3,
                          preferred_element_type=jnp.float32)   # (bblk, N, N)
        dots = dots - jnp.max(dots, axis=-1, keepdims=True)
        e = jnp.exp(dots)
        denom = jnp.sum(e, axis=-1, keepdims=True)
        attn = e * pl.reciprocal(denom, approx=True)            # EUP reciprocal

        oh = jnp.einsum('bqk,bkd->bqd', attn.astype(mm_dtype), v3,
                        preferred_element_type=jnp.float32)     # (bblk, N, dh)
        attn_out = attn_out + jnp.dot(oh.reshape(rows, dim_head).astype(mm_dtype),
                                      wo_ref[h].astype(mm_dtype),
                                      preferred_element_type=jnp.float32)

    x1 = attn_out + bo_ref[...] + x                             # out-proj bias + residual

    # ---------------------------- FeedForward ----------------------------
    xn2 = _layernorm(x1, ln2g_ref[...], ln2b_ref[...]).astype(mm_dtype)
    hdn = jnp.dot(xn2, w1_ref[...].astype(mm_dtype),
                  preferred_element_type=jnp.float32) + b1_ref[...]
    hdn = _gelu(hdn)
    y = jnp.dot(hdn.astype(mm_dtype), w2_ref[...].astype(mm_dtype),
                preferred_element_type=jnp.float32) + b2_ref[...]

    y_ref[...] = (y + x1).astype(y_ref.dtype)                   # second residual


# ---------------------------------------------------------------------------
# Wrapper: one pallas_call per transformer layer
# ---------------------------------------------------------------------------
def _const_spec(a):
    zeros = (0,) * a.ndim
    return pl.BlockSpec(a.shape, lambda i: zeros)


def transformer_layer(x, attn_p, ff_p, *, heads, dim_head, batch_block=1,
                      matmul_dtype=jnp.float32, vmem_limit_bytes=None):
    B, N, D = x.shape
    inner = heads * dim_head
    mlp = ff_p["w1"].shape[1]
    scale = dim_head ** (-0.5)

    assert B % batch_block == 0, "batch_block must divide batch"
    rows_blk = batch_block * N
    assert rows_blk % 8 == 0 or batch_block == B, \
        "batch_block * seq should be a multiple of 8 (sublane tiling)"

    # ---- trace-time weight re-layout (cheap XLA ops, done once per call) ----
    wqkv = attn_p["w_qkv"]                                   # (D, 3*inner), cols = [q|k|v]
    wq = wqkv[:, :inner] * scale                             # fold softmax scale into q
    wk = wqkv[:, inner:2 * inner]
    wv = wqkv[:, 2 * inner:]
    to_heads = lambda w: w.reshape(D, heads, dim_head).transpose(1, 0, 2)   # (H, D, dh)
    wq_h, wk_h, wv_h = to_heads(wq), to_heads(wk), to_heads(wv)
    wo_h = attn_p["w_out"].reshape(heads, dim_head, D)       # (H, dh, D)

    x2 = x.reshape(B * N, D)                                 # row-parallel flattening

    grid = (B // batch_block,)
    row_spec = pl.BlockSpec((rows_blk, D), lambda i: (i, 0))

    # advisory cost estimate for the XLA scheduler
    flops = (2 * B * N * D * 3 * inner            # qkv projections
             + 4 * B * heads * N * N * dim_head   # q k^T and attn v
             + 2 * B * N * inner * D              # output projection
             + 4 * B * N * D * mlp)               # two MLP matmuls
    transcendentals = B * heads * N * N + B * N * mlp
    param_bytes = 4 * (D * 3 * inner + inner * D + D * mlp + mlp * D + 6 * D + mlp)
    bytes_accessed = 2 * B * N * D * x.dtype.itemsize + param_bytes

    kernel = partial(_layer_kernel, heads=heads, dim_head=dim_head,
                     bblk=batch_block, seq=N, mm_dtype=matmul_dtype)

    operands = (x2,
                attn_p["ln_g"], attn_p["ln_b"], wq_h, wk_h, wv_h, wo_h, attn_p["b_out"],
                ff_p["ln_g"], ff_p["ln_b"], ff_p["w1"], ff_p["b1"], ff_p["w2"], ff_p["b2"])

    y2 = pl.pallas_call(
        kernel,
        out_shape=jax.ShapeDtypeStruct((B * N, D), x.dtype),
        grid=grid,
        in_specs=[row_spec] + [_const_spec(a) for a in operands[1:]],
        out_specs=row_spec,
        compiler_params=pltpu.CompilerParams(
            dimension_semantics=("parallel",),
            vmem_limit_bytes=vmem_limit_bytes),
        cost_estimate=pl.CostEstimate(flops=flops,
                                      transcendentals=transcendentals,
                                      bytes_accessed=bytes_accessed),
    )(*operands)
    return y2.reshape(B, N, D)


def transformer_forward(x, layers, *, heads, dim_head, batch_block=1,
                        matmul_dtype=jnp.float32, vmem_limit_bytes=None):
    # for attn, ff in self.layers: x = attn(x) + x ; x = ff(x) + x   (fused per layer)
    for attn_p, ff_p in layers:
        x = transformer_layer(x, attn_p, ff_p, heads=heads, dim_head=dim_head,
                              batch_block=batch_block, matmul_dtype=matmul_dtype,
                              vmem_limit_bytes=vmem_limit_bytes)
    return x


# ---------------------------------------------------------------------------
# Deterministic parameter construction (synthetic init, no checkpoint)
# ---------------------------------------------------------------------------
def init_transformer_params(key, dim, depth, heads, dim_head, mlp_dim):
    inner = heads * dim_head
    layers = []
    for _ in range(depth):
        keys = jax.random.split(key, 5)
        key = keys[0]
        attn_p = {
            "ln_g": jnp.ones((1, dim), jnp.float32),
            "ln_b": jnp.zeros((1, dim), jnp.float32),
            "w_qkv": 0.05 * jax.random.normal(keys[1], (dim, 3 * inner), jnp.float32),
            "w_out": 0.05 * jax.random.normal(keys[2], (inner, dim), jnp.float32),
            "b_out": jnp.zeros((1, dim), jnp.float32),
        }
        ff_p = {
            "ln_g": jnp.ones((1, dim), jnp.float32),
            "ln_b": jnp.zeros((1, dim), jnp.float32),
            "w1": 0.05 * jax.random.normal(keys[3], (dim, mlp_dim), jnp.float32),
            "b1": jnp.zeros((1, mlp_dim), jnp.float32),
            "w2": 0.05 * jax.random.normal(keys[4], (mlp_dim, dim), jnp.float32),
            "b2": jnp.zeros((1, dim), jnp.float32),
        }
        layers.append((attn_p, ff_p))
    return layers


# ---------------------------------------------------------------------------
if __name__ == "__main__":
    # small shapes consistent with the module's forward: x is (batch, seq, dim)
    B, N, DIM = 2, 8, 32
    DEPTH, HEADS, DIM_HEAD, MLP_DIM = 2, 4, 16, 64

    key = jax.random.PRNGKey(0)
    kx, kp = jax.random.split(key)
    x = jax.random.normal(kx, (B, N, DIM), jnp.float32)

    layers = init_transformer_params(kp, DIM, DEPTH, HEADS, DIM_HEAD, MLP_DIM)

    # batch_block=1 -> grid=(2,), balanced across the two TensorCores on v7x.
    # matmul_dtype=jnp.bfloat16 is the recommended setting on v6e/v7x; the demo
    # keeps f32 to stay numerically closest to the f32 PyTorch reference.
    fwd = jax.jit(partial(transformer_forward, heads=HEADS, dim_head=DIM_HEAD,
                          batch_block=1, matmul_dtype=jnp.float32))
    y = fwd(x, layers)
    jax.block_until_ready(y)

    assert y.shape == (B, N, DIM) and y.dtype == jnp.float32
    print("KERNEL_OK")
</pallas_src>

<mosaic_0001>
module attributes {stable_mosaic.version = 11 : i64} {
  func.func @_layer_kernel(%arg0: i32, %arg1: memref<8x32xf32, #tpu.memory_space<vmem>>, %arg2: memref<1x32xf32, #tpu.memory_space<vmem>>, %arg3: memref<1x32xf32, #tpu.memory_space<vmem>>, %arg4: memref<4x32x16xf32, #tpu.memory_space<vmem>>, %arg5: memref<4x32x16xf32, #tpu.memory_space<vmem>>, %arg6: memref<4x32x16xf32, #tpu.memory_space<vmem>>, %arg7: memref<4x16x32xf32, #tpu.memory_space<vmem>>, %arg8: memref<1x32xf32, #tpu.memory_space<vmem>>, %arg9: memref<1x32xf32, #tpu.memory_space<vmem>>, %arg10: memref<1x32xf32, #tpu.memory_space<vmem>>, %arg11: memref<32x64xf32, #tpu.memory_space<vmem>>, %arg12: memref<1x64xf32, #tpu.memory_space<vmem>>, %arg13: memref<64x32xf32, #tpu.memory_space<vmem>>, %arg14: memref<1x32xf32, #tpu.memory_space<vmem>>, %arg15: memref<8x32xf32, #tpu.memory_space<vmem>>) attributes {dimension_semantics = [#tpu.dimension_semantics<parallel>], iteration_bounds = array<i64: 2>, scalar_prefetch = 0 : i64, scratch_operands = 0 : i64, tpu.core_type = #tpu.core_type<tc>, window_params = [{transform_indices = @transform_0, window_bounds = array<i64: 8, 32>}, {pipeline_mode = #tpu.pipeline_mode<synchronous>, transform_indices = @transform_1, window_bounds = array<i64: 1, 32>}, {pipeline_mode = #tpu.pipeline_mode<synchronous>, transform_indices = @transform_2, window_bounds = array<i64: 1, 32>}, {pipeline_mode = #tpu.pipeline_mode<synchronous>, transform_indices = @transform_3, window_bounds = array<i64: 4, 32, 16>}, {pipeline_mode = #tpu.pipeline_mode<synchronous>, transform_indices = @transform_4, window_bounds = array<i64: 4, 32, 16>}, {pipeline_mode = #tpu.pipeline_mode<synchronous>, transform_indices = @transform_5, window_bounds = array<i64: 4, 32, 16>}, {pipeline_mode = #tpu.pipeline_mode<synchronous>, transform_indices = @transform_6, window_bounds = array<i64: 4, 16, 32>}, {pipeline_mode = #tpu.pipeline_mode<synchronous>, transform_indices = @transform_7, window_bounds = array<i64: 1, 32>}, {pipeline_mode = #tpu.pipeline_mode<synchronous>, transform_indices = @transform_8, window_bounds = array<i64: 1, 32>}, {pipeline_mode = #tpu.pipeline_mode<synchronous>, transform_indices = @transform_9, window_bounds = array<i64: 1, 32>}, {pipeline_mode = #tpu.pipeline_mode<synchronous>, transform_indices = @transform_10, window_bounds = array<i64: 32, 64>}, {pipeline_mode = #tpu.pipeline_mode<synchronous>, transform_indices = @transform_11, window_bounds = array<i64: 1, 64>}, {pipeline_mode = #tpu.pipeline_mode<synchronous>, transform_indices = @transform_12, window_bounds = array<i64: 64, 32>}, {pipeline_mode = #tpu.pipeline_mode<synchronous>, transform_indices = @transform_13, window_bounds = array<i64: 1, 32>}, {transform_indices = @transform_14, window_bounds = array<i64: 8, 32>}]} {
    %c0 = arith.constant 0 : index
    %c0_0 = arith.constant 0 : index
    %0 = vector.load %arg1[%c0, %c0_0] : memref<8x32xf32, #tpu.memory_space<vmem>>, vector<8x32xf32>
    %c0_1 = arith.constant 0 : index
    %c0_2 = arith.constant 0 : index
    %1 = vector.load %arg2[%c0_1, %c0_2] : memref<1x32xf32, #tpu.memory_space<vmem>>, vector<1x32xf32>
    %c0_3 = arith.constant 0 : index
    %c0_4 = arith.constant 0 : index
    %2 = vector.load %arg3[%c0_3, %c0_4] : memref<1x32xf32, #tpu.memory_space<vmem>>, vector<1x32xf32>
    %cst = arith.constant dense<0.000000e+00> : vector<8xf32>
    %3 = vector.multi_reduction <add>, %0, %cst [1] : vector<8x32xf32> to vector<8xf32>
    %4 = vector.shape_cast %3 : vector<8xf32> to vector<8x1xf32>
    %cst_5 = arith.constant 3.200000e+01 : f32
    %5 = vector.broadcast %cst_5 : f32 to vector<8x1xf32>
    %6 = arith.divf %4, %5 : vector<8x1xf32>
    %7 = vector.broadcast %6 : vector<8x1xf32> to vector<8x32xf32>
    %8 = arith.subf %0, %7 : vector<8x32xf32>
    %9 = vector.broadcast %6 : vector<8x1xf32> to vector<8x32xf32>
    %10 = arith.subf %0, %9 : vector<8x32xf32>
    %11 = arith.mulf %8, %10 : vector<8x32xf32>
    %cst_6 = arith.constant dense<0.000000e+00> : vector<8xf32>
    %12 = vector.multi_reduction <add>, %11, %cst_6 [1] : vector<8x32xf32> to vector<8xf32>
    %13 = vector.shape_cast %12 : vector<8xf32> to vector<8x1xf32>
    %cst_7 = arith.constant 3.200000e+01 : f32
    %14 = vector.broadcast %cst_7 : f32 to vector<8x1xf32>
    %15 = arith.divf %13, %14 : vector<8x1xf32>
    %16 = vector.broadcast %6 : vector<8x1xf32> to vector<8x32xf32>
    %17 = arith.subf %0, %16 : vector<8x32xf32>
    %cst_8 = arith.constant 9.99999974E-6 : f32
    %18 = vector.broadcast %cst_8 : f32 to vector<8x1xf32>
    %19 = arith.addf %15, %18 : vector<8x1xf32>
    %20 = math.rsqrt %19 : vector<8x1xf32>
    %21 = vector.broadcast %20 : vector<8x1xf32> to vector<8x32xf32>
    %22 = arith.mulf %17, %21 : vector<8x32xf32>
    %23 = vector.broadcast %1 : vector<1x32xf32> to vector<8x32xf32>
    %24 = arith.mulf %22, %23 : vector<8x32xf32>
    %25 = vector.broadcast %2 : vector<1x32xf32> to vector<8x32xf32>
    %26 = arith.addf %24, %25 : vector<8x32xf32>
    %cst_9 = arith.constant 0.000000e+00 : f32
    %27 = vector.broadcast %cst_9 : f32 to vector<8x32xf32>
    %c0_10 = arith.constant 0 : index
    %c0_11 = arith.constant 0 : index
    %c0_12 = arith.constant 0 : index
    %28 = vector.load %arg4[%c0_10, %c0_11, %c0_12] : memref<4x32x16xf32, #tpu.memory_space<vmem>>, vector<1x32x16xf32>
    %29 = vector.shape_cast %28 : vector<1x32x16xf32> to vector<32x16xf32>
    %cst_13 = arith.constant dense<0.000000e+00> : vector<8x16xf32>
    %30 = tpu.matmul %26, %29, %cst_13 {dimension_numbers = #tpu.dot_dimension_numbers<[1], [0], [0], [1], [0, 0, 1, 1], [], []>} : vector<8x32xf32>, vector<32x16xf32>, vector<8x16xf32> -> vector<8x16xf32>
    %c0_14 = arith.constant 0 : index
    %c0_15 = arith.constant 0 : index
    %c0_16 = arith.constant 0 : index
    %31 = vector.load %arg5[%c0_14, %c0_15, %c0_16] : memref<4x32x16xf32, #tpu.memory_space<vmem>>, vector<1x32x16xf32>
    %32 = vector.shape_cast %31 : vector<1x32x16xf32> to vector<32x16xf32>
    %cst_17 = arith.constant dense<0.000000e+00> : vector<8x16xf32>
    %33 = tpu.matmul %26, %32, %cst_17 {dimension_numbers = #tpu.dot_dimension_numbers<[1], [0], [0], [1], [0, 0, 1, 1], [], []>} : vector<8x32xf32>, vector<32x16xf32>, vector<8x16xf32> -> vector<8x16xf32>
    %c0_18 = arith.constant 0 : index
    %c0_19 = arith.constant 0 : index
    %c0_20 = arith.constant 0 : index
    %34 = vector.load %arg6[%c0_18, %c0_19, %c0_20] : memref<4x32x16xf32, #tpu.memory_space<vmem>>, vector<1x32x16xf32>
    %35 = vector.shape_cast %34 : vector<1x32x16xf32> to vector<32x16xf32>
    %cst_21 = arith.constant dense<0.000000e+00> : vector<8x16xf32>
    %36 = tpu.matmul %26, %35, %cst_21 {dimension_numbers = #tpu.dot_dimension_numbers<[1], [0], [0], [1], [0, 0, 1, 1], [], []>} : vector<8x32xf32>, vector<32x16xf32>, vector<8x16xf32> -> vector<8x16xf32>
    %37 = vector.shape_cast %30 : vector<8x16xf32> to vector<1x8x16xf32>
    %38 = vector.shape_cast %33 : vector<8x16xf32> to vector<1x8x16xf32>
    %39 = vector.shape_cast %36 : vector<8x16xf32> to vector<1x8x16xf32>
    "tpu.trace_start"() <{level = 10 : i32, message = "bqd,bkd->bqk"}> : () -> ()
    %cst_22 = arith.constant dense<0.000000e+00> : vector<1x8x8xf32>
    %40 = tpu.matmul %37, %38, %cst_22 {dimension_numbers = #tpu.dot_dimension_numbers<[2], [2], [1], [1], [0, 0, 0, 1, 1, 1], [0], [0]>} : vector<1x8x16xf32>, vector<1x8x16xf32>, vector<1x8x8xf32> -> vector<1x8x8xf32>
    "tpu.trace_stop"() : () -> ()
    %cst_23 = arith.constant dense<0xFF800000> : vector<1x8xf32>
    %41 = vector.multi_reduction <maximumf>, %40, %cst_23 [2] : vector<1x8x8xf32> to vector<1x8xf32>
    %42 = vector.shape_cast %41 : vector<1x8xf32> to vector<1x8x1xf32>
    %43 = vector.broadcast %42 : vector<1x8x1xf32> to vector<1x8x8xf32>
    %44 = arith.subf %40, %43 : vector<1x8x8xf32>
    %45 = math.exp %44 : vector<1x8x8xf32>
    %cst_24 = arith.constant dense<0.000000e+00> : vector<1x8xf32>
    %46 = vector.multi_reduction <add>, %45, %cst_24 [2] : vector<1x8x8xf32> to vector<1x8xf32>
    %47 = vector.shape_cast %46 : vector<1x8xf32> to vector<1x8x1xf32>
    %48 = tpu.reciprocal %47 {approx = true} : vector<1x8x1xf32> -> vector<1x8x1xf32>
    %49 = vector.broadcast %48 : vector<1x8x1xf32> to vector<1x8x8xf32>
    %50 = arith.mulf %45, %49 : vector<1x8x8xf32>
    "tpu.trace_start"() <{level = 10 : i32, message = "bqk,bkd->bqd"}> : () -> ()
    %cst_25 = arith.constant dense<0.000000e+00> : vector<1x8x16xf32>
    %51 = tpu.matmul %50, %39, %cst_25 {dimension_numbers = #tpu.dot_dimension_numbers<[2], [1], [1], [2], [0, 0, 0, 1, 1, 2], [0], [0]>} : vector<1x8x8xf32>, vector<1x8x16xf32>, vector<1x8x16xf32> -> vector<1x8x16xf32>
    "tpu.trace_stop"() : () -> ()
    %52 = vector.shape_cast %51 : vector<1x8x16xf32> to vector<8x16xf32>
    %c0_26 = arith.constant 0 : index
    %c0_27 = arith.constant 0 : index
    %c0_28 = arith.constant 0 : index
    %53 = vector.load %arg7[%c0_26, %c0_27, %c0_28] : memref<4x16x32xf32, #tpu.memory_space<vmem>>, vector<1x16x32xf32>
    %54 = vector.shape_cast %53 : vector<1x16x32xf32> to vector<16x32xf32>
    %cst_29 = arith.constant dense<0.000000e+00> : vector<8x32xf32>
    %55 = tpu.matmul %52, %54, %cst_29 {dimension_numbers = #tpu.dot_dimension_numbers<[1], [0], [0], [1], [0, 0, 1, 1], [], []>} : vector<8x16xf32>, vector<16x32xf32>, vector<8x32xf32> -> vector<8x32xf32>
    %56 = arith.addf %27, %55 : vector<8x32xf32>
    %c1 = arith.constant 1 : index
    %c0_30 = arith.constant 0 : index
    %c0_31 = arith.constant 0 : index
    %57 = vector.load %arg4[%c1, %c0_30, %c0_31] : memref<4x32x16xf32, #tpu.memory_space<vmem>>, vector<1x32x16xf32>
    %58 = vector.shape_cast %57 : vector<1x32x16xf32> to vector<32x16xf32>
    %cst_32 = arith.constant dense<0.000000e+00> : vector<8x16xf32>
    %59 = tpu.matmul %26, %58, %cst_32 {dimension_numbers = #tpu.dot_dimension_numbers<[1], [0], [0], [1], [0, 0, 1, 1], [], []>} : vector<8x32xf32>, vector<32x16xf32>, vector<8x16xf32> -> vector<8x16xf32>
    %c1_33 = arith.constant 1 : index
    %c0_34 = arith.constant 0 : index
    %c0_35 = arith.constant 0 : index
    %60 = vector.load %arg5[%c1_33, %c0_34, %c0_35] : memref<4x32x16xf32, #tpu.memory_space<vmem>>, vector<1x32x16xf32>
    %61 = vector.shape_cast %60 : vector<1x32x16xf32> to vector<32x16xf32>
    %cst_36 = arith.constant dense<0.000000e+00> : vector<8x16xf32>
    %62 = tpu.matmul %26, %61, %cst_36 {dimension_numbers = #tpu.dot_dimension_numbers<[1], [0], [0], [1], [0, 0, 1, 1], [], []>} : vector<8x32xf32>, vector<32x16xf32>, vector<8x16xf32> -> vector<8x16xf32>
    %c1_37 = arith.constant 1 : index
    %c0_38 = arith.constant 0 : index
    %c0_39 = arith.constant 0 : index
    %63 = vector.load %arg6[%c1_37, %c0_38, %c0_39] : memref<4x32x16xf32, #tpu.memory_space<vmem>>, vector<1x32x16xf32>
    %64 = vector.shape_cast %63 : vector<1x32x16xf32> to vector<32x16xf32>
    %cst_40 = arith.constant dense<0.000000e+00> : vector<8x16xf32>
    %65 = tpu.matmul %26, %64, %cst_40 {dimension_numbers = #tpu.dot_dimension_numbers<[1], [0], [0], [1], [0, 0, 1, 1], [], []>} : vector<8x32xf32>, vector<32x16xf32>, vector<8x16xf32> -> vector<8x16xf32>
    %66 = vector.shape_cast %59 : vector<8x16xf32> to vector<1x8x16xf32>
    %67 = vector.shape_cast %62 : vector<8x16xf32> to vector<1x8x16xf32>
    %68 = vector.shape_cast %65 : vector<8x16xf32> to vector<1x8x16xf32>
    "tpu.trace_start"() <{level = 10 : i32, message = "bqd,bkd->bqk"}> : () -> ()
    %cst_41 = arith.constant dense<0.000000e+00> : vector<1x8x8xf32>
    %69 = tpu.matmul %66, %67, %cst_41 {dimension_numbers = #tpu.dot_dimension_numbers<[2], [2], [1], [1], [0, 0, 0, 1, 1, 1], [0], [0]>} : vector<1x8x16xf32>, vector<1x8x16xf32>, vector<1x8x8xf32> -> vector<1x8x8xf32>
    "tpu.trace_stop"() : () -> ()
    %cst_42 = arith.constant dense<0xFF800000> : vector<1x8xf32>
    %70 = vector.multi_reduction <maximumf>, %69, %cst_42 [2] : vector<1x8x8xf32> to vector<1x8xf32>
    %71 = vector.shape_cast %70 : vector<1x8xf32> to vector<1x8x1xf32>
    %72 = vector.broadcast %71 : vector<1x8x1xf32> to vector<1x8x8xf32>
    %73 = arith.subf %69, %72 : vector<1x8x8xf32>
    %74 = math.exp %73 : vector<1x8x8xf32>
    %cst_43 = arith.constant dense<0.000000e+00> : vector<1x8xf32>
    %75 = vector.multi_reduction <add>, %74, %cst_43 [2] : vector<1x8x8xf32> to vector<1x8xf32>
    %76 = vector.shape_cast %75 : vector<1x8xf32> to vector<1x8x1xf32>
    %77 = tpu.reciprocal %76 {approx = true} : vector<1x8x1xf32> -> vector<1x8x1xf32>
    %78 = vector.broadcast %77 : vector<1x8x1xf32> to vector<1x8x8xf32>
    %79 = arith.mulf %74, %78 : vector<1x8x8xf32>
    "tpu.trace_start"() <{level = 10 : i32, message = "bqk,bkd->bqd"}> : () -> ()
    %cst_44 = arith.constant dense<0.000000e+00> : vector<1x8x16xf32>
    %80 = tpu.matmul %79, %68, %cst_44 {dimension_numbers = #tpu.dot_dimension_numbers<[2], [1], [1], [2], [0, 0, 0, 1, 1, 2], [0], [0]>} : vector<1x8x8xf32>, vector<1x8x16xf32>, vector<1x8x16xf32> -> vector<1x8x16xf32>
    "tpu.trace_stop"() : () -> ()
    %81 = vector.shape_cast %80 : vector<1x8x16xf32> to vector<8x16xf32>
    %c1_45 = arith.constant 1 : index
    %c0_46 = arith.constant 0 : index
    %c0_47 = arith.constant 0 : index
    %82 = vector.load %arg7[%c1_45, %c0_46, %c0_47] : memref<4x16x32xf32, #tpu.memory_space<vmem>>, vector<1x16x32xf32>
    %83 = vector.shape_cast %82 : vector<1x16x32xf32> to vector<16x32xf32>
    %cst_48 = arith.constant dense<0.000000e+00> : vector<8x32xf32>
    %84 = tpu.matmul %81, %83, %cst_48 {dimension_numbers = #tpu.dot_dimension_numbers<[1], [0], [0], [1], [0, 0, 1, 1], [], []>} : vector<8x16xf32>, vector<16x32xf32>, vector<8x32xf32> -> vector<8x32xf32>
    %85 = arith.addf %56, %84 : vector<8x32xf32>
    %c2 = arith.constant 2 : index
    %c0_49 = arith.constant 0 : index
    %c0_50 = arith.constant 0 : index
    %86 = vector.load %arg4[%c2, %c0_49, %c0_50] : memref<4x32x16xf32, #tpu.memory_space<vmem>>, vector<1x32x16xf32>
    %87 = vector.shape_cast %86 : vector<1x32x16xf32> to vector<32x16xf32>
    %cst_51 = arith.constant dense<0.000000e+00> : vector<8x16xf32>
    %88 = tpu.matmul %26, %87, %cst_51 {dimension_numbers = #tpu.dot_dimension_numbers<[1], [0], [0], [1], [0, 0, 1, 1], [], []>} : vector<8x32xf32>, vector<32x16xf32>, vector<8x16xf32> -> vector<8x16xf32>
    %c2_52 = arith.constant 2 : index
    %c0_53 = arith.constant 0 : index
    %c0_54 = arith.constant 0 : index
    %89 = vector.load %arg5[%c2_52, %c0_53, %c0_54] : memref<4x32x16xf32, #tpu.memory_space<vmem>>, vector<1x32x16xf32>
    %90 = vector.shape_cast %89 : vector<1x32x16xf32> to vector<32x16xf32>
    %cst_55 = arith.constant dense<0.000000e+00> : vector<8x16xf32>
    %91 = tpu.matmul %26, %90, %cst_55 {dimension_numbers = #tpu.dot_dimension_numbers<[1], [0], [0], [1], [0, 0, 1, 1], [], []>} : vector<8x32xf32>, vector<32x16xf32>, vector<8x16xf32> -> vector<8x16xf32>
    %c2_56 = arith.constant 2 : index
    %c0_57 = arith.constant 0 : index
    %c0_58 = arith.constant 0 : index
    %92 = vector.load %arg6[%c2_56, %c0_57, %c0_58] : memref<4x32x16xf32, #tpu.memory_space<vmem>>, vector<1x32x16xf32>
    %93 = vector.shape_cast %92 : vector<1x32x16xf32> to vector<32x16xf32>
    %cst_59 = arith.constant dense<0.000000e+00> : vector<8x16xf32>
    %94 = tpu.matmul %26, %93, %cst_59 {dimension_numbers = #tpu.dot_dimension_numbers<[1], [0], [0], [1], [0, 0, 1, 1], [], []>} : vector<8x32xf32>, vector<32x16xf32>, vector<8x16xf32> -> vector<8x16xf32>
    %95 = vector.shape_cast %88 : vector<8x16xf32> to vector<1x8x16xf32>
    %96 = vector.shape_cast %91 : vector<8x16xf32> to vector<1x8x16xf32>
    %97 = vector.shape_cast %94 : vector<8x16xf32> to vector<1x8x16xf32>
    "tpu.trace_start"() <{level = 10 : i32, message = "bqd,bkd->bqk"}> : () -> ()
    %cst_60 = arith.constant dense<0.000000e+00> : vector<1x8x8xf32>
    %98 = tpu.matmul %95, %96, %cst_60 {dimension_numbers = #tpu.dot_dimension_numbers<[2], [2], [1], [1], [0, 0, 0, 1, 1, 1], [0], [0]>} : vector<1x8x16xf32>, vector<1x8x16xf32>, vector<1x8x8xf32> -> vector<1x8x8xf32>
    "tpu.trace_stop"() : () -> ()
    %cst_61 = arith.constant dense<0xFF800000> : vector<1x8xf32>
    %99 = vector.multi_reduction <maximumf>, %98, %cst_61 [2] : vector<1x8x8xf32> to vector<1x8xf32>
    %100 = vector.shape_cast %99 : vector<1x8xf32> to vector<1x8x1xf32>
    %101 = vector.broadcast %100 : vector<1x8x1xf32> to vector<1x8x8xf32>
    %102 = arith.subf %98, %101 : vector<1x8x8xf32>
    %103 = math.exp %102 : vector<1x8x8xf32>
    %cst_62 = arith.constant dense<0.000000e+00> : vector<1x8xf32>
    %104 = vector.multi_reduction <add>, %103, %cst_62 [2] : vector<1x8x8xf32> to vector<1x8xf32>
    %105 = vector.shape_cast %104 : vector<1x8xf32> to vector<1x8x1xf32>
    %106 = tpu.reciprocal %105 {approx = true} : vector<1x8x1xf32> -> vector<1x8x1xf32>
    %107 = vector.broadcast %106 : vector<1x8x1xf32> to vector<1x8x8xf32>
    %108 = arith.mulf %103, %107 : vector<1x8x8xf32>
    "tpu.trace_start"() <{level = 10 : i32, message = "bqk,bkd->bqd"}> : () -> ()
    %cst_63 = arith.constant dense<0.000000e+00> : vector<1x8x16xf32>
    %109 = tpu.matmul %108, %97, %cst_63 {dimension_numbers = #tpu.dot_dimension_numbers<[2], [1], [1], [2], [0, 0, 0, 1, 1, 2], [0], [0]>} : vector<1x8x8xf32>, vector<1x8x16xf32>, vector<1x8x16xf32> -> vector<1x8x16xf32>
    "tpu.trace_stop"() : () -> ()
    %110 = vector.shape_cast %109 : vector<1x8x16xf32> to vector<8x16xf32>
    %c2_64 = arith.constant 2 : index
    %c0_65 = arith.constant 0 : index
    %c0_66 = arith.constant 0 : index
    %111 = vector.load %arg7[%c2_64, %c0_65, %c0_66] : memref<4x16x32xf32, #tpu.memory_space<vmem>>, vector<1x16x32xf32>
    %112 = vector.shape_cast %111 : vector<1x16x32xf32> to vector<16x32xf32>
    %cst_67 = arith.constant dense<0.000000e+00> : vector<8x32xf32>
    %113 = tpu.matmul %110, %112, %cst_67 {dimension_numbers = #tpu.dot_dimension_numbers<[1], [0], [0], [1], [0, 0, 1, 1], [], []>} : vector<8x16xf32>, vector<16x32xf32>, vector<8x32xf32> -> vector<8x32xf32>
    %114 = arith.addf %85, %113 : vector<8x32xf32>
    %c3 = arith.constant 3 : index
    %c0_68 = arith.constant 0 : index
    %c0_69 = arith.constant 0 : index
    %115 = vector.load %arg4[%c3, %c0_68, %c0_69] : memref<4x32x16xf32, #tpu.memory_space<vmem>>, vector<1x32x16xf32>
    %116 = vector.shape_cast %115 : vector<1x32x16xf32> to vector<32x16xf32>
    %cst_70 = arith.constant dense<0.000000e+00> : vector<8x16xf32>
    %117 = tpu.matmul %26, %116, %cst_70 {dimension_numbers = #tpu.dot_dimension_numbers<[1], [0], [0], [1], [0, 0, 1, 1], [], []>} : vector<8x32xf32>, vector<32x16xf32>, vector<8x16xf32> -> vector<8x16xf32>
    %c3_71 = arith.constant 3 : index
    %c0_72 = arith.constant 0 : index
    %c0_73 = arith.constant 0 : index
    %118 = vector.load %arg5[%c3_71, %c0_72, %c0_73] : memref<4x32x16xf32, #tpu.memory_space<vmem>>, vector<1x32x16xf32>
    %119 = vector.shape_cast %118 : vector<1x32x16xf32> to vector<32x16xf32>
    %cst_74 = arith.constant dense<0.000000e+00> : vector<8x16xf32>
    %120 = tpu.matmul %26, %119, %cst_74 {dimension_numbers = #tpu.dot_dimension_numbers<[1], [0], [0], [1], [0, 0, 1, 1], [], []>} : vector<8x32xf32>, vector<32x16xf32>, vector<8x16xf32> -> vector<8x16xf32>
    %c3_75 = arith.constant 3 : index
    %c0_76 = arith.constant 0 : index
    %c0_77 = arith.constant 0 : index
    %121 = vector.load %arg6[%c3_75, %c0_76, %c0_77] : memref<4x32x16xf32, #tpu.memory_space<vmem>>, vector<1x32x16xf32>
    %122 = vector.shape_cast %121 : vector<1x32x16xf32> to vector<32x16xf32>
    %cst_78 = arith.constant dense<0.000000e+00> : vector<8x16xf32>
    %123 = tpu.matmul %26, %122, %cst_78 {dimension_numbers = #tpu.dot_dimension_numbers<[1], [0], [0], [1], [0, 0, 1, 1], [], []>} : vector<8x32xf32>, vector<32x16xf32>, vector<8x16xf32> -> vector<8x16xf32>
    %124 = vector.shape_cast %117 : vector<8x16xf32> to vector<1x8x16xf32>
    %125 = vector.shape_cast %120 : vector<8x16xf32> to vector<1x8x16xf32>
    %126 = vector.shape_cast %123 : vector<8x16xf32> to vector<1x8x16xf32>
    "tpu.trace_start"() <{level = 10 : i32, message = "bqd,bkd->bqk"}> : () -> ()
    %cst_79 = arith.constant dense<0.000000e+00> : vector<1x8x8xf32>
    %127 = tpu.matmul %124, %125, %cst_79 {dimension_numbers = #tpu.dot_dimension_numbers<[2], [2], [1], [1], [0, 0, 0, 1, 1, 1], [0], [0]>} : vector<1x8x16xf32>, vector<1x8x16xf32>, vector<1x8x8xf32> -> vector<1x8x8xf32>
    "tpu.trace_stop"() : () -> ()
    %cst_80 = arith.constant dense<0xFF800000> : vector<1x8xf32>
    %128 = vector.multi_reduction <maximumf>, %127, %cst_80 [2] : vector<1x8x8xf32> to vector<1x8xf32>
    %129 = vector.shape_cast %128 : vector<1x8xf32> to vector<1x8x1xf32>
    %130 = vector.broadcast %129 : vector<1x8x1xf32> to vector<1x8x8xf32>
    %131 = arith.subf %127, %130 : vector<1x8x8xf32>
    %132 = math.exp %131 : vector<1x8x8xf32>
    %cst_81 = arith.constant dense<0.000000e+00> : vector<1x8xf32>
    %133 = vector.multi_reduction <add>, %132, %cst_81 [2] : vector<1x8x8xf32> to vector<1x8xf32>
    %134 = vector.shape_cast %133 : vector<1x8xf32> to vector<1x8x1xf32>
    %135 = tpu.reciprocal %134 {approx = true} : vector<1x8x1xf32> -> vector<1x8x1xf32>
    %136 = vector.broadcast %135 : vector<1x8x1xf32> to vector<1x8x8xf32>
    %137 = arith.mulf %132, %136 : vector<1x8x8xf32>
    "tpu.trace_start"() <{level = 10 : i32, message = "bqk,bkd->bqd"}> : () -> ()
    %cst_82 = arith.constant dense<0.000000e+00> : vector<1x8x16xf32>
    %138 = tpu.matmul %137, %126, %cst_82 {dimension_numbers = #tpu.dot_dimension_numbers<[2], [1], [1], [2], [0, 0, 0, 1, 1, 2], [0], [0]>} : vector<1x8x8xf32>, vector<1x8x16xf32>, vector<1x8x16xf32> -> vector<1x8x16xf32>
    "tpu.trace_stop"() : () -> ()
    %139 = vector.shape_cast %138 : vector<1x8x16xf32> to vector<8x16xf32>
    %c3_83 = arith.constant 3 : index
    %c0_84 = arith.constant 0 : index
    %c0_85 = arith.constant 0 : index
    %140 = vector.load %arg7[%c3_83, %c0_84, %c0_85] : memref<4x16x32xf32, #tpu.memory_space<vmem>>, vector<1x16x32xf32>
    %141 = vector.shape_cast %140 : vector<1x16x32xf32> to vector<16x32xf32>
    %cst_86 = arith.constant dense<0.000000e+00> : vector<8x32xf32>
    %142 = tpu.matmul %139, %141, %cst_86 {dimension_numbers = #tpu.dot_dimension_numbers<[1], [0], [0], [1], [0, 0, 1, 1], [], []>} : vector<8x16xf32>, vector<16x32xf32>, vector<8x32xf32> -> vector<8x32xf32>
    %143 = arith.addf %114, %142 : vector<8x32xf32>
    %c0_87 = arith.constant 0 : index
    %c0_88 = arith.constant 0 : index
    %144 = vector.load %arg8[%c0_87, %c0_88] : memref<1x32xf32, #tpu.memory_space<vmem>>, vector<1x32xf32>
    %145 = vector.broadcast %144 : vector<1x32xf32> to vector<8x32xf32>
    %146 = arith.addf %143, %145 : vector<8x32xf32>
    %147 = arith.addf %146, %0 : vector<8x32xf32>
    %c0_89 = arith.constant 0 : index
    %c0_90 = arith.constant 0 : index
    %148 = vector.load %arg9[%c0_89, %c0_90] : memref<1x32xf32, #tpu.memory_space<vmem>>, vector<1x32xf32>
    %c0_91 = arith.constant 0 : index
    %c0_92 = arith.constant 0 : index
    %149 = vector.load %arg10[%c0_91, %c0_92] : memref<1x32xf32, #tpu.memory_space<vmem>>, vector<1x32xf32>
    %cst_93 = arith.constant dense<0.000000e+00> : vector<8xf32>
    %150 = vector.multi_reduction <add>, %147, %cst_93 [1] : vector<8x32xf32> to vector<8xf32>
    %151 = vector.shape_cast %150 : vector<8xf32> to vector<8x1xf32>
    %cst_94 = arith.constant 3.200000e+01 : f32
    %152 = vector.broadcast %cst_94 : f32 to vector<8x1xf32>
    %153 = arith.divf %151, %152 : vector<8x1xf32>
    %154 = vector.broadcast %153 : vector<8x1xf32> to vector<8x32xf32>
    %155 = arith.subf %147, %154 : vector<8x32xf32>
    %156 = vector.broadcast %153 : vector<8x1xf32> to vector<8x32xf32>
    %157 = arith.subf %147, %156 : vector<8x32xf32>
    %158 = arith.mulf %155, %157 : vector<8x32xf32>
    %cst_95 = arith.constant dense<0.000000e+00> : vector<8xf32>
    %159 = vector.multi_reduction <add>, %158, %cst_95 [1] : vector<8x32xf32> to vector<8xf32>
    %160 = vector.shape_cast %159 : vector<8xf32> to vector<8x1xf32>
    %cst_96 = arith.constant 3.200000e+01 : f32
    %161 = vector.broadcast %cst_96 : f32 to vector<8x1xf32>
    %162 = arith.divf %160, %161 : vector<8x1xf32>
    %163 = vector.broadcast %153 : vector<8x1xf32> to vector<8x32xf32>
    %164 = arith.subf %147, %163 : vector<8x32xf32>
    %cst_97 = arith.constant 9.99999974E-6 : f32
    %165 = vector.broadcast %cst_97 : f32 to vector<8x1xf32>
    %166 = arith.addf %162, %165 : vector<8x1xf32>
    %167 = math.rsqrt %166 : vector<8x1xf32>
    %168 = vector.broadcast %167 : vector<8x1xf32> to vector<8x32xf32>
    %169 = arith.mulf %164, %168 : vector<8x32xf32>
    %170 = vector.broadcast %148 : vector<1x32xf32> to vector<8x32xf32>
    %171 = arith.mulf %169, %170 : vector<8x32xf32>
    %172 = vector.broadcast %149 : vector<1x32xf32> to vector<8x32xf32>
    %173 = arith.addf %171, %172 : vector<8x32xf32>
    %c0_98 = arith.constant 0 : index
    %c0_99 = arith.constant 0 : index
    %174 = vector.load %arg11[%c0_98, %c0_99] : memref<32x64xf32, #tpu.memory_space<vmem>>, vector<32x64xf32>
    %cst_100 = arith.constant dense<0.000000e+00> : vector<8x64xf32>
    %175 = tpu.matmul %173, %174, %cst_100 {dimension_numbers = #tpu.dot_dimension_numbers<[1], [0], [0], [1], [0, 0, 1, 1], [], []>} : vector<8x32xf32>, vector<32x64xf32>, vector<8x64xf32> -> vector<8x64xf32>
    %c0_101 = arith.constant 0 : index
    %c0_102 = arith.constant 0 : index
    %176 = vector.load %arg12[%c0_101, %c0_102] : memref<1x64xf32, #tpu.memory_space<vmem>>, vector<1x64xf32>
    %177 = vector.broadcast %176 : vector<1x64xf32> to vector<8x64xf32>
    %178 = arith.addf %175, %177 : vector<8x64xf32>
    %cst_103 = arith.constant 5.000000e-01 : f32
    %179 = vector.broadcast %cst_103 : f32 to vector<8x64xf32>
    %180 = arith.mulf %179, %178 : vector<8x64xf32>
    %cst_104 = arith.constant 0.707106769 : f32
    %181 = vector.broadcast %cst_104 : f32 to vector<8x64xf32>
    %182 = arith.mulf %178, %181 : vector<8x64xf32>
    %cst_105 = arith.constant 0.000000e+00 : f32
    %183 = vector.broadcast %cst_105 : f32 to vector<8x64xf32>
    %184 = arith.cmpf oge, %182, %183 : vector<8x64xf32>
    %cst_106 = arith.constant 1.000000e+00 : f32
    %cst_107 = arith.constant -1.000000e+00 : f32
    %185 = vector.broadcast %cst_106 : f32 to vector<8x64xf32>
    %186 = vector.broadcast %cst_107 : f32 to vector<8x64xf32>
    %187 = arith.select %184, %185, %186 : vector<8x64xi1>, vector<8x64xf32>
    %188 = math.absf %182 : vector<8x64xf32>
    %cst_108 = arith.constant 0.327591091 : f32
    %189 = vector.broadcast %cst_108 : f32 to vector<8x64xf32>
    %190 = arith.mulf %189, %188 : vector<8x64xf32>
    %cst_109 = arith.constant 1.000000e+00 : f32
    %191 = vector.broadcast %cst_109 : f32 to vector<8x64xf32>
    %192 = arith.addf %191, %190 : vector<8x64xf32>
    %cst_110 = arith.constant 1.000000e+00 : f32
    %193 = vector.broadcast %cst_110 : f32 to vector<8x64xf32>
    %194 = arith.divf %193, %192 : vector<8x64xf32>
    %cst_111 = arith.constant 1.06140542 : f32
    %195 = vector.broadcast %cst_111 : f32 to vector<8x64xf32>
    %196 = arith.mulf %195, %194 : vector<8x64xf32>
    %cst_112 = arith.constant -1.45315206 : f32
    %197 = vector.broadcast %cst_112 : f32 to vector<8x64xf32>
    %198 = arith.addf %196, %197 : vector<8x64xf32>
    %199 = arith.mulf %198, %194 : vector<8x64xf32>
    %cst_113 = arith.constant 1.42141378 : f32
    %200 = vector.broadcast %cst_113 : f32 to vector<8x64xf32>
    %201 = arith.addf %199, %200 : vector<8x64xf32>
    %202 = arith.mulf %201, %194 : vector<8x64xf32>
    %cst_114 = arith.constant -0.284496725 : f32
    %203 = vector.broadcast %cst_114 : f32 to vector<8x64xf32>
    %204 = arith.addf %202, %203 : vector<8x64xf32>
    %205 = arith.mulf %204, %194 : vector<8x64xf32>
    %cst_115 = arith.constant 0.254829586 : f32
    %206 = vector.broadcast %cst_115 : f32 to vector<8x64xf32>
    %207 = arith.addf %205, %206 : vector<8x64xf32>
    %208 = arith.mulf %207, %194 : vector<8x64xf32>
    %cst_116 = arith.constant 0.000000e+00 : f32
    %209 = vector.broadcast %cst_116 : f32 to vector<8x64xf32>
    %210 = arith.subf %209, %188 : vector<8x64xf32>
    %211 = arith.mulf %210, %188 : vector<8x64xf32>
    %212 = math.exp %211 : vector<8x64xf32>
    %213 = arith.mulf %208, %212 : vector<8x64xf32>
    %cst_117 = arith.constant 1.000000e+00 : f32
    %214 = vector.broadcast %cst_117 : f32 to vector<8x64xf32>
    %215 = arith.subf %214, %213 : vector<8x64xf32>
    %216 = arith.mulf %187, %215 : vector<8x64xf32>
    %cst_118 = arith.constant 1.000000e+00 : f32
    %217 = vector.broadcast %cst_118 : f32 to vector<8x64xf32>
    %218 = arith.addf %217, %216 : vector<8x64xf32>
    %219 = arith.mulf %180, %218 : vector<8x64xf32>
    %c0_119 = arith.constant 0 : index
    %c0_120 = arith.constant 0 : index
    %220 = vector.load %arg13[%c0_119, %c0_120] : memref<64x32xf32, #tpu.memory_space<vmem>>, vector<64x32xf32>
    %cst_121 = arith.constant dense<0.000000e+00> : vector<8x32xf32>
    %221 = tpu.matmul %219, %220, %cst_121 {dimension_numbers = #tpu.dot_dimension_numbers<[1], [0], [0], [1], [0, 0, 1, 1], [], []>} : vector<8x64xf32>, vector<64x32xf32>, vector<8x32xf32> -> vector<8x32xf32>
    %c0_122 = arith.constant 0 : index
    %c0_123 = arith.constant 0 : index
    %222 = vector.load %arg14[%c0_122, %c0_123] : memref<1x32xf32, #tpu.memory_space<vmem>>, vector<1x32xf32>
    %223 = vector.broadcast %222 : vector<1x32xf32> to vector<8x32xf32>
    %224 = arith.addf %221, %223 : vector<8x32xf32>
    %225 = arith.addf %224, %147 : vector<8x32xf32>
    %c0_124 = arith.constant 0 : index
    %c0_125 = arith.constant 0 : index
    %226 = vector.load %arg15[%c0_124, %c0_125] : memref<8x32xf32, #tpu.memory_space<vmem>>, vector<8x32xf32>
    tpu.vector_store %arg15[%c0_124, %c0_125], %225 {strides = array<i32>} : memref<8x32xf32, #tpu.memory_space<vmem>>, vector<8x32xf32>,
    return
  }
  func.func @transform_0(%arg0: i32) -> (i32, i32) {
    %c0_i32 = arith.constant 0 : i32
    %c0_i32_0 = arith.constant 0 : i32
    return %arg0, %c0_i32 : i32, i32
  }
  func.func @transform_1(%arg0: i32) -> (i32, i32) {
    %c0_i32 = arith.constant 0 : i32
    %c0_i32_0 = arith.constant 0 : i32
    %c0_i32_1 = arith.constant 0 : i32
    return %c0_i32, %c0_i32_0 : i32, i32
  }
  func.func @transform_2(%arg0: i32) -> (i32, i32) {
    %c0_i32 = arith.constant 0 : i32
    %c0_i32_0 = arith.constant 0 : i32
    %c0_i32_1 = arith.constant 0 : i32
    return %c0_i32, %c0_i32_0 : i32, i32
  }
  func.func @transform_3(%arg0: i32) -> (i32, i32, i32) {
    %c0_i32 = arith.constant 0 : i32
    %c0_i32_0 = arith.constant 0 : i32
    %c0_i32_1 = arith.constant 0 : i32
    %c0_i32_2 = arith.constant 0 : i32
    return %c0_i32, %c0_i32_0, %c0_i32_1 : i32, i32, i32
  }
  func.func @transform_4(%arg0: i32) -> (i32, i32, i32) {
    %c0_i32 = arith.constant 0 : i32
    %c0_i32_0 = arith.constant 0 : i32
    %c0_i32_1 = arith.constant 0 : i32
    %c0_i32_2 = arith.constant 0 : i32
    return %c0_i32, %c0_i32_0, %c0_i32_1 : i32, i32, i32
  }
  func.func @transform_5(%arg0: i32) -> (i32, i32, i32) {
    %c0_i32 = arith.constant 0 : i32
    %c0_i32_0 = arith.constant 0 : i32
    %c0_i32_1 = arith.constant 0 : i32
    %c0_i32_2 = arith.constant 0 : i32
    return %c0_i32, %c0_i32_0, %c0_i32_1 : i32, i32, i32
  }
  func.func @transform_6(%arg0: i32) -> (i32, i32, i32) {
    %c0_i32 = arith.constant 0 : i32
    %c0_i32_0 = arith.constant 0 : i32
    %c0_i32_1 = arith.constant 0 : i32
    %c0_i32_2 = arith.constant 0 : i32
    return %c0_i32, %c0_i32_0, %c0_i32_1 : i32, i32, i32
  }
  func.func @transform_7(%arg0: i32) -> (i32, i32) {
    %c0_i32 = arith.constant 0 : i32
    %c0_i32_0 = arith.constant 0 : i32
    %c0_i32_1 = arith.constant 0 : i32
    return %c0_i32, %c0_i32_0 : i32, i32
  }
  func.func @transform_8(%arg0: i32) -> (i32, i32) {
    %c0_i32 = arith.constant 0 : i32
    %c0_i32_0 = arith.constant 0 : i32
    %c0_i32_1 = arith.constant 0 : i32
    return %c0_i32, %c0_i32_0 : i32, i32
  }
  func.func @transform_9(%arg0: i32) -> (i32, i32) {
    %c0_i32 = arith.constant 0 : i32
    %c0_i32_0 = arith.constant 0 : i32
    %c0_i32_1 = arith.constant 0 : i32
    return %c0_i32, %c0_i32_0 : i32, i32
  }
  func.func @transform_10(%arg0: i32) -> (i32, i32) {
    %c0_i32 = arith.constant 0 : i32
    %c0_i32_0 = arith.constant 0 : i32
    %c0_i32_1 = arith.constant 0 : i32
    return %c0_i32, %c0_i32_0 : i32, i32
  }
  func.func @transform_11(%arg0: i32) -> (i32, i32) {
    %c0_i32 = arith.constant 0 : i32
    %c0_i32_0 = arith.constant 0 : i32
    %c0_i32_1 = arith.constant 0 : i32
    return %c0_i32, %c0_i32_0 : i32, i32
  }
  func.func @transform_12(%arg0: i32) -> (i32, i32) {
    %c0_i32 = arith.constant 0 : i32
    %c0_i32_0 = arith.constant 0 : i32
    %c0_i32_1 = arith.constant 0 : i32
    return %c0_i32, %c0_i32_0 : i32, i32
  }
  func.func @transform_13(%arg0: i32) -> (i32, i32) {
    %c0_i32 = arith.constant 0 : i32
    %c0_i32_0 = arith.constant 0 : i32
    %c0_i32_1 = arith.constant 0 : i32
    return %c0_i32, %c0_i32_0 : i32, i32
  }
  func.func @transform_14(%arg0: i32) -> (i32, i32) {
    %c0_i32 = arith.constant 0 : i32
    %c0_i32_0 = arith.constant 0 : i32
    return %arg0, %c0_i32 : i32, i32
  }
}

module attributes {stable_mosaic.version = 11 : i64} {
  func.func @_layer_kernel(%arg0: i32, %arg1: memref<8x32xf32, #tpu.memory_space<vmem>>, %arg2: memref<1x32xf32, #tpu.memory_space<vmem>>, %arg3: memref<1x32xf32, #tpu.memory_space<vmem>>, %arg4: memref<4x32x16xf32, #tpu.memory_space<vmem>>, %arg5: memref<4x32x16xf32, #tpu.memory_space<vmem>>, %arg6: memref<4x32x16xf32, #tpu.memory_space<vmem>>, %arg7: memref<4x16x32xf32, #tpu.memory_space<vmem>>, %arg8: memref<1x32xf32, #tpu.memory_space<vmem>>, %arg9: memref<1x32xf32, #tpu.memory_space<vmem>>, %arg10: memref<1x32xf32, #tpu.memory_space<vmem>>, %arg11: memref<32x64xf32, #tpu.memory_space<vmem>>, %arg12: memref<1x64xf32, #tpu.memory_space<vmem>>, %arg13: memref<64x32xf32, #tpu.memory_space<vmem>>, %arg14: memref<1x32xf32, #tpu.memory_space<vmem>>, %arg15: memref<8x32xf32, #tpu.memory_space<vmem>>) attributes {dimension_semantics = [#tpu.dimension_semantics<parallel>], iteration_bounds = array<i64: 2>, scalar_prefetch = 0 : i64, scratch_operands = 0 : i64, tpu.core_type = #tpu.core_type<tc>, window_params = [{transform_indices = @transform_0, window_bounds = array<i64: 8, 32>}, {pipeline_mode = #tpu.pipeline_mode<synchronous>, transform_indices = @transform_1, window_bounds = array<i64: 1, 32>}, {pipeline_mode = #tpu.pipeline_mode<synchronous>, transform_indices = @transform_2, window_bounds = array<i64: 1, 32>}, {pipeline_mode = #tpu.pipeline_mode<synchronous>, transform_indices = @transform_3, window_bounds = array<i64: 4, 32, 16>}, {pipeline_mode = #tpu.pipeline_mode<synchronous>, transform_indices = @transform_4, window_bounds = array<i64: 4, 32, 16>}, {pipeline_mode = #tpu.pipeline_mode<synchronous>, transform_indices = @transform_5, window_bounds = array<i64: 4, 32, 16>}, {pipeline_mode = #tpu.pipeline_mode<synchronous>, transform_indices = @transform_6, window_bounds = array<i64: 4, 16, 32>}, {pipeline_mode = #tpu.pipeline_mode<synchronous>, transform_indices = @transform_7, window_bounds = array<i64: 1, 32>}, {pipeline_mode = #tpu.pipeline_mode<synchronous>, transform_indices = @transform_8, window_bounds = array<i64: 1, 32>}, {pipeline_mode = #tpu.pipeline_mode<synchronous>, transform_indices = @transform_9, window_bounds = array<i64: 1, 32>}, {pipeline_mode = #tpu.pipeline_mode<synchronous>, transform_indices = @transform_10, window_bounds = array<i64: 32, 64>}, {pipeline_mode = #tpu.pipeline_mode<synchronous>, transform_indices = @transform_11, window_bounds = array<i64: 1, 64>}, {pipeline_mode = #tpu.pipeline_mode<synchronous>, transform_indices = @transform_12, window_bounds = array<i64: 64, 32>}, {pipeline_mode = #tpu.pipeline_mode<synchronous>, transform_indices = @transform_13, window_bounds = array<i64: 1, 32>}, {transform_indices = @transform_14, window_bounds = array<i64: 8, 32>}]} {
    %c0 = arith.constant 0 : index
    %c0_0 = arith.constant 0 : index
    %0 = vector.load %arg1[%c0, %c0_0] : memref<8x32xf32, #tpu.memory_space<vmem>>, vector<8x32xf32>
    %c0_1 = arith.constant 0 : index
    %c0_2 = arith.constant 0 : index
    %1 = vector.load %arg2[%c0_1, %c0_2] : memref<1x32xf32, #tpu.memory_space<vmem>>, vector<1x32xf32>
    %c0_3 = arith.constant 0 : index
    %c0_4 = arith.constant 0 : index
    %2 = vector.load %arg3[%c0_3, %c0_4] : memref<1x32xf32, #tpu.memory_space<vmem>>, vector<1x32xf32>
    %cst = arith.constant dense<0.000000e+00> : vector<8xf32>
    %3 = vector.multi_reduction <add>, %0, %cst [1] : vector<8x32xf32> to vector<8xf32>
    %4 = vector.shape_cast %3 : vector<8xf32> to vector<8x1xf32>
    %cst_5 = arith.constant 3.200000e+01 : f32
    %5 = vector.broadcast %cst_5 : f32 to vector<8x1xf32>
    %6 = arith.divf %4, %5 : vector<8x1xf32>
    %7 = vector.broadcast %6 : vector<8x1xf32> to vector<8x32xf32>
    %8 = arith.subf %0, %7 : vector<8x32xf32>
    %9 = vector.broadcast %6 : vector<8x1xf32> to vector<8x32xf32>
    %10 = arith.subf %0, %9 : vector<8x32xf32>
    %11 = arith.mulf %8, %10 : vector<8x32xf32>
    %cst_6 = arith.constant dense<0.000000e+00> : vector<8xf32>
    %12 = vector.multi_reduction <add>, %11, %cst_6 [1] : vector<8x32xf32> to vector<8xf32>
    %13 = vector.shape_cast %12 : vector<8xf32> to vector<8x1xf32>
    %cst_7 = arith.constant 3.200000e+01 : f32
    %14 = vector.broadcast %cst_7 : f32 to vector<8x1xf32>
    %15 = arith.divf %13, %14 : vector<8x1xf32>
    %16 = vector.broadcast %6 : vector<8x1xf32> to vector<8x32xf32>
    %17 = arith.subf %0, %16 : vector<8x32xf32>
    %cst_8 = arith.constant 9.99999974E-6 : f32
    %18 = vector.broadcast %cst_8 : f32 to vector<8x1xf32>
    %19 = arith.addf %15, %18 : vector<8x1xf32>
    %20 = math.rsqrt %19 : vector<8x1xf32>
    %21 = vector.broadcast %20 : vector<8x1xf32> to vector<8x32xf32>
    %22 = arith.mulf %17, %21 : vector<8x32xf32>
    %23 = vector.broadcast %1 : vector<1x32xf32> to vector<8x32xf32>
    %24 = arith.mulf %22, %23 : vector<8x32xf32>
    %25 = vector.broadcast %2 : vector<1x32xf32> to vector<8x32xf32>
    %26 = arith.addf %24, %25 : vector<8x32xf32>
    %cst_9 = arith.constant 0.000000e+00 : f32
    %27 = vector.broadcast %cst_9 : f32 to vector<8x32xf32>
    %c0_10 = arith.constant 0 : index
    %c0_11 = arith.constant 0 : index
    %c0_12 = arith.constant 0 : index
    %28 = vector.load %arg4[%c0_10, %c0_11, %c0_12] : memref<4x32x16xf32, #tpu.memory_space<vmem>>, vector<1x32x16xf32>
    %29 = vector.shape_cast %28 : vector<1x32x16xf32> to vector<32x16xf32>
    %cst_13 = arith.constant dense<0.000000e+00> : vector<8x16xf32>
    %30 = tpu.matmul %26, %29, %cst_13 {dimension_numbers = #tpu.dot_dimension_numbers<[1], [0], [0], [1], [0, 0, 1, 1], [], []>} : vector<8x32xf32>, vector<32x16xf32>, vector<8x16xf32> -> vector<8x16xf32>
    %c0_14 = arith.constant 0 : index
    %c0_15 = arith.constant 0 : index
    %c0_16 = arith.constant 0 : index
    %31 = vector.load %arg5[%c0_14, %c0_15, %c0_16] : memref<4x32x16xf32, #tpu.memory_space<vmem>>, vector<1x32x16xf32>
    %32 = vector.shape_cast %31 : vector<1x32x16xf32> to vector<32x16xf32>
    %cst_17 = arith.constant dense<0.000000e+00> : vector<8x16xf32>
    %33 = tpu.matmul %26, %32, %cst_17 {dimension_numbers = #tpu.dot_dimension_numbers<[1], [0], [0], [1], [0, 0, 1, 1], [], []>} : vector<8x32xf32>, vector<32x16xf32>, vector<8x16xf32> -> vector<8x16xf32>
    %c0_18 = arith.constant 0 : index
    %c0_19 = arith.constant 0 : index
    %c0_20 = arith.constant 0 : index
    %34 = vector.load %arg6[%c0_18, %c0_19, %c0_20] : memref<4x32x16xf32, #tpu.memory_space<vmem>>, vector<1x32x16xf32>
    %35 = vector.shape_cast %34 : vector<1x32x16xf32> to vector<32x16xf32>
    %cst_21 = arith.constant dense<0.000000e+00> : vector<8x16xf32>
    %36 = tpu.matmul %26, %35, %cst_21 {dimension_numbers = #tpu.dot_dimension_numbers<[1], [0], [0], [1], [0, 0, 1, 1], [], []>} : vector<8x32xf32>, vector<32x16xf32>, vector<8x16xf32> -> vector<8x16xf32>
    %37 = vector.shape_cast %30 : vector<8x16xf32> to vector<1x8x16xf32>
    %38 = vector.shape_cast %33 : vector<8x16xf32> to vector<1x8x16xf32>
    %39 = vector.shape_cast %36 : vector<8x16xf32> to vector<1x8x16xf32>
    "tpu.trace_start"() <{level = 10 : i32, message = "bqd,bkd->bqk"}> : () -> ()
    %cst_22 = arith.constant dense<0.000000e+00> : vector<1x8x8xf32>
    %40 = tpu.matmul %37, %38, %cst_22 {dimension_numbers = #tpu.dot_dimension_numbers<[2], [2], [1], [1], [0, 0, 0, 1, 1, 1], [0], [0]>} : vector<1x8x16xf32>, vector<1x8x16xf32>, vector<1x8x8xf32> -> vector<1x8x8xf32>
    "tpu.trace_stop"() : () -> ()
    %cst_23 = arith.constant dense<0xFF800000> : vector<1x8xf32>
    %41 = vector.multi_reduction <maximumf>, %40, %cst_23 [2] : vector<1x8x8xf32> to vector<1x8xf32>
    %42 = vector.shape_cast %41 : vector<1x8xf32> to vector<1x8x1xf32>
    %43 = vector.broadcast %42 : vector<1x8x1xf32> to vector<1x8x8xf32>
    %44 = arith.subf %40, %43 : vector<1x8x8xf32>
    %45 = math.exp %44 : vector<1x8x8xf32>
    %cst_24 = arith.constant dense<0.000000e+00> : vector<1x8xf32>
    %46 = vector.multi_reduction <add>, %45, %cst_24 [2] : vector<1x8x8xf32> to vector<1x8xf32>
    %47 = vector.shape_cast %46 : vector<1x8xf32> to vector<1x8x1xf32>
    %48 = tpu.reciprocal %47 {approx = true} : vector<1x8x1xf32> -> vector<1x8x1xf32>
    %49 = vector.broadcast %48 : vector<1x8x1xf32> to vector<1x8x8xf32>
    %50 = arith.mulf %45, %49 : vector<1x8x8xf32>
    "tpu.trace_start"() <{level = 10 : i32, message = "bqk,bkd->bqd"}> : () -> ()
    %cst_25 = arith.constant dense<0.000000e+00> : vector<1x8x16xf32>
    %51 = tpu.matmul %50, %39, %cst_25 {dimension_numbers = #tpu.dot_dimension_numbers<[2], [1], [1], [2], [0, 0, 0, 1, 1, 2], [0], [0]>} : vector<1x8x8xf32>, vector<1x8x16xf32>, vector<1x8x16xf32> -> vector<1x8x16xf32>
    "tpu.trace_stop"() : () -> ()
    %52 = vector.shape_cast %51 : vector<1x8x16xf32> to vector<8x16xf32>
    %c0_26 = arith.constant 0 : index
    %c0_27 = arith.constant 0 : index
    %c0_28 = arith.constant 0 : index
    %53 = vector.load %arg7[%c0_26, %c0_27, %c0_28] : memref<4x16x32xf32, #tpu.memory_space<vmem>>, vector<1x16x32xf32>
    %54 = vector.shape_cast %53 : vector<1x16x32xf32> to vector<16x32xf32>
    %cst_29 = arith.constant dense<0.000000e+00> : vector<8x32xf32>
    %55 = tpu.matmul %52, %54, %cst_29 {dimension_numbers = #tpu.dot_dimension_numbers<[1], [0], [0], [1], [0, 0, 1, 1], [], []>} : vector<8x16xf32>, vector<16x32xf32>, vector<8x32xf32> -> vector<8x32xf32>
    %56 = arith.addf %27, %55 : vector<8x32xf32>
    %c1 = arith.constant 1 : index
    %c0_30 = arith.constant 0 : index
    %c0_31 = arith.constant 0 : index
    %57 = vector.load %arg4[%c1, %c0_30, %c0_31] : memref<4x32x16xf32, #tpu.memory_space<vmem>>, vector<1x32x16xf32>
    %58 = vector.shape_cast %57 : vector<1x32x16xf32> to vector<32x16xf32>
    %cst_32 = arith.constant dense<0.000000e+00> : vector<8x16xf32>
    %59 = tpu.matmul %26, %58, %cst_32 {dimension_numbers = #tpu.dot_dimension_numbers<[1], [0], [0], [1], [0, 0, 1, 1], [], []>} : vector<8x32xf32>, vector<32x16xf32>, vector<8x16xf32> -> vector<8x16xf32>
    %c1_33 = arith.constant 1 : index
    %c0_34 = arith.constant 0 : index
    %c0_35 = arith.constant 0 : index
    %60 = vector.load %arg5[%c1_33, %c0_34, %c0_35] : memref<4x32x16xf32, #tpu.memory_space<vmem>>, vector<1x32x16xf32>
    %61 = vector.shape_cast %60 : vector<1x32x16xf32> to vector<32x16xf32>
    %cst_36 = arith.constant dense<0.000000e+00> : vector<8x16xf32>
    %62 = tpu.matmul %26, %61, %cst_36 {dimension_numbers = #tpu.dot_dimension_numbers<[1], [0], [0], [1], [0, 0, 1, 1], [], []>} : vector<8x32xf32>, vector<32x16xf32>, vector<8x16xf32> -> vector<8x16xf32>
    %c1_37 = arith.constant 1 : index
    %c0_38 = arith.constant 0 : index
    %c0_39 = arith.constant 0 : index
    %63 = vector.load %arg6[%c1_37, %c0_38, %c0_39] : memref<4x32x16xf32, #tpu.memory_space<vmem>>, vector<1x32x16xf32>
    %64 = vector.shape_cast %63 : vector<1x32x16xf32> to vector<32x16xf32>
    %cst_40 = arith.constant dense<0.000000e+00> : vector<8x16xf32>
    %65 = tpu.matmul %26, %64, %cst_40 {dimension_numbers = #tpu.dot_dimension_numbers<[1], [0], [0], [1], [0, 0, 1, 1], [], []>} : vector<8x32xf32>, vector<32x16xf32>, vector<8x16xf32> -> vector<8x16xf32>
    %66 = vector.shape_cast %59 : vector<8x16xf32> to vector<1x8x16xf32>
    %67 = vector.shape_cast %62 : vector<8x16xf32> to vector<1x8x16xf32>
    %68 = vector.shape_cast %65 : vector<8x16xf32> to vector<1x8x16xf32>
    "tpu.trace_start"() <{level = 10 : i32, message = "bqd,bkd->bqk"}> : () -> ()
    %cst_41 = arith.constant dense<0.000000e+00> : vector<1x8x8xf32>
    %69 = tpu.matmul %66, %67, %cst_41 {dimension_numbers = #tpu.dot_dimension_numbers<[2], [2], [1], [1], [0, 0, 0, 1, 1, 1], [0], [0]>} : vector<1x8x16xf32>, vector<1x8x16xf32>, vector<1x8x8xf32> -> vector<1x8x8xf32>
    "tpu.trace_stop"() : () -> ()
    %cst_42 = arith.constant dense<0xFF800000> : vector<1x8xf32>
    %70 = vector.multi_reduction <maximumf>, %69, %cst_42 [2] : vector<1x8x8xf32> to vector<1x8xf32>
    %71 = vector.shape_cast %70 : vector<1x8xf32> to vector<1x8x1xf32>
    %72 = vector.broadcast %71 : vector<1x8x1xf32> to vector<1x8x8xf32>
    %73 = arith.subf %69, %72 : vector<1x8x8xf32>
    %74 = math.exp %73 : vector<1x8x8xf32>
    %cst_43 = arith.constant dense<0.000000e+00> : vector<1x8xf32>
    %75 = vector.multi_reduction <add>, %74, %cst_43 [2] : vector<1x8x8xf32> to vector<1x8xf32>
    %76 = vector.shape_cast %75 : vector<1x8xf32> to vector<1x8x1xf32>
    %77 = tpu.reciprocal %76 {approx = true} : vector<1x8x1xf32> -> vector<1x8x1xf32>
    %78 = vector.broadcast %77 : vector<1x8x1xf32> to vector<1x8x8xf32>
    %79 = arith.mulf %74, %78 : vector<1x8x8xf32>
    "tpu.trace_start"() <{level = 10 : i32, message = "bqk,bkd->bqd"}> : () -> ()
    %cst_44 = arith.constant dense<0.000000e+00> : vector<1x8x16xf32>
    %80 = tpu.matmul %79, %68, %cst_44 {dimension_numbers = #tpu.dot_dimension_numbers<[2], [1], [1], [2], [0, 0, 0, 1, 1, 2], [0], [0]>} : vector<1x8x8xf32>, vector<1x8x16xf32>, vector<1x8x16xf32> -> vector<1x8x16xf32>
    "tpu.trace_stop"() : () -> ()
    %81 = vector.shape_cast %80 : vector<1x8x16xf32> to vector<8x16xf32>
    %c1_45 = arith.constant 1 : index
    %c0_46 = arith.constant 0 : index
    %c0_47 = arith.constant 0 : index
    %82 = vector.load %arg7[%c1_45, %c0_46, %c0_47] : memref<4x16x32xf32, #tpu.memory_space<vmem>>, vector<1x16x32xf32>
    %83 = vector.shape_cast %82 : vector<1x16x32xf32> to vector<16x32xf32>
    %cst_48 = arith.constant dense<0.000000e+00> : vector<8x32xf32>
    %84 = tpu.matmul %81, %83, %cst_48 {dimension_numbers = #tpu.dot_dimension_numbers<[1], [0], [0], [1], [0, 0, 1, 1], [], []>} : vector<8x16xf32>, vector<16x32xf32>, vector<8x32xf32> -> vector<8x32xf32>
    %85 = arith.addf %56, %84 : vector<8x32xf32>
    %c2 = arith.constant 2 : index
    %c0_49 = arith.constant 0 : index
    %c0_50 = arith.constant 0 : index
    %86 = vector.load %arg4[%c2, %c0_49, %c0_50] : memref<4x32x16xf32, #tpu.memory_space<vmem>>, vector<1x32x16xf32>
    %87 = vector.shape_cast %86 : vector<1x32x16xf32> to vector<32x16xf32>
    %cst_51 = arith.constant dense<0.000000e+00> : vector<8x16xf32>
    %88 = tpu.matmul %26, %87, %cst_51 {dimension_numbers = #tpu.dot_dimension_numbers<[1], [0], [0], [1], [0, 0, 1, 1], [], []>} : vector<8x32xf32>, vector<32x16xf32>, vector<8x16xf32> -> vector<8x16xf32>
    %c2_52 = arith.constant 2 : index
    %c0_53 = arith.constant 0 : index
    %c0_54 = arith.constant 0 : index
    %89 = vector.load %arg5[%c2_52, %c0_53, %c0_54] : memref<4x32x16xf32, #tpu.memory_space<vmem>>, vector<1x32x16xf32>
    %90 = vector.shape_cast %89 : vector<1x32x16xf32> to vector<32x16xf32>
    %cst_55 = arith.constant dense<0.000000e+00> : vector<8x16xf32>
    %91 = tpu.matmul %26, %90, %cst_55 {dimension_numbers = #tpu.dot_dimension_numbers<[1], [0], [0], [1], [0, 0, 1, 1], [], []>} : vector<8x32xf32>, vector<32x16xf32>, vector<8x16xf32> -> vector<8x16xf32>
    %c2_56 = arith.constant 2 : index
    %c0_57 = arith.constant 0 : index
    %c0_58 = arith.constant 0 : index
    %92 = vector.load %arg6[%c2_56, %c0_57, %c0_58] : memref<4x32x16xf32, #tpu.memory_space<vmem>>, vector<1x32x16xf32>
    %93 = vector.shape_cast %92 : vector<1x32x16xf32> to vector<32x16xf32>
    %cst_59 = arith.constant dense<0.000000e+00> : vector<8x16xf32>
    %94 = tpu.matmul %26, %93, %cst_59 {dimension_numbers = #tpu.dot_dimension_numbers<[1], [0], [0], [1], [0, 0, 1, 1], [], []>} : vector<8x32xf32>, vector<32x16xf32>, vector<8x16xf32> -> vector<8x16xf32>
    %95 = vector.shape_cast %88 : vector<8x16xf32> to vector<1x8x16xf32>
    %96 = vector.shape_cast %91 : vector<8x16xf32> to vector<1x8x16xf32>
    %97 = vector.shape_cast %94 : vector<8x16xf32> to vector<1x8x16xf32>
    "tpu.trace_start"() <{level = 10 : i32, message = "bqd,bkd->bqk"}> : () -> ()
    %cst_60 = arith.constant dense<0.000000e+00> : vector<1x8x8xf32>
    %98 = tpu.matmul %95, %96, %cst_60 {dimension_numbers = #tpu.dot_dimension_numbers<[2], [2], [1], [1], [0, 0, 0, 1, 1, 1], [0], [0]>} : vector<1x8x16xf32>, vector<1x8x16xf32>, vector<1x8x8xf32> -> vector<1x8x8xf32>
    "tpu.trace_stop"() : () -> ()
    %cst_61 = arith.constant dense<0xFF800000> : vector<1x8xf32>
    %99 = vector.multi_reduction <maximumf>, %98, %cst_61 [2] : vector<1x8x8xf32> to vector<1x8xf32>
    %100 = vector.shape_cast %99 : vector<1x8xf32> to vector<1x8x1xf32>
    %101 = vector.broadcast %100 : vector<1x8x1xf32> to vector<1x8x8xf32>
    %102 = arith.subf %98, %101 : vector<1x8x8xf32>
    %103 = math.exp %102 : vector<1x8x8xf32>
    %cst_62 = arith.constant dense<0.000000e+00> : vector<1x8xf32>
    %104 = vector.multi_reduction <add>, %103, %cst_62 [2] : vector<1x8x8xf32> to vector<1x8xf32>
    %105 = vector.shape_cast %104 : vector<1x8xf32> to vector<1x8x1xf32>
    %106 = tpu.reciprocal %105 {approx = true} : vector<1x8x1xf32> -> vector<1x8x1xf32>
    %107 = vector.broadcast %106 : vector<1x8x1xf32> to vector<1x8x8xf32>
    %108 = arith.mulf %103, %107 : vector<1x8x8xf32>
    "tpu.trace_start"() <{level = 10 : i32, message = "bqk,bkd->bqd"}> : () -> ()
    %cst_63 = arith.constant dense<0.000000e+00> : vector<1x8x16xf32>
    %109 = tpu.matmul %108, %97, %cst_63 {dimension_numbers = #tpu.dot_dimension_numbers<[2], [1], [1], [2], [0, 0, 0, 1, 1, 2], [0], [0]>} : vector<1x8x8xf32>, vector<1x8x16xf32>, vector<1x8x16xf32> -> vector<1x8x16xf32>
    "tpu.trace_stop"() : () -> ()
    %110 = vector.shape_cast %109 : vector<1x8x16xf32> to vector<8x16xf32>
    %c2_64 = arith.constant 2 : index
    %c0_65 = arith.constant 0 : index
    %c0_66 = arith.constant 0 : index
    %111 = vector.load %arg7[%c2_64, %c0_65, %c0_66] : memref<4x16x32xf32, #tpu.memory_space<vmem>>, vector<1x16x32xf32>
    %112 = vector.shape_cast %111 : vector<1x16x32xf32> to vector<16x32xf32>
    %cst_67 = arith.constant dense<0.000000e+00> : vector<8x32xf32>
    %113 = tpu.matmul %110, %112, %cst_67 {dimension_numbers = #tpu.dot_dimension_numbers<[1], [0], [0], [1], [0, 0, 1, 1], [], []>} : vector<8x16xf32>, vector<16x32xf32>, vector<8x32xf32> -> vector<8x32xf32>
    %114 = arith.addf %85, %113 : vector<8x32xf32>
    %c3 = arith.constant 3 : index
    %c0_68 = arith.constant 0 : index
    %c0_69 = arith.constant 0 : index
    %115 = vector.load %arg4[%c3, %c0_68, %c0_69] : memref<4x32x16xf32, #tpu.memory_space<vmem>>, vector<1x32x16xf32>
    %116 = vector.shape_cast %115 : vector<1x32x16xf32> to vector<32x16xf32>
    %cst_70 = arith.constant dense<0.000000e+00> : vector<8x16xf32>
    %117 = tpu.matmul %26, %116, %cst_70 {dimension_numbers = #tpu.dot_dimension_numbers<[1], [0], [0], [1], [0, 0, 1, 1], [], []>} : vector<8x32xf32>, vector<32x16xf32>, vector<8x16xf32> -> vector<8x16xf32>
    %c3_71 = arith.constant 3 : index
    %c0_72 = arith.constant 0 : index
    %c0_73 = arith.constant 0 : index
    %118 = vector.load %arg5[%c3_71, %c0_72, %c0_73] : memref<4x32x16xf32, #tpu.memory_space<vmem>>, vector<1x32x16xf32>
    %119 = vector.shape_cast %118 : vector<1x32x16xf32> to vector<32x16xf32>
    %cst_74 = arith.constant dense<0.000000e+00> : vector<8x16xf32>
    %120 = tpu.matmul %26, %119, %cst_74 {dimension_numbers = #tpu.dot_dimension_numbers<[1], [0], [0], [1], [0, 0, 1, 1], [], []>} : vector<8x32xf32>, vector<32x16xf32>, vector<8x16xf32> -> vector<8x16xf32>
    %c3_75 = arith.constant 3 : index
    %c0_76 = arith.constant 0 : index
    %c0_77 = arith.constant 0 : index
    %121 = vector.load %arg6[%c3_75, %c0_76, %c0_77] : memref<4x32x16xf32, #tpu.memory_space<vmem>>, vector<1x32x16xf32>
    %122 = vector.shape_cast %121 : vector<1x32x16xf32> to vector<32x16xf32>
    %cst_78 = arith.constant dense<0.000000e+00> : vector<8x16xf32>
    %123 = tpu.matmul %26, %122, %cst_78 {dimension_numbers = #tpu.dot_dimension_numbers<[1], [0], [0], [1], [0, 0, 1, 1], [], []>} : vector<8x32xf32>, vector<32x16xf32>, vector<8x16xf32> -> vector<8x16xf32>
    %124 = vector.shape_cast %117 : vector<8x16xf32> to vector<1x8x16xf32>
    %125 = vector.shape_cast %120 : vector<8x16xf32> to vector<1x8x16xf32>
    %126 = vector.shape_cast %123 : vector<8x16xf32> to vector<1x8x16xf32>
    "tpu.trace_start"() <{level = 10 : i32, message = "bqd,bkd->bqk"}> : () -> ()
    %cst_79 = arith.constant dense<0.000000e+00> : vector<1x8x8xf32>
    %127 = tpu.matmul %124, %125, %cst_79 {dimension_numbers = #tpu.dot_dimension_numbers<[2], [2], [1], [1], [0, 0, 0, 1, 1, 1], [0], [0]>} : vector<1x8x16xf32>, vector<1x8x16xf32>, vector<1x8x8xf32> -> vector<1x8x8xf32>
    "tpu.trace_stop"() : () -> ()
    %cst_80 = arith.constant dense<0xFF800000> : vector<1x8xf32>
    %128 = vector.multi_reduction <maximumf>, %127, %cst_80 [2] : vector<1x8x8xf32> to vector<1x8xf32>
    %129 = vector.shape_cast %128 : vector<1x8xf32> to vector<1x8x1xf32>
    %130 = vector.broadcast %129 : vector<1x8x1xf32> to vector<1x8x8xf32>
    %131 = arith.subf %127, %130 : vector<1x8x8xf32>
    %132 = math.exp %131 : vector<1x8x8xf32>
    %cst_81 = arith.constant dense<0.000000e+00> : vector<1x8xf32>
    %133 = vector.multi_reduction <add>, %132, %cst_81 [2] : vector<1x8x8xf32> to vector<1x8xf32>
    %134 = vector.shape_cast %133 : vector<1x8xf32> to vector<1x8x1xf32>
    %135 = tpu.reciprocal %134 {approx = true} : vector<1x8x1xf32> -> vector<1x8x1xf32>
    %136 = vector.broadcast %135 : vector<1x8x1xf32> to vector<1x8x8xf32>
    %137 = arith.mulf %132, %136 : vector<1x8x8xf32>
    "tpu.trace_start"() <{level = 10 : i32, message = "bqk,bkd->bqd"}> : () -> ()
    %cst_82 = arith.constant dense<0.000000e+00> : vector<1x8x16xf32>
    %138 = tpu.matmul %137, %126, %cst_82 {dimension_numbers = #tpu.dot_dimension_numbers<[2], [1], [1], [2], [0, 0, 0, 1, 1, 2], [0], [0]>} : vector<1x8x8xf32>, vector<1x8x16xf32>, vector<1x8x16xf32> -> vector<1x8x16xf32>
    "tpu.trace_stop"() : () -> ()
    %139 = vector.shape_cast %138 : vector<1x8x16xf32> to vector<8x16xf32>
    %c3_83 = arith.constant 3 : index
    %c0_84 = arith.constant 0 : index
    %c0_85 = arith.constant 0 : index
    %140 = vector.load %arg7[%c3_83, %c0_84, %c0_85] : memref<4x16x32xf32, #tpu.memory_space<vmem>>, vector<1x16x32xf32>
    %141 = vector.shape_cast %140 : vector<1x16x32xf32> to vector<16x32xf32>
    %cst_86 = arith.constant dense<0.000000e+00> : vector<8x32xf32>
    %142 = tpu.matmul %139, %141, %cst_86 {dimension_numbers = #tpu.dot_dimension_numbers<[1], [0], [0], [1], [0, 0, 1, 1], [], []>} : vector<8x16xf32>, vector<16x32xf32>, vector<8x32xf32> -> vector<8x32xf32>
    %143 = arith.addf %114, %142 : vector<8x32xf32>
    %c0_87 = arith.constant 0 : index
    %c0_88 = arith.constant 0 : index
    %144 = vector.load %arg8[%c0_87, %c0_88] : memref<1x32xf32, #tpu.memory_space<vmem>>, vector<1x32xf32>
    %145 = vector.broadcast %144 : vector<1x32xf32> to vector<8x32xf32>
    %146 = arith.addf %143, %145 : vector<8x32xf32>
    %147 = arith.addf %146, %0 : vector<8x32xf32>
    %c0_89 = arith.constant 0 : index
    %c0_90 = arith.constant 0 : index
    %148 = vector.load %arg9[%c0_89, %c0_90] : memref<1x32xf32, #tpu.memory_space<vmem>>, vector<1x32xf32>
    %c0_91 = arith.constant 0 : index
    %c0_92 = arith.constant 0 : index
    %149 = vector.load %arg10[%c0_91, %c0_92] : memref<1x32xf32, #tpu.memory_space<vmem>>, vector<1x32xf32>
    %cst_93 = arith.constant dense<0.000000e+00> : vector<8xf32>
    %150 = vector.multi_reduction <add>, %147, %cst_93 [1] : vector<8x32xf32> to vector<8xf32>
    %151 = vector.shape_cast %150 : vector<8xf32> to vector<8x1xf32>
    %cst_94 = arith.constant 3.200000e+01 : f32
    %152 = vector.broadcast %cst_94 : f32 to vector<8x1xf32>
    %153 = arith.divf %151, %152 : vector<8x1xf32>
    %154 = vector.broadcast %153 : vector<8x1xf32> to vector<8x32xf32>
    %155 = arith.subf %147, %154 : vector<8x32xf32>
    %156 = vector.broadcast %153 : vector<8x1xf32> to vector<8x32xf32>
    %157 = arith.subf %147, %156 : vector<8x32xf32>
    %158 = arith.mulf %155, %157 : vector<8x32xf32>
    %cst_95 = arith.constant dense<0.000000e+00> : vector<8xf32>
    %159 = vector.multi_reduction <add>, %158, %cst_95 [1] : vector<8x32xf32> to vector<8xf32>
    %160 = vector.shape_cast %159 : vector<8xf32> to vector<8x1xf32>
    %cst_96 = arith.constant 3.200000e+01 : f32
    %161 = vector.broadcast %cst_96 : f32 to vector<8x1xf32>
    %162 = arith.divf %160, %161 : vector<8x1xf32>
    %163 = vector.broadcast %153 : vector<8x1xf32> to vector<8x32xf32>
    %164 = arith.subf %147, %163 : vector<8x32xf32>
    %cst_97 = arith.constant 9.99999974E-6 : f32
    %165 = vector.broadcast %cst_97 : f32 to vector<8x1xf32>
    %166 = arith.addf %162, %165 : vector<8x1xf32>
    %167 = math.rsqrt %166 : vector<8x1xf32>
    %168 = vector.broadcast %167 : vector<8x1xf32> to vector<8x32xf32>
    %169 = arith.mulf %164, %168 : vector<8x32xf32>
    %170 = vector.broadcast %148 : vector<1x32xf32> to vector<8x32xf32>
    %171 = arith.mulf %169, %170 : vector<8x32xf32>
    %172 = vector.broadcast %149 : vector<1x32xf32> to vector<8x32xf32>
    %173 = arith.addf %171, %172 : vector<8x32xf32>
    %c0_98 = arith.constant 0 : index
    %c0_99 = arith.constant 0 : index
    %174 = vector.load %arg11[%c0_98, %c0_99] : memref<32x64xf32, #tpu.memory_space<vmem>>, vector<32x64xf32>
    %cst_100 = arith.constant dense<0.000000e+00> : vector<8x64xf32>
    %175 = tpu.matmul %173, %174, %cst_100 {dimension_numbers = #tpu.dot_dimension_numbers<[1], [0], [0], [1], [0, 0, 1, 1], [], []>} : vector<8x32xf32>, vector<32x64xf32>, vector<8x64xf32> -> vector<8x64xf32>
    %c0_101 = arith.constant 0 : index
    %c0_102 = arith.constant 0 : index
    %176 = vector.load %arg12[%c0_101, %c0_102] : memref<1x64xf32, #tpu.memory_space<vmem>>, vector<1x64xf32>
    %177 = vector.broadcast %176 : vector<1x64xf32> to vector<8x64xf32>
    %178 = arith.addf %175, %177 : vector<8x64xf32>
    %cst_103 = arith.constant 5.000000e-01 : f32
    %179 = vector.broadcast %cst_103 : f32 to vector<8x64xf32>
    %180 = arith.mulf %179, %178 : vector<8x64xf32>
    %cst_104 = arith.constant 0.707106769 : f32
    %181 = vector.broadcast %cst_104 : f32 to vector<8x64xf32>
    %182 = arith.mulf %178, %181 : vector<8x64xf32>
    %cst_105 = arith.constant 0.000000e+00 : f32
    %183 = vector.broadcast %cst_105 : f32 to vector<8x64xf32>
    %184 = arith.cmpf oge, %182, %183 : vector<8x64xf32>
    %cst_106 = arith.constant 1.000000e+00 : f32
    %cst_107 = arith.constant -1.000000e+00 : f32
    %185 = vector.broadcast %cst_106 : f32 to vector<8x64xf32>
    %186 = vector.broadcast %cst_107 : f32 to vector<8x64xf32>
    %187 = arith.select %184, %185, %186 : vector<8x64xi1>, vector<8x64xf32>
    %188 = math.absf %182 : vector<8x64xf32>
    %cst_108 = arith.constant 0.327591091 : f32
    %189 = vector.broadcast %cst_108 : f32 to vector<8x64xf32>
    %190 = arith.mulf %189, %188 : vector<8x64xf32>
    %cst_109 = arith.constant 1.000000e+00 : f32
    %191 = vector.broadcast %cst_109 : f32 to vector<8x64xf32>
    %192 = arith.addf %191, %190 : vector<8x64xf32>
    %cst_110 = arith.constant 1.000000e+00 : f32
    %193 = vector.broadcast %cst_110 : f32 to vector<8x64xf32>
    %194 = arith.divf %193, %192 : vector<8x64xf32>
    %cst_111 = arith.constant 1.06140542 : f32
    %195 = vector.broadcast %cst_111 : f32 to vector<8x64xf32>
    %196 = arith.mulf %195, %194 : vector<8x64xf32>
    %cst_112 = arith.constant -1.45315206 : f32
    %197 = vector.broadcast %cst_112 : f32 to vector<8x64xf32>
    %198 = arith.addf %196, %197 : vector<8x64xf32>
    %199 = arith.mulf %198, %194 : vector<8x64xf32>
    %cst_113 = arith.constant 1.42141378 : f32
    %200 = vector.broadcast %cst_113 : f32 to vector<8x64xf32>
    %201 = arith.addf %199, %200 : vector<8x64xf32>
    %202 = arith.mulf %201, %194 : vector<8x64xf32>
    %cst_114 = arith.constant -0.284496725 : f32
    %203 = vector.broadcast %cst_114 : f32 to vector<8x64xf32>
    %204 = arith.addf %202, %203 : vector<8x64xf32>
    %205 = arith.mulf %204, %194 : vector<8x64xf32>
    %cst_115 = arith.constant 0.254829586 : f32
    %206 = vector.broadcast %cst_115 : f32 to vector<8x64xf32>
    %207 = arith.addf %205, %206 : vector<8x64xf32>
    %208 = arith.mulf %207, %194 : vector<8x64xf32>
    %cst_116 = arith.constant 0.000000e+00 : f32
    %209 = vector.broadcast %cst_116 : f32 to vector<8x64xf32>
    %210 = arith.subf %209, %188 : vector<8x64xf32>
    %211 = arith.mulf %210, %188 : vector<8x64xf32>
    %212 = math.exp %211 : vector<8x64xf32>
    %213 = arith.mulf %208, %212 : vector<8x64xf32>
    %cst_117 = arith.constant 1.000000e+00 : f32
    %214 = vector.broadcast %cst_117 : f32 to vector<8x64xf32>
    %215 = arith.subf %214, %213 : vector<8x64xf32>
    %216 = arith.mulf %187, %215 : vector<8x64xf32>
    %cst_118 = arith.constant 1.000000e+00 : f32
    %217 = vector.broadcast %cst_118 : f32 to vector<8x64xf32>
    %218 = arith.addf %217, %216 : vector<8x64xf32>
    %219 = arith.mulf %180, %218 : vector<8x64xf32>
    %c0_119 = arith.constant 0 : index
    %c0_120 = arith.constant 0 : index
    %220 = vector.load %arg13[%c0_119, %c0_120] : memref<64x32xf32, #tpu.memory_space<vmem>>, vector<64x32xf32>
    %cst_121 = arith.constant dense<0.000000e+00> : vector<8x32xf32>
    %221 = tpu.matmul %219, %220, %cst_121 {dimension_numbers = #tpu.dot_dimension_numbers<[1], [0], [0], [1], [0, 0, 1, 1], [], []>} : vector<8x64xf32>, vector<64x32xf32>, vector<8x32xf32> -> vector<8x32xf32>
    %c0_122 = arith.constant 0 : index
    %c0_123 = arith.constant 0 : index
    %222 = vector.load %arg14[%c0_122, %c0_123] : memref<1x32xf32, #tpu.memory_space<vmem>>, vector<1x32xf32>
    %223 = vector.broadcast %222 : vector<1x32xf32> to vector<8x32xf32>
    %224 = arith.addf %221, %223 : vector<8x32xf32>
    %225 = arith.addf %224, %147 : vector<8x32xf32>
    %c0_124 = arith.constant 0 : index
    %c0_125 = arith.constant 0 : index
    %226 = vector.load %arg15[%c0_124, %c0_125] : memref<8x32xf32, #tpu.memory_space<vmem>>, vector<8x32xf32>
    tpu.vector_store %arg15[%c0_124, %c0_125], %225 {strides = array<i32>} : memref<8x32xf32, #tpu.memory_space<vmem>>, vector<8x32xf32>,
    return
  }
  func.func @transform_0(%arg0: i32) -> (i32, i32) {
    %c0_i32 = arith.constant 0 : i32
    %c0_i32_0 = arith.constant 0 : i32
    return %arg0, %c0_i32 : i32, i32
  }
  func.func @transform_1(%arg0: i32) -> (i32, i32) {
    %c0_i32 = arith.constant 0 : i32
    %c0_i32_0 = arith.constant 0 : i32
    %c0_i32_1 = arith.constant 0 : i32
    return %c0_i32, %c0_i32_0 : i32, i32
  }
  func.func @transform_2(%arg0: i32) -> (i32, i32) {
    %c0_i32 = arith.constant 0 : i32
    %c0_i32_0 = arith.constant 0 : i32
    %c0_i32_1 = arith.constant 0 : i32
    return %c0_i32, %c0_i32_0 : i32, i32
  }
  func.func @transform_3(%arg0: i32) -> (i32, i32, i32) {
    %c0_i32 = arith.constant 0 : i32
    %c0_i32_0 = arith.constant 0 : i32
    %c0_i32_1 = arith.constant 0 : i32
    %c0_i32_2 = arith.constant 0 : i32
    return %c0_i32, %c0_i32_0, %c0_i32_1 : i32, i32, i32
  }
  func.func @transform_4(%arg0: i32) -> (i32, i32, i32) {
    %c0_i32 = arith.constant 0 : i32
    %c0_i32_0 = arith.constant 0 : i32
    %c0_i32_1 = arith.constant 0 : i32
    %c0_i32_2 = arith.constant 0 : i32
    return %c0_i32, %c0_i32_0, %c0_i32_1 : i32, i32, i32
  }
  func.func @transform_5(%arg0: i32) -> (i32, i32, i32) {
    %c0_i32 = arith.constant 0 : i32
    %c0_i32_0 = arith.constant 0 : i32
    %c0_i32_1 = arith.constant 0 : i32
    %c0_i32_2 = arith.constant 0 : i32
    return %c0_i32, %c0_i32_0, %c0_i32_1 : i32, i32, i32
  }
  func.func @transform_6(%arg0: i32) -> (i32, i32, i32) {
    %c0_i32 = arith.constant 0 : i32
    %c0_i32_0 = arith.constant 0 : i32
    %c0_i32_1 = arith.constant 0 : i32
    %c0_i32_2 = arith.constant 0 : i32
    return %c0_i32, %c0_i32_0, %c0_i32_1 : i32, i32, i32
  }
  func.func @transform_7(%arg0: i32) -> (i32, i32) {
    %c0_i32 = arith.constant 0 : i32
    %c0_i32_0 = arith.constant 0 : i32
    %c0_i32_1 = arith.constant 0 : i32
    return %c0_i32, %c0_i32_0 : i32, i32
  }
  func.func @transform_8(%arg0: i32) -> (i32, i32) {
    %c0_i32 = arith.constant 0 : i32
    %c0_i32_0 = arith.constant 0 : i32
    %c0_i32_1 = arith.constant 0 : i32
    return %c0_i32, %c0_i32_0 : i32, i32
  }
  func.func @transform_9(%arg0: i32) -> (i32, i32) {
    %c0_i32 = arith.constant 0 : i32
    %c0_i32_0 = arith.constant 0 : i32
    %c0_i32_1 = arith.constant 0 : i32
    return %c0_i32, %c0_i32_0 : i32, i32
  }
  func.func @transform_10(%arg0: i32) -> (i32, i32) {
    %c0_i32 = arith.constant 0 : i32
    %c0_i32_0 = arith.constant 0 : i32
    %c0_i32_1 = arith.constant 0 : i32
    return %c0_i32, %c0_i32_0 : i32, i32
  }
  func.func @transform_11(%arg0: i32) -> (i32, i32) {
    %c0_i32 = arith.constant 0 : i32
    %c0_i32_0 = arith.constant 0 : i32
    %c0_i32_1 = arith.constant 0 : i32
    return %c0_i32, %c0_i32_0 : i32, i32
  }
  func.func @transform_12(%arg0: i32) -> (i32, i32) {
    %c0_i32 = arith.constant 0 : i32
    %c0_i32_0 = arith.constant 0 : i32
    %c0_i32_1 = arith.constant 0 : i32
    return %c0_i32, %c0_i32_0 : i32, i32
  }
  func.func @transform_13(%arg0: i32) -> (i32, i32) {
    %c0_i32 = arith.constant 0 : i32
    %c0_i32_0 = arith.constant 0 : i32
    %c0_i32_1 = arith.constant 0 : i32
    return %c0_i32, %c0_i32_0 : i32, i32
  }
  func.func @transform_14(%arg0: i32) -> (i32, i32) {
    %c0_i32 = arith.constant 0 : i32
    %c0_i32_0 = arith.constant 0 : i32
    return %arg0, %c0_i32 : i32, i32
  }
}

</mosaic_0001>

<llo_original>
// kernel: transformer_forward.2
$region0: #{transformer_forward.2}
  #allocation0 [shape = 'u32[]', space=smem, size = 0x4, offset = 0x4, fixed_abs, tag = 'smem constant byte address 0x4 - core index']
  #allocation1 [shape = 'u32[144,128]{1,0:T(1,128)}', space=vmem, size = 0x12000, scoped, tag = 'internal scratch']
  %s0 = inlined_call_operand.vmem [shape: f32[16,32], index: 0, kind: input, shape index: {}]
  %s1 = inlined_call_operand.vmem [shape: f32[1,32], index: 1, kind: input, shape index: {}]
  %s2 = inlined_call_operand.vmem [shape: f32[1,32], index: 2, kind: input, shape index: {}]
  %s3 = inlined_call_operand.vmem [shape: f32[4,32,16], index: 3, kind: input, shape index: {}]
  %s4 = inlined_call_operand.vmem [shape: f32[4,32,16], index: 4, kind: input, shape index: {}]
  %s5 = inlined_call_operand.vmem [shape: f32[4,32,16], index: 5, kind: input, shape index: {}]
  %s6 = inlined_call_operand.vmem [shape: f32[4,16,32], index: 6, kind: input, shape index: {}]
  %s7 = inlined_call_operand.vmem [shape: f32[1,32], index: 7, kind: input, shape index: {}]
  %s8 = inlined_call_operand.vmem [shape: f32[1,32], index: 8, kind: input, shape index: {}]
  %s9 = inlined_call_operand.vmem [shape: f32[1,32], index: 9, kind: input, shape index: {}]
  %s10 = inlined_call_operand.vmem [shape: f32[32,64], index: 10, kind: input, shape index: {}]
  %s11 = inlined_call_operand.vmem [shape: f32[1,64], index: 11, kind: input, shape index: {}]
  %s12 = inlined_call_operand.vmem [shape: f32[64,32], index: 12, kind: input, shape index: {}]
  %s13 = inlined_call_operand.vmem [shape: f32[1,32], index: 13, kind: input, shape index: {}]
  %s14 = inlined_call_operand.vmem [shape: f32[16,32], index: 14, kind: output, shape index: {}]
  %s15 = sld [smem:[#allocation0]]
  $region89: #{transformer_forward.2} parent=0
    _
  %s17 = ssub.s32 1, %s15
  %s18 = scalar_select 0, %s17, %s15
  loop: start=0, step=1, limit=4
  $region2: #{transformer_forward.2} parent=0 // loop_pre_header
    _
  $region3: #{transformer_forward.2} parent=0 // loop_header
    %s20 = sphi 0, %s24
    %p21 = scmp.ge.s32.totalorder %s20, 4
    %s30 = sphi 0, %s32
    %s33 = sphi 0, %s30
    %s34 = sphi 0, %s33
    %s50 = sphi 0, %s34
    %s54 = sphi 0, %s54
    %s56 = sphi 0, %s54
    %s57 = sphi 0, %s56
    %s71 = sphi 0, %s57
    %s75 = sphi 0, %s75
    %s77 = sphi 0, %s75
    %s78 = sphi 0, %s77
    %s92 = sphi 0, %s78
    %s96 = sphi 0, %s96
    %s98 = sphi 0, %s96
    %s99 = sphi 0, %s98
    %s113 = sphi 0, %s99
    %s117 = sphi 0, %s117
    %s119 = sphi 0, %s117
    %s120 = sphi 0, %s119
    %s134 = sphi 0, %s120
    %s138 = sphi 0, %s138
    %s140 = sphi 0, %s138
    %s141 = sphi 0, %s140
    %s155 = sphi 0, %s141
    %s159 = sphi 0, %s159
    %s161 = sphi 0, %s159
    %s162 = sphi 0, %s161
    %s176 = sphi 0, %s162
    %s180 = sphi 0, %s180
    %s182 = sphi 0, %s180
    %s183 = sphi 0, %s182
    %s197 = sphi 0, %s183
    %s201 = sphi 0, %s201
    %s203 = sphi 0, %s201
    %s204 = sphi 0, %s203
    %s218 = sphi 0, %s204
    %s222 = sphi 0, %s222
    %s224 = sphi 0, %s222
    %s225 = sphi 0, %s224
    %s239 = sphi 0, %s225
    %s243 = sphi 0, %s243
    %s245 = sphi 0, %s243
    %s246 = sphi 0, %s245
    %s260 = sphi 0, %s246
    %s264 = sphi 0, %s264
    %s266 = sphi 0, %s264
    %s267 = sphi 0, %s266
    %s281 = sphi 0, %s267
    %s285 = sphi 0, %s285
    %s287 = sphi 0, %s285
    %s288 = sphi 0, %s287
    %s302 = sphi 0, %s288
    %s306 = sphi 0, %s306
    %s308 = sphi 0, %s306
    %s309 = sphi 0, %s308
    %s323 = sphi 0, %s309
    %s329 = sphi 0, %s331
    %s332 = sphi 0, %s329
    %s333 = sphi 0, %s332
    %s349 = sphi 0, %s333
  $region4: #{transformer_forward.2} parent=0 // loop_header_branch
    %23 = sbr.rel (%p21) target = $region8
  $region5: #{transformer_forward.2} parent=0 // loop_body
    %s25 = ssub.s32 %s20, 1
    %s26 = ssub.s32 %s20, 2
    %s27 = sadd.s32 %s20, 1
    %s28 = ssub.s32 %s20, %s27
    %p29 = scmp.eq.s32.totalorder %s28, 0
    %s31 = sadd.s32 %s30, 1
    %s32 = scalar_select %p29, %s30, %s31
    %p35 = pneg %p29
    %p36 = scmp.eq.s32.totalorder %s20, 1
    %p37 = por %p35, %p36
    %p38 = scmp.ne.s32.totalorder %s30, %s33
    %p39 = scmp.eq.s32.totalorder %s20, 0
    %p40 = por %p38, %p39
    %p41 = scmp.ne.s32.totalorder %s30, %s33
    %p42 = scmp.eq.s32.totalorder %s25, 1
    %p43 = por %p41, %p42
    %p44 = scmp.ne.s32.totalorder %s33, %s34
    %p45 = scmp.eq.s32.totalorder %s25, 0
    %p46 = por %p44, %p45
    %p47 = scmp.ne.s32.totalorder %s33, %s34
    %p48 = scmp.eq.s32.totalorder %s26, 1
    %p49 = por %p47, %p48
    %p51 = scmp.ne.s32.totalorder %s34, %s50
    %p52 = scmp.eq.s32.totalorder %s26, 0
    %p53 = por %p51, %p52
    %s55 = sadd.s32 %s54, 1
    %p58 = scmp.eq.s32.totalorder %s20, 1
    %p59 = scmp.ne.s32.totalorder %s54, %s56
    %p60 = scmp.eq.s32.totalorder %s20, 0
    %p61 = por %p59, %p60
    %p62 = scmp.ne.s32.totalorder %s54, %s56
    %p63 = scmp.eq.s32.totalorder %s25, 1
    %p64 = por %p62, %p63
    %p65 = scmp.ne.s32.totalorder %s56, %s57
    %p66 = scmp.eq.s32.totalorder %s25, 0
    %p67 = por %p65, %p66
    %p68 = scmp.ne.s32.totalorder %s56, %s57
    %p69 = scmp.eq.s32.totalorder %s26, 1
    %p70 = por %p68, %p69
    %p72 = scmp.ne.s32.totalorder %s57, %s71
    %p73 = scmp.eq.s32.totalorder %s26, 0
    %p74 = por %p72, %p73
    %s76 = sadd.s32 %s75, 1
    %p79 = scmp.eq.s32.totalorder %s20, 1
    %p80 = scmp.ne.s32.totalorder %s75, %s77
    %p81 = scmp.eq.s32.totalorder %s20, 0
    %p82 = por %p80, %p81
    %p83 = scmp.ne.s32.totalorder %s75, %s77
    %p84 = scmp.eq.s32.totalorder %s25, 1
    %p85 = por %p83, %p84
    %p86 = scmp.ne.s32.totalorder %s77, %s78
    %p87 = scmp.eq.s32.totalorder %s25, 0
    %p88 = por %p86, %p87
    %p89 = scmp.ne.s32.totalorder %s77, %s78
    %p90 = scmp.eq.s32.totalorder %s26, 1
    %p91 = por %p89, %p90
    %p93 = scmp.ne.s32.totalorder %s78, %s92
    %p94 = scmp.eq.s32.totalorder %s26, 0
    %p95 = por %p93, %p94
    %s97 = sadd.s32 %s96, 1
    %p100 = scmp.eq.s32.totalorder %s20, 1
    %p101 = scmp.ne.s32.totalorder %s96, %s98
    %p102 = scmp.eq.s32.totalorder %s20, 0
    %p103 = por %p101, %p102
    %p104 = scmp.ne.s32.totalorder %s96, %s98
    %p105 = scmp.eq.s32.totalorder %s25, 1
    %p106 = por %p104, %p105
    %p107 = scmp.ne.s32.totalorder %s98, %s99
    %p108 = scmp.eq.s32.totalorder %s25, 0
    %p109 = por %p107, %p108
    %p110 = scmp.ne.s32.totalorder %s98, %s99
    %p111 = scmp.eq.s32.totalorder %s26, 1
    %p112 = por %p110, %p111
    %p114 = scmp.ne.s32.totalorder %s99, %s113
    %p115 = scmp.eq.s32.totalorder %s26, 0
    %p116 = por %p114, %p115
    %s118 = sadd.s32 %s117, 1
    %p121 = scmp.eq.s32.totalorder %s20, 1
    %p122 = scmp.ne.s32.totalorder %s117, %s119
    %p123 = scmp.eq.s32.totalorder %s20, 0
    %p124 = por %p122, %p123
    %p125 = scmp.ne.s32.totalorder %s117, %s119
    %p126 = scmp.eq.s32.totalorder %s25, 1
    %p127 = por %p125, %p126
    %p128 = scmp.ne.s32.totalorder %s119, %s120
    %p129 = scmp.eq.s32.totalorder %s25, 0
    %p130 = por %p128, %p129
    %p131 = scmp.ne.s32.totalorder %s119, %s120
    %p132 = scmp.eq.s32.totalorder %s26, 1
    %p133 = por %p131, %p132
    %p135 = scmp.ne.s32.totalorder %s120, %s134
    %p136 = scmp.eq.s32.totalorder %s26, 0
    %p137 = por %p135, %p136
    %s139 = sadd.s32 %s138, 1
    %p142 = scmp.eq.s32.totalorder %s20, 1
    %p143 = scmp.ne.s32.totalorder %s138, %s140
    %p144 = scmp.eq.s32.totalorder %s20, 0
    %p145 = por %p143, %p144
    %p146 = scmp.ne.s32.totalorder %s138, %s140
    %p147 = scmp.eq.s32.totalorder %s25, 1
    %p148 = por %p146, %p147
    %p149 = scmp.ne.s32.totalorder %s140, %s141
    %p150 = scmp.eq.s32.totalorder %s25, 0
    %p151 = por %p149, %p150
    %p152 = scmp.ne.s32.totalorder %s140, %s141
    %p153 = scmp.eq.s32.totalorder %s26, 1
    %p154 = por %p152, %p153
    %p156 = scmp.ne.s32.totalorder %s141, %s155
    %p157 = scmp.eq.s32.totalorder %s26, 0
    %p158 = por %p156, %p157
    %s160 = sadd.s32 %s159, 1
    %p163 = scmp.eq.s32.totalorder %s20, 1
    %p164 = scmp.ne.s32.totalorder %s159, %s161
    %p165 = scmp.eq.s32.totalorder %s20, 0
    %p166 = por %p164, %p165
    %p167 = scmp.ne.s32.totalorder %s159, %s161
    %p168 = scmp.eq.s32.totalorder %s25, 1
    %p169 = por %p167, %p168
    %p170 = scmp.ne.s32.totalorder %s161, %s162
    %p171 = scmp.eq.s32.totalorder %s25, 0
    %p172 = por %p170, %p171
    %p173 = scmp.ne.s32.totalorder %s161, %s162
    %p174 = scmp.eq.s32.totalorder %s26, 1
    %p175 = por %p173, %p174
    %p177 = scmp.ne.s32.totalorder %s162, %s176
    %p178 = scmp.eq.s32.totalorder %s26, 0
    %p179 = por %p177, %p178
    %s181 = sadd.s32 %s180, 1
    %p184 = scmp.eq.s32.totalorder %s20, 1
    %p185 = scmp.ne.s32.totalorder %s180, %s182
    %p186 = scmp.eq.s32.totalorder %s20, 0
    %p187 = por %p185, %p186
    %p188 = scmp.ne.s32.totalorder %s180, %s182
    %p189 = scmp.eq.s32.totalorder %s25, 1
    %p190 = por %p188, %p189
    %p191 = scmp.ne.s32.totalorder %s182, %s183
    %p192 = scmp.eq.s32.totalorder %s25, 0
    %p193 = por %p191, %p192
    %p194 = scmp.ne.s32.totalorder %s182, %s183
    %p195 = scmp.eq.s32.totalorder %s26, 1
    %p196 = por %p194, %p195
    %p198 = scmp.ne.s32.totalorder %s183, %s197
    %p199 = scmp.eq.s32.totalorder %s26, 0
    %p200 = por %p198, %p199
    %s202 = sadd.s32 %s201, 1
    %p205 = scmp.eq.s32.totalorder %s20, 1
    %p206 = scmp.ne.s32.totalorder %s201, %s203
    %p207 = scmp.eq.s32.totalorder %s20, 0
    %p208 = por %p206, %p207
    %p209 = scmp.ne.s32.totalorder %s201, %s203
    %p210 = scmp.eq.s32.totalorder %s25, 1
    %p211 = por %p209, %p210
    %p212 = scmp.ne.s32.totalorder %s203, %s204
    %p213 = scmp.eq.s32.totalorder %s25, 0
    %p214 = por %p212, %p213
    %p215 = scmp.ne.s32.totalorder %s203, %s204
    %p216 = scmp.eq.s32.totalorder %s26, 1
    %p217 = por %p215, %p216
    %p219 = scmp.ne.s32.totalorder %s204, %s218
    %p220 = scmp.eq.s32.totalorder %s26, 0
    %p221 = por %p219, %p220
    %s223 = sadd.s32 %s222, 1
    %p226 = scmp.eq.s32.totalorder %s20, 1
    %p227 = scmp.ne.s32.totalorder %s222, %s224
    %p228 = scmp.eq.s32.totalorder %s20, 0
    %p229 = por %p227, %p228
    %p230 = scmp.ne.s32.totalorder %s222, %s224
    %p231 = scmp.eq.s32.totalorder %s25, 1
    %p232 = por %p230, %p231
    %p233 = scmp.ne.s32.totalorder %s224, %s225
    %p234 = scmp.eq.s32.totalorder %s25, 0
    %p235 = por %p233, %p234
    %p236 = scmp.ne.s32.totalorder %s224, %s225
    %p237 = scmp.eq.s32.totalorder %s26, 1
    %p238 = por %p236, %p237
    %p240 = scmp.ne.s32.totalorder %s225, %s239
    %p241 = scmp.eq.s32.totalorder %s26, 0
    %p242 = por %p240, %p241
    %s244 = sadd.s32 %s243, 1
    %p247 = scmp.eq.s32.totalorder %s20, 1
    %p248 = scmp.ne.s32.totalorder %s243, %s245
    %p249 = scmp.eq.s32.totalorder %s20, 0
    %p250 = por %p248, %p249
    %p251 = scmp.ne.s32.totalorder %s243, %s245
    %p252 = scmp.eq.s32.totalorder %s25, 1
    %p253 = por %p251, %p252
    %p254 = scmp.ne.s32.totalorder %s245, %s246
    %p255 = scmp.eq.s32.totalorder %s25, 0
    %p256 = por %p254, %p255
    %p257 = scmp.ne.s32.totalorder %s245, %s246
    %p258 = scmp.eq.s32.totalorder %s26, 1
    %p259 = por %p257, %p258
    %p261 = scmp.ne.s32.totalorder %s246, %s260
    %p262 = scmp.eq.s32.totalorder %s26, 0
    %p263 = por %p261, %p262
    %s265 = sadd.s32 %s264, 1
    %p268 = scmp.eq.s32.totalorder %s20, 1
    %p269 = scmp.ne.s32.totalorder %s264, %s266
    %p270 = scmp.eq.s32.totalorder %s20, 0
    %p271 = por %p269, %p270
    %p272 = scmp.ne.s32.totalorder %s264, %s266
    %p273 = scmp.eq.s32.totalorder %s25, 1
    %p274 = por %p272, %p273
    %p275 = scmp.ne.s32.totalorder %s266, %s267
    %p276 = scmp.eq.s32.totalorder %s25, 0
    %p277 = por %p275, %p276
    %p278 = scmp.ne.s32.totalorder %s266, %s267
    %p279 = scmp.eq.s32.totalorder %s26, 1
    %p280 = por %p278, %p279
    %p282 = scmp.ne.s32.totalorder %s267, %s281
    %p283 = scmp.eq.s32.totalorder %s26, 0
    %p284 = por %p282, %p283
    %s286 = sadd.s32 %s285, 1
    %p289 = scmp.eq.s32.totalorder %s20, 1
    %p290 = scmp.ne.s32.totalorder %s285, %s287
    %p291 = scmp.eq.s32.totalorder %s20, 0
    %p292 = por %p290, %p291
    %p293 = scmp.ne.s32.totalorder %s285, %s287
    %p294 = scmp.eq.s32.totalorder %s25, 1
    %p295 = por %p293, %p294
    %p296 = scmp.ne.s32.totalorder %s287, %s288
    %p297 = scmp.eq.s32.totalorder %s25, 0
    %p298 = por %p296, %p297
    %p299 = scmp.ne.s32.totalorder %s287, %s288
    %p300 = scmp.eq.s32.totalorder %s26, 1
    %p301 = por %p299, %p300
    %p303 = scmp.ne.s32.totalorder %s288, %s302
    %p304 = scmp.eq.s32.totalorder %s26, 0
    %p305 = por %p303, %p304
    %s307 = sadd.s32 %s306, 1
    %p310 = scmp.eq.s32.totalorder %s20, 1
    %p311 = scmp.ne.s32.totalorder %s306, %s308
    %p312 = scmp.eq.s32.totalorder %s20, 0
    %p313 = por %p311, %p312
    %p314 = scmp.ne.s32.totalorder %s306, %s308
    %p315 = scmp.eq.s32.totalorder %s25, 1
    %p316 = por %p314, %p315
    %p317 = scmp.ne.s32.totalorder %s308, %s309
    %p318 = scmp.eq.s32.totalorder %s25, 0
    %p319 = por %p317, %p318
    %p320 = scmp.ne.s32.totalorder %s308, %s309
    %p321 = scmp.eq.s32.totalorder %s26, 1
    %p322 = por %p320, %p321
    %p324 = scmp.ne.s32.totalorder %s309, %s323
    %p325 = scmp.eq.s32.totalorder %s26, 0
    %p326 = por %p324, %p325
    %s327 = ssub.s32 %s20, %s27
    %p328 = scmp.eq.s32.totalorder %s327, 0
    %s330 = sadd.s32 %s329, 1
    %s331 = scalar_select %p328, %s329, %s330
    %p334 = pneg %p328
    %p335 = scmp.eq.s32.totalorder %s20, 1
    %p336 = por %p334, %p335
    %p337 = scmp.ne.s32.totalorder %s329, %s332
    %p338 = scmp.eq.s32.totalorder %s20, 0
    %p339 = por %p337, %p338
    %p340 = scmp.ne.s32.totalorder %s329, %s332
    %p341 = scmp.eq.s32.totalorder %s25, 1
    %p342 = por %p340, %p341
    %p343 = scmp.ne.s32.totalorder %s332, %s333
    %p344 = scmp.eq.s32.totalorder %s25, 0
    %p345 = por %p343, %p344
    %p346 = scmp.ne.s32.totalorder %s332, %s333
    %p347 = scmp.eq.s32.totalorder %s26, 1
    %p348 = por %p346, %p347
    %p350 = scmp.ne.s32.totalorder %s333, %s349
    %p351 = scmp.eq.s32.totalorder %s26, 0
    %p352 = por %p350, %p351
    %p353 = scmp.le.s32.totalorder 1, %s20
    %p354 = scmp.lt.s32.totalorder %s20, 3
    %p355 = pnand %p353, %p354
    %p356 = pneg %p355
    // Predicated region
    $region9: #{transformer_forward.2} parent=5 // pred_check
      _
    $region10: #{transformer_forward.2} parent=5 // pred_check_branch
      %358 = sbr.rel (%p355) target = $region12
    $region11: #{transformer_forward.2} parent=5 // pred_region
      %s359 = ssub.s32 %s20, 1
      // Predicated region
      $region13: #{transformer_forward.2} parent=11 // pred_check
        %p360 = pneg %p67
      $region14: #{transformer_forward.2} parent=11 // pred_check_branch
        %362 = sbr.rel (%p360) target = $region16
      $region15: #{transformer_forward.2} parent=11 // pred_region
        _
      $region16: #{transformer_forward.2} parent=11 // pred_fallthru
        _
      // Predicated region
      $region17: #{transformer_forward.2} parent=11 // pred_check
        %p363 = pneg %p88
      $region18: #{transformer_forward.2} parent=11 // pred_check_branch
        %365 = sbr.rel (%p363) target = $region20
      $region19: #{transformer_forward.2} parent=11 // pred_region
        _
      $region20: #{transformer_forward.2} parent=11 // pred_fallthru
        _
      // Predicated region
      $region21: #{transformer_forward.2} parent=11 // pred_check
        %p366 = pneg %p109
      $region22: #{transformer_forward.2} parent=11 // pred_check_branch
        %368 = sbr.rel (%p366) target = $region24
      $region23: #{transformer_forward.2} parent=11 // pred_region
        _
      $region24: #{transformer_forward.2} parent=11 // pred_fallthru
        _
      // Predicated region
      $region25: #{transformer_forward.2} parent=11 // pred_check
        %p369 = pneg %p130
      $region26: #{transformer_forward.2} parent=11 // pred_check_branch
        %371 = sbr.rel (%p369) target = $region28
      $region27: #{transformer_forward.2} parent=11 // pred_region
        _
      $region28: #{transformer_forward.2} parent=11 // pred_fallthru
        _
      // Predicated region
      $region29: #{transformer_forward.2} parent=11 // pred_check
        %p372 = pneg %p151
      $region30: #{transformer_forward.2} parent=11 // pred_check_branch
        %374 = sbr.rel (%p372) target = $region32
      $region31: #{transformer_forward.2} parent=11 // pred_region
        _
      $region32: #{transformer_forward.2} parent=11 // pred_fallthru
        _
      // Predicated region
      $region33: #{transformer_forward.2} parent=11 // pred_check
        %p375 = pneg %p172
      $region34: #{transformer_forward.2} parent=11 // pred_check_branch
        %377 = sbr.rel (%p375) target = $region36
      $region35: #{transformer_forward.2} parent=11 // pred_region
        _
      $region36: #{transformer_forward.2} parent=11 // pred_fallthru
        _
      // Predicated region
      $region37: #{transformer_forward.2} parent=11 // pred_check
        %p378 = pneg %p193
      $region38: #{transformer_forward.2} parent=11 // pred_check_branch
        %380 = sbr.rel (%p378) target = $region40
      $region39: #{transformer_forward.2} parent=11 // pred_region
        _
      $region40: #{transformer_forward.2} parent=11 // pred_fallthru
        _
      // Predicated region
      $region41: #{transformer_forward.2} parent=11 // pred_check
        %p381 = pneg %p214
      $region42: #{transformer_forward.2} parent=11 // pred_check_branch
        %383 = sbr.rel (%p381) target = $region44
      $region43: #{transformer_forward.2} parent=11 // pred_region
        _
      $region44: #{transformer_forward.2} parent=11 // pred_fallthru
        _
      // Predicated region
      $region45: #{transformer_forward.2} parent=11 // pred_check
        %p384 = pneg %p235
      $region46: #{transformer_forward.2} parent=11 // pred_check_branch
        %386 = sbr.rel (%p384) target = $region48
      $region47: #{transformer_forward.2} parent=11 // pred_region
        _
      $region48: #{transformer_forward.2} parent=11 // pred_fallthru
        _
      // Predicated region
      $region49: #{transformer_forward.2} parent=11 // pred_check
        %p387 = pneg %p256
      $region50: #{transformer_forward.2} parent=11 // pred_check_branch
        %389 = sbr.rel (%p387) target = $region52
      $region51: #{transformer_forward.2} parent=11 // pred_region
        _
      $region52: #{transformer_forward.2} parent=11 // pred_fallthru
        _
      // Predicated region
      $region53: #{transformer_forward.2} parent=11 // pred_check
        %p390 = pneg %p277
      $region54: #{transformer_forward.2} parent=11 // pred_check_branch
        %392 = sbr.rel (%p390) target = $region56
      $region55: #{transformer_forward.2} parent=11 // pred_region
        _
      $region56: #{transformer_forward.2} parent=11 // pred_fallthru
        _
      // Predicated region
      $region57: #{transformer_forward.2} parent=11 // pred_check
        %p393 = pneg %p298
      $region58: #{transformer_forward.2} parent=11 // pred_check_branch
        %395 = sbr.rel (%p393) target = $region60
      $region59: #{transformer_forward.2} parent=11 // pred_region
        _
      $region60: #{transformer_forward.2} parent=11 // pred_fallthru
        _
      // Predicated region
      $region61: #{transformer_forward.2} parent=11 // pred_check
        %p396 = pneg %p319
      $region62: #{transformer_forward.2} parent=11 // pred_check_branch
        %398 = sbr.rel (%p396) target = $region64
      $region63: #{transformer_forward.2} parent=11 // pred_region
        _
      $region64: #{transformer_forward.2} parent=11 // pred_fallthru
        _
    $region12: #{transformer_forward.2} parent=5 // pred_fallthru
      _
    %p399 = scmp.lt.s32.totalorder %s20, 2
    // Predicated region
    $region65: #{transformer_forward.2} parent=5 // pred_check
      %p400 = pneg %p399
    $region66: #{transformer_forward.2} parent=5 // pred_check_branch
      %402 = sbr.rel (%p400) target = $region68
    $region67: #{transformer_forward.2} parent=5 // pred_region
      // Predicated region
      $region69: #{transformer_forward.2} parent=67 // pred_check
        %p403 = pneg %p40
      $region70: #{transformer_forward.2} parent=67 // pred_check_branch
        %405 = sbr.rel (%p403) target = $region72
      $region71: #{transformer_forward.2} parent=67 // pred_region
        %p406 = scmp.lt.s32.totalorder %s20, 1
        %s407 = scalar_select %p406, %s20, 1
        %s408 = smul.addr %s407, 8
        %s409 = scalar_lea.vmem %s0, %s408
      $region72: #{transformer_forward.2} parent=67 // pred_fallthru
        _
    $region68: #{transformer_forward.2} parent=5 // pred_fallthru
      _
    %p410 = scmp.le.s32.totalorder 1, %s20
    %p411 = scmp.lt.s32.totalorder %s20, 3
    %p412 = pnand %p410, %p411
    %p413 = pneg %p412
    // Predicated region
    $region73: #{transformer_forward.2} parent=5 // pred_check
      _
    $region74: #{transformer_forward.2} parent=5 // pred_check_branch
      %415 = sbr.rel (%p412) target = $region76
    $region75: #{transformer_forward.2} parent=5 // pred_region
      %s416 = ssub.s32 %s20, 1
      %p417 = scmp.lt.s32.totalorder %s25, 1
      %s418 = scalar_select %p417, %s25, 1
      %s419 = smul.addr %s418, 8
      %s420 = scalar_lea.vmem %s0, %s419
      %p421 = pneg %p46
      %p422 = pneg %p43
      %p423 = pneg %p67
      %p424 = pneg %p64
      %p425 = pneg %p88
      %p426 = pneg %p85
      %p427 = pneg %p109
      %p428 = pneg %p106
      %p429 = pneg %p130
      %p430 = pneg %p127
      %p431 = pneg %p151
      %p432 = pneg %p148
      %p433 = pneg %p172
      %p434 = pneg %p169
      %p435 = pneg %p193
      %p436 = pneg %p190
      %p437 = pneg %p214
      %p438 = pneg %p211
      %p439 = pneg %p235
      %p440 = pneg %p232
      %p441 = pneg %p256
      %p442 = pneg %p253
      %p443 = pneg %p277
      %p444 = pneg %p274
      %p445 = pneg %p298
      %p446 = pneg %p295
      %p447 = pneg %p319
      %p448 = pneg %p316
      %p449 = pneg %p345
      %p450 = pneg %p342
      %p451 = scmp.lt.s32.totalorder %s25, 1
      %s452 = scalar_select %p451, %s25, 1
      %s453 = smul.addr %s452, 8
      %s454 = scalar_lea.vmem %s14, %s453
      %p455 = scmp.lt.s32.totalorder %s25, 1
      %s456 = scalar_select %p455, %s25, 1
      %s457 = smul.addr %s456, 8
      %s458 = scalar_lea.vmem %s0, %s457
      %p459 = scmp.lt.s32.totalorder %s25, 1
      %s460 = scalar_select %p459, %s25, 1
      %s461 = smul.addr %s460, 8
      %s462 = scalar_lea.vmem %s14, %s461
      %v463 = vld [vmem:[%s458] sm:$0xff]
      %v464 = vld [vmem:[%s1] sm:$0x1]
      %v465 = vld [vmem:[%s2] sm:$0x1]
      %vm466 = vcmask 261120
      %v467 = vsel %vm466, %v463, 0.0
      %468 = vadd.xlane.f32.xlu0 %v467
      %v469 = vpop.xlane.xlu0 %468
      %v470 = vrcp.pop 32.0
      %v471 = vmul.f32 %v469, %v470
      %v472 = vsub.f32 %v463, %v471
      %v473 = vmul.f32 %v472, %v472
      %v474 = vsel %vm466, %v473, 0.0
      %475 = vadd.xlane.f32.xlu0 %v474
      %v476 = vpop.xlane.xlu0 %475
      %v477 = vmul.f32 %v476, %v470
      %v478 = vadd.f32 %v477, 1e-05
      %v479 = vrsqrt.pop %v478
      %v480 = vmul.f32 %v472, %v479
      %v482 = vlaneseq
      %v483 = vshrl.u32 %v482, 7
      %v484 = vsub.s32 0, %v483
      %v485 = vrot.slane %v464, %v484
      %v487 = vmul.f32 %v480, %v485
      %v489 = vlaneseq
      %v490 = vshrl.u32 %v489, 7
      %v491 = vsub.s32 0, %v490
      %v492 = vrot.slane %v465, %v491
      %v494 = vadd.f32 %v487, %v492
      %v495 = vld [vmem:[%s3] sm:$0xff]
      %v496 = vld [vmem:[%s3 + $0x8] sm:$0xff]
      %v497 = vld [vmem:[%s3 + $0x10] sm:$0xff]
      %v498 = vld [vmem:[%s3 + $0x18] sm:$0xff]
      %v500 = vsel %vm466, %v494, 0
      %502 = vmatprep.subr.mxu0 0.0
      %503 = vmatpush1.msra.mxu0 %v495
      %504 = vmatprep.subr.mxu0 0.0
      %505 = vmatpush1.msra.mxu0 %v496
      %506 = vmatprep.subr.mxu0 0.0
      %507 = vmatpush1.msra.mxu0 %v497
      %508 = vmatprep.subr.mxu0 0.0
      %509 = vmatpush1.msra.mxu0 %v498
      %510 = vmatprep.subr.mxu0 0.0
      %511 = vmatpush1.msra.mxu0 0.0
      %512 = vmatprep.subr.mxu0 0.0
      %513 = vmatpush1.msra.mxu0 0.0
      %514 = vmatprep.subr.mxu0 0.0
      %515 = vmatpush1.msra.mxu0 0.0
      %516 = vmatprep.subr.mxu0 0.0
      %517 = vmatpush1.msra.mxu0 0.0
      %518 = vmatprep.subr.mxu0 0.0
      %519 = vmatpush1.msra.mxu0 0.0
      %520 = vmatprep.subr.mxu0 0.0
      %521 = vmatpush1.msra.mxu0 0.0
      %522 = vmatprep.subr.mxu0 0.0
      %523 = vmatpush1.msra.mxu0 0.0
      %524 = vmatprep.subr.mxu0 0.0
      %525 = vmatpush1.msra.mxu0 0.0
      %526 = vmatprep.subr.mxu0 0.0
      %527 = vmatpush1.msra.mxu0 0.0
      %528 = vmatprep.subr.mxu0 0.0
      %529 = vmatpush1.msra.mxu0 0.0
      %530 = vmatprep.subr.mxu0 0.0
      %531 = vmatpush1.msra.mxu0 0.0
      %532 = vmatprep.subr.mxu0 0.0
      %533 = vmatpush1.msra.mxu0 0.0
      %534 = vmatprep.subr.mxu0 0.0
      %535 = vmatpush1.msra.mxu0 0.0
      %536 = vmatprep.subr.mxu0 0.0
      %537 = vmatpush1.msra.mxu0 0.0
      %538 = vmatprep.subr.mxu0 0.0
      %539 = vmatpush1.msra.mxu0 0.0
      %540 = vmatprep.subr.mxu0 0.0
      %541 = vmatpush1.msra.mxu0 0.0
      %542 = vmatprep.subr.mxu0 0.0
      %543 = vmatpush1.msra.mxu0 0.0
      %544 = vmatprep.subr.mxu0 0.0
      %545 = vmatpush1.msra.mxu0 0.0
      %546 = vmatprep.subr.mxu0 0.0
      %547 = vmatpush1.msra.mxu0 0.0
      %548 = vmatprep.subr.mxu0 0.0
      %549 = vmatpush1.msra.mxu0 0.0
      %550 = vmatprep.subr.mxu0 0.0
      %551 = vmatpush1.msra.mxu0 0.0
      %552 = vmatprep.subr.mxu0 0.0
      %553 = vmatpush1.msra.mxu0 0.0
      %554 = vmatprep.subr.mxu0 0.0
      %555 = vmatpush1.msra.mxu0 0.0
      %556 = vmatprep.subr.mxu0 0.0
      %557 = vmatpush1.msra.mxu0 0.0
      %558 = vmatprep.subr.mxu0 0.0
      %559 = vmatpush1.msra.mxu0 0.0
      %560 = vmatprep.subr.mxu0 0.0
      %561 = vmatpush1.msra.mxu0 0.0
      %562 = vmatprep.subr.mxu0 0.0
      %563 = vmatpush1.msra.mxu0 0.0
      %564 = vmatprep.subr.mxu0 0.0
      %565 = vmatpush1.msra.mxu0 0.0
      %566 = vmatprep.mubr.f32.mxu0 0.0
      %567 = vmatmul.mubr.f32.gmra.mrb[0].mxu0 %v500
      %v568 = vpop.f32.mrb[0].mxu0
      %v569 = vadd.f32 0.0, %v568
      %v570 = vpop.f32.mrb[0].mxu0
      %571 = vdwg.mxu0
      %v572 = vld [vmem:[%s4] sm:$0xff]
      %v573 = vld [vmem:[%s4 + $0x8] sm:$0xff]
      %v574 = vld [vmem:[%s4 + $0x10] sm:$0xff]
      %v575 = vld [vmem:[%s4 + $0x18] sm:$0xff]
      %576 = vmatprep.subr.mxu0 0.0
      %577 = vmatpush1.msra.mxu0 %v572
      %578 = vmatprep.subr.mxu0 0.0
      %579 = vmatpush1.msra.mxu0 %v573
      %580 = vmatprep.subr.mxu0 0.0
      %581 = vmatpush1.msra.mxu0 %v574
      %582 = vmatprep.subr.mxu0 0.0
      %583 = vmatpush1.msra.mxu0 %v575
      %584 = vmatprep.subr.mxu0 0.0
      %585 = vmatpush1.msra.mxu0 0.0
      %586 = vmatprep.subr.mxu0 0.0
      %587 = vmatpush1.msra.mxu0 0.0
      %588 = vmatprep.subr.mxu0 0.0
      %589 = vmatpush1.msra.mxu0 0.0
      %590 = vmatprep.subr.mxu0 0.0
      %591 = vmatpush1.msra.mxu0 0.0
      %592 = vmatprep.subr.mxu0 0.0
      %593 = vmatpush1.msra.mxu0 0.0
      %594 = vmatprep.subr.mxu0 0.0
      %595 = vmatpush1.msra.mxu0 0.0
      %596 = vmatprep.subr.mxu0 0.0
      %597 = vmatpush1.msra.mxu0 0.0
      %598 = vmatprep.subr.mxu0 0.0
      %599 = vmatpush1.msra.mxu0 0.0
      %600 = vmatprep.subr.mxu0 0.0
      %601 = vmatpush1.msra.mxu0 0.0
      %602 = vmatprep.subr.mxu0 0.0
      %603 = vmatpush1.msra.mxu0 0.0
      %604 = vmatprep.subr.mxu0 0.0
      %605 = vmatpush1.msra.mxu0 0.0
      %606 = vmatprep.subr.mxu0 0.0
      %607 = vmatpush1.msra.mxu0 0.0
      %608 = vmatprep.subr.mxu0 0.0
      %609 = vmatpush1.msra.mxu0 0.0
      %610 = vmatprep.subr.mxu0 0.0
      %611 = vmatpush1.msra.mxu0 0.0
      %612 = vmatprep.subr.mxu0 0.0
      %613 = vmatpush1.msra.mxu0 0.0
      %614 = vmatprep.subr.mxu0 0.0
      %615 = vmatpush1.msra.mxu0 0.0
      %616 = vmatprep.subr.mxu0 0.0
      %617 = vmatpush1.msra.mxu0 0.0
      %618 = vmatprep.subr.mxu0 0.0
      %619 = vmatpush1.msra.mxu0 0.0
      %620 = vmatprep.subr.mxu0 0.0
      %621 = vmatpush1.msra.mxu0 0.0
      %622 = vmatprep.subr.mxu0 0.0
      %623 = vmatpush1.msra.mxu0 0.0
      %624 = vmatprep.subr.mxu0 0.0
      %625 = vmatpush1.msra.mxu0 0.0
      %626 = vmatprep.subr.mxu0 0.0
      %627 = vmatpush1.msra.mxu0 0.0
      %628 = vmatprep.subr.mxu0 0.0
      %629 = vmatpush1.msra.mxu0 0.0
      %630 = vmatprep.subr.mxu0 0.0
      %631 = vmatpush1.msra.mxu0 0.0
      %632 = vmatprep.subr.mxu0 0.0
      %633 = vmatpush1.msra.mxu0 0.0
      %634 = vmatprep.subr.mxu0 0.0
      %635 = vmatpush1.msra.mxu0 0.0
      %636 = vmatprep.subr.mxu0 0.0
      %637 = vmatpush1.msra.mxu0 0.0
      %638 = vmatprep.subr.mxu0 0.0
      %639 = vmatpush1.msra.mxu0 0.0
      %640 = vmatprep.mubr.f32.mxu0 0.0
      %641 = vmatmul.mubr.f32.gmra.mrb[0].mxu0 %v500
      %v642 = vpop.f32.mrb[0].mxu0
      %v643 = vadd.f32 0.0, %v642
      %v644 = vpop.f32.mrb[0].mxu0
      %645 = vdwg.mxu0
      %v646 = vld [vmem:[%s5] sm:$0xff]
      %v647 = vld [vmem:[%s5 + $0x8] sm:$0xff]
      %v648 = vld [vmem:[%s5 + $0x10] sm:$0xff]
      %v649 = vld [vmem:[%s5 + $0x18] sm:$0xff]
      %650 = vmatprep.subr.mxu0 0.0
      %651 = vmatpush1.msra.mxu0 %v646
      %652 = vmatprep.subr.mxu0 0.0
      %653 = vmatpush1.msra.mxu0 %v647
      %654 = vmatprep.subr.mxu0 0.0
      %655 = vmatpush1.msra.mxu0 %v648
      %656 = vmatprep.subr.mxu0 0.0
      %657 = vmatpush1.msra.mxu0 %v649
      %658 = vmatprep.subr.mxu0 0.0
      %659 = vmatpush1.msra.mxu0 0.0
      %660 = vmatprep.subr.mxu0 0.0
      %661 = vmatpush1.msra.mxu0 0.0
      %662 = vmatprep.subr.mxu0 0.0
      %663 = vmatpush1.msra.mxu0 0.0
      %664 = vmatprep.subr.mxu0 0.0
      %665 = vmatpush1.msra.mxu0 0.0
      %666 = vmatprep.subr.mxu0 0.0
      %667 = vmatpush1.msra.mxu0 0.0
      %668 = vmatprep.subr.mxu0 0.0
      %669 = vmatpush1.msra.mxu0 0.0
      %670 = vmatprep.subr.mxu0 0.0
      %671 = vmatpush1.msra.mxu0 0.0
      %672 = vmatprep.subr.mxu0 0.0
      %673 = vmatpush1.msra.mxu0 0.0
      %674 = vmatprep.subr.mxu0 0.0
      %675 = vmatpush1.msra.mxu0 0.0
      %676 = vmatprep.subr.mxu0 0.0
      %677 = vmatpush1.msra.mxu0 0.0
      %678 = vmatprep.subr.mxu0 0.0
      %679 = vmatpush1.msra.mxu0 0.0
      %680 = vmatprep.subr.mxu0 0.0
      %681 = vmatpush1.msra.mxu0 0.0
      %682 = vmatprep.subr.mxu0 0.0
      %683 = vmatpush1.msra.mxu0 0.0
      %684 = vmatprep.subr.mxu0 0.0
      %685 = vmatpush1.msra.mxu0 0.0
      %686 = vmatprep.subr.mxu0 0.0
      %687 = vmatpush1.msra.mxu0 0.0
      %688 = vmatprep.subr.mxu0 0.0
      %689 = vmatpush1.msra.mxu0 0.0
      %690 = vmatprep.subr.mxu0 0.0
      %691 = vmatpush1.msra.mxu0 0.0
      %692 = vmatprep.subr.mxu0 0.0
      %693 = vmatpush1.msra.mxu0 0.0
      %694 = vmatprep.subr.mxu0 0.0
      %695 = vmatpush1.msra.mxu0 0.0
      %696 = vmatprep.subr.mxu0 0.0
      %697 = vmatpush1.msra.mxu0 0.0
      %698 = vmatprep.subr.mxu0 0.0
      %699 = vmatpush1.msra.mxu0 0.0
      %700 = vmatprep.subr.mxu0 0.0
      %701 = vmatpush1.msra.mxu0 0.0
      %702 = vmatprep.subr.mxu0 0.0
      %703 = vmatpush1.msra.mxu0 0.0
      %704 = vmatprep.subr.mxu0 0.0
      %705 = vmatpush1.msra.mxu0 0.0
      %706 = vmatprep.subr.mxu0 0.0
      %707 = vmatpush1.msra.mxu0 0.0
      %708 = vmatprep.subr.mxu0 0.0
      %709 = vmatpush1.msra.mxu0 0.0
      %710 = vmatprep.subr.mxu0 0.0
      %711 = vmatpush1.msra.mxu0 0.0
      %712 = vmatprep.subr.mxu0 0.0
      %713 = vmatpush1.msra.mxu0 0.0
      %714 = vmatprep.mubr.f32.mxu0 0.0
      %715 = vmatmul.mubr.f32.gmra.mrb[0].mxu0 %v500
      %v716 = vpop.f32.mrb[0].mxu0
      %v717 = vadd.f32 0.0, %v716
      %v718 = vpop.f32.mrb[0].mxu0
      %719 = vdwg.mxu0
      %vm720 = vcmask 130048
      %v722 = vsel %vm720, %v569, 0
      %v725 = vsel %vm720, %v643, 0
      %727 = vmatprep.subr.mxu0 0.0
      %728 = vmatpush1.xpose.msra.mxu0 %v725
      %729 = vmatprep.subr.mxu0 0.0
      %730 = vmatpush1.xpose.msra.mxu0 0.0
      %731 = vmatprep.subr.mxu0 0.0
      %732 = vmatpush1.xpose.msra.mxu0 0.0
      %733 = vmatprep.subr.mxu0 0.0
      %734 = vmatpush1.xpose.msra.mxu0 0.0
      %735 = vmatprep.subr.mxu0 0.0
      %736 = vmatpush1.xpose.msra.mxu0 0.0
      %737 = vmatprep.subr.mxu0 0.0
      %738 = vmatpush1.xpose.msra.mxu0 0.0
      %739 = vmatprep.subr.mxu0 0.0
      %740 = vmatpush1.xpose.msra.mxu0 0.0
      %741 = vmatprep.subr.mxu0 0.0
      %742 = vmatpush1.xpose.msra.mxu0 0.0
      %743 = vmatprep.subr.mxu0 0.0
      %744 = vmatpush1.xpose.msra.mxu0 0.0
      %745 = vmatprep.subr.mxu0 0.0
      %746 = vmatpush1.xpose.msra.mxu0 0.0
      %747 = vmatprep.subr.mxu0 0.0
      %748 = vmatpush1.xpose.msra.mxu0 0.0
      %749 = vmatprep.subr.mxu0 0.0
      %750 = vmatpush1.xpose.msra.mxu0 0.0
      %751 = vmatprep.subr.mxu0 0.0
      %752 = vmatpush1.xpose.msra.mxu0 0.0
      %753 = vmatprep.subr.mxu0 0.0
      %754 = vmatpush1.xpose.msra.mxu0 0.0
      %755 = vmatprep.subr.mxu0 0.0
      %756 = vmatpush1.xpose.msra.mxu0 0.0
      %757 = vmatprep.subr.mxu0 0.0
      %758 = vmatpush1.xpose.msra.mxu0 0.0
      %759 = vmatprep.subr.mxu0 0.0
      %760 = vmatpush1.xpose.msra.mxu0 0.0
      %761 = vmatprep.subr.mxu0 0.0
      %762 = vmatpush1.xpose.msra.mxu0 0.0
      %763 = vmatprep.subr.mxu0 0.0
      %764 = vmatpush1.xpose.msra.mxu0 0.0
      %765 = vmatprep.subr.mxu0 0.0
      %766 = vmatpush1.xpose.msra.mxu0 0.0
      %767 = vmatprep.subr.mxu0 0.0
      %768 = vmatpush1.xpose.msra.mxu0 0.0
      %769 = vmatprep.subr.mxu0 0.0
      %770 = vmatpush1.xpose.msra.mxu0 0.0
      %771 = vmatprep.subr.mxu0 0.0
      %772 = vmatpush1.xpose.msra.mxu0 0.0
      %773 = vmatprep.subr.mxu0 0.0
      %774 = vmatpush1.xpose.msra.mxu0 0.0
      %775 = vmatprep.subr.mxu0 0.0
      %776 = vmatpush1.xpose.msra.mxu0 0.0
      %777 = vmatprep.subr.mxu0 0.0
      %778 = vmatpush1.xpose.msra.mxu0 0.0
      %779 = vmatprep.subr.mxu0 0.0
      %780 = vmatpush1.xpose.msra.mxu0 0.0
      %781 = vmatprep.subr.mxu0 0.0
      %782 = vmatpush1.xpose.msra.mxu0 0.0
      %783 = vmatprep.subr.mxu0 0.0
      %784 = vmatpush1.xpose.msra.mxu0 0.0
      %785 = vmatprep.subr.mxu0 0.0
      %786 = vmatpush1.xpose.msra.mxu0 0.0
      %787 = vmatprep.subr.mxu0 0.0
      %788 = vmatpush1.xpose.msra.mxu0 0.0
      %789 = vmatprep.subr.mxu0 0.0
      %790 = vmatpush1.xpose.msra.mxu0 0.0
      %791 = vmatprep.mubr.f32.mxu0 0.0
      %792 = vmatmul.mubr.f32.gmra.mrb[0].mxu0 %v722
      %v793 = vpop.f32.mrb[0].mxu0
      %v794 = vadd.f32 0.0, %v793
      %v795 = vpop.f32.mrb[0].mxu0
      %796 = vdwg.mxu0
      %vm797 = vcmask 64512
      %v798 = vsel %vm797, %v794, -inf
      %799 = vmax.xlane.f32.xlu0 %v798
      %v800 = vpop.xlane.xlu0 %799
      %v801 = vsub.f32 %v794, %v800
      %v802 = vmul.f32 %v801, 1.442695
      %v803 = vpow.pop %v802
      %v804 = vsel %vm797, %v803, 0.0
      %805 = vadd.xlane.f32.xlu0 %v804
      %v806 = vpop.xlane.xlu0 %805
      %v807 = vrcp.pop %v806
      %v808 = vmul.f32 %v803, %v807
      %v810 = vsel %vm797, %v808, 0
      %812 = vmatprep.subr.mxu0 0.0
      %813 = vmatpush1.msra.mxu0 %v717
      %814 = vmatprep.subr.mxu0 0.0
      %815 = vmatpush1.msra.mxu0 0.0
      %816 = vmatprep.subr.mxu0 0.0
      %817 = vmatpush1.msra.mxu0 0.0
      %818 = vmatprep.subr.mxu0 0.0
      %819 = vmatpush1.msra.mxu0 0.0
      %820 = vmatprep.subr.mxu0 0.0
      %821 = vmatpush1.msra.mxu0 0.0
      %822 = vmatprep.subr.mxu0 0.0
      %823 = vmatpush1.msra.mxu0 0.0
      %824 = vmatprep.subr.mxu0 0.0
      %825 = vmatpush1.msra.mxu0 0.0
      %826 = vmatprep.subr.mxu0 0.0
      %827 = vmatpush1.msra.mxu0 0.0
      %828 = vmatprep.subr.mxu0 0.0
      %829 = vmatpush1.msra.mxu0 0.0
      %830 = vmatprep.subr.mxu0 0.0
      %831 = vmatpush1.msra.mxu0 0.0
      %832 = vmatprep.subr.mxu0 0.0
      %833 = vmatpush1.msra.mxu0 0.0
      %834 = vmatprep.subr.mxu0 0.0
      %835 = vmatpush1.msra.mxu0 0.0
      %836 = vmatprep.subr.mxu0 0.0
      %837 = vmatpush1.msra.mxu0 0.0
      %838 = vmatprep.subr.mxu0 0.0
      %839 = vmatpush1.msra.mxu0 0.0
      %840 = vmatprep.subr.mxu0 0.0
      %841 = vmatpush1.msra.mxu0 0.0
      %842 = vmatprep.subr.mxu0 0.0
      %843 = vmatpush1.msra.mxu0 0.0
      %844 = vmatprep.subr.mxu0 0.0
      %845 = vmatpush1.msra.mxu0 0.0
      %846 = vmatprep.subr.mxu0 0.0
      %847 = vmatpush1.msra.mxu0 0.0
      %848 = vmatprep.subr.mxu0 0.0
      %849 = vmatpush1.msra.mxu0 0.0
      %850 = vmatprep.subr.mxu0 0.0
      %851 = vmatpush1.msra.mxu0 0.0
      %852 = vmatprep.subr.mxu0 0.0
      %853 = vmatpush1.msra.mxu0 0.0
      %854 = vmatprep.subr.mxu0 0.0
      %855 = vmatpush1.msra.mxu0 0.0
      %856 = vmatprep.subr.mxu0 0.0
      %857 = vmatpush1.msra.mxu0 0.0
      %858 = vmatprep.subr.mxu0 0.0
      %859 = vmatpush1.msra.mxu0 0.0
      %860 = vmatprep.subr.mxu0 0.0
      %861 = vmatpush1.msra.mxu0 0.0
      %862 = vmatprep.subr.mxu0 0.0
      %863 = vmatpush1.msra.mxu0 0.0
      %864 = vmatprep.subr.mxu0 0.0
      %865 = vmatpush1.msra.mxu0 0.0
      %866 = vmatprep.subr.mxu0 0.0
      %867 = vmatpush1.msra.mxu0 0.0
      %868 = vmatprep.subr.mxu0 0.0
      %869 = vmatpush1.msra.mxu0 0.0
      %870 = vmatprep.subr.mxu0 0.0
      %871 = vmatpush1.msra.mxu0 0.0
      %872 = vmatprep.subr.mxu0 0.0
      %873 = vmatpush1.msra.mxu0 0.0
      %874 = vmatprep.subr.mxu0 0.0
      %875 = vmatpush1.msra.mxu0 0.0
      %876 = vmatprep.mubr.f32.mxu0 0.0
      %877 = vmatmul.mubr.f32.gmra.mrb[0].mxu0 %v810
      %v878 = vpop.f32.mrb[0].mxu0
      %v879 = vadd.f32 0.0, %v878
      %v880 = vpop.f32.mrb[0].mxu0
      %881 = vdwg.mxu0
      %v882 = vld [vmem:[%s6] sm:$0xff]
      %v883 = vld [vmem:[%s6 + $0x8] sm:$0xff]
      %s884 = scalar_lea.vmem %s3, 32
      %v885 = vld [vmem:[%s884] sm:$0xff]
      %v886 = vld [vmem:[%s884 + $0x8] sm:$0xff]
      %v887 = vld [vmem:[%s884 + $0x10] sm:$0xff]
      %v888 = vld [vmem:[%s884 + $0x18] sm:$0xff]
      %889 = vmatprep.subr.mxu0 0.0
      %890 = vmatpush1.msra.mxu0 %v885
      %891 = vmatprep.subr.mxu0 0.0
      %892 = vmatpush1.msra.mxu0 %v886
      %893 = vmatprep.subr.mxu0 0.0
      %894 = vmatpush1.msra.mxu0 %v887
      %895 = vmatprep.subr.mxu0 0.0
      %896 = vmatpush1.msra.mxu0 %v888
      %897 = vmatprep.subr.mxu0 0.0
      %898 = vmatpush1.msra.mxu0 0.0
      %899 = vmatprep.subr.mxu0 0.0
      %900 = vmatpush1.msra.mxu0 0.0
      %901 = vmatprep.subr.mxu0 0.0
      %902 = vmatpush1.msra.mxu0 0.0
      %903 = vmatprep.subr.mxu0 0.0
      %904 = vmatpush1.msra.mxu0 0.0
      %905 = vmatprep.subr.mxu0 0.0
      %906 = vmatpush1.msra.mxu0 0.0
      %907 = vmatprep.subr.mxu0 0.0
      %908 = vmatpush1.msra.mxu0 0.0
      %909 = vmatprep.subr.mxu0 0.0
      %910 = vmatpush1.msra.mxu0 0.0
      %911 = vmatprep.subr.mxu0 0.0
      %912 = vmatpush1.msra.mxu0 0.0
      %913 = vmatprep.subr.mxu0 0.0
      %914 = vmatpush1.msra.mxu0 0.0
      %915 = vmatprep.subr.mxu0 0.0
      %916 = vmatpush1.msra.mxu0 0.0
      %917 = vmatprep.subr.mxu0 0.0
      %918 = vmatpush1.msra.mxu0 0.0
      %919 = vmatprep.subr.mxu0 0.0
      %920 = vmatpush1.msra.mxu0 0.0
      %921 = vmatprep.subr.mxu0 0.0
      %922 = vmatpush1.msra.mxu0 0.0
      %923 = vmatprep.subr.mxu0 0.0
      %924 = vmatpush1.msra.mxu0 0.0
      %925 = vmatprep.subr.mxu0 0.0
      %926 = vmatpush1.msra.mxu0 0.0
      %927 = vmatprep.subr.mxu0 0.0
      %928 = vmatpush1.msra.mxu0 0.0
      %929 = vmatprep.subr.mxu0 0.0
      %930 = vmatpush1.msra.mxu0 0.0
      %931 = vmatprep.subr.mxu0 0.0
      %932 = vmatpush1.msra.mxu0 0.0
      %933 = vmatprep.subr.mxu0 0.0
      %934 = vmatpush1.msra.mxu0 0.0
      %935 = vmatprep.subr.mxu0 0.0
      %936 = vmatpush1.msra.mxu0 0.0
      %937 = vmatprep.subr.mxu0 0.0
      %938 = vmatpush1.msra.mxu0 0.0
      %939 = vmatprep.subr.mxu0 0.0
      %940 = vmatpush1.msra.mxu0 0.0
      %941 = vmatprep.subr.mxu0 0.0
      %942 = vmatpush1.msra.mxu0 0.0
      %943 = vmatprep.subr.mxu0 0.0
      %944 = vmatpush1.msra.mxu0 0.0
      %945 = vmatprep.subr.mxu0 0.0
      %946 = vmatpush1.msra.mxu0 0.0
      %947 = vmatprep.subr.mxu0 0.0
      %948 = vmatpush1.msra.mxu0 0.0
      %949 = vmatprep.subr.mxu0 0.0
      %950 = vmatpush1.msra.mxu0 0.0
      %951 = vmatprep.subr.mxu0 0.0
      %952 = vmatpush1.msra.mxu0 0.0
      %953 = vmatprep.mubr.f32.mxu0 0.0
      %954 = vmatmul.mubr.f32.gmra.mrb[0].mxu0 %v500
      %v955 = vpop.f32.mrb[0].mxu0
      %v956 = vadd.f32 0.0, %v955
      %v957 = vpop.f32.mrb[0].mxu0
      %958 = vdwg.mxu0
      %s959 = scalar_lea.vmem %s4, 32
      %v960 = vld [vmem:[%s959] sm:$0xff]
      %v961 = vld [vmem:[%s959 + $0x8] sm:$0xff]
      %v962 = vld [vmem:[%s959 + $0x10] sm:$0xff]
      %v963 = vld [vmem:[%s959 + $0x18] sm:$0xff]
      %964 = vmatprep.subr.mxu0 0.0
      %965 = vmatpush1.msra.mxu0 %v960
      %966 = vmatprep.subr.mxu0 0.0
      %967 = vmatpush1.msra.mxu0 %v961
      %968 = vmatprep.subr.mxu0 0.0
      %969 = vmatpush1.msra.mxu0 %v962
      %970 = vmatprep.subr.mxu0 0.0
      %971 = vmatpush1.msra.mxu0 %v963
      %972 = vmatprep.subr.mxu0 0.0
      %973 = vmatpush1.msra.mxu0 0.0
      %974 = vmatprep.subr.mxu0 0.0
      %975 = vmatpush1.msra.mxu0 0.0
      %976 = vmatprep.subr.mxu0 0.0
      %977 = vmatpush1.msra.mxu0 0.0
      %978 = vmatprep.subr.mxu0 0.0
      %979 = vmatpush1.msra.mxu0 0.0
      %980 = vmatprep.subr.mxu0 0.0
      %981 = vmatpush1.msra.mxu0 0.0
      %982 = vmatprep.subr.mxu0 0.0
      %983 = vmatpush1.msra.mxu0 0.0
      %984 = vmatprep.subr.mxu0 0.0
      %985 = vmatpush1.msra.mxu0 0.0
      %986 = vmatprep.subr.mxu0 0.0
      %987 = vmatpush1.msra.mxu0 0.0
      %988 = vmatprep.subr.mxu0 0.0
      %989 = vmatpush1.msra.mxu0 0.0
      %990 = vmatprep.subr.mxu0 0.0
      %991 = vmatpush1.msra.mxu0 0.0
      %992 = vmatprep.subr.mxu0 0.0
      %993 = vmatpush1.msra.mxu0 0.0
      %994 = vmatprep.subr.mxu0 0.0
      %995 = vmatpush1.msra.mxu0 0.0
      %996 = vmatprep.subr.mxu0 0.0
      %997 = vmatpush1.msra.mxu0 0.0
      %998 = vmatprep.subr.mxu0 0.0
      %999 = vmatpush1.msra.mxu0 0.0
      %1000 = vmatprep.subr.mxu0 0.0
      %1001 = vmatpush1.msra.mxu0 0.0
      %1002 = vmatprep.subr.mxu0 0.0
      %1003 = vmatpush1.msra.mxu0 0.0
      %1004 = vmatprep.subr.mxu0 0.0
      %1005 = vmatpush1.msra.mxu0 0.0
      %1006 = vmatprep.subr.mxu0 0.0
      %1007 = vmatpush1.msra.mxu0 0.0
      %1008 = vmatprep.subr.mxu0 0.0
      %1009 = vmatpush1.msra.mxu0 0.0
      %1010 = vmatprep.subr.mxu0 0.0
      %1011 = vmatpush1.msra.mxu0 0.0
      %1012 = vmatprep.subr.mxu0 0.0
      %1013 = vmatpush1.msra.mxu0 0.0
      %1014 = vmatprep.subr.mxu0 0.0
      %1015 = vmatpush1.msra.mxu0 0.0
      %1016 = vmatprep.subr.mxu0 0.0
      %1017 = vmatpush1.msra.mxu0 0.0
      %1018 = vmatprep.subr.mxu0 0.0
      %1019 = vmatpush1.msra.mxu0 0.0
      %1020 = vmatprep.subr.mxu0 0.0
      %1021 = vmatpush1.msra.mxu0 0.0
      %1022 = vmatprep.subr.mxu0 0.0
      %1023 = vmatpush1.msra.mxu0 0.0
      %1024 = vmatprep.subr.mxu0 0.0
      %1025 = vmatpush1.msra.mxu0 0.0
      %1026 = vmatprep.subr.mxu0 0.0
      %1027 = vmatpush1.msra.mxu0 0.0
      %1028 = vmatprep.mubr.f32.mxu0 0.0
      %1029 = vmatmul.mubr.f32.gmra.mrb[0].mxu0 %v500
      %v1030 = vpop.f32.mrb[0].mxu0
      %v1031 = vadd.f32 0.0, %v1030
      %v1032 = vpop.f32.mrb[0].mxu0
      %1033 = vdwg.mxu0
      %s1034 = scalar_lea.vmem %s5, 32
      %v1035 = vld [vmem:[%s1034] sm:$0xff]
      %v1036 = vld [vmem:[%s1034 + $0x8] sm:$0xff]
      %v1037 = vld [vmem:[%s1034 + $0x10] sm:$0xff]
      %v1038 = vld [vmem:[%s1034 + $0x18] sm:$0xff]
      %1039 = vmatprep.subr.mxu0 0.0
      %1040 = vmatpush1.msra.mxu0 %v1035
      %1041 = vmatprep.subr.mxu0 0.0
      %1042 = vmatpush1.msra.mxu0 %v1036
      %1043 = vmatprep.subr.mxu0 0.0
      %1044 = vmatpush1.msra.mxu0 %v1037
      %1045 = vmatprep.subr.mxu0 0.0
      %1046 = vmatpush1.msra.mxu0 %v1038
      %1047 = vmatprep.subr.mxu0 0.0
      %1048 = vmatpush1.msra.mxu0 0.0
      %1049 = vmatprep.subr.mxu0 0.0
      %1050 = vmatpush1.msra.mxu0 0.0
      %1051 = vmatprep.subr.mxu0 0.0
      %1052 = vmatpush1.msra.mxu0 0.0
      %1053 = vmatprep.subr.mxu0 0.0
      %1054 = vmatpush1.msra.mxu0 0.0
      %1055 = vmatprep.subr.mxu0 0.0
      %1056 = vmatpush1.msra.mxu0 0.0
      %1057 = vmatprep.subr.mxu0 0.0
      %1058 = vmatpush1.msra.mxu0 0.0
      %1059 = vmatprep.subr.mxu0 0.0
      %1060 = vmatpush1.msra.mxu0 0.0
      %1061 = vmatprep.subr.mxu0 0.0
      %1062 = vmatpush1.msra.mxu0 0.0
      %1063 = vmatprep.subr.mxu0 0.0
      %1064 = vmatpush1.msra.mxu0 0.0
      %1065 = vmatprep.subr.mxu0 0.0
      %1066 = vmatpush1.msra.mxu0 0.0
      %1067 = vmatprep.subr.mxu0 0.0
      %1068 = vmatpush1.msra.mxu0 0.0
      %1069 = vmatprep.subr.mxu0 0.0
      %1070 = vmatpush1.msra.mxu0 0.0
      %1071 = vmatprep.subr.mxu0 0.0
      %1072 = vmatpush1.msra.mxu0 0.0
      %1073 = vmatprep.subr.mxu0 0.0
      %1074 = vmatpush1.msra.mxu0 0.0
      %1075 = vmatprep.subr.mxu0 0.0
      %1076 = vmatpush1.msra.mxu0 0.0
      %1077 = vmatprep.subr.mxu0 0.0
      %1078 = vmatpush1.msra.mxu0 0.0
      %1079 = vmatprep.subr.mxu0 0.0
      %1080 = vmatpush1.msra.mxu0 0.0
      %1081 = vmatprep.subr.mxu0 0.0
      %1082 = vmatpush1.msra.mxu0 0.0
      %1083 = vmatprep.subr.mxu0 0.0
      %1084 = vmatpush1.msra.mxu0 0.0
      %1085 = vmatprep.subr.mxu0 0.0
      %1086 = vmatpush1.msra.mxu0 0.0
      %1087 = vmatprep.subr.mxu0 0.0
      %1088 = vmatpush1.msra.mxu0 0.0
      %1089 = vmatprep.subr.mxu0 0.0
      %1090 = vmatpush1.msra.mxu0 0.0
      %1091 = vmatprep.subr.mxu0 0.0
      %1092 = vmatpush1.msra.mxu0 0.0
      %1093 = vmatprep.subr.mxu0 0.0
      %1094 = vmatpush1.msra.mxu0 0.0
      %1095 = vmatprep.subr.mxu0 0.0
      %1096 = vmatpush1.msra.mxu0 0.0
      %1097 = vmatprep.subr.mxu0 0.0
      %1098 = vmatpush1.msra.mxu0 0.0
      %1099 = vmatprep.subr.mxu0 0.0
      %1100 = vmatpush1.msra.mxu0 0.0
      %1101 = vmatprep.subr.mxu0 0.0
      %1102 = vmatpush1.msra.mxu0 0.0
      %1103 = vmatprep.mubr.f32.mxu0 0.0
      %1104 = vmatmul.mubr.f32.gmra.mrb[0].mxu0 %v500
      %v1105 = vpop.f32.mrb[0].mxu0
      %v1106 = vadd.f32 0.0, %v1105
      %v1107 = vpop.f32.mrb[0].mxu0
      %1108 = vdwg.mxu0
      %v1110 = vsel %vm720, %v956, 0
      %v1113 = vsel %vm720, %v1031, 0
      %1115 = vmatprep.subr.mxu0 0.0
      %1116 = vmatpush1.xpose.msra.mxu0 %v1113
      %1117 = vmatprep.subr.mxu0 0.0
      %1118 = vmatpush1.xpose.msra.mxu0 0.0
      %1119 = vmatprep.subr.mxu0 0.0
      %1120 = vmatpush1.xpose.msra.mxu0 0.0
      %1121 = vmatprep.subr.mxu0 0.0
      %1122 = vmatpush1.xpose.msra.mxu0 0.0
      %1123 = vmatprep.subr.mxu0 0.0
      %1124 = vmatpush1.xpose.msra.mxu0 0.0
      %1125 = vmatprep.subr.mxu0 0.0
      %1126 = vmatpush1.xpose.msra.mxu0 0.0
      %1127 = vmatprep.subr.mxu0 0.0
      %1128 = vmatpush1.xpose.msra.mxu0 0.0
      %1129 = vmatprep.subr.mxu0 0.0
      %1130 = vmatpush1.xpose.msra.mxu0 0.0
      %1131 = vmatprep.subr.mxu0 0.0
      %1132 = vmatpush1.xpose.msra.mxu0 0.0
      %1133 = vmatprep.subr.mxu0 0.0
      %1134 = vmatpush1.xpose.msra.mxu0 0.0
      %1135 = vmatprep.subr.mxu0 0.0
      %1136 = vmatpush1.xpose.msra.mxu0 0.0
      %1137 = vmatprep.subr.mxu0 0.0
      %1138 = vmatpush1.xpose.msra.mxu0 0.0
      %1139 = vmatprep.subr.mxu0 0.0
      %1140 = vmatpush1.xpose.msra.mxu0 0.0
      %1141 = vmatprep.subr.mxu0 0.0
      %1142 = vmatpush1.xpose.msra.mxu0 0.0
      %1143 = vmatprep.subr.mxu0 0.0
      %1144 = vmatpush1.xpose.msra.mxu0 0.0
      %1145 = vmatprep.subr.mxu0 0.0
      %1146 = vmatpush1.xpose.msra.mxu0 0.0
      %1147 = vmatprep.subr.mxu0 0.0
      %1148 = vmatpush1.xpose.msra.mxu0 0.0
      %1149 = vmatprep.subr.mxu0 0.0
      %1150 = vmatpush1.xpose.msra.mxu0 0.0
      %1151 = vmatprep.subr.mxu0 0.0
      %1152 = vmatpush1.xpose.msra.mxu0 0.0
      %1153 = vmatprep.subr.mxu0 0.0
      %1154 = vmatpush1.xpose.msra.mxu0 0.0
      %1155 = vmatprep.subr.mxu0 0.0
      %1156 = vmatpush1.xpose.msra.mxu0 0.0
      %1157 = vmatprep.subr.mxu0 0.0
      %1158 = vmatpush1.xpose.msra.mxu0 0.0
      %1159 = vmatprep.subr.mxu0 0.0
      %1160 = vmatpush1.xpose.msra.mxu0 0.0
      %1161 = vmatprep.subr.mxu0 0.0
      %1162 = vmatpush1.xpose.msra.mxu0 0.0
      %1163 = vmatprep.subr.mxu0 0.0
      %1164 = vmatpush1.xpose.msra.mxu0 0.0
      %1165 = vmatprep.subr.mxu0 0.0
      %1166 = vmatpush1.xpose.msra.mxu0 0.0
      %1167 = vmatprep.subr.mxu0 0.0
      %1168 = vmatpush1.xpose.msra.mxu0 0.0
      %1169 = vmatprep.subr.mxu0 0.0
      %1170 = vmatpush1.xpose.msra.mxu0 0.0
      %1171 = vmatprep.subr.mxu0 0.0
      %1172 = vmatpush1.xpose.msra.mxu0 0.0
      %1173 = vmatprep.subr.mxu0 0.0
      %1174 = vmatpush1.xpose.msra.mxu0 0.0
      %1175 = vmatprep.subr.mxu0 0.0
      %1176 = vmatpush1.xpose.msra.mxu0 0.0
      %1177 = vmatprep.subr.mxu0 0.0
      %1178 = vmatpush1.xpose.msra.mxu0 0.0
      %1179 = vmatprep.mubr.f32.mxu0 0.0
      %1180 = vmatmul.mubr.f32.gmra.mrb[0].mxu0 %v1110
      %v1181 = vpop.f32.mrb[0].mxu0
      %v1182 = vadd.f32 0.0, %v1181
      %v1183 = vpop.f32.mrb[0].mxu0
      %1184 = vdwg.mxu0
      %v1185 = vsel %vm797, %v1182, -inf
      %1186 = vmax.xlane.f32.xlu0 %v1185
      %v1187 = vpop.xlane.xlu0 %1186
      %v1188 = vsub.f32 %v1182, %v1187
      %v1189 = vmul.f32 %v1188, 1.442695
      %v1190 = vpow.pop %v1189
      %v1191 = vsel %vm797, %v1190, 0.0
      %1192 = vadd.xlane.f32.xlu0 %v1191
      %v1193 = vpop.xlane.xlu0 %1192
      %v1194 = vrcp.pop %v1193
      %v1195 = vmul.f32 %v1190, %v1194
      %v1197 = vsel %vm797, %v1195, 0
      %1199 = vmatprep.subr.mxu0 0.0
      %1200 = vmatpush1.msra.mxu0 %v1106
      %1201 = vmatprep.subr.mxu0 0.0
      %1202 = vmatpush1.msra.mxu0 0.0
      %1203 = vmatprep.subr.mxu0 0.0
      %1204 = vmatpush1.msra.mxu0 0.0
      %1205 = vmatprep.subr.mxu0 0.0
      %1206 = vmatpush1.msra.mxu0 0.0
      %1207 = vmatprep.subr.mxu0 0.0
      %1208 = vmatpush1.msra.mxu0 0.0
      %1209 = vmatprep.subr.mxu0 0.0
      %1210 = vmatpush1.msra.mxu0 0.0
      %1211 = vmatprep.subr.mxu0 0.0
      %1212 = vmatpush1.msra.mxu0 0.0
      %1213 = vmatprep.subr.mxu0 0.0
      %1214 = vmatpush1.msra.mxu0 0.0
      %1215 = vmatprep.subr.mxu0 0.0
      %1216 = vmatpush1.msra.mxu0 0.0
      %1217 = vmatprep.subr.mxu0 0.0
      %1218 = vmatpush1.msra.mxu0 0.0
      %1219 = vmatprep.subr.mxu0 0.0
      %1220 = vmatpush1.msra.mxu0 0.0
      %1221 = vmatprep.subr.mxu0 0.0
      %1222 = vmatpush1.msra.mxu0 0.0
      %1223 = vmatprep.subr.mxu0 0.0
      %1224 = vmatpush1.msra.mxu0 0.0
      %1225 = vmatprep.subr.mxu0 0.0
      %1226 = vmatpush1.msra.mxu0 0.0
      %1227 = vmatprep.subr.mxu0 0.0
      %1228 = vmatpush1.msra.mxu0 0.0
      %1229 = vmatprep.subr.mxu0 0.0
      %1230 = vmatpush1.msra.mxu0 0.0
      %1231 = vmatprep.subr.mxu0 0.0
      %1232 = vmatpush1.msra.mxu0 0.0
      %1233 = vmatprep.subr.mxu0 0.0
      %1234 = vmatpush1.msra.mxu0 0.0
      %1235 = vmatprep.subr.mxu0 0.0
      %1236 = vmatpush1.msra.mxu0 0.0
      %1237 = vmatprep.subr.mxu0 0.0
      %1238 = vmatpush1.msra.mxu0 0.0
      %1239 = vmatprep.subr.mxu0 0.0
      %1240 = vmatpush1.msra.mxu0 0.0
      %1241 = vmatprep.subr.mxu0 0.0
      %1242 = vmatpush1.msra.mxu0 0.0
      %1243 = vmatprep.subr.mxu0 0.0
      %1244 = vmatpush1.msra.mxu0 0.0
      %1245 = vmatprep.subr.mxu0 0.0
      %1246 = vmatpush1.msra.mxu0 0.0
      %1247 = vmatprep.subr.mxu0 0.0
      %1248 = vmatpush1.msra.mxu0 0.0
      %1249 = vmatprep.subr.mxu0 0.0
      %1250 = vmatpush1.msra.mxu0 0.0
      %1251 = vmatprep.subr.mxu0 0.0
      %1252 = vmatpush1.msra.mxu0 0.0
      %1253 = vmatprep.subr.mxu0 0.0
      %1254 = vmatpush1.msra.mxu0 0.0
      %1255 = vmatprep.subr.mxu0 0.0
      %1256 = vmatpush1.msra.mxu0 0.0
      %1257 = vmatprep.subr.mxu0 0.0
      %1258 = vmatpush1.msra.mxu0 0.0
      %1259 = vmatprep.subr.mxu0 0.0
      %1260 = vmatpush1.msra.mxu0 0.0
      %1261 = vmatprep.subr.mxu0 0.0
      %1262 = vmatpush1.msra.mxu0 0.0
      %1263 = vmatprep.mubr.f32.mxu0 0.0
      %1264 = vmatmul.mubr.f32.gmra.mrb[0].mxu0 %v1197
      %v1265 = vpop.f32.mrb[0].mxu0
      %v1266 = vadd.f32 0.0, %v1265
      %v1267 = vpop.f32.mrb[0].mxu0
      %1268 = vdwg.mxu0
      %s1269 = scalar_lea.vmem %s6, 16
      %v1270 = vld [vmem:[%s1269] sm:$0xff]
      %v1271 = vld [vmem:[%s1269 + $0x8] sm:$0xff]
      %v1273 = vsel %vm720, %v1266, 0
      %1275 = vmatprep.subr.mxu0 0.0
      %1276 = vmatpush1.msra.mxu0 %v1270
      %1277 = vmatprep.subr.mxu0 0.0
      %1278 = vmatpush1.msra.mxu0 %v1271
      %1279 = vmatprep.subr.mxu0 0.0
      %1280 = vmatpush1.msra.mxu0 0.0
      %1281 = vmatprep.subr.mxu0 0.0
      %1282 = vmatpush1.msra.mxu0 0.0
      %1283 = vmatprep.subr.mxu0 0.0
      %1284 = vmatpush1.msra.mxu0 0.0
      %1285 = vmatprep.subr.mxu0 0.0
      %1286 = vmatpush1.msra.mxu0 0.0
      %1287 = vmatprep.subr.mxu0 0.0
      %1288 = vmatpush1.msra.mxu0 0.0
      %1289 = vmatprep.subr.mxu0 0.0
      %1290 = vmatpush1.msra.mxu0 0.0
      %1291 = vmatprep.subr.mxu0 0.0
      %1292 = vmatpush1.msra.mxu0 0.0
      %1293 = vmatprep.subr.mxu0 0.0
      %1294 = vmatpush1.msra.mxu0 0.0
      %1295 = vmatprep.subr.mxu0 0.0
      %1296 = vmatpush1.msra.mxu0 0.0
      %1297 = vmatprep.subr.mxu0 0.0
      %1298 = vmatpush1.msra.mxu0 0.0
      %1299 = vmatprep.subr.mxu0 0.0
      %1300 = vmatpush1.msra.mxu0 0.0
      %1301 = vmatprep.subr.mxu0 0.0
      %1302 = vmatpush1.msra.mxu0 0.0
      %1303 = vmatprep.subr.mxu0 0.0
      %1304 = vmatpush1.msra.mxu0 0.0
      %1305 = vmatprep.subr.mxu0 0.0
      %1306 = vmatpush1.msra.mxu0 0.0
      %1307 = vmatprep.subr.mxu0 0.0
      %1308 = vmatpush1.msra.mxu0 0.0
      %1309 = vmatprep.subr.mxu0 0.0
      %1310 = vmatpush1.msra.mxu0 0.0
      %1311 = vmatprep.subr.mxu0 0.0
      %1312 = vmatpush1.msra.mxu0 0.0
      %1313 = vmatprep.subr.mxu0 0.0
      %1314 = vmatpush1.msra.mxu0 0.0
      %1315 = vmatprep.subr.mxu0 0.0
      %1316 = vmatpush1.msra.mxu0 0.0
      %1317 = vmatprep.subr.mxu0 0.0
      %1318 = vmatpush1.msra.mxu0 0.0
      %1319 = vmatprep.subr.mxu0 0.0
      %1320 = vmatpush1.msra.mxu0 0.0
      %1321 = vmatprep.subr.mxu0 0.0
      %1322 = vmatpush1.msra.mxu0 0.0
      %1323 = vmatprep.subr.mxu0 0.0
      %1324 = vmatpush1.msra.mxu0 0.0
      %1325 = vmatprep.subr.mxu0 0.0
      %1326 = vmatpush1.msra.mxu0 0.0
      %1327 = vmatprep.subr.mxu0 0.0
      %1328 = vmatpush1.msra.mxu0 0.0
      %1329 = vmatprep.subr.mxu0 0.0
      %1330 = vmatpush1.msra.mxu0 0.0
      %1331 = vmatprep.subr.mxu0 0.0
      %1332 = vmatpush1.msra.mxu0 0.0
      %1333 = vmatprep.subr.mxu0 0.0
      %1334 = vmatpush1.msra.mxu0 0.0
      %1335 = vmatprep.subr.mxu0 0.0
      %1336 = vmatpush1.msra.mxu0 0.0
      %1337 = vmatprep.subr.mxu0 0.0
      %1338 = vmatpush1.msra.mxu0 0.0
      %1339 = vmatprep.mubr.f32.mxu0 0.0
      %1340 = vmatmul.mubr.f32.gmra.mrb[0].mxu0 %v1273
      %v1341 = vpop.f32.mrb[0].mxu0
      %v1342 = vadd.f32 0.0, %v1341
      %v1343 = vpop.f32.mrb[0].mxu0
      %1344 = vdwg.mxu0
      %v1346 = vsel %vm720, %v879, 0
      %1348 = vmatprep.subr.mxu0 0.0
      %1349 = vmatpush1.msra.mxu0 %v882
      %1350 = vmatprep.subr.mxu0 0.0
      %1351 = vmatpush1.msra.mxu0 %v883
      %1352 = vmatprep.subr.mxu0 0.0
      %1353 = vmatpush1.msra.mxu0 0.0
      %1354 = vmatprep.subr.mxu0 0.0
      %1355 = vmatpush1.msra.mxu0 0.0
      %1356 = vmatprep.subr.mxu0 0.0
      %1357 = vmatpush1.msra.mxu0 0.0
      %1358 = vmatprep.subr.mxu0 0.0
      %1359 = vmatpush1.msra.mxu0 0.0
      %1360 = vmatprep.subr.mxu0 0.0
      %1361 = vmatpush1.msra.mxu0 0.0
      %1362 = vmatprep.subr.mxu0 0.0
      %1363 = vmatpush1.msra.mxu0 0.0
      %1364 = vmatprep.subr.mxu0 0.0
      %1365 = vmatpush1.msra.mxu0 0.0
      %1366 = vmatprep.subr.mxu0 0.0
      %1367 = vmatpush1.msra.mxu0 0.0
      %1368 = vmatprep.subr.mxu0 0.0
      %1369 = vmatpush1.msra.mxu0 0.0
      %1370 = vmatprep.subr.mxu0 0.0
      %1371 = vmatpush1.msra.mxu0 0.0
      %1372 = vmatprep.subr.mxu0 0.0
      %1373 = vmatpush1.msra.mxu0 0.0
      %1374 = vmatprep.subr.mxu0 0.0
      %1375 = vmatpush1.msra.mxu0 0.0
      %1376 = vmatprep.subr.mxu0 0.0
      %1377 = vmatpush1.msra.mxu0 0.0
      %1378 = vmatprep.subr.mxu0 0.0
      %1379 = vmatpush1.msra.mxu0 0.0
      %1380 = vmatprep.subr.mxu0 0.0
      %1381 = vmatpush1.msra.mxu0 0.0
      %1382 = vmatprep.subr.mxu0 0.0
      %1383 = vmatpush1.msra.mxu0 0.0
      %1384 = vmatprep.subr.mxu0 0.0
      %1385 = vmatpush1.msra.mxu0 0.0
      %1386 = vmatprep.subr.mxu0 0.0
      %1387 = vmatpush1.msra.mxu0 0.0
      %1388 = vmatprep.subr.mxu0 0.0
      %1389 = vmatpush1.msra.mxu0 0.0
      %1390 = vmatprep.subr.mxu0 0.0
      %1391 = vmatpush1.msra.mxu0 0.0
      %1392 = vmatprep.subr.mxu0 0.0
      %1393 = vmatpush1.msra.mxu0 0.0
      %1394 = vmatprep.subr.mxu0 0.0
      %1395 = vmatpush1.msra.mxu0 0.0
      %1396 = vmatprep.subr.mxu0 0.0
      %1397 = vmatpush1.msra.mxu0 0.0
      %1398 = vmatprep.subr.mxu0 0.0
      %1399 = vmatpush1.msra.mxu0 0.0
      %1400 = vmatprep.subr.mxu0 0.0
      %1401 = vmatpush1.msra.mxu0 0.0
      %1402 = vmatprep.subr.mxu0 0.0
      %1403 = vmatpush1.msra.mxu0 0.0
      %1404 = vmatprep.subr.mxu0 0.0
      %1405 = vmatpush1.msra.mxu0 0.0
      %1406 = vmatprep.subr.mxu0 0.0
      %1407 = vmatpush1.msra.mxu0 0.0
      %1408 = vmatprep.subr.mxu0 0.0
      %1409 = vmatpush1.msra.mxu0 0.0
      %1410 = vmatprep.subr.mxu0 0.0
      %1411 = vmatpush1.msra.mxu0 0.0
      %1412 = vmatprep.mubr.f32.mxu0 0.0
      %1413 = vmatmul.mubr.f32.gmra.mrb[0].mxu0 %v1346
      %v1414 = vpop.f32.mrb[0].mxu0
      %v1415 = vadd.f32 %v1342, %v1414
      %v1416 = vpop.f32.mrb[0].mxu0
      %1417 = vdwg.mxu0
      %s1418 = scalar_lea.vmem %s3, 64
      %v1419 = vld [vmem:[%s1418] sm:$0xff]
      %v1420 = vld [vmem:[%s1418 + $0x8] sm:$0xff]
      %v1421 = vld [vmem:[%s1418 + $0x10] sm:$0xff]
      %v1422 = vld [vmem:[%s1418 + $0x18] sm:$0xff]
      %1423 = vmatprep.subr.mxu0 0.0
      %1424 = vmatpush1.msra.mxu0 %v1419
      %1425 = vmatprep.subr.mxu0 0.0
      %1426 = vmatpush1.msra.mxu0 %v1420
      %1427 = vmatprep.subr.mxu0 0.0
      %1428 = vmatpush1.msra.mxu0 %v1421
      %1429 = vmatprep.subr.mxu0 0.0
      %1430 = vmatpush1.msra.mxu0 %v1422
      %1431 = vmatprep.subr.mxu0 0.0
      %1432 = vmatpush1.msra.mxu0 0.0
      %1433 = vmatprep.subr.mxu0 0.0
      %1434 = vmatpush1.msra.mxu0 0.0
      %1435 = vmatprep.subr.mxu0 0.0
      %1436 = vmatpush1.msra.mxu0 0.0
      %1437 = vmatprep.subr.mxu0 0.0
      %1438 = vmatpush1.msra.mxu0 0.0
      %1439 = vmatprep.subr.mxu0 0.0
      %1440 = vmatpush1.msra.mxu0 0.0
      %1441 = vmatprep.subr.mxu0 0.0
      %1442 = vmatpush1.msra.mxu0 0.0
      %1443 = vmatprep.subr.mxu0 0.0
      %1444 = vmatpush1.msra.mxu0 0.0
      %1445 = vmatprep.subr.mxu0 0.0
      %1446 = vmatpush1.msra.mxu0 0.0
      %1447 = vmatprep.subr.mxu0 0.0
      %1448 = vmatpush1.msra.mxu0 0.0
      %1449 = vmatprep.subr.mxu0 0.0
      %1450 = vmatpush1.msra.mxu0 0.0
      %1451 = vmatprep.subr.mxu0 0.0
      %1452 = vmatpush1.msra.mxu0 0.0
      %1453 = vmatprep.subr.mxu0 0.0
      %1454 = vmatpush1.msra.mxu0 0.0
      %1455 = vmatprep.subr.mxu0 0.0
      %1456 = vmatpush1.msra.mxu0 0.0
      %1457 = vmatprep.subr.mxu0 0.0
      %1458 = vmatpush1.msra.mxu0 0.0
      %1459 = vmatprep.subr.mxu0 0.0
      %1460 = vmatpush1.msra.mxu0 0.0
      %1461 = vmatprep.subr.mxu0 0.0
      %1462 = vmatpush1.msra.mxu0 0.0
      %1463 = vmatprep.subr.mxu0 0.0
      %1464 = vmatpush1.msra.mxu0 0.0
      %1465 = vmatprep.subr.mxu0 0.0
      %1466 = vmatpush1.msra.mxu0 0.0
      %1467 = vmatprep.subr.mxu0 0.0
      %1468 = vmatpush1.msra.mxu0 0.0
      %1469 = vmatprep.subr.mxu0 0.0
      %1470 = vmatpush1.msra.mxu0 0.0
      %1471 = vmatprep.subr.mxu0 0.0
      %1472 = vmatpush1.msra.mxu0 0.0
      %1473 = vmatprep.subr.mxu0 0.0
      %1474 = vmatpush1.msra.mxu0 0.0
      %1475 = vmatprep.subr.mxu0 0.0
      %1476 = vmatpush1.msra.mxu0 0.0
      %1477 = vmatprep.subr.mxu0 0.0
      %1478 = vmatpush1.msra.mxu0 0.0
      %1479 = vmatprep.subr.mxu0 0.0
      %1480 = vmatpush1.msra.mxu0 0.0
      %1481 = vmatprep.subr.mxu0 0.0
      %1482 = vmatpush1.msra.mxu0 0.0
      %1483 = vmatprep.subr.mxu0 0.0
      %1484 = vmatpush1.msra.mxu0 0.0
      %1485 = vmatprep.subr.mxu0 0.0
      %1486 = vmatpush1.msra.mxu0 0.0
      %1487 = vmatprep.mubr.f32.mxu0 0.0
      %1488 = vmatmul.mubr.f32.gmra.mrb[0].mxu0 %v500
      %v1489 = vpop.f32.mrb[0].mxu0
      %v1490 = vadd.f32 0.0, %v1489
      %v1491 = vpop.f32.mrb[0].mxu0
      %1492 = vdwg.mxu0
      %s1493 = scalar_lea.vmem %s4, 64
      %v1494 = vld [vmem:[%s1493] sm:$0xff]
      %v1495 = vld [vmem:[%s1493 + $0x8] sm:$0xff]
      %v1496 = vld [vmem:[%s1493 + $0x10] sm:$0xff]
      %v1497 = vld [vmem:[%s1493 + $0x18] sm:$0xff]
      %1498 = vmatprep.subr.mxu0 0.0
      %1499 = vmatpush1.msra.mxu0 %v1494
      %1500 = vmatprep.subr.mxu0 0.0
      %1501 = vmatpush1.msra.mxu0 %v1495
      %1502 = vmatprep.subr.mxu0 0.0
      %1503 = vmatpush1.msra.mxu0 %v1496
      %1504 = vmatprep.subr.mxu0 0.0
      %1505 = vmatpush1.msra.mxu0 %v1497
      %1506 = vmatprep.subr.mxu0 0.0
      %1507 = vmatpush1.msra.mxu0 0.0
      %1508 = vmatprep.subr.mxu0 0.0
      %1509 = vmatpush1.msra.mxu0 0.0
      %1510 = vmatprep.subr.mxu0 0.0
      %1511 = vmatpush1.msra.mxu0 0.0
      %1512 = vmatprep.subr.mxu0 0.0
      %1513 = vmatpush1.msra.mxu0 0.0
      %1514 = vmatprep.subr.mxu0 0.0
      %1515 = vmatpush1.msra.mxu0 0.0
      %1516 = vmatprep.subr.mxu0 0.0
      %1517 = vmatpush1.msra.mxu0 0.0
      %1518 = vmatprep.subr.mxu0 0.0
      %1519 = vmatpush1.msra.mxu0 0.0
      %1520 = vmatprep.subr.mxu0 0.0
      %1521 = vmatpush1.msra.mxu0 0.0
      %1522 = vmatprep.subr.mxu0 0.0
      %1523 = vmatpush1.msra.mxu0 0.0
      %1524 = vmatprep.subr.mxu0 0.0
      %1525 = vmatpush1.msra.mxu0 0.0
      %1526 = vmatprep.subr.mxu0 0.0
      %1527 = vmatpush1.msra.mxu0 0.0
      %1528 = vmatprep.subr.mxu0 0.0
      %1529 = vmatpush1.msra.mxu0 0.0
      %1530 = vmatprep.subr.mxu0 0.0
      %1531 = vmatpush1.msra.mxu0 0.0
      %1532 = vmatprep.subr.mxu0 0.0
      %1533 = vmatpush1.msra.mxu0 0.0
      %1534 = vmatprep.subr.mxu0 0.0
      %1535 = vmatpush1.msra.mxu0 0.0
      %1536 = vmatprep.subr.mxu0 0.0
      %1537 = vmatpush1.msra.mxu0 0.0
      %1538 = vmatprep.subr.mxu0 0.0
      %1539 = vmatpush1.msra.mxu0 0.0
      %1540 = vmatprep.subr.mxu0 0.0
      %1541 = vmatpush1.msra.mxu0 0.0
      %1542 = vmatprep.subr.mxu0 0.0
      %1543 = vmatpush1.msra.mxu0 0.0
      %1544 = vmatprep.subr.mxu0 0.0
      %1545 = vmatpush1.msra.mxu0 0.0
      %1546 = vmatprep.subr.mxu0 0.0
      %1547 = vmatpush1.msra.mxu0 0.0
      %1548 = vmatprep.subr.mxu0 0.0
      %1549 = vmatpush1.msra.mxu0 0.0
      %1550 = vmatprep.subr.mxu0 0.0
      %1551 = vmatpush1.msra.mxu0 0.0
      %1552 = vmatprep.subr.mxu0 0.0
      %1553 = vmatpush1.msra.mxu0 0.0
      %1554 = vmatprep.subr.mxu0 0.0
      %1555 = vmatpush1.msra.mxu0 0.0
      %1556 = vmatprep.subr.mxu0 0.0
      %1557 = vmatpush1.msra.mxu0 0.0
      %1558 = vmatprep.subr.mxu0 0.0
      %1559 = vmatpush1.msra.mxu0 0.0
      %1560 = vmatprep.subr.mxu0 0.0
      %1561 = vmatpush1.msra.mxu0 0.0
      %1562 = vmatprep.mubr.f32.mxu0 0.0
      %1563 = vmatmul.mubr.f32.gmra.mrb[0].mxu0 %v500
      %v1564 = vpop.f32.mrb[0].mxu0
      %v1565 = vadd.f32 0.0, %v1564
      %v1566 = vpop.f32.mrb[0].mxu0
      %1567 = vdwg.mxu0
      %s1568 = scalar_lea.vmem %s5, 64
      %v1569 = vld [vmem:[%s1568] sm:$0xff]
      %v1570 = vld [vmem:[%s1568 + $0x8] sm:$0xff]
      %v1571 = vld [vmem:[%s1568 + $0x10] sm:$0xff]
      %v1572 = vld [vmem:[%s1568 + $0x18] sm:$0xff]
      %1573 = vmatprep.subr.mxu0 0.0
      %1574 = vmatpush1.msra.mxu0 %v1569
      %1575 = vmatprep.subr.mxu0 0.0
      %1576 = vmatpush1.msra.mxu0 %v1570
      %1577 = vmatprep.subr.mxu0 0.0
      %1578 = vmatpush1.msra.mxu0 %v1571
      %1579 = vmatprep.subr.mxu0 0.0
      %1580 = vmatpush1.msra.mxu0 %v1572
      %1581 = vmatprep.subr.mxu0 0.0
      %1582 = vmatpush1.msra.mxu0 0.0
      %1583 = vmatprep.subr.mxu0 0.0
      %1584 = vmatpush1.msra.mxu0 0.0
      %1585 = vmatprep.subr.mxu0 0.0
      %1586 = vmatpush1.msra.mxu0 0.0
      %1587 = vmatprep.subr.mxu0 0.0
      %1588 = vmatpush1.msra.mxu0 0.0
      %1589 = vmatprep.subr.mxu0 0.0
      %1590 = vmatpush1.msra.mxu0 0.0
      %1591 = vmatprep.subr.mxu0 0.0
      %1592 = vmatpush1.msra.mxu0 0.0
      %1593 = vmatprep.subr.mxu0 0.0
      %1594 = vmatpush1.msra.mxu0 0.0
      %1595 = vmatprep.subr.mxu0 0.0
      %1596 = vmatpush1.msra.mxu0 0.0
      %1597 = vmatprep.subr.mxu0 0.0
      %1598 = vmatpush1.msra.mxu0 0.0
      %1599 = vmatprep.subr.mxu0 0.0
      %1600 = vmatpush1.msra.mxu0 0.0
      %1601 = vmatprep.subr.mxu0 0.0
      %1602 = vmatpush1.msra.mxu0 0.0
      %1603 = vmatprep.subr.mxu0 0.0
      %1604 = vmatpush1.msra.mxu0 0.0
      %1605 = vmatprep.subr.mxu0 0.0
      %1606 = vmatpush1.msra.mxu0 0.0
      %1607 = vmatprep.subr.mxu0 0.0
      %1608 = vmatpush1.msra.mxu0 0.0
      %1609 = vmatprep.subr.mxu0 0.0
      %1610 = vmatpush1.msra.mxu0 0.0
      %1611 = vmatprep.subr.mxu0 0.0
      %1612 = vmatpush1.msra.mxu0 0.0
      %1613 = vmatprep.subr.mxu0 0.0
      %1614 = vmatpush1.msra.mxu0 0.0
      %1615 = vmatprep.subr.mxu0 0.0
      %1616 = vmatpush1.msra.mxu0 0.0
      %1617 = vmatprep.subr.mxu0 0.0
      %1618 = vmatpush1.msra.mxu0 0.0
      %1619 = vmatprep.subr.mxu0 0.0
      %1620 = vmatpush1.msra.mxu0 0.0
      %1621 = vmatprep.subr.mxu0 0.0
      %1622 = vmatpush1.msra.mxu0 0.0
      %1623 = vmatprep.subr.mxu0 0.0
      %1624 = vmatpush1.msra.mxu0 0.0
      %1625 = vmatprep.subr.mxu0 0.0
      %1626 = vmatpush1.msra.mxu0 0.0
      %1627 = vmatprep.subr.mxu0 0.0
      %1628 = vmatpush1.msra.mxu0 0.0
      %1629 = vmatprep.subr.mxu0 0.0
      %1630 = vmatpush1.msra.mxu0 0.0
      %1631 = vmatprep.subr.mxu0 0.0
      %1632 = vmatpush1.msra.mxu0 0.0
      %1633 = vmatprep.subr.mxu0 0.0
      %1634 = vmatpush1.msra.mxu0 0.0
      %1635 = vmatprep.subr.mxu0 0.0
      %1636 = vmatpush1.msra.mxu0 0.0
      %1637 = vmatprep.mubr.f32.mxu0 0.0
      %1638 = vmatmul.mubr.f32.gmra.mrb[0].mxu0 %v500
      %v1639 = vpop.f32.mrb[0].mxu0
      %v1640 = vadd.f32 0.0, %v1639
      %v1641 = vpop.f32.mrb[0].mxu0
      %1642 = vdwg.mxu0
      %v1644 = vsel %vm720, %v1490, 0
      %v1647 = vsel %vm720, %v1565, 0
      %1649 = vmatprep.subr.mxu0 0.0
      %1650 = vmatpush1.xpose.msra.mxu0 %v1647
      %1651 = vmatprep.subr.mxu0 0.0
      %1652 = vmatpush1.xpose.msra.mxu0 0.0
      %1653 = vmatprep.subr.mxu0 0.0
      %1654 = vmatpush1.xpose.msra.mxu0 0.0
      %1655 = vmatprep.subr.mxu0 0.0
      %1656 = vmatpush1.xpose.msra.mxu0 0.0
      %1657 = vmatprep.subr.mxu0 0.0
      %1658 = vmatpush1.xpose.msra.mxu0 0.0
      %1659 = vmatprep.subr.mxu0 0.0
      %1660 = vmatpush1.xpose.msra.mxu0 0.0
      %1661 = vmatprep.subr.mxu0 0.0
      %1662 = vmatpush1.xpose.msra.mxu0 0.0
      %1663 = vmatprep.subr.mxu0 0.0
      %1664 = vmatpush1.xpose.msra.mxu0 0.0
      %1665 = vmatprep.subr.mxu0 0.0
      %1666 = vmatpush1.xpose.msra.mxu0 0.0
      %1667 = vmatprep.subr.mxu0 0.0
      %1668 = vmatpush1.xpose.msra.mxu0 0.0
      %1669 = vmatprep.subr.mxu0 0.0
      %1670 = vmatpush1.xpose.msra.mxu0 0.0
      %1671 = vmatprep.subr.mxu0 0.0
      %1672 = vmatpush1.xpose.msra.mxu0 0.0
      %1673 = vmatprep.subr.mxu0 0.0
      %1674 = vmatpush1.xpose.msra.mxu0 0.0
      %1675 = vmatprep.subr.mxu0 0.0
      %1676 = vmatpush1.xpose.msra.mxu0 0.0
      %1677 = vmatprep.subr.mxu0 0.0
      %1678 = vmatpush1.xpose.msra.mxu0 0.0
      %1679 = vmatprep.subr.mxu0 0.0
      %1680 = vmatpush1.xpose.msra.mxu0 0.0
      %1681 = vmatprep.subr.mxu0 0.0
      %1682 = vmatpush1.xpose.msra.mxu0 0.0
      %1683 = vmatprep.subr.mxu0 0.0
      %1684 = vmatpush1.xpose.msra.mxu0 0.0
      %1685 = vmatprep.subr.mxu0 0.0
      %1686 = vmatpush1.xpose.msra.mxu0 0.0
      %1687 = vmatprep.subr.mxu0 0.0
      %1688 = vmatpush1.xpose.msra.mxu0 0.0
      %1689 = vmatprep.subr.mxu0 0.0
      %1690 = vmatpush1.xpose.msra.mxu0 0.0
      %1691 = vmatprep.subr.mxu0 0.0
      %1692 = vmatpush1.xpose.msra.mxu0 0.0
      %1693 = vmatprep.subr.mxu0 0.0
      %1694 = vmatpush1.xpose.msra.mxu0 0.0
      %1695 = vmatprep.subr.mxu0 0.0
      %1696 = vmatpush1.xpose.msra.mxu0 0.0
      %1697 = vmatprep.subr.mxu0 0.0
      %1698 = vmatpush1.xpose.msra.mxu0 0.0
      %1699 = vmatprep.subr.mxu0 0.0
      %1700 = vmatpush1.xpose.msra.mxu0 0.0
      %1701 = vmatprep.subr.mxu0 0.0
      %1702 = vmatpush1.xpose.msra.mxu0 0.0
      %1703 = vmatprep.subr.mxu0 0.0
      %1704 = vmatpush1.xpose.msra.mxu0 0.0
      %1705 = vmatprep.subr.mxu0 0.0
      %1706 = vmatpush1.xpose.msra.mxu0 0.0
      %1707 = vmatprep.subr.mxu0 0.0
      %1708 = vmatpush1.xpose.msra.mxu0 0.0
      %1709 = vmatprep.subr.mxu0 0.0
      %1710 = vmatpush1.xpose.msra.mxu0 0.0
      %1711 = vmatprep.subr.mxu0 0.0
      %1712 = vmatpush1.xpose.msra.mxu0 0.0
      %1713 = vmatprep.mubr.f32.mxu0 0.0
      %1714 = vmatmul.mubr.f32.gmra.mrb[0].mxu0 %v1644
      %v1715 = vpop.f32.mrb[0].mxu0
      %v1716 = vadd.f32 0.0, %v1715
      %v1717 = vpop.f32.mrb[0].mxu0
      %1718 = vdwg.mxu0
      %v1719 = vsel %vm797, %v1716, -inf
      %1720 = vmax.xlane.f32.xlu0 %v1719
      %v1721 = vpop.xlane.xlu0 %1720
      %v1722 = vsub.f32 %v1716, %v1721
      %v1723 = vmul.f32 %v1722, 1.442695
      %v1724 = vpow.pop %v1723
      %v1725 = vsel %vm797, %v1724, 0.0
      %1726 = vadd.xlane.f32.xlu0 %v1725
      %v1727 = vpop.xlane.xlu0 %1726
      %v1728 = vrcp.pop %v1727
      %v1729 = vmul.f32 %v1724, %v1728
      %v1731 = vsel %vm797, %v1729, 0
      %1733 = vmatprep.subr.mxu0 0.0
      %1734 = vmatpush1.msra.mxu0 %v1640
      %1735 = vmatprep.subr.mxu0 0.0
      %1736 = vmatpush1.msra.mxu0 0.0
      %1737 = vmatprep.subr.mxu0 0.0
      %1738 = vmatpush1.msra.mxu0 0.0
      %1739 = vmatprep.subr.mxu0 0.0
      %1740 = vmatpush1.msra.mxu0 0.0
      %1741 = vmatprep.subr.mxu0 0.0
      %1742 = vmatpush1.msra.mxu0 0.0
      %1743 = vmatprep.subr.mxu0 0.0
      %1744 = vmatpush1.msra.mxu0 0.0
      %1745 = vmatprep.subr.mxu0 0.0
      %1746 = vmatpush1.msra.mxu0 0.0
      %1747 = vmatprep.subr.mxu0 0.0
      %1748 = vmatpush1.msra.mxu0 0.0
      %1749 = vmatprep.subr.mxu0 0.0
      %1750 = vmatpush1.msra.mxu0 0.0
      %1751 = vmatprep.subr.mxu0 0.0
      %1752 = vmatpush1.msra.mxu0 0.0
      %1753 = vmatprep.subr.mxu0 0.0
      %1754 = vmatpush1.msra.mxu0 0.0
      %1755 = vmatprep.subr.mxu0 0.0
      %1756 = vmatpush1.msra.mxu0 0.0
      %1757 = vmatprep.subr.mxu0 0.0
      %1758 = vmatpush1.msra.mxu0 0.0
      %1759 = vmatprep.subr.mxu0 0.0
      %1760 = vmatpush1.msra.mxu0 0.0
      %1761 = vmatprep.subr.mxu0 0.0
      %1762 = vmatpush1.msra.mxu0 0.0
      %1763 = vmatprep.subr.mxu0 0.0
      %1764 = vmatpush1.msra.mxu0 0.0
      %1765 = vmatprep.subr.mxu0 0.0
      %1766 = vmatpush1.msra.mxu0 0.0
      %1767 = vmatprep.subr.mxu0 0.0
      %1768 = vmatpush1.msra.mxu0 0.0
      %1769 = vmatprep.subr.mxu0 0.0
      %1770 = vmatpush1.msra.mxu0 0.0
      %1771 = vmatprep.subr.mxu0 0.0
      %1772 = vmatpush1.msra.mxu0 0.0
      %1773 = vmatprep.subr.mxu0 0.0
      %1774 = vmatpush1.msra.mxu0 0.0
      %1775 = vmatprep.subr.mxu0 0.0
      %1776 = vmatpush1.msra.mxu0 0.0
      %1777 = vmatprep.subr.mxu0 0.0
      %1778 = vmatpush1.msra.mxu0 0.0
      %1779 = vmatprep.subr.mxu0 0.0
      %1780 = vmatpush1.msra.mxu0 0.0
      %1781 = vmatprep.subr.mxu0 0.0
      %1782 = vmatpush1.msra.mxu0 0.0
      %1783 = vmatprep.subr.mxu0 0.0
      %1784 = vmatpush1.msra.mxu0 0.0
      %1785 = vmatprep.subr.mxu0 0.0
      %1786 = vmatpush1.msra.mxu0 0.0
      %1787 = vmatprep.subr.mxu0 0.0
      %1788 = vmatpush1.msra.mxu0 0.0
      %1789 = vmatprep.subr.mxu0 0.0
      %1790 = vmatpush1.msra.mxu0 0.0
      %1791 = vmatprep.subr.mxu0 0.0
      %1792 = vmatpush1.msra.mxu0 0.0
      %1793 = vmatprep.subr.mxu0 0.0
      %1794 = vmatpush1.msra.mxu0 0.0
      %1795 = vmatprep.subr.mxu0 0.0
      %1796 = vmatpush1.msra.mxu0 0.0
      %1797 = vmatprep.mubr.f32.mxu0 0.0
      %1798 = vmatmul.mubr.f32.gmra.mrb[0].mxu0 %v1731
      %v1799 = vpop.f32.mrb[0].mxu0
      %v1800 = vadd.f32 0.0, %v1799
      %v1801 = vpop.f32.mrb[0].mxu0
      %1802 = vdwg.mxu0
      %s1803 = scalar_lea.vmem %s6, 32
      %v1804 = vld [vmem:[%s1803] sm:$0xff]
      %v1805 = vld [vmem:[%s1803 + $0x8] sm:$0xff]
      %v1807 = vsel %vm720, %v1800, 0
      %1809 = vmatprep.subr.mxu0 0.0
      %1810 = vmatpush1.msra.mxu0 %v1804
      %1811 = vmatprep.subr.mxu0 0.0
      %1812 = vmatpush1.msra.mxu0 %v1805
      %1813 = vmatprep.subr.mxu0 0.0
      %1814 = vmatpush1.msra.mxu0 0.0
      %1815 = vmatprep.subr.mxu0 0.0
      %1816 = vmatpush1.msra.mxu0 0.0
      %1817 = vmatprep.subr.mxu0 0.0
      %1818 = vmatpush1.msra.mxu0 0.0
      %1819 = vmatprep.subr.mxu0 0.0
      %1820 = vmatpush1.msra.mxu0 0.0
      %1821 = vmatprep.subr.mxu0 0.0
      %1822 = vmatpush1.msra.mxu0 0.0
      %1823 = vmatprep.subr.mxu0 0.0
      %1824 = vmatpush1.msra.mxu0 0.0
      %1825 = vmatprep.subr.mxu0 0.0
      %1826 = vmatpush1.msra.mxu0 0.0
      %1827 = vmatprep.subr.mxu0 0.0
      %1828 = vmatpush1.msra.mxu0 0.0
      %1829 = vmatprep.subr.mxu0 0.0
      %1830 = vmatpush1.msra.mxu0 0.0
      %1831 = vmatprep.subr.mxu0 0.0
      %1832 = vmatpush1.msra.mxu0 0.0
      %1833 = vmatprep.subr.mxu0 0.0
      %1834 = vmatpush1.msra.mxu0 0.0
      %1835 = vmatprep.subr.mxu0 0.0
      %1836 = vmatpush1.msra.mxu0 0.0
      %1837 = vmatprep.subr.mxu0 0.0
      %1838 = vmatpush1.msra.mxu0 0.0
      %1839 = vmatprep.subr.mxu0 0.0
      %1840 = vmatpush1.msra.mxu0 0.0
      %1841 = vmatprep.subr.mxu0 0.0
      %1842 = vmatpush1.msra.mxu0 0.0
      %1843 = vmatprep.subr.mxu0 0.0
      %1844 = vmatpush1.msra.mxu0 0.0
      %1845 = vmatprep.subr.mxu0 0.0
      %1846 = vmatpush1.msra.mxu0 0.0
      %1847 = vmatprep.subr.mxu0 0.0
      %1848 = vmatpush1.msra.mxu0 0.0
      %1849 = vmatprep.subr.mxu0 0.0
      %1850 = vmatpush1.msra.mxu0 0.0
      %1851 = vmatprep.subr.mxu0 0.0
      %1852 = vmatpush1.msra.mxu0 0.0
      %1853 = vmatprep.subr.mxu0 0.0
      %1854 = vmatpush1.msra.mxu0 0.0
      %1855 = vmatprep.subr.mxu0 0.0
      %1856 = vmatpush1.msra.mxu0 0.0
      %1857 = vmatprep.subr.mxu0 0.0
      %1858 = vmatpush1.msra.mxu0 0.0
      %1859 = vmatprep.subr.mxu0 0.0
      %1860 = vmatpush1.msra.mxu0 0.0
      %1861 = vmatprep.subr.mxu0 0.0
      %1862 = vmatpush1.msra.mxu0 0.0
      %1863 = vmatprep.subr.mxu0 0.0
      %1864 = vmatpush1.msra.mxu0 0.0
      %1865 = vmatprep.subr.mxu0 0.0
      %1866 = vmatpush1.msra.mxu0 0.0
      %1867 = vmatprep.subr.mxu0 0.0
      %1868 = vmatpush1.msra.mxu0 0.0
      %1869 = vmatprep.subr.mxu0 0.0
      %1870 = vmatpush1.msra.mxu0 0.0
      %1871 = vmatprep.subr.mxu0 0.0
      %1872 = vmatpush1.msra.mxu0 0.0
      %1873 = vmatprep.mubr.f32.mxu0 0.0
      %1874 = vmatmul.mubr.f32.gmra.mrb[0].mxu0 %v1807
      %v1875 = vpop.f32.mrb[0].mxu0
      %v1876 = vadd.f32 0.0, %v1875
      %v1877 = vpop.f32.mrb[0].mxu0
      %1878 = vdwg.mxu0
      %v1879 = vadd.f32 %v1415, %v1876
      %s1880 = scalar_lea.vmem %s3, 96
      %v1881 = vld [vmem:[%s1880] sm:$0xff]
      %v1882 = vld [vmem:[%s1880 + $0x8] sm:$0xff]
      %v1883 = vld [vmem:[%s1880 + $0x10] sm:$0xff]
      %v1884 = vld [vmem:[%s1880 + $0x18] sm:$0xff]
      %1885 = vmatprep.subr.mxu0 0.0
      %1886 = vmatpush1.msra.mxu0 %v1881
      %1887 = vmatprep.subr.mxu0 0.0
      %1888 = vmatpush1.msra.mxu0 %v1882
      %1889 = vmatprep.subr.mxu0 0.0
      %1890 = vmatpush1.msra.mxu0 %v1883
      %1891 = vmatprep.subr.mxu0 0.0
      %1892 = vmatpush1.msra.mxu0 %v1884
      %1893 = vmatprep.subr.mxu0 0.0
      %1894 = vmatpush1.msra.mxu0 0.0
      %1895 = vmatprep.subr.mxu0 0.0
      %1896 = vmatpush1.msra.mxu0 0.0
      %1897 = vmatprep.subr.mxu0 0.0
      %1898 = vmatpush1.msra.mxu0 0.0
      %1899 = vmatprep.subr.mxu0 0.0
      %1900 = vmatpush1.msra.mxu0 0.0
      %1901 = vmatprep.subr.mxu0 0.0
      %1902 = vmatpush1.msra.mxu0 0.0
      %1903 = vmatprep.subr.mxu0 0.0
      %1904 = vmatpush1.msra.mxu0 0.0
      %1905 = vmatprep.subr.mxu0 0.0
      %1906 = vmatpush1.msra.mxu0 0.0
      %1907 = vmatprep.subr.mxu0 0.0
      %1908 = vmatpush1.msra.mxu0 0.0
      %1909 = vmatprep.subr.mxu0 0.0
      %1910 = vmatpush1.msra.mxu0 0.0
      %1911 = vmatprep.subr.mxu0 0.0
      %1912 = vmatpush1.msra.mxu0 0.0
      %1913 = vmatprep.subr.mxu0 0.0
      %1914 = vmatpush1.msra.mxu0 0.0
      %1915 = vmatprep.subr.mxu0 0.0
      %1916 = vmatpush1.msra.mxu0 0.0
      %1917 = vmatprep.subr.mxu0 0.0
      %1918 = vmatpush1.msra.mxu0 0.0
      %1919 = vmatprep.subr.mxu0 0.0
      %1920 = vmatpush1.msra.mxu0 0.0
      %1921 = vmatprep.subr.mxu0 0.0
      %1922 = vmatpush1.msra.mxu0 0.0
      %1923 = vmatprep.subr.mxu0 0.0
      %1924 = vmatpush1.msra.mxu0 0.0
      %1925 = vmatprep.subr.mxu0 0.0
      %1926 = vmatpush1.msra.mxu0 0.0
      %1927 = vmatprep.subr.mxu0 0.0
      %1928 = vmatpush1.msra.mxu0 0.0
      %1929 = vmatprep.subr.mxu0 0.0
      %1930 = vmatpush1.msra.mxu0 0.0
      %1931 = vmatprep.subr.mxu0 0.0
      %1932 = vmatpush1.msra.mxu0 0.0
      %1933 = vmatprep.subr.mxu0 0.0
      %1934 = vmatpush1.msra.mxu0 0.0
      %1935 = vmatprep.subr.mxu0 0.0
      %1936 = vmatpush1.msra.mxu0 0.0
      %1937 = vmatprep.subr.mxu0 0.0
      %1938 = vmatpush1.msra.mxu0 0.0
      %1939 = vmatprep.subr.mxu0 0.0
      %1940 = vmatpush1.msra.mxu0 0.0
      %1941 = vmatprep.subr.mxu0 0.0
      %1942 = vmatpush1.msra.mxu0 0.0
      %1943 = vmatprep.subr.mxu0 0.0
      %1944 = vmatpush1.msra.mxu0 0.0
      %1945 = vmatprep.subr.mxu0 0.0
      %1946 = vmatpush1.msra.mxu0 0.0
      %1947 = vmatprep.subr.mxu0 0.0
      %1948 = vmatpush1.msra.mxu0 0.0
      %1949 = vmatprep.mubr.f32.mxu0 0.0
      %1950 = vmatmul.mubr.f32.gmra.mrb[0].mxu0 %v500
      %v1951 = vpop.f32.mrb[0].mxu0
      %v1952 = vadd.f32 0.0, %v1951
      %v1953 = vpop.f32.mrb[0].mxu0
      %1954 = vdwg.mxu0
      %s1955 = scalar_lea.vmem %s4, 96
      %v1956 = vld [vmem:[%s1955] sm:$0xff]
      %v1957 = vld [vmem:[%s1955 + $0x8] sm:$0xff]
      %v1958 = vld [vmem:[%s1955 + $0x10] sm:$0xff]
      %v1959 = vld [vmem:[%s1955 + $0x18] sm:$0xff]
      %1960 = vmatprep.subr.mxu0 0.0
      %1961 = vmatpush1.msra.mxu0 %v1956
      %1962 = vmatprep.subr.mxu0 0.0
      %1963 = vmatpush1.msra.mxu0 %v1957
      %1964 = vmatprep.subr.mxu0 0.0
      %1965 = vmatpush1.msra.mxu0 %v1958
      %1966 = vmatprep.subr.mxu0 0.0
      %1967 = vmatpush1.msra.mxu0 %v1959
      %1968 = vmatprep.subr.mxu0 0.0
      %1969 = vmatpush1.msra.mxu0 0.0
      %1970 = vmatprep.subr.mxu0 0.0
      %1971 = vmatpush1.msra.mxu0 0.0
      %1972 = vmatprep.subr.mxu0 0.0
      %1973 = vmatpush1.msra.mxu0 0.0
      %1974 = vmatprep.subr.mxu0 0.0
      %1975 = vmatpush1.msra.mxu0 0.0
      %1976 = vmatprep.subr.mxu0 0.0
      %1977 = vmatpush1.msra.mxu0 0.0
      %1978 = vmatprep.subr.mxu0 0.0
      %1979 = vmatpush1.msra.mxu0 0.0
      %1980 = vmatprep.subr.mxu0 0.0
      %1981 = vmatpush1.msra.mxu0 0.0
      %1982 = vmatprep.subr.mxu0 0.0
      %1983 = vmatpush1.msra.mxu0 0.0
      %1984 = vmatprep.subr.mxu0 0.0
      %1985 = vmatpush1.msra.mxu0 0.0
      %1986 = vmatprep.subr.mxu0 0.0
      %1987 = vmatpush1.msra.mxu0 0.0
      %1988 = vmatprep.subr.mxu0 0.0
      %1989 = vmatpush1.msra.mxu0 0.0
      %1990 = vmatprep.subr.mxu0 0.0
      %1991 = vmatpush1.msra.mxu0 0.0
      %1992 = vmatprep.subr.mxu0 0.0
      %1993 = vmatpush1.msra.mxu0 0.0
      %1994 = vmatprep.subr.mxu0 0.0
      %1995 = vmatpush1.msra.mxu0 0.0
      %1996 = vmatprep.subr.mxu0 0.0
      %1997 = vmatpush1.msra.mxu0 0.0
      %1998 = vmatprep.subr.mxu0 0.0
      %1999 = vmatpush1.msra.mxu0 0.0
      %2000 = vmatprep.subr.mxu0 0.0
      %2001 = vmatpush1.msra.mxu0 0.0
      %2002 = vmatprep.subr.mxu0 0.0
      %2003 = vmatpush1.msra.mxu0 0.0
      %2004 = vmatprep.subr.mxu0 0.0
      %2005 = vmatpush1.msra.mxu0 0.0
      %2006 = vmatprep.subr.mxu0 0.0
      %2007 = vmatpush1.msra.mxu0 0.0
      %2008 = vmatprep.subr.mxu0 0.0
      %2009 = vmatpush1.msra.mxu0 0.0
      %2010 = vmatprep.subr.mxu0 0.0
      %2011 = vmatpush1.msra.mxu0 0.0
      %2012 = vmatprep.subr.mxu0 0.0
      %2013 = vmatpush1.msra.mxu0 0.0
      %2014 = vmatprep.subr.mxu0 0.0
      %2015 = vmatpush1.msra.mxu0 0.0
      %2016 = vmatprep.subr.mxu0 0.0
      %2017 = vmatpush1.msra.mxu0 0.0
      %2018 = vmatprep.subr.mxu0 0.0
      %2019 = vmatpush1.msra.mxu0 0.0
      %2020 = vmatprep.subr.mxu0 0.0
      %2021 = vmatpush1.msra.mxu0 0.0
      %2022 = vmatprep.subr.mxu0 0.0
      %2023 = vmatpush1.msra.mxu0 0.0
      %2024 = vmatprep.mubr.f32.mxu0 0.0
      %2025 = vmatmul.mubr.f32.gmra.mrb[0].mxu0 %v500
      %v2026 = vpop.f32.mrb[0].mxu0
      %v2027 = vadd.f32 0.0, %v2026
      %v2028 = vpop.f32.mrb[0].mxu0
      %2029 = vdwg.mxu0
      %s2030 = scalar_lea.vmem %s5, 96
      %v2031 = vld [vmem:[%s2030] sm:$0xff]
      %v2032 = vld [vmem:[%s2030 + $0x8] sm:$0xff]
      %v2033 = vld [vmem:[%s2030 + $0x10] sm:$0xff]
      %v2034 = vld [vmem:[%s2030 + $0x18] sm:$0xff]
      %2035 = vmatprep.subr.mxu0 0.0
      %2036 = vmatpush1.msra.mxu0 %v2031
      %2037 = vmatprep.subr.mxu0 0.0
      %2038 = vmatpush1.msra.mxu0 %v2032
      %2039 = vmatprep.subr.mxu0 0.0
      %2040 = vmatpush1.msra.mxu0 %v2033
      %2041 = vmatprep.subr.mxu0 0.0
      %2042 = vmatpush1.msra.mxu0 %v2034
      %2043 = vmatprep.subr.mxu0 0.0
      %2044 = vmatpush1.msra.mxu0 0.0
      %2045 = vmatprep.subr.mxu0 0.0
      %2046 = vmatpush1.msra.mxu0 0.0
      %2047 = vmatprep.subr.mxu0 0.0
      %2048 = vmatpush1.msra.mxu0 0.0
      %2049 = vmatprep.subr.mxu0 0.0
      %2050 = vmatpush1.msra.mxu0 0.0
      %2051 = vmatprep.subr.mxu0 0.0
      %2052 = vmatpush1.msra.mxu0 0.0
      %2053 = vmatprep.subr.mxu0 0.0
      %2054 = vmatpush1.msra.mxu0 0.0
      %2055 = vmatprep.subr.mxu0 0.0
      %2056 = vmatpush1.msra.mxu0 0.0
      %2057 = vmatprep.subr.mxu0 0.0
      %2058 = vmatpush1.msra.mxu0 0.0
      %2059 = vmatprep.subr.mxu0 0.0
      %2060 = vmatpush1.msra.mxu0 0.0
      %2061 = vmatprep.subr.mxu0 0.0
      %2062 = vmatpush1.msra.mxu0 0.0
      %2063 = vmatprep.subr.mxu0 0.0
      %2064 = vmatpush1.msra.mxu0 0.0
      %2065 = vmatprep.subr.mxu0 0.0
      %2066 = vmatpush1.msra.mxu0 0.0
      %2067 = vmatprep.subr.mxu0 0.0
      %2068 = vmatpush1.msra.mxu0 0.0
      %2069 = vmatprep.subr.mxu0 0.0
      %2070 = vmatpush1.msra.mxu0 0.0
      %2071 = vmatprep.subr.mxu0 0.0
      %2072 = vmatpush1.msra.mxu0 0.0
      %2073 = vmatprep.subr.mxu0 0.0
      %2074 = vmatpush1.msra.mxu0 0.0
      %2075 = vmatprep.subr.mxu0 0.0
      %2076 = vmatpush1.msra.mxu0 0.0
      %2077 = vmatprep.subr.mxu0 0.0
      %2078 = vmatpush1.msra.mxu0 0.0
      %2079 = vmatprep.subr.mxu0 0.0
      %2080 = vmatpush1.msra.mxu0 0.0
      %2081 = vmatprep.subr.mxu0 0.0
      %2082 = vmatpush1.msra.mxu0 0.0
      %2083 = vmatprep.subr.mxu0 0.0
      %2084 = vmatpush1.msra.mxu0 0.0
      %2085 = vmatprep.subr.mxu0 0.0
      %2086 = vmatpush1.msra.mxu0 0.0
      %2087 = vmatprep.subr.mxu0 0.0
      %2088 = vmatpush1.msra.mxu0 0.0
      %2089 = vmatprep.subr.mxu0 0.0
      %2090 = vmatpush1.msra.mxu0 0.0
      %2091 = vmatprep.subr.mxu0 0.0
      %2092 = vmatpush1.msra.mxu0 0.0
      %2093 = vmatprep.subr.mxu0 0.0
      %2094 = vmatpush1.msra.mxu0 0.0
      %2095 = vmatprep.subr.mxu0 0.0
      %2096 = vmatpush1.msra.mxu0 0.0
      %2097 = vmatprep.subr.mxu0 0.0
      %2098 = vmatpush1.msra.mxu0 0.0
      %2099 = vmatprep.mubr.f32.mxu0 0.0
      %2100 = vmatmul.mubr.f32.gmra.mrb[0].mxu0 %v500
      %v2101 = vpop.f32.mrb[0].mxu0
      %v2102 = vadd.f32 0.0, %v2101
      %v2103 = vpop.f32.mrb[0].mxu0
      %2104 = vdwg.mxu0
      %v2106 = vsel %vm720, %v1952, 0
      %v2109 = vsel %vm720, %v2027, 0
      %2111 = vmatprep.subr.mxu0 0.0
      %2112 = vmatpush1.xpose.msra.mxu0 %v2109
      %2113 = vmatprep.subr.mxu0 0.0
      %2114 = vmatpush1.xpose.msra.mxu0 0.0
      %2115 = vmatprep.subr.mxu0 0.0
      %2116 = vmatpush1.xpose.msra.mxu0 0.0
      %2117 = vmatprep.subr.mxu0 0.0
      %2118 = vmatpush1.xpose.msra.mxu0 0.0
      %2119 = vmatprep.subr.mxu0 0.0
      %2120 = vmatpush1.xpose.msra.mxu0 0.0
      %2121 = vmatprep.subr.mxu0 0.0
      %2122 = vmatpush1.xpose.msra.mxu0 0.0
      %2123 = vmatprep.subr.mxu0 0.0
      %2124 = vmatpush1.xpose.msra.mxu0 0.0
      %2125 = vmatprep.subr.mxu0 0.0
      %2126 = vmatpush1.xpose.msra.mxu0 0.0
      %2127 = vmatprep.subr.mxu0 0.0
      %2128 = vmatpush1.xpose.msra.mxu0 0.0
      %2129 = vmatprep.subr.mxu0 0.0
      %2130 = vmatpush1.xpose.msra.mxu0 0.0
      %2131 = vmatprep.subr.mxu0 0.0
      %2132 = vmatpush1.xpose.msra.mxu0 0.0
      %2133 = vmatprep.subr.mxu0 0.0
      %2134 = vmatpush1.xpose.msra.mxu0 0.0
      %2135 = vmatprep.subr.mxu0 0.0
      %2136 = vmatpush1.xpose.msra.mxu0 0.0
      %2137 = vmatprep.subr.mxu0 0.0
      %2138 = vmatpush1.xpose.msra.mxu0 0.0
      %2139 = vmatprep.subr.mxu0 0.0
      %2140 = vmatpush1.xpose.msra.mxu0 0.0
      %2141 = vmatprep.subr.mxu0 0.0
      %2142 = vmatpush1.xpose.msra.mxu0 0.0
      %2143 = vmatprep.subr.mxu0 0.0
      %2144 = vmatpush1.xpose.msra.mxu0 0.0
      %2145 = vmatprep.subr.mxu0 0.0
      %2146 = vmatpush1.xpose.msra.mxu0 0.0
      %2147 = vmatprep.subr.mxu0 0.0
      %2148 = vmatpush1.xpose.msra.mxu0 0.0
      %2149 = vmatprep.subr.mxu0 0.0
      %2150 = vmatpush1.xpose.msra.mxu0 0.0
      %2151 = vmatprep.subr.mxu0 0.0
      %2152 = vmatpush1.xpose.msra.mxu0 0.0
      %2153 = vmatprep.subr.mxu0 0.0
      %2154 = vmatpush1.xpose.msra.mxu0 0.0
      %2155 = vmatprep.subr.mxu0 0.0
      %2156 = vmatpush1.xpose.msra.mxu0 0.0
      %2157 = vmatprep.subr.mxu0 0.0
      %2158 = vmatpush1.xpose.msra.mxu0 0.0
      %2159 = vmatprep.subr.mxu0 0.0
      %2160 = vmatpush1.xpose.msra.mxu0 0.0
      %2161 = vmatprep.subr.mxu0 0.0
      %2162 = vmatpush1.xpose.msra.mxu0 0.0
      %2163 = vmatprep.subr.mxu0 0.0
      %2164 = vmatpush1.xpose.msra.mxu0 0.0
      %2165 = vmatprep.subr.mxu0 0.0
      %2166 = vmatpush1.xpose.msra.mxu0 0.0
      %2167 = vmatprep.subr.mxu0 0.0
      %2168 = vmatpush1.xpose.msra.mxu0 0.0
      %2169 = vmatprep.subr.mxu0 0.0
      %2170 = vmatpush1.xpose.msra.mxu0 0.0
      %2171 = vmatprep.subr.mxu0 0.0
      %2172 = vmatpush1.xpose.msra.mxu0 0.0
      %2173 = vmatprep.subr.mxu0 0.0
      %2174 = vmatpush1.xpose.msra.mxu0 0.0
      %2175 = vmatprep.mubr.f32.mxu0 0.0
      %2176 = vmatmul.mubr.f32.gmra.mrb[0].mxu0 %v2106
      %v2177 = vpop.f32.mrb[0].mxu0
      %v2178 = vadd.f32 0.0, %v2177
      %v2179 = vpop.f32.mrb[0].mxu0
      %2180 = vdwg.mxu0
      %v2181 = vsel %vm797, %v2178, -inf
      %2182 = vmax.xlane.f32.xlu0 %v2181
      %v2183 = vpop.xlane.xlu0 %2182
      %v2184 = vsub.f32 %v2178, %v2183
      %v2185 = vmul.f32 %v2184, 1.442695
      %v2186 = vpow.pop %v2185
      %v2187 = vsel %vm797, %v2186, 0.0
      %2188 = vadd.xlane.f32.xlu0 %v2187
      %v2189 = vpop.xlane.xlu0 %2188
      %v2190 = vrcp.pop %v2189
      %v2191 = vmul.f32 %v2186, %v2190
      %v2193 = vsel %vm797, %v2191, 0
      %2195 = vmatprep.subr.mxu0 0.0
      %2196 = vmatpush1.msra.mxu0 %v2102
      %2197 = vmatprep.subr.mxu0 0.0
      %2198 = vmatpush1.msra.mxu0 0.0
      %2199 = vmatprep.subr.mxu0 0.0
      %2200 = vmatpush1.msra.mxu0 0.0
      %2201 = vmatprep.subr.mxu0 0.0
      %2202 = vmatpush1.msra.mxu0 0.0
      %2203 = vmatprep.subr.mxu0 0.0
      %2204 = vmatpush1.msra.mxu0 0.0
      %2205 = vmatprep.subr.mxu0 0.0
      %2206 = vmatpush1.msra.mxu0 0.0
      %2207 = vmatprep.subr.mxu0 0.0
      %2208 = vmatpush1.msra.mxu0 0.0
      %2209 = vmatprep.subr.mxu0 0.0
      %2210 = vmatpush1.msra.mxu0 0.0
      %2211 = vmatprep.subr.mxu0 0.0
      %2212 = vmatpush1.msra.mxu0 0.0
      %2213 = vmatprep.subr.mxu0 0.0
      %2214 = vmatpush1.msra.mxu0 0.0
      %2215 = vmatprep.subr.mxu0 0.0
      %2216 = vmatpush1.msra.mxu0 0.0
      %2217 = vmatprep.subr.mxu0 0.0
      %2218 = vmatpush1.msra.mxu0 0.0
      %2219 = vmatprep.subr.mxu0 0.0
      %2220 = vmatpush1.msra.mxu0 0.0
      %2221 = vmatprep.subr.mxu0 0.0
      %2222 = vmatpush1.msra.mxu0 0.0
      %2223 = vmatprep.subr.mxu0 0.0
      %2224 = vmatpush1.msra.mxu0 0.0
      %2225 = vmatprep.subr.mxu0 0.0
      %2226 = vmatpush1.msra.mxu0 0.0
      %2227 = vmatprep.subr.mxu0 0.0
      %2228 = vmatpush1.msra.mxu0 0.0
      %2229 = vmatprep.subr.mxu0 0.0
      %2230 = vmatpush1.msra.mxu0 0.0
      %2231 = vmatprep.subr.mxu0 0.0
      %2232 = vmatpush1.msra.mxu0 0.0
      %2233 = vmatprep.subr.mxu0 0.0
      %2234 = vmatpush1.msra.mxu0 0.0
      %2235 = vmatprep.subr.mxu0 0.0
      %2236 = vmatpush1.msra.mxu0 0.0
      %2237 = vmatprep.subr.mxu0 0.0
      %2238 = vmatpush1.msra.mxu0 0.0
      %2239 = vmatprep.subr.mxu0 0.0
      %2240 = vmatpush1.msra.mxu0 0.0
      %2241 = vmatprep.subr.mxu0 0.0
      %2242 = vmatpush1.msra.mxu0 0.0
      %2243 = vmatprep.subr.mxu0 0.0
      %2244 = vmatpush1.msra.mxu0 0.0
      %2245 = vmatprep.subr.mxu0 0.0
      %2246 = vmatpush1.msra.mxu0 0.0
      %2247 = vmatprep.subr.mxu0 0.0
      %2248 = vmatpush1.msra.mxu0 0.0
      %2249 = vmatprep.subr.mxu0 0.0
      %2250 = vmatpush1.msra.mxu0 0.0
      %2251 = vmatprep.subr.mxu0 0.0
      %2252 = vmatpush1.msra.mxu0 0.0
      %2253 = vmatprep.subr.mxu0 0.0
      %2254 = vmatpush1.msra.mxu0 0.0
      %2255 = vmatprep.subr.mxu0 0.0
      %2256 = vmatpush1.msra.mxu0 0.0
      %2257 = vmatprep.subr.mxu0 0.0
      %2258 = vmatpush1.msra.mxu0 0.0
      %2259 = vmatprep.mubr.f32.mxu0 0.0
      %2260 = vmatmul.mubr.f32.gmra.mrb[0].mxu0 %v2193
      %v2261 = vpop.f32.mrb[0].mxu0
      %v2262 = vadd.f32 0.0, %v2261
      %v2263 = vpop.f32.mrb[0].mxu0
      %2264 = vdwg.mxu0
      %s2265 = scalar_lea.vmem %s6, 48
      %v2266 = vld [vmem:[%s2265] sm:$0xff]
      %v2267 = vld [vmem:[%s2265 + $0x8] sm:$0xff]
      %v2269 = vsel %vm720, %v2262, 0
      %2271 = vmatprep.subr.mxu0 0.0
      %2272 = vmatpush1.msra.mxu0 %v2266
      %2273 = vmatprep.subr.mxu0 0.0
      %2274 = vmatpush1.msra.mxu0 %v2267
      %2275 = vmatprep.subr.mxu0 0.0
      %2276 = vmatpush1.msra.mxu0 0.0
      %2277 = vmatprep.subr.mxu0 0.0
      %2278 = vmatpush1.msra.mxu0 0.0
      %2279 = vmatprep.subr.mxu0 0.0
      %2280 = vmatpush1.msra.mxu0 0.0
      %2281 = vmatprep.subr.mxu0 0.0
      %2282 = vmatpush1.msra.mxu0 0.0
      %2283 = vmatprep.subr.mxu0 0.0
      %2284 = vmatpush1.msra.mxu0 0.0
      %2285 = vmatprep.subr.mxu0 0.0
      %2286 = vmatpush1.msra.mxu0 0.0
      %2287 = vmatprep.subr.mxu0 0.0
      %2288 = vmatpush1.msra.mxu0 0.0
      %2289 = vmatprep.subr.mxu0 0.0
      %2290 = vmatpush1.msra.mxu0 0.0
      %2291 = vmatprep.subr.mxu0 0.0
      %2292 = vmatpush1.msra.mxu0 0.0
      %2293 = vmatprep.subr.mxu0 0.0
      %2294 = vmatpush1.msra.mxu0 0.0
      %2295 = vmatprep.subr.mxu0 0.0
      %2296 = vmatpush1.msra.mxu0 0.0
      %2297 = vmatprep.subr.mxu0 0.0
      %2298 = vmatpush1.msra.mxu0 0.0
      %2299 = vmatprep.subr.mxu0 0.0
      %2300 = vmatpush1.msra.mxu0 0.0
      %2301 = vmatprep.subr.mxu0 0.0
      %2302 = vmatpush1.msra.mxu0 0.0
      %2303 = vmatprep.subr.mxu0 0.0
      %2304 = vmatpush1.msra.mxu0 0.0
      %2305 = vmatprep.subr.mxu0 0.0
      %2306 = vmatpush1.msra.mxu0 0.0
      %2307 = vmatprep.subr.mxu0 0.0
      %2308 = vmatpush1.msra.mxu0 0.0
      %2309 = vmatprep.subr.mxu0 0.0
      %2310 = vmatpush1.msra.mxu0 0.0
      %2311 = vmatprep.subr.mxu0 0.0
      %2312 = vmatpush1.msra.mxu0 0.0
      %2313 = vmatprep.subr.mxu0 0.0
      %2314 = vmatpush1.msra.mxu0 0.0
      %2315 = vmatprep.subr.mxu0 0.0
      %2316 = vmatpush1.msra.mxu0 0.0
      %2317 = vmatprep.subr.mxu0 0.0
      %2318 = vmatpush1.msra.mxu0 0.0
      %2319 = vmatprep.subr.mxu0 0.0
      %2320 = vmatpush1.msra.mxu0 0.0
      %2321 = vmatprep.subr.mxu0 0.0
      %2322 = vmatpush1.msra.mxu0 0.0
      %2323 = vmatprep.subr.mxu0 0.0
      %2324 = vmatpush1.msra.mxu0 0.0
      %2325 = vmatprep.subr.mxu0 0.0
      %2326 = vmatpush1.msra.mxu0 0.0
      %2327 = vmatprep.subr.mxu0 0.0
      %2328 = vmatpush1.msra.mxu0 0.0
      %2329 = vmatprep.subr.mxu0 0.0
      %2330 = vmatpush1.msra.mxu0 0.0
      %2331 = vmatprep.subr.mxu0 0.0
      %2332 = vmatpush1.msra.mxu0 0.0
      %2333 = vmatprep.subr.mxu0 0.0
      %2334 = vmatpush1.msra.mxu0 0.0
      %2335 = vmatprep.mubr.f32.mxu0 0.0
      %2336 = vmatmul.mubr.f32.gmra.mrb[0].mxu0 %v2269
      %v2337 = vpop.f32.mrb[0].mxu0
      %v2338 = vadd.f32 0.0, %v2337
      %v2339 = vpop.f32.mrb[0].mxu0
      %2340 = vdwg.mxu0
      %v2341 = vadd.f32 %v1879, %v2338
      %v2342 = vld [vmem:[%s7] sm:$0x1]
      %v2344 = vlaneseq
      %v2345 = vshrl.u32 %v2344, 7
      %v2346 = vsub.s32 0, %v2345
      %v2347 = vrot.slane %v2342, %v2346
      %v2349 = vadd.f32 %v2341, %v2347
      %v2350 = vadd.f32 %v2349, %v463
      %v2351 = vld [vmem:[%s8] sm:$0x1]
      %v2352 = vld [vmem:[%s9] sm:$0x1]
      %v2353 = vsel %vm466, %v2350, 0.0
      %2354 = vadd.xlane.f32.xlu0 %v2353
      %v2355 = vpop.xlane.xlu0 %2354
      %v2356 = vmul.f32 %v2355, %v470
      %v2357 = vsub.f32 %v2350, %v2356
      %v2358 = vmul.f32 %v2357, %v2357
      %v2359 = vsel %vm466, %v2358, 0.0
      %2360 = vadd.xlane.f32.xlu0 %v2359
      %v2361 = vpop.xlane.xlu0 %2360
      %v2362 = vmul.f32 %v2361, %v470
      %v2363 = vadd.f32 %v2362, 1e-05
      %v2364 = vrsqrt.pop %v2363
      %v2365 = vmul.f32 %v2357, %v2364
      %v2367 = vlaneseq
      %v2368 = vshrl.u32 %v2367, 7
      %v2369 = vsub.s32 0, %v2368
      %v2370 = vrot.slane %v2351, %v2369
      %v2372 = vmul.f32 %v2365, %v2370
      %v2374 = vlaneseq
      %v2375 = vshrl.u32 %v2374, 7
      %v2376 = vsub.s32 0, %v2375
      %v2377 = vrot.slane %v2352, %v2376
      %v2379 = vadd.f32 %v2372, %v2377
      %v2380 = vld [vmem:[%s10] sm:$0xff]
      %v2381 = vld [vmem:[%s10 + $0x8] sm:$0xff]
      %v2382 = vld [vmem:[%s10 + $0x10] sm:$0xff]
      %v2383 = vld [vmem:[%s10 + $0x18] sm:$0xff]
      %v2384 = vld [vmem:[%s11] sm:$0x1]
      %v2386 = vlaneseq
      %v2387 = vshrl.u32 %v2386, 7
      %v2388 = vsub.s32 0, %v2387
      %v2389 = vrot.slane %v2384, %v2388
      %v2392 = vsel %vm466, %v2379, 0
      %2394 = vmatprep.subr.mxu0 0.0
      %2395 = vmatpush1.msra.mxu0 %v2380
      %2396 = vmatprep.subr.mxu0 0.0
      %2397 = vmatpush1.msra.mxu0 %v2381
      %2398 = vmatprep.subr.mxu0 0.0
      %2399 = vmatpush1.msra.mxu0 %v2382
      %2400 = vmatprep.subr.mxu0 0.0
      %2401 = vmatpush1.msra.mxu0 %v2383
      %2402 = vmatprep.subr.mxu0 0.0
      %2403 = vmatpush1.msra.mxu0 0.0
      %2404 = vmatprep.subr.mxu0 0.0
      %2405 = vmatpush1.msra.mxu0 0.0
      %2406 = vmatprep.subr.mxu0 0.0
      %2407 = vmatpush1.msra.mxu0 0.0
      %2408 = vmatprep.subr.mxu0 0.0
      %2409 = vmatpush1.msra.mxu0 0.0
      %2410 = vmatprep.subr.mxu0 0.0
      %2411 = vmatpush1.msra.mxu0 0.0
      %2412 = vmatprep.subr.mxu0 0.0
      %2413 = vmatpush1.msra.mxu0 0.0
      %2414 = vmatprep.subr.mxu0 0.0
      %2415 = vmatpush1.msra.mxu0 0.0
      %2416 = vmatprep.subr.mxu0 0.0
      %2417 = vmatpush1.msra.mxu0 0.0
      %2418 = vmatprep.subr.mxu0 0.0
      %2419 = vmatpush1.msra.mxu0 0.0
      %2420 = vmatprep.subr.mxu0 0.0
      %2421 = vmatpush1.msra.mxu0 0.0
      %2422 = vmatprep.subr.mxu0 0.0
      %2423 = vmatpush1.msra.mxu0 0.0
      %2424 = vmatprep.subr.mxu0 0.0
      %2425 = vmatpush1.msra.mxu0 0.0
      %2426 = vmatprep.subr.mxu0 0.0
      %2427 = vmatpush1.msra.mxu0 0.0
      %2428 = vmatprep.subr.mxu0 0.0
      %2429 = vmatpush1.msra.mxu0 0.0
      %2430 = vmatprep.subr.mxu0 0.0
      %2431 = vmatpush1.msra.mxu0 0.0
      %2432 = vmatprep.subr.mxu0 0.0
      %2433 = vmatpush1.msra.mxu0 0.0
      %2434 = vmatprep.subr.mxu0 0.0
      %2435 = vmatpush1.msra.mxu0 0.0
      %2436 = vmatprep.subr.mxu0 0.0
      %2437 = vmatpush1.msra.mxu0 0.0
      %2438 = vmatprep.subr.mxu0 0.0
      %2439 = vmatpush1.msra.mxu0 0.0
      %2440 = vmatprep.subr.mxu0 0.0
      %2441 = vmatpush1.msra.mxu0 0.0
      %2442 = vmatprep.subr.mxu0 0.0
      %2443 = vmatpush1.msra.mxu0 0.0
      %2444 = vmatprep.subr.mxu0 0.0
      %2445 = vmatpush1.msra.mxu0 0.0
      %2446 = vmatprep.subr.mxu0 0.0
      %2447 = vmatpush1.msra.mxu0 0.0
      %2448 = vmatprep.subr.mxu0 0.0
      %2449 = vmatpush1.msra.mxu0 0.0
      %2450 = vmatprep.subr.mxu0 0.0
      %2451 = vmatpush1.msra.mxu0 0.0
      %2452 = vmatprep.subr.mxu0 0.0
      %2453 = vmatpush1.msra.mxu0 0.0
      %2454 = vmatprep.subr.mxu0 0.0
      %2455 = vmatpush1.msra.mxu0 0.0
      %2456 = vmatprep.subr.mxu0 0.0
      %2457 = vmatpush1.msra.mxu0 0.0
      %2458 = vmatprep.mubr.f32.mxu0 0.0
      %2459 = vmatmul.mubr.f32.gmra.mrb[0].mxu0 %v2392
      %v2460 = vpop.f32.mrb[0].mxu0
      %v2461 = vadd.f32 %v2389, %v2460
      %v2462 = vpop.f32.mrb[0].mxu0
      %2463 = vdwg.mxu0
      %v2464 = vmul.f32 %v2461, 0.5
      %v2465 = vmul.f32 %v2461, 0.70710677
      %vm2466 = vcmp.ge.f32.partialorder %v2465, 0.0
      %v2467 = vsel %vm2466, 1.0, -1.0
      %v2468 = vand.u32 2147483647, %v2465
      %v2469 = vmul.f32 %v2468, 0.3275911
      %v2470 = vadd.f32 %v2469, 1.0
      %v2471 = vrcp.pop %v2470
      %v2472 = vmul.f32 1.0, %v2471
      %v2473 = vmul.f32 %v2472, 1.0614054
      %v2474 = vadd.f32 %v2473, -1.4531521
      %v2475 = vmul.f32 %v2474, %v2472
      %v2476 = vadd.f32 %v2475, 1.4214138
      %v2477 = vmul.f32 %v2476, %v2472
      %v2478 = vadd.f32 %v2477, -0.28449672
      %v2479 = vmul.f32 %v2478, %v2472
      %v2480 = vadd.f32 %v2479, 0.2548296
      %v2481 = vmul.f32 %v2480, %v2472
      %v2482 = vsub.f32 0.0, %v2468
      %v2483 = vmul.f32 %v2482, %v2468
      %v2484 = vmul.f32 %v2483, 1.442695
      %v2485 = vpow.pop %v2484
      %v2486 = vmul.f32 %v2481, %v2485
      %v2487 = vsub.f32 1.0, %v2486
      %v2488 = vmul.f32 %v2467, %v2487
      %v2489 = vadd.f32 %v2488, 1.0
      %v2490 = vmul.f32 %v2464, %v2489
      %v2491 = vld [vmem:[%s12] sm:$0xff]
      %v2492 = vld [vmem:[%s12 + $0x8] sm:$0xff]
      %v2493 = vld [vmem:[%s12 + $0x10] sm:$0xff]
      %v2494 = vld [vmem:[%s12 + $0x18] sm:$0xff]
      %v2495 = vld [vmem:[%s12 + $0x20] sm:$0xff]
      %v2496 = vld [vmem:[%s12 + $0x28] sm:$0xff]
      %v2497 = vld [vmem:[%s12 + $0x30] sm:$0xff]
      %v2498 = vld [vmem:[%s12 + $0x38] sm:$0xff]
      %v2499 = vld [vmem:[%s13] sm:$0x1]
      %v2501 = vlaneseq
      %v2502 = vshrl.u32 %v2501, 7
      %v2503 = vsub.s32 0, %v2502
      %v2504 = vrot.slane %v2499, %v2503
      %vm2506 = vcmask 523264
      %v2508 = vsel %vm2506, %v2490, 0
      %2510 = vmatprep.subr.mxu0 0.0
      %2511 = vmatpush1.msra.mxu0 %v2491
      %2512 = vmatprep.subr.mxu0 0.0
      %2513 = vmatpush1.msra.mxu0 %v2492
      %2514 = vmatprep.subr.mxu0 0.0
      %2515 = vmatpush1.msra.mxu0 %v2493
      %2516 = vmatprep.subr.mxu0 0.0
      %2517 = vmatpush1.msra.mxu0 %v2494
      %2518 = vmatprep.subr.mxu0 0.0
      %2519 = vmatpush1.msra.mxu0 %v2495
      %2520 = vmatprep.subr.mxu0 0.0
      %2521 = vmatpush1.msra.mxu0 %v2496
      %2522 = vmatprep.subr.mxu0 0.0
      %2523 = vmatpush1.msra.mxu0 %v2497
      %2524 = vmatprep.subr.mxu0 0.0
      %2525 = vmatpush1.msra.mxu0 %v2498
      %2526 = vmatprep.subr.mxu0 0.0
      %2527 = vmatpush1.msra.mxu0 0.0
      %2528 = vmatprep.subr.mxu0 0.0
      %2529 = vmatpush1.msra.mxu0 0.0
      %2530 = vmatprep.subr.mxu0 0.0
      %2531 = vmatpush1.msra.mxu0 0.0
      %2532 = vmatprep.subr.mxu0 0.0
      %2533 = vmatpush1.msra.mxu0 0.0
      %2534 = vmatprep.subr.mxu0 0.0
      %2535 = vmatpush1.msra.mxu0 0.0
      %2536 = vmatprep.subr.mxu0 0.0
      %2537 = vmatpush1.msra.mxu0 0.0
      %2538 = vmatprep.subr.mxu0 0.0
      %2539 = vmatpush1.msra.mxu0 0.0
      %2540 = vmatprep.subr.mxu0 0.0
      %2541 = vmatpush1.msra.mxu0 0.0
      %2542 = vmatprep.subr.mxu0 0.0
      %2543 = vmatpush1.msra.mxu0 0.0
      %2544 = vmatprep.subr.mxu0 0.0
      %2545 = vmatpush1.msra.mxu0 0.0
      %2546 = vmatprep.subr.mxu0 0.0
      %2547 = vmatpush1.msra.mxu0 0.0
      %2548 = vmatprep.subr.mxu0 0.0
      %2549 = vmatpush1.msra.mxu0 0.0
      %2550 = vmatprep.subr.mxu0 0.0
      %2551 = vmatpush1.msra.mxu0 0.0
      %2552 = vmatprep.subr.mxu0 0.0
      %2553 = vmatpush1.msra.mxu0 0.0
      %2554 = vmatprep.subr.mxu0 0.0
      %2555 = vmatpush1.msra.mxu0 0.0
      %2556 = vmatprep.subr.mxu0 0.0
      %2557 = vmatpush1.msra.mxu0 0.0
      %2558 = vmatprep.subr.mxu0 0.0
      %2559 = vmatpush1.msra.mxu0 0.0
      %2560 = vmatprep.subr.mxu0 0.0
      %2561 = vmatpush1.msra.mxu0 0.0
      %2562 = vmatprep.subr.mxu0 0.0
      %2563 = vmatpush1.msra.mxu0 0.0
      %2564 = vmatprep.subr.mxu0 0.0
      %2565 = vmatpush1.msra.mxu0 0.0
      %2566 = vmatprep.subr.mxu0 0.0
      %2567 = vmatpush1.msra.mxu0 0.0
      %2568 = vmatprep.subr.mxu0 0.0
      %2569 = vmatpush1.msra.mxu0 0.0
      %2570 = vmatprep.subr.mxu0 0.0
      %2571 = vmatpush1.msra.mxu0 0.0
      %2572 = vmatprep.subr.mxu0 0.0
      %2573 = vmatpush1.msra.mxu0 0.0
      %2574 = vmatprep.mubr.f32.mxu0 0.0
      %2575 = vmatmul.mubr.f32.gmra.mrb[0].mxu0 %v2508
      %v2576 = vpop.f32.mrb[0].mxu0
      %v2577 = vadd.f32 %v2504, %v2576
      %v2578 = vpop.f32.mrb[0].mxu0
      %2579 = vdwg.mxu0
      %v2580 = vadd.f32 %v2577, %v2350
      %2581 = vst.msk [vmem:[%s462] sm:$0xff] %vm466, %v2580
      %p2582 = scmp.lt.s32.totalorder %s25, 1
      %s2583 = scalar_select %p2582, %s25, 1
      %s2584 = smul.addr %s2583, 8
      %s2585 = scalar_lea.vmem %s14, %s2584
      // Predicated region
      $region77: #{transformer_forward.2} parent=75 // pred_check
        %p2586 = pneg %p342
      $region78: #{transformer_forward.2} parent=75 // pred_check_branch
        %2588 = sbr.rel (%p2586) target = $region80
      $region79: #{transformer_forward.2} parent=75 // pred_region
        _
      $region80: #{transformer_forward.2} parent=75 // pred_fallthru
        _
    $region76: #{transformer_forward.2} parent=5 // pred_fallthru
      _
    %p2589 = scmp.le.s32.totalorder 2, %s20
    // Predicated region
    $region81: #{transformer_forward.2} parent=5 // pred_check
      %p2590 = pneg %p2589
    $region82: #{transformer_forward.2} parent=5 // pred_check_branch
      %2592 = sbr.rel (%p2590) target = $region84
    $region83: #{transformer_forward.2} parent=5 // pred_region
      %s2593 = ssub.s32 %s20, 2
      // Predicated region
      $region85: #{transformer_forward.2} parent=83 // pred_check
        %p2594 = pneg %p348
      $region86: #{transformer_forward.2} parent=83 // pred_check_branch
        %2596 = sbr.rel (%p2594) target = $region88
      $region87: #{transformer_forward.2} parent=83 // pred_region
        %p2597 = scmp.lt.s32.totalorder %s26, 1
        %s2598 = scalar_select %p2597, %s26, 1
        %s2599 = smul.addr %s2598, 8
        %s2600 = scalar_lea.vmem %s14, %s2599
      $region88: #{transformer_forward.2} parent=83 // pred_fallthru
        _
    $region84: #{transformer_forward.2} parent=5 // pred_fallthru
      _
  $region6: #{transformer_forward.2} parent=0 // loop_footer
    %s24 = sadd.s32 1, %s20
  $region7: #{transformer_forward.2} parent=0 // loop_footer_branch
    %19 = sbr.rel target = $region3
  $region8: #{transformer_forward.2} parent=0 // loop_exit
    _

// kernel: transformer_forward.3
$region0: #{transformer_forward.3}
  #allocation0 [shape = 'u32[]', space=smem, size = 0x4, offset = 0x4, fixed_abs, tag = 'smem constant byte address 0x4 - core index']
  #allocation1 [shape = 'u32[144,128]{1,0:T(1,128)}', space=vmem, size = 0x12000, scoped, tag = 'internal scratch']
  %s0 = inlined_call_operand.vmem [shape: f32[16,32], index: 0, kind: input, shape index: {}]
  %s1 = inlined_call_operand.vmem [shape: f32[1,32], index: 1, kind: input, shape index: {}]
  %s2 = inlined_call_operand.vmem [shape: f32[1,32], index: 2, kind: input, shape index: {}]
  %s3 = inlined_call_operand.vmem [shape: f32[4,32,16], index: 3, kind: input, shape index: {}]
  %s4 = inlined_call_operand.vmem [shape: f32[4,32,16], index: 4, kind: input, shape index: {}]
  %s5 = inlined_call_operand.vmem [shape: f32[4,32,16], index: 5, kind: input, shape index: {}]
  %s6 = inlined_call_operand.vmem [shape: f32[4,16,32], index: 6, kind: input, shape index: {}]
  %s7 = inlined_call_operand.vmem [shape: f32[1,32], index: 7, kind: input, shape index: {}]
  %s8 = inlined_call_operand.vmem [shape: f32[1,32], index: 8, kind: input, shape index: {}]
  %s9 = inlined_call_operand.vmem [shape: f32[1,32], index: 9, kind: input, shape index: {}]
  %s10 = inlined_call_operand.vmem [shape: f32[32,64], index: 10, kind: input, shape index: {}]
  %s11 = inlined_call_operand.vmem [shape: f32[1,64], index: 11, kind: input, shape index: {}]
  %s12 = inlined_call_operand.vmem [shape: f32[64,32], index: 12, kind: input, shape index: {}]
  %s13 = inlined_call_operand.vmem [shape: f32[1,32], index: 13, kind: input, shape index: {}]
  %s14 = inlined_call_operand.hbm [shape: f32[16,32], index: 14, kind: output, shape index: {}]
  %s15 = sld [smem:[#allocation0]]
  $region89: #{transformer_forward.3} parent=0
    _
  %s17 = ssub.s32 1, %s15
  %s18 = scalar_select 0, %s17, %s15
  $region1: #{transformer_forward.3} parent=0
    #allocation2 [shape = 'u8[8192]{0}', space=vmem, size = 0x2000, scoped, tag = 'output window, operand 0']
    #allocation3 [shape = 's32[2]{0}', space=sflag, size = 0x8, scoped, tag = 'scoped memory for transformer_forward.3']
    %19 = vsyncpa [#allocation3], 0
    %s20 = scalar_lea.sflag [#allocation3], 1
    %21 = vsyncpa %s20, 0
    loop: start=0, step=1, limit=4
    $region2: #{transformer_forward.3} parent=1 // loop_pre_header
      _
    $region3: #{transformer_forward.3} parent=1 // loop_header
      %s23 = sphi 0, %s27
      %p24 = scmp.ge.s32.totalorder %s23, 4
      %s33 = sphi 0, %s35
      %s36 = sphi 0, %s33
      %s37 = sphi 0, %s36
      %s53 = sphi 0, %s37
      %s57 = sphi 0, %s57
      %s59 = sphi 0, %s57
      %s60 = sphi 0, %s59
      %s74 = sphi 0, %s60
      %s78 = sphi 0, %s78
      %s80 = sphi 0, %s78
      %s81 = sphi 0, %s80
      %s95 = sphi 0, %s81
      %s99 = sphi 0, %s99
      %s101 = sphi 0, %s99
      %s102 = sphi 0, %s101
      %s116 = sphi 0, %s102
      %s120 = sphi 0, %s120
      %s122 = sphi 0, %s120
      %s123 = sphi 0, %s122
      %s137 = sphi 0, %s123
      %s141 = sphi 0, %s141
      %s143 = sphi 0, %s141
      %s144 = sphi 0, %s143
      %s158 = sphi 0, %s144
      %s162 = sphi 0, %s162
      %s164 = sphi 0, %s162
      %s165 = sphi 0, %s164
      %s179 = sphi 0, %s165
      %s183 = sphi 0, %s183
      %s185 = sphi 0, %s183
      %s186 = sphi 0, %s185
      %s200 = sphi 0, %s186
      %s204 = sphi 0, %s204
      %s206 = sphi 0, %s204
      %s207 = sphi 0, %s206
      %s221 = sphi 0, %s207
      %s225 = sphi 0, %s225
      %s227 = sphi 0, %s225
      %s228 = sphi 0, %s227
      %s242 = sphi 0, %s228
      %s246 = sphi 0, %s246
      %s248 = sphi 0, %s246
      %s249 = sphi 0, %s248
      %s263 = sphi 0, %s249
      %s267 = sphi 0, %s267
      %s269 = sphi 0, %s267
      %s270 = sphi 0, %s269
      %s284 = sphi 0, %s270
      %s288 = sphi 0, %s288
      %s290 = sphi 0, %s288
      %s291 = sphi 0, %s290
      %s305 = sphi 0, %s291
      %s309 = sphi 0, %s309
      %s311 = sphi 0, %s309
      %s312 = sphi 0, %s311
      %s326 = sphi 0, %s312
      %s332 = sphi 0, %s334
      %s335 = sphi 0, %s332
      %s336 = sphi 0, %s335
      %s352 = sphi 0, %s336
    $region4: #{transformer_forward.3} parent=1 // loop_header_branch
      %26 = sbr.rel (%p24) target = $region8
    $region5: #{transformer_forward.3} parent=1 // loop_body
      %s28 = ssub.s32 %s23, 1
      %s29 = ssub.s32 %s23, 2
      %s30 = sadd.s32 %s23, 1
      %s31 = ssub.s32 %s23, %s30
      %p32 = scmp.eq.s32.totalorder %s31, 0
      %s34 = sadd.s32 %s33, 1
      %s35 = scalar_select %p32, %s33, %s34
      %p38 = pneg %p32
      %p39 = scmp.eq.s32.totalorder %s23, 1
      %p40 = por %p38, %p39
      %p41 = scmp.ne.s32.totalorder %s33, %s36
      %p42 = scmp.eq.s32.totalorder %s23, 0
      %p43 = por %p41, %p42
      %p44 = scmp.ne.s32.totalorder %s33, %s36
      %p45 = scmp.eq.s32.totalorder %s28, 1
      %p46 = por %p44, %p45
      %p47 = scmp.ne.s32.totalorder %s36, %s37
      %p48 = scmp.eq.s32.totalorder %s28, 0
      %p49 = por %p47, %p48
      %p50 = scmp.ne.s32.totalorder %s36, %s37
      %p51 = scmp.eq.s32.totalorder %s29, 1
      %p52 = por %p50, %p51
      %p54 = scmp.ne.s32.totalorder %s37, %s53
      %p55 = scmp.eq.s32.totalorder %s29, 0
      %p56 = por %p54, %p55
      %s58 = sadd.s32 %s57, 1
      %p61 = scmp.eq.s32.totalorder %s23, 1
      %p62 = scmp.ne.s32.totalorder %s57, %s59
      %p63 = scmp.eq.s32.totalorder %s23, 0
      %p64 = por %p62, %p63
      %p65 = scmp.ne.s32.totalorder %s57, %s59
      %p66 = scmp.eq.s32.totalorder %s28, 1
      %p67 = por %p65, %p66
      %p68 = scmp.ne.s32.totalorder %s59, %s60
      %p69 = scmp.eq.s32.totalorder %s28, 0
      %p70 = por %p68, %p69
      %p71 = scmp.ne.s32.totalorder %s59, %s60
      %p72 = scmp.eq.s32.totalorder %s29, 1
      %p73 = por %p71, %p72
      %p75 = scmp.ne.s32.totalorder %s60, %s74
      %p76 = scmp.eq.s32.totalorder %s29, 0
      %p77 = por %p75, %p76
      %s79 = sadd.s32 %s78, 1
      %p82 = scmp.eq.s32.totalorder %s23, 1
      %p83 = scmp.ne.s32.totalorder %s78, %s80
      %p84 = scmp.eq.s32.totalorder %s23, 0
      %p85 = por %p83, %p84
      %p86 = scmp.ne.s32.totalorder %s78, %s80
      %p87 = scmp.eq.s32.totalorder %s28, 1
      %p88 = por %p86, %p87
      %p89 = scmp.ne.s32.totalorder %s80, %s81
      %p90 = scmp.eq.s32.totalorder %s28, 0
      %p91 = por %p89, %p90
      %p92 = scmp.ne.s32.totalorder %s80, %s81
      %p93 = scmp.eq.s32.totalorder %s29, 1
      %p94 = por %p92, %p93
      %p96 = scmp.ne.s32.totalorder %s81, %s95
      %p97 = scmp.eq.s32.totalorder %s29, 0
      %p98 = por %p96, %p97
      %s100 = sadd.s32 %s99, 1
      %p103 = scmp.eq.s32.totalorder %s23, 1
      %p104 = scmp.ne.s32.totalorder %s99, %s101
      %p105 = scmp.eq.s32.totalorder %s23, 0
      %p106 = por %p104, %p105
      %p107 = scmp.ne.s32.totalorder %s99, %s101
      %p108 = scmp.eq.s32.totalorder %s28, 1
      %p109 = por %p107, %p108
      %p110 = scmp.ne.s32.totalorder %s101, %s102
      %p111 = scmp.eq.s32.totalorder %s28, 0
      %p112 = por %p110, %p111
      %p113 = scmp.ne.s32.totalorder %s101, %s102
      %p114 = scmp.eq.s32.totalorder %s29, 1
      %p115 = por %p113, %p114
      %p117 = scmp.ne.s32.totalorder %s102, %s116
      %p118 = scmp.eq.s32.totalorder %s29, 0
      %p119 = por %p117, %p118
      %s121 = sadd.s32 %s120, 1
      %p124 = scmp.eq.s32.totalorder %s23, 1
      %p125 = scmp.ne.s32.totalorder %s120, %s122
      %p126 = scmp.eq.s32.totalorder %s23, 0
      %p127 = por %p125, %p126
      %p128 = scmp.ne.s32.totalorder %s120, %s122
      %p129 = scmp.eq.s32.totalorder %s28, 1
      %p130 = por %p128, %p129
      %p131 = scmp.ne.s32.totalorder %s122, %s123
      %p132 = scmp.eq.s32.totalorder %s28, 0
      %p133 = por %p131, %p132
      %p134 = scmp.ne.s32.totalorder %s122, %s123
      %p135 = scmp.eq.s32.totalorder %s29, 1
      %p136 = por %p134, %p135
      %p138 = scmp.ne.s32.totalorder %s123, %s137
      %p139 = scmp.eq.s32.totalorder %s29, 0
      %p140 = por %p138, %p139
      %s142 = sadd.s32 %s141, 1
      %p145 = scmp.eq.s32.totalorder %s23, 1
      %p146 = scmp.ne.s32.totalorder %s141, %s143
      %p147 = scmp.eq.s32.totalorder %s23, 0
      %p148 = por %p146, %p147
      %p149 = scmp.ne.s32.totalorder %s141, %s143
      %p150 = scmp.eq.s32.totalorder %s28, 1
      %p151 = por %p149, %p150
      %p152 = scmp.ne.s32.totalorder %s143, %s144
      %p153 = scmp.eq.s32.totalorder %s28, 0
      %p154 = por %p152, %p153
      %p155 = scmp.ne.s32.totalorder %s143, %s144
      %p156 = scmp.eq.s32.totalorder %s29, 1
      %p157 = por %p155, %p156
      %p159 = scmp.ne.s32.totalorder %s144, %s158
      %p160 = scmp.eq.s32.totalorder %s29, 0
      %p161 = por %p159, %p160
      %s163 = sadd.s32 %s162, 1
      %p166 = scmp.eq.s32.totalorder %s23, 1
      %p167 = scmp.ne.s32.totalorder %s162, %s164
      %p168 = scmp.eq.s32.totalorder %s23, 0
      %p169 = por %p167, %p168
      %p170 = scmp.ne.s32.totalorder %s162, %s164
      %p171 = scmp.eq.s32.totalorder %s28, 1
      %p172 = por %p170, %p171
      %p173 = scmp.ne.s32.totalorder %s164, %s165
      %p174 = scmp.eq.s32.totalorder %s28, 0
      %p175 = por %p173, %p174
      %p176 = scmp.ne.s32.totalorder %s164, %s165
      %p177 = scmp.eq.s32.totalorder %s29, 1
      %p178 = por %p176, %p177
      %p180 = scmp.ne.s32.totalorder %s165, %s179
      %p181 = scmp.eq.s32.totalorder %s29, 0
      %p182 = por %p180, %p181
      %s184 = sadd.s32 %s183, 1
      %p187 = scmp.eq.s32.totalorder %s23, 1
      %p188 = scmp.ne.s32.totalorder %s183, %s185
      %p189 = scmp.eq.s32.totalorder %s23, 0
      %p190 = por %p188, %p189
      %p191 = scmp.ne.s32.totalorder %s183, %s185
      %p192 = scmp.eq.s32.totalorder %s28, 1
      %p193 = por %p191, %p192
      %p194 = scmp.ne.s32.totalorder %s185, %s186
      %p195 = scmp.eq.s32.totalorder %s28, 0
      %p196 = por %p194, %p195
      %p197 = scmp.ne.s32.totalorder %s185, %s186
      %p198 = scmp.eq.s32.totalorder %s29, 1
      %p199 = por %p197, %p198
      %p201 = scmp.ne.s32.totalorder %s186, %s200
      %p202 = scmp.eq.s32.totalorder %s29, 0
      %p203 = por %p201, %p202
      %s205 = sadd.s32 %s204, 1
      %p208 = scmp.eq.s32.totalorder %s23, 1
      %p209 = scmp.ne.s32.totalorder %s204, %s206
      %p210 = scmp.eq.s32.totalorder %s23, 0
      %p211 = por %p209, %p210
      %p212 = scmp.ne.s32.totalorder %s204, %s206
      %p213 = scmp.eq.s32.totalorder %s28, 1
      %p214 = por %p212, %p213
      %p215 = scmp.ne.s32.totalorder %s206, %s207
      %p216 = scmp.eq.s32.totalorder %s28, 0
      %p217 = por %p215, %p216
      %p218 = scmp.ne.s32.totalorder %s206, %s207
      %p219 = scmp.eq.s32.totalorder %s29, 1
      %p220 = por %p218, %p219
      %p222 = scmp.ne.s32.totalorder %s207, %s221
      %p223 = scmp.eq.s32.totalorder %s29, 0
      %p224 = por %p222, %p223
      %s226 = sadd.s32 %s225, 1
      %p229 = scmp.eq.s32.totalorder %s23, 1
      %p230 = scmp.ne.s32.totalorder %s225, %s227
      %p231 = scmp.eq.s32.totalorder %s23, 0
      %p232 = por %p230, %p231
      %p233 = scmp.ne.s32.totalorder %s225, %s227
      %p234 = scmp.eq.s32.totalorder %s28, 1
      %p235 = por %p233, %p234
      %p236 = scmp.ne.s32.totalorder %s227, %s228
      %p237 = scmp.eq.s32.totalorder %s28, 0
      %p238 = por %p236, %p237
      %p239 = scmp.ne.s32.totalorder %s227, %s228
      %p240 = scmp.eq.s32.totalorder %s29, 1
      %p241 = por %p239, %p240
      %p243 = scmp.ne.s32.totalorder %s228, %s242
      %p244 = scmp.eq.s32.totalorder %s29, 0
      %p245 = por %p243, %p244
      %s247 = sadd.s32 %s246, 1
      %p250 = scmp.eq.s32.totalorder %s23, 1
      %p251 = scmp.ne.s32.totalorder %s246, %s248
      %p252 = scmp.eq.s32.totalorder %s23, 0
      %p253 = por %p251, %p252
      %p254 = scmp.ne.s32.totalorder %s246, %s248
      %p255 = scmp.eq.s32.totalorder %s28, 1
      %p256 = por %p254, %p255
      %p257 = scmp.ne.s32.totalorder %s248, %s249
      %p258 = scmp.eq.s32.totalorder %s28, 0
      %p259 = por %p257, %p258
      %p260 = scmp.ne.s32.totalorder %s248, %s249
      %p261 = scmp.eq.s32.totalorder %s29, 1
      %p262 = por %p260, %p261
      %p264 = scmp.ne.s32.totalorder %s249, %s263
      %p265 = scmp.eq.s32.totalorder %s29, 0
      %p266 = por %p264, %p265
      %s268 = sadd.s32 %s267, 1
      %p271 = scmp.eq.s32.totalorder %s23, 1
      %p272 = scmp.ne.s32.totalorder %s267, %s269
      %p273 = scmp.eq.s32.totalorder %s23, 0
      %p274 = por %p272, %p273
      %p275 = scmp.ne.s32.totalorder %s267, %s269
      %p276 = scmp.eq.s32.totalorder %s28, 1
      %p277 = por %p275, %p276
      %p278 = scmp.ne.s32.totalorder %s269, %s270
      %p279 = scmp.eq.s32.totalorder %s28, 0
      %p280 = por %p278, %p279
      %p281 = scmp.ne.s32.totalorder %s269, %s270
      %p282 = scmp.eq.s32.totalorder %s29, 1
      %p283 = por %p281, %p282
      %p285 = scmp.ne.s32.totalorder %s270, %s284
      %p286 = scmp.eq.s32.totalorder %s29, 0
      %p287 = por %p285, %p286
      %s289 = sadd.s32 %s288, 1
      %p292 = scmp.eq.s32.totalorder %s23, 1
      %p293 = scmp.ne.s32.totalorder %s288, %s290
      %p294 = scmp.eq.s32.totalorder %s23, 0
      %p295 = por %p293, %p294
      %p296 = scmp.ne.s32.totalorder %s288, %s290
      %p297 = scmp.eq.s32.totalorder %s28, 1
      %p298 = por %p296, %p297
      %p299 = scmp.ne.s32.totalorder %s290, %s291
      %p300 = scmp.eq.s32.totalorder %s28, 0
      %p301 = por %p299, %p300
      %p302 = scmp.ne.s32.totalorder %s290, %s291
      %p303 = scmp.eq.s32.totalorder %s29, 1
      %p304 = por %p302, %p303
      %p306 = scmp.ne.s32.totalorder %s291, %s305
      %p307 = scmp.eq.s32.totalorder %s29, 0
      %p308 = por %p306, %p307
      %s310 = sadd.s32 %s309, 1
      %p313 = scmp.eq.s32.totalorder %s23, 1
      %p314 = scmp.ne.s32.totalorder %s309, %s311
      %p315 = scmp.eq.s32.totalorder %s23, 0
      %p316 = por %p314, %p315
      %p317 = scmp.ne.s32.totalorder %s309, %s311
      %p318 = scmp.eq.s32.totalorder %s28, 1
      %p319 = por %p317, %p318
      %p320 = scmp.ne.s32.totalorder %s311, %s312
      %p321 = scmp.eq.s32.totalorder %s28, 0
      %p322 = por %p320, %p321
      %p323 = scmp.ne.s32.totalorder %s311, %s312
      %p324 = scmp.eq.s32.totalorder %s29, 1
      %p325 = por %p323, %p324
      %p327 = scmp.ne.s32.totalorder %s312, %s326
      %p328 = scmp.eq.s32.totalorder %s29, 0
      %p329 = por %p327, %p328
      %s330 = ssub.s32 %s23, %s30
      %p331 = scmp.eq.s32.totalorder %s330, 0
      %s333 = sadd.s32 %s332, 1
      %s334 = scalar_select %p331, %s332, %s333
      %p337 = pneg %p331
      %p338 = scmp.eq.s32.totalorder %s23, 1
      %p339 = por %p337, %p338
      %p340 = scmp.ne.s32.totalorder %s332, %s335
      %p341 = scmp.eq.s32.totalorder %s23, 0
      %p342 = por %p340, %p341
      %p343 = scmp.ne.s32.totalorder %s332, %s335
      %p344 = scmp.eq.s32.totalorder %s28, 1
      %p345 = por %p343, %p344
      %p346 = scmp.ne.s32.totalorder %s335, %s336
      %p347 = scmp.eq.s32.totalorder %s28, 0
      %p348 = por %p346, %p347
      %p349 = scmp.ne.s32.totalorder %s335, %s336
      %p350 = scmp.eq.s32.totalorder %s29, 1
      %p351 = por %p349, %p350
      %p353 = scmp.ne.s32.totalorder %s336, %s352
      %p354 = scmp.eq.s32.totalorder %s29, 0
      %p355 = por %p353, %p354
      %p356 = scmp.le.s32.totalorder 1, %s23
      %p357 = scmp.lt.s32.totalorder %s23, 3
      %p358 = pnand %p356, %p357
      %p359 = pneg %p358
      // Predicated region
      $region9: #{transformer_forward.3} parent=5 // pred_check
        _
      $region10: #{transformer_forward.3} parent=5 // pred_check_branch
        %361 = sbr.rel (%p358) target = $region12
      $region11: #{transformer_forward.3} parent=5 // pred_region
        %s362 = ssub.s32 %s23, 1
        // Predicated region
        $region13: #{transformer_forward.3} parent=11 // pred_check
          %p363 = pneg %p70
        $region14: #{transformer_forward.3} parent=11 // pred_check_branch
          %365 = sbr.rel (%p363) target = $region16
        $region15: #{transformer_forward.3} parent=11 // pred_region
          _
        $region16: #{transformer_forward.3} parent=11 // pred_fallthru
          _
        // Predicated region
        $region17: #{transformer_forward.3} parent=11 // pred_check
          %p366 = pneg %p91
        $region18: #{transformer_forward.3} parent=11 // pred_check_branch
          %368 = sbr.rel (%p366) target = $region20
        $region19: #{transformer_forward.3} parent=11 // pred_region
          _
        $region20: #{transformer_forward.3} parent=11 // pred_fallthru
          _
        // Predicated region
        $region21: #{transformer_forward.3} parent=11 // pred_check
          %p369 = pneg %p112
        $region22: #{transformer_forward.3} parent=11 // pred_check_branch
          %371 = sbr.rel (%p369) target = $region24
        $region23: #{transformer_forward.3} parent=11 // pred_region
          _
        $region24: #{transformer_forward.3} parent=11 // pred_fallthru
          _
        // Predicated region
        $region25: #{transformer_forward.3} parent=11 // pred_check
          %p372 = pneg %p133
        $region26: #{transformer_forward.3} parent=11 // pred_check_branch
          %374 = sbr.rel (%p372) target = $region28
        $region27: #{transformer_forward.3} parent=11 // pred_region
          _
        $region28: #{transformer_forward.3} parent=11 // pred_fallthru
          _
        // Predicated region
        $region29: #{transformer_forward.3} parent=11 // pred_check
          %p375 = pneg %p154
        $region30: #{transformer_forward.3} parent=11 // pred_check_branch
          %377 = sbr.rel (%p375) target = $region32
        $region31: #{transformer_forward.3} parent=11 // pred_region
          _
        $region32: #{transformer_forward.3} parent=11 // pred_fallthru
          _
        // Predicated region
        $region33: #{transformer_forward.3} parent=11 // pred_check
          %p378 = pneg %p175
        $region34: #{transformer_forward.3} parent=11 // pred_check_branch
          %380 = sbr.rel (%p378) target = $region36
        $region35: #{transformer_forward.3} parent=11 // pred_region
          _
        $region36: #{transformer_forward.3} parent=11 // pred_fallthru
          _
        // Predicated region
        $region37: #{transformer_forward.3} parent=11 // pred_check
          %p381 = pneg %p196
        $region38: #{transformer_forward.3} parent=11 // pred_check_branch
          %383 = sbr.rel (%p381) target = $region40
        $region39: #{transformer_forward.3} parent=11 // pred_region
          _
        $region40: #{transformer_forward.3} parent=11 // pred_fallthru
          _
        // Predicated region
        $region41: #{transformer_forward.3} parent=11 // pred_check
          %p384 = pneg %p217
        $region42: #{transformer_forward.3} parent=11 // pred_check_branch
          %386 = sbr.rel (%p384) target = $region44
        $region43: #{transformer_forward.3} parent=11 // pred_region
          _
        $region44: #{transformer_forward.3} parent=11 // pred_fallthru
          _
        // Predicated region
        $region45: #{transformer_forward.3} parent=11 // pred_check
          %p387 = pneg %p238
        $region46: #{transformer_forward.3} parent=11 // pred_check_branch
          %389 = sbr.rel (%p387) target = $region48
        $region47: #{transformer_forward.3} parent=11 // pred_region
          _
        $region48: #{transformer_forward.3} parent=11 // pred_fallthru
          _
        // Predicated region
        $region49: #{transformer_forward.3} parent=11 // pred_check
          %p390 = pneg %p259
        $region50: #{transformer_forward.3} parent=11 // pred_check_branch
          %392 = sbr.rel (%p390) target = $region52
        $region51: #{transformer_forward.3} parent=11 // pred_region
          _
        $region52: #{transformer_forward.3} parent=11 // pred_fallthru
          _
        // Predicated region
        $region53: #{transformer_forward.3} parent=11 // pred_check
          %p393 = pneg %p280
        $region54: #{transformer_forward.3} parent=11 // pred_check_branch
          %395 = sbr.rel (%p393) target = $region56
        $region55: #{transformer_forward.3} parent=11 // pred_region
          _
        $region56: #{transformer_forward.3} parent=11 // pred_fallthru
          _
        // Predicated region
        $region57: #{transformer_forward.3} parent=11 // pred_check
          %p396 = pneg %p301
        $region58: #{transformer_forward.3} parent=11 // pred_check_branch
          %398 = sbr.rel (%p396) target = $region60
        $region59: #{transformer_forward.3} parent=11 // pred_region
          _
        $region60: #{transformer_forward.3} parent=11 // pred_fallthru
          _
        // Predicated region
        $region61: #{transformer_forward.3} parent=11 // pred_check
          %p399 = pneg %p322
        $region62: #{transformer_forward.3} parent=11 // pred_check_branch
          %401 = sbr.rel (%p399) target = $region64
        $region63: #{transformer_forward.3} parent=11 // pred_region
          _
        $region64: #{transformer_forward.3} parent=11 // pred_fallthru
          _
      $region12: #{transformer_forward.3} parent=5 // pred_fallthru
        _
      %p402 = scmp.lt.s32.totalorder %s23, 2
      // Predicated region
      $region65: #{transformer_forward.3} parent=5 // pred_check
        %p403 = pneg %p402
      $region66: #{transformer_forward.3} parent=5 // pred_check_branch
        %405 = sbr.rel (%p403) target = $region68
      $region67: #{transformer_forward.3} parent=5 // pred_region
        // Predicated region
        $region69: #{transformer_forward.3} parent=67 // pred_check
          %p406 = pneg %p43
        $region70: #{transformer_forward.3} parent=67 // pred_check_branch
          %408 = sbr.rel (%p406) target = $region72
        $region71: #{transformer_forward.3} parent=67 // pred_region
          %p409 = scmp.lt.s32.totalorder %s23, 1
          %s410 = scalar_select %p409, %s23, 1
          %s411 = smul.addr %s410, 8
          %s412 = scalar_lea.vmem %s0, %s411
        $region72: #{transformer_forward.3} parent=67 // pred_fallthru
          _
      $region68: #{transformer_forward.3} parent=5 // pred_fallthru
        _
      %p413 = scmp.le.s32.totalorder 1, %s23
      %p414 = scmp.lt.s32.totalorder %s23, 3
      %p415 = pnand %p413, %p414
      %p416 = pneg %p415
      // Predicated region
      $region73: #{transformer_forward.3} parent=5 // pred_check
        _
      $region74: #{transformer_forward.3} parent=5 // pred_check_branch
        %418 = sbr.rel (%p415) target = $region76
      $region75: #{transformer_forward.3} parent=5 // pred_region
        %s419 = ssub.s32 %s23, 1
        %p420 = scmp.lt.s32.totalorder %s28, 1
        %s421 = scalar_select %p420, %s28, 1
        %s422 = smul.addr %s421, 8
        %s423 = scalar_lea.vmem %s0, %s422
        %p424 = pneg %p49
        %p425 = pneg %p46
        %p426 = pneg %p70
        %p427 = pneg %p67
        %p428 = pneg %p91
        %p429 = pneg %p88
        %p430 = pneg %p112
        %p431 = pneg %p109
        %p432 = pneg %p133
        %p433 = pneg %p130
        %p434 = pneg %p154
        %p435 = pneg %p151
        %p436 = pneg %p175
        %p437 = pneg %p172
        %p438 = pneg %p196
        %p439 = pneg %p193
        %p440 = pneg %p217
        %p441 = pneg %p214
        %p442 = pneg %p238
        %p443 = pneg %p235
        %p444 = pneg %p259
        %p445 = pneg %p256
        %p446 = pneg %p280
        %p447 = pneg %p277
        %p448 = pneg %p301
        %p449 = pneg %p298
        %p450 = pneg %p322
        %p451 = pneg %p319
        %p452 = pneg %p348
        %p453 = pneg %p345
        %s454 = sand.u32 %s335, 1
        %s455 = scalar_lea.sflag [#allocation3], %s454
        %s456 = sand.u32 %s335, 1
        %s457 = smul.addr %s456, 8
        %s458 = scalar_lea.vmem [#allocation2], %s457
        %p459 = scmp.lt.s32.totalorder %s28, 1
        %s460 = scalar_select %p459, %s28, 1
        %s461 = smul.addr %s460, 8
        %s462 = scalar_lea.vmem %s0, %s461
        %v463 = vld [vmem:[%s462] sm:$0xff]
        %v464 = vld [vmem:[%s1] sm:$0x1]
        %v465 = vld [vmem:[%s2] sm:$0x1]
        %vm466 = vcmask 261120
        %v467 = vsel %vm466, %v463, 0.0
        %468 = vadd.xlane.f32.xlu0 %v467
        %v469 = vpop.xlane.xlu0 %468
        %v470 = vrcp.pop 32.0
        %v471 = vmul.f32 %v469, %v470
        %v472 = vsub.f32 %v463, %v471
        %v473 = vmul.f32 %v472, %v472
        %v474 = vsel %vm466, %v473, 0.0
        %475 = vadd.xlane.f32.xlu0 %v474
        %v476 = vpop.xlane.xlu0 %475
        %v477 = vmul.f32 %v476, %v470
        %v478 = vadd.f32 %v477, 1e-05
        %v479 = vrsqrt.pop %v478
        %v480 = vmul.f32 %v472, %v479
        %v482 = vlaneseq
        %v483 = vshrl.u32 %v482, 7
        %v484 = vsub.s32 0, %v483
        %v485 = vrot.slane %v464, %v484
        %v487 = vmul.f32 %v480, %v485
        %v489 = vlaneseq
        %v490 = vshrl.u32 %v489, 7
        %v491 = vsub.s32 0, %v490
        %v492 = vrot.slane %v465, %v491
        %v494 = vadd.f32 %v487, %v492
        %v495 = vld [vmem:[%s3] sm:$0xff]
        %v496 = vld [vmem:[%s3 + $0x8] sm:$0xff]
        %v497 = vld [vmem:[%s3 + $0x10] sm:$0xff]
        %v498 = vld [vmem:[%s3 + $0x18] sm:$0xff]
        %v500 = vsel %vm466, %v494, 0
        %502 = vmatprep.subr.mxu0 0.0
        %503 = vmatpush1.msra.mxu0 %v495
        %504 = vmatprep.subr.mxu0 0.0
        %505 = vmatpush1.msra.mxu0 %v496
        %506 = vmatprep.subr.mxu0 0.0
        %507 = vmatpush1.msra.mxu0 %v497
        %508 = vmatprep.subr.mxu0 0.0
        %509 = vmatpush1.msra.mxu0 %v498
        %510 = vmatprep.subr.mxu0 0.0
        %511 = vmatpush1.msra.mxu0 0.0
        %512 = vmatprep.subr.mxu0 0.0
        %513 = vmatpush1.msra.mxu0 0.0
        %514 = vmatprep.subr.mxu0 0.0
        %515 = vmatpush1.msra.mxu0 0.0
        %516 = vmatprep.subr.mxu0 0.0
        %517 = vmatpush1.msra.mxu0 0.0
        %518 = vmatprep.subr.mxu0 0.0
        %519 = vmatpush1.msra.mxu0 0.0
        %520 = vmatprep.subr.mxu0 0.0
        %521 = vmatpush1.msra.mxu0 0.0
        %522 = vmatprep.subr.mxu0 0.0
        %523 = vmatpush1.msra.mxu0 0.0
        %524 = vmatprep.subr.mxu0 0.0
        %525 = vmatpush1.msra.mxu0 0.0
        %526 = vmatprep.subr.mxu0 0.0
        %527 = vmatpush1.msra.mxu0 0.0
        %528 = vmatprep.subr.mxu0 0.0
        %529 = vmatpush1.msra.mxu0 0.0
        %530 = vmatprep.subr.mxu0 0.0
        %531 = vmatpush1.msra.mxu0 0.0
        %532 = vmatprep.subr.mxu0 0.0
        %533 = vmatpush1.msra.mxu0 0.0
        %534 = vmatprep.subr.mxu0 0.0
        %535 = vmatpush1.msra.mxu0 0.0
        %536 = vmatprep.subr.mxu0 0.0
        %537 = vmatpush1.msra.mxu0 0.0
        %538 = vmatprep.subr.mxu0 0.0
        %539 = vmatpush1.msra.mxu0 0.0
        %540 = vmatprep.subr.mxu0 0.0
        %541 = vmatpush1.msra.mxu0 0.0
        %542 = vmatprep.subr.mxu0 0.0
        %543 = vmatpush1.msra.mxu0 0.0
        %544 = vmatprep.subr.mxu0 0.0
        %545 = vmatpush1.msra.mxu0 0.0
        %546 = vmatprep.subr.mxu0 0.0
        %547 = vmatpush1.msra.mxu0 0.0
        %548 = vmatprep.subr.mxu0 0.0
        %549 = vmatpush1.msra.mxu0 0.0
        %550 = vmatprep.subr.mxu0 0.0
        %551 = vmatpush1.msra.mxu0 0.0
        %552 = vmatprep.subr.mxu0 0.0
        %553 = vmatpush1.msra.mxu0 0.0
        %554 = vmatprep.subr.mxu0 0.0
        %555 = vmatpush1.msra.mxu0 0.0
        %556 = vmatprep.subr.mxu0 0.0
        %557 = vmatpush1.msra.mxu0 0.0
        %558 = vmatprep.subr.mxu0 0.0
        %559 = vmatpush1.msra.mxu0 0.0
        %560 = vmatprep.subr.mxu0 0.0
        %561 = vmatpush1.msra.mxu0 0.0
        %562 = vmatprep.subr.mxu0 0.0
        %563 = vmatpush1.msra.mxu0 0.0
        %564 = vmatprep.subr.mxu0 0.0
        %565 = vmatpush1.msra.mxu0 0.0
        %566 = vmatprep.mubr.f32.mxu0 0.0
        %567 = vmatmul.mubr.f32.gmra.mrb[0].mxu0 %v500
        %v568 = vpop.f32.mrb[0].mxu0
        %v569 = vadd.f32 0.0, %v568
        %v570 = vpop.f32.mrb[0].mxu0
        %571 = vdwg.mxu0
        %v572 = vld [vmem:[%s4] sm:$0xff]
        %v573 = vld [vmem:[%s4 + $0x8] sm:$0xff]
        %v574 = vld [vmem:[%s4 + $0x10] sm:$0xff]
        %v575 = vld [vmem:[%s4 + $0x18] sm:$0xff]
        %576 = vmatprep.subr.mxu0 0.0
        %577 = vmatpush1.msra.mxu0 %v572
        %578 = vmatprep.subr.mxu0 0.0
        %579 = vmatpush1.msra.mxu0 %v573
        %580 = vmatprep.subr.mxu0 0.0
        %581 = vmatpush1.msra.mxu0 %v574
        %582 = vmatprep.subr.mxu0 0.0
        %583 = vmatpush1.msra.mxu0 %v575
        %584 = vmatprep.subr.mxu0 0.0
        %585 = vmatpush1.msra.mxu0 0.0
        %586 = vmatprep.subr.mxu0 0.0
        %587 = vmatpush1.msra.mxu0 0.0
        %588 = vmatprep.subr.mxu0 0.0
        %589 = vmatpush1.msra.mxu0 0.0
        %590 = vmatprep.subr.mxu0 0.0
        %591 = vmatpush1.msra.mxu0 0.0
        %592 = vmatprep.subr.mxu0 0.0
        %593 = vmatpush1.msra.mxu0 0.0
        %594 = vmatprep.subr.mxu0 0.0
        %595 = vmatpush1.msra.mxu0 0.0
        %596 = vmatprep.subr.mxu0 0.0
        %597 = vmatpush1.msra.mxu0 0.0
        %598 = vmatprep.subr.mxu0 0.0
        %599 = vmatpush1.msra.mxu0 0.0
        %600 = vmatprep.subr.mxu0 0.0
        %601 = vmatpush1.msra.mxu0 0.0
        %602 = vmatprep.subr.mxu0 0.0
        %603 = vmatpush1.msra.mxu0 0.0
        %604 = vmatprep.subr.mxu0 0.0
        %605 = vmatpush1.msra.mxu0 0.0
        %606 = vmatprep.subr.mxu0 0.0
        %607 = vmatpush1.msra.mxu0 0.0
        %608 = vmatprep.subr.mxu0 0.0
        %609 = vmatpush1.msra.mxu0 0.0
        %610 = vmatprep.subr.mxu0 0.0
        %611 = vmatpush1.msra.mxu0 0.0
        %612 = vmatprep.subr.mxu0 0.0
        %613 = vmatpush1.msra.mxu0 0.0
        %614 = vmatprep.subr.mxu0 0.0
        %615 = vmatpush1.msra.mxu0 0.0
        %616 = vmatprep.subr.mxu0 0.0
        %617 = vmatpush1.msra.mxu0 0.0
        %618 = vmatprep.subr.mxu0 0.0
        %619 = vmatpush1.msra.mxu0 0.0
        %620 = vmatprep.subr.mxu0 0.0
        %621 = vmatpush1.msra.mxu0 0.0
        %622 = vmatprep.subr.mxu0 0.0
        %623 = vmatpush1.msra.mxu0 0.0
        %624 = vmatprep.subr.mxu0 0.0
        %625 = vmatpush1.msra.mxu0 0.0
        %626 = vmatprep.subr.mxu0 0.0
        %627 = vmatpush1.msra.mxu0 0.0
        %628 = vmatprep.subr.mxu0 0.0
        %629 = vmatpush1.msra.mxu0 0.0
        %630 = vmatprep.subr.mxu0 0.0
        %631 = vmatpush1.msra.mxu0 0.0
        %632 = vmatprep.subr.mxu0 0.0
        %633 = vmatpush1.msra.mxu0 0.0
        %634 = vmatprep.subr.mxu0 0.0
        %635 = vmatpush1.msra.mxu0 0.0
        %636 = vmatprep.subr.mxu0 0.0
        %637 = vmatpush1.msra.mxu0 0.0
        %638 = vmatprep.subr.mxu0 0.0
        %639 = vmatpush1.msra.mxu0 0.0
        %640 = vmatprep.mubr.f32.mxu0 0.0
        %641 = vmatmul.mubr.f32.gmra.mrb[0].mxu0 %v500
        %v642 = vpop.f32.mrb[0].mxu0
        %v643 = vadd.f32 0.0, %v642
        %v644 = vpop.f32.mrb[0].mxu0
        %645 = vdwg.mxu0
        %v646 = vld [vmem:[%s5] sm:$0xff]
        %v647 = vld [vmem:[%s5 + $0x8] sm:$0xff]
        %v648 = vld [vmem:[%s5 + $0x10] sm:$0xff]
        %v649 = vld [vmem:[%s5 + $0x18] sm:$0xff]
        %650 = vmatprep.subr.mxu0 0.0
        %651 = vmatpush1.msra.mxu0 %v646
        %652 = vmatprep.subr.mxu0 0.0
        %653 = vmatpush1.msra.mxu0 %v647
        %654 = vmatprep.subr.mxu0 0.0
        %655 = vmatpush1.msra.mxu0 %v648
        %656 = vmatprep.subr.mxu0 0.0
        %657 = vmatpush1.msra.mxu0 %v649
        %658 = vmatprep.subr.mxu0 0.0
        %659 = vmatpush1.msra.mxu0 0.0
        %660 = vmatprep.subr.mxu0 0.0
        %661 = vmatpush1.msra.mxu0 0.0
        %662 = vmatprep.subr.mxu0 0.0
        %663 = vmatpush1.msra.mxu0 0.0
        %664 = vmatprep.subr.mxu0 0.0
        %665 = vmatpush1.msra.mxu0 0.0
        %666 = vmatprep.subr.mxu0 0.0
        %667 = vmatpush1.msra.mxu0 0.0
        %668 = vmatprep.subr.mxu0 0.0
        %669 = vmatpush1.msra.mxu0 0.0
        %670 = vmatprep.subr.mxu0 0.0
        %671 = vmatpush1.msra.mxu0 0.0
        %672 = vmatprep.subr.mxu0 0.0
        %673 = vmatpush1.msra.mxu0 0.0
        %674 = vmatprep.subr.mxu0 0.0
        %675 = vmatpush1.msra.mxu0 0.0
        %676 = vmatprep.subr.mxu0 0.0
        %677 = vmatpush1.msra.mxu0 0.0
        %678 = vmatprep.subr.mxu0 0.0
        %679 = vmatpush1.msra.mxu0 0.0
        %680 = vmatprep.subr.mxu0 0.0
        %681 = vmatpush1.msra.mxu0 0.0
        %682 = vmatprep.subr.mxu0 0.0
        %683 = vmatpush1.msra.mxu0 0.0
        %684 = vmatprep.subr.mxu0 0.0
        %685 = vmatpush1.msra.mxu0 0.0
        %686 = vmatprep.subr.mxu0 0.0
        %687 = vmatpush1.msra.mxu0 0.0
        %688 = vmatprep.subr.mxu0 0.0
        %689 = vmatpush1.msra.mxu0 0.0
        %690 = vmatprep.subr.mxu0 0.0
        %691 = vmatpush1.msra.mxu0 0.0
        %692 = vmatprep.subr.mxu0 0.0
        %693 = vmatpush1.msra.mxu0 0.0
        %694 = vmatprep.subr.mxu0 0.0
        %695 = vmatpush1.msra.mxu0 0.0
        %696 = vmatprep.subr.mxu0 0.0
        %697 = vmatpush1.msra.mxu0 0.0
        %698 = vmatprep.subr.mxu0 0.0
        %699 = vmatpush1.msra.mxu0 0.0
        %700 = vmatprep.subr.mxu0 0.0
        %701 = vmatpush1.msra.mxu0 0.0
        %702 = vmatprep.subr.mxu0 0.0
        %703 = vmatpush1.msra.mxu0 0.0
        %704 = vmatprep.subr.mxu0 0.0
        %705 = vmatpush1.msra.mxu0 0.0
        %706 = vmatprep.subr.mxu0 0.0
        %707 = vmatpush1.msra.mxu0 0.0
        %708 = vmatprep.subr.mxu0 0.0
        %709 = vmatpush1.msra.mxu0 0.0
        %710 = vmatprep.subr.mxu0 0.0
        %711 = vmatpush1.msra.mxu0 0.0
        %712 = vmatprep.subr.mxu0 0.0
        %713 = vmatpush1.msra.mxu0 0.0
        %714 = vmatprep.mubr.f32.mxu0 0.0
        %715 = vmatmul.mubr.f32.gmra.mrb[0].mxu0 %v500
        %v716 = vpop.f32.mrb[0].mxu0
        %v717 = vadd.f32 0.0, %v716
        %v718 = vpop.f32.mrb[0].mxu0
        %719 = vdwg.mxu0
        %vm720 = vcmask 130048
        %v722 = vsel %vm720, %v569, 0
        %v725 = vsel %vm720, %v643, 0
        %727 = vmatprep.subr.mxu0 0.0
        %728 = vmatpush1.xpose.msra.mxu0 %v725
        %729 = vmatprep.subr.mxu0 0.0
        %730 = vmatpush1.xpose.msra.mxu0 0.0
        %731 = vmatprep.subr.mxu0 0.0
        %732 = vmatpush1.xpose.msra.mxu0 0.0
        %733 = vmatprep.subr.mxu0 0.0
        %734 = vmatpush1.xpose.msra.mxu0 0.0
        %735 = vmatprep.subr.mxu0 0.0
        %736 = vmatpush1.xpose.msra.mxu0 0.0
        %737 = vmatprep.subr.mxu0 0.0
        %738 = vmatpush1.xpose.msra.mxu0 0.0
        %739 = vmatprep.subr.mxu0 0.0
        %740 = vmatpush1.xpose.msra.mxu0 0.0
        %741 = vmatprep.subr.mxu0 0.0
        %742 = vmatpush1.xpose.msra.mxu0 0.0
        %743 = vmatprep.subr.mxu0 0.0
        %744 = vmatpush1.xpose.msra.mxu0 0.0
        %745 = vmatprep.subr.mxu0 0.0
        %746 = vmatpush1.xpose.msra.mxu0 0.0
        %747 = vmatprep.subr.mxu0 0.0
        %748 = vmatpush1.xpose.msra.mxu0 0.0
        %749 = vmatprep.subr.mxu0 0.0
        %750 = vmatpush1.xpose.msra.mxu0 0.0
        %751 = vmatprep.subr.mxu0 0.0
        %752 = vmatpush1.xpose.msra.mxu0 0.0
        %753 = vmatprep.subr.mxu0 0.0
        %754 = vmatpush1.xpose.msra.mxu0 0.0
        %755 = vmatprep.subr.mxu0 0.0
        %756 = vmatpush1.xpose.msra.mxu0 0.0
        %757 = vmatprep.subr.mxu0 0.0
        %758 = vmatpush1.xpose.msra.mxu0 0.0
        %759 = vmatprep.subr.mxu0 0.0
        %760 = vmatpush1.xpose.msra.mxu0 0.0
        %761 = vmatprep.subr.mxu0 0.0
        %762 = vmatpush1.xpose.msra.mxu0 0.0
        %763 = vmatprep.subr.mxu0 0.0
        %764 = vmatpush1.xpose.msra.mxu0 0.0
        %765 = vmatprep.subr.mxu0 0.0
        %766 = vmatpush1.xpose.msra.mxu0 0.0
        %767 = vmatprep.subr.mxu0 0.0
        %768 = vmatpush1.xpose.msra.mxu0 0.0
        %769 = vmatprep.subr.mxu0 0.0
        %770 = vmatpush1.xpose.msra.mxu0 0.0
        %771 = vmatprep.subr.mxu0 0.0
        %772 = vmatpush1.xpose.msra.mxu0 0.0
        %773 = vmatprep.subr.mxu0 0.0
        %774 = vmatpush1.xpose.msra.mxu0 0.0
        %775 = vmatprep.subr.mxu0 0.0
        %776 = vmatpush1.xpose.msra.mxu0 0.0
        %777 = vmatprep.subr.mxu0 0.0
        %778 = vmatpush1.xpose.msra.mxu0 0.0
        %779 = vmatprep.subr.mxu0 0.0
        %780 = vmatpush1.xpose.msra.mxu0 0.0
        %781 = vmatprep.subr.mxu0 0.0
        %782 = vmatpush1.xpose.msra.mxu0 0.0
        %783 = vmatprep.subr.mxu0 0.0
        %784 = vmatpush1.xpose.msra.mxu0 0.0
        %785 = vmatprep.subr.mxu0 0.0
        %786 = vmatpush1.xpose.msra.mxu0 0.0
        %787 = vmatprep.subr.mxu0 0.0
        %788 = vmatpush1.xpose.msra.mxu0 0.0
        %789 = vmatprep.subr.mxu0 0.0
        %790 = vmatpush1.xpose.msra.mxu0 0.0
        %791 = vmatprep.mubr.f32.mxu0 0.0
        %792 = vmatmul.mubr.f32.gmra.mrb[0].mxu0 %v722
        %v793 = vpop.f32.mrb[0].mxu0
        %v794 = vadd.f32 0.0, %v793
        %v795 = vpop.f32.mrb[0].mxu0
        %796 = vdwg.mxu0
        %vm797 = vcmask 64512
        %v798 = vsel %vm797, %v794, -inf
        %799 = vmax.xlane.f32.xlu0 %v798
        %v800 = vpop.xlane.xlu0 %799
        %v801 = vsub.f32 %v794, %v800
        %v802 = vmul.f32 %v801, 1.442695
        %v803 = vpow.pop %v802
        %v804 = vsel %vm797, %v803, 0.0
        %805 = vadd.xlane.f32.xlu0 %v804
        %v806 = vpop.xlane.xlu0 %805
        %v807 = vrcp.pop %v806
        %v808 = vmul.f32 %v803, %v807
        %v810 = vsel %vm797, %v808, 0
        %812 = vmatprep.subr.mxu0 0.0
        %813 = vmatpush1.msra.mxu0 %v717
        %814 = vmatprep.subr.mxu0 0.0
        %815 = vmatpush1.msra.mxu0 0.0
        %816 = vmatprep.subr.mxu0 0.0
        %817 = vmatpush1.msra.mxu0 0.0
        %818 = vmatprep.subr.mxu0 0.0
        %819 = vmatpush1.msra.mxu0 0.0
        %820 = vmatprep.subr.mxu0 0.0
        %821 = vmatpush1.msra.mxu0 0.0
        %822 = vmatprep.subr.mxu0 0.0
        %823 = vmatpush1.msra.mxu0 0.0
        %824 = vmatprep.subr.mxu0 0.0
        %825 = vmatpush1.msra.mxu0 0.0
        %826 = vmatprep.subr.mxu0 0.0
        %827 = vmatpush1.msra.mxu0 0.0
        %828 = vmatprep.subr.mxu0 0.0
        %829 = vmatpush1.msra.mxu0 0.0
        %830 = vmatprep.subr.mxu0 0.0
        %831 = vmatpush1.msra.mxu0 0.0
        %832 = vmatprep.subr.mxu0 0.0
        %833 = vmatpush1.msra.mxu0 0.0
        %834 = vmatprep.subr.mxu0 0.0
        %835 = vmatpush1.msra.mxu0 0.0
        %836 = vmatprep.subr.mxu0 0.0
        %837 = vmatpush1.msra.mxu0 0.0
        %838 = vmatprep.subr.mxu0 0.0
        %839 = vmatpush1.msra.mxu0 0.0
        %840 = vmatprep.subr.mxu0 0.0
        %841 = vmatpush1.msra.mxu0 0.0
        %842 = vmatprep.subr.mxu0 0.0
        %843 = vmatpush1.msra.mxu0 0.0
        %844 = vmatprep.subr.mxu0 0.0
        %845 = vmatpush1.msra.mxu0 0.0
        %846 = vmatprep.subr.mxu0 0.0
        %847 = vmatpush1.msra.mxu0 0.0
        %848 = vmatprep.subr.mxu0 0.0
        %849 = vmatpush1.msra.mxu0 0.0
        %850 = vmatprep.subr.mxu0 0.0
        %851 = vmatpush1.msra.mxu0 0.0
        %852 = vmatprep.subr.mxu0 0.0
        %853 = vmatpush1.msra.mxu0 0.0
        %854 = vmatprep.subr.mxu0 0.0
        %855 = vmatpush1.msra.mxu0 0.0
        %856 = vmatprep.subr.mxu0 0.0
        %857 = vmatpush1.msra.mxu0 0.0
        %858 = vmatprep.subr.mxu0 0.0
        %859 = vmatpush1.msra.mxu0 0.0
        %860 = vmatprep.subr.mxu0 0.0
        %861 = vmatpush1.msra.mxu0 0.0
        %862 = vmatprep.subr.mxu0 0.0
        %863 = vmatpush1.msra.mxu0 0.0
        %864 = vmatprep.subr.mxu0 0.0
        %865 = vmatpush1.msra.mxu0 0.0
        %866 = vmatprep.subr.mxu0 0.0
        %867 = vmatpush1.msra.mxu0 0.0
        %868 = vmatprep.subr.mxu0 0.0
        %869 = vmatpush1.msra.mxu0 0.0
        %870 = vmatprep.subr.mxu0 0.0
        %871 = vmatpush1.msra.mxu0 0.0
        %872 = vmatprep.subr.mxu0 0.0
        %873 = vmatpush1.msra.mxu0 0.0
        %874 = vmatprep.subr.mxu0 0.0
        %875 = vmatpush1.msra.mxu0 0.0
        %876 = vmatprep.mubr.f32.mxu0 0.0
        %877 = vmatmul.mubr.f32.gmra.mrb[0].mxu0 %v810
        %v878 = vpop.f32.mrb[0].mxu0
        %v879 = vadd.f32 0.0, %v878
        %v880 = vpop.f32.mrb[0].mxu0
        %881 = vdwg.mxu0
        %v882 = vld [vmem:[%s6] sm:$0xff]
        %v883 = vld [vmem:[%s6 + $0x8] sm:$0xff]
        %s884 = scalar_lea.vmem %s3, 32
        %v885 = vld [vmem:[%s884] sm:$0xff]
        %v886 = vld [vmem:[%s884 + $0x8] sm:$0xff]
        %v887 = vld [vmem:[%s884 + $0x10] sm:$0xff]
        %v888 = vld [vmem:[%s884 + $0x18] sm:$0xff]
        %889 = vmatprep.subr.mxu0 0.0
        %890 = vmatpush1.msra.mxu0 %v885
        %891 = vmatprep.subr.mxu0 0.0
        %892 = vmatpush1.msra.mxu0 %v886
        %893 = vmatprep.subr.mxu0 0.0
        %894 = vmatpush1.msra.mxu0 %v887
        %895 = vmatprep.subr.mxu0 0.0
        %896 = vmatpush1.msra.mxu0 %v888
        %897 = vmatprep.subr.mxu0 0.0
        %898 = vmatpush1.msra.mxu0 0.0
        %899 = vmatprep.subr.mxu0 0.0
        %900 = vmatpush1.msra.mxu0 0.0
        %901 = vmatprep.subr.mxu0 0.0
        %902 = vmatpush1.msra.mxu0 0.0
        %903 = vmatprep.subr.mxu0 0.0
        %904 = vmatpush1.msra.mxu0 0.0
        %905 = vmatprep.subr.mxu0 0.0
        %906 = vmatpush1.msra.mxu0 0.0
        %907 = vmatprep.subr.mxu0 0.0
        %908 = vmatpush1.msra.mxu0 0.0
        %909 = vmatprep.subr.mxu0 0.0
        %910 = vmatpush1.msra.mxu0 0.0
        %911 = vmatprep.subr.mxu0 0.0
        %912 = vmatpush1.msra.mxu0 0.0
        %913 = vmatprep.subr.mxu0 0.0
        %914 = vmatpush1.msra.mxu0 0.0
        %915 = vmatprep.subr.mxu0 0.0
        %916 = vmatpush1.msra.mxu0 0.0
        %917 = vmatprep.subr.mxu0 0.0
        %918 = vmatpush1.msra.mxu0 0.0
        %919 = vmatprep.subr.mxu0 0.0
        %920 = vmatpush1.msra.mxu0 0.0
        %921 = vmatprep.subr.mxu0 0.0
        %922 = vmatpush1.msra.mxu0 0.0
        %923 = vmatprep.subr.mxu0 0.0
        %924 = vmatpush1.msra.mxu0 0.0
        %925 = vmatprep.subr.mxu0 0.0
        %926 = vmatpush1.msra.mxu0 0.0
        %927 = vmatprep.subr.mxu0 0.0
        %928 = vmatpush1.msra.mxu0 0.0
        %929 = vmatprep.subr.mxu0 0.0
        %930 = vmatpush1.msra.mxu0 0.0
        %931 = vmatprep.subr.mxu0 0.0
        %932 = vmatpush1.msra.mxu0 0.0
        %933 = vmatprep.subr.mxu0 0.0
        %934 = vmatpush1.msra.mxu0 0.0
        %935 = vmatprep.subr.mxu0 0.0
        %936 = vmatpush1.msra.mxu0 0.0
        %937 = vmatprep.subr.mxu0 0.0
        %938 = vmatpush1.msra.mxu0 0.0
        %939 = vmatprep.subr.mxu0 0.0
        %940 = vmatpush1.msra.mxu0 0.0
        %941 = vmatprep.subr.mxu0 0.0
        %942 = vmatpush1.msra.mxu0 0.0
        %943 = vmatprep.subr.mxu0 0.0
        %944 = vmatpush1.msra.mxu0 0.0
        %945 = vmatprep.subr.mxu0 0.0
        %946 = vmatpush1.msra.mxu0 0.0
        %947 = vmatprep.subr.mxu0 0.0
        %948 = vmatpush1.msra.mxu0 0.0
        %949 = vmatprep.subr.mxu0 0.0
        %950 = vmatpush1.msra.mxu0 0.0
        %951 = vmatprep.subr.mxu0 0.0
        %952 = vmatpush1.msra.mxu0 0.0
        %953 = vmatprep.mubr.f32.mxu0 0.0
        %954 = vmatmul.mubr.f32.gmra.mrb[0].mxu0 %v500
        %v955 = vpop.f32.mrb[0].mxu0
        %v956 = vadd.f32 0.0, %v955
        %v957 = vpop.f32.mrb[0].mxu0
        %958 = vdwg.mxu0
        %s959 = scalar_lea.vmem %s4, 32
        %v960 = vld [vmem:[%s959] sm:$0xff]
        %v961 = vld [vmem:[%s959 + $0x8] sm:$0xff]
        %v962 = vld [vmem:[%s959 + $0x10] sm:$0xff]
        %v963 = vld [vmem:[%s959 + $0x18] sm:$0xff]
        %964 = vmatprep.subr.mxu0 0.0
        %965 = vmatpush1.msra.mxu0 %v960
        %966 = vmatprep.subr.mxu0 0.0
        %967 = vmatpush1.msra.mxu0 %v961
        %968 = vmatprep.subr.mxu0 0.0
        %969 = vmatpush1.msra.mxu0 %v962
        %970 = vmatprep.subr.mxu0 0.0
        %971 = vmatpush1.msra.mxu0 %v963
        %972 = vmatprep.subr.mxu0 0.0
        %973 = vmatpush1.msra.mxu0 0.0
        %974 = vmatprep.subr.mxu0 0.0
        %975 = vmatpush1.msra.mxu0 0.0
        %976 = vmatprep.subr.mxu0 0.0
        %977 = vmatpush1.msra.mxu0 0.0
        %978 = vmatprep.subr.mxu0 0.0
        %979 = vmatpush1.msra.mxu0 0.0
        %980 = vmatprep.subr.mxu0 0.0
        %981 = vmatpush1.msra.mxu0 0.0
        %982 = vmatprep.subr.mxu0 0.0
        %983 = vmatpush1.msra.mxu0 0.0
        %984 = vmatprep.subr.mxu0 0.0
        %985 = vmatpush1.msra.mxu0 0.0
        %986 = vmatprep.subr.mxu0 0.0
        %987 = vmatpush1.msra.mxu0 0.0
        %988 = vmatprep.subr.mxu0 0.0
        %989 = vmatpush1.msra.mxu0 0.0
        %990 = vmatprep.subr.mxu0 0.0
        %991 = vmatpush1.msra.mxu0 0.0
        %992 = vmatprep.subr.mxu0 0.0
        %993 = vmatpush1.msra.mxu0 0.0
        %994 = vmatprep.subr.mxu0 0.0
        %995 = vmatpush1.msra.mxu0 0.0
        %996 = vmatprep.subr.mxu0 0.0
        %997 = vmatpush1.msra.mxu0 0.0
        %998 = vmatprep.subr.mxu0 0.0
        %999 = vmatpush1.msra.mxu0 0.0
        %1000 = vmatprep.subr.mxu0 0.0
        %1001 = vmatpush1.msra.mxu0 0.0
        %1002 = vmatprep.subr.mxu0 0.0
        %1003 = vmatpush1.msra.mxu0 0.0
        %1004 = vmatprep.subr.mxu0 0.0
        %1005 = vmatpush1.msra.mxu0 0.0
        %1006 = vmatprep.subr.mxu0 0.0
        %1007 = vmatpush1.msra.mxu0 0.0
        %1008 = vmatprep.subr.mxu0 0.0
        %1009 = vmatpush1.msra.mxu0 0.0
        %1010 = vmatprep.subr.mxu0 0.0
        %1011 = vmatpush1.msra.mxu0 0.0
        %1012 = vmatprep.subr.mxu0 0.0
        %1013 = vmatpush1.msra.mxu0 0.0
        %1014 = vmatprep.subr.mxu0 0.0
        %1015 = vmatpush1.msra.mxu0 0.0
        %1016 = vmatprep.subr.mxu0 0.0
        %1017 = vmatpush1.msra.mxu0 0.0
        %1018 = vmatprep.subr.mxu0 0.0
        %1019 = vmatpush1.msra.mxu0 0.0
        %1020 = vmatprep.subr.mxu0 0.0
        %1021 = vmatpush1.msra.mxu0 0.0
        %1022 = vmatprep.subr.mxu0 0.0
        %1023 = vmatpush1.msra.mxu0 0.0
        %1024 = vmatprep.subr.mxu0 0.0
        %1025 = vmatpush1.msra.mxu0 0.0
        %1026 = vmatprep.subr.mxu0 0.0
        %1027 = vmatpush1.msra.mxu0 0.0
        %1028 = vmatprep.mubr.f32.mxu0 0.0
        %1029 = vmatmul.mubr.f32.gmra.mrb[0].mxu0 %v500
        %v1030 = vpop.f32.mrb[0].mxu0
        %v1031 = vadd.f32 0.0, %v1030
        %v1032 = vpop.f32.mrb[0].mxu0
        %1033 = vdwg.mxu0
        %s1034 = scalar_lea.vmem %s5, 32
        %v1035 = vld [vmem:[%s1034] sm:$0xff]
        %v1036 = vld [vmem:[%s1034 + $0x8] sm:$0xff]
        %v1037 = vld [vmem:[%s1034 + $0x10] sm:$0xff]
        %v1038 = vld [vmem:[%s1034 + $0x18] sm:$0xff]
        %1039 = vmatprep.subr.mxu0 0.0
        %1040 = vmatpush1.msra.mxu0 %v1035
        %1041 = vmatprep.subr.mxu0 0.0
        %1042 = vmatpush1.msra.mxu0 %v1036
        %1043 = vmatprep.subr.mxu0 0.0
        %1044 = vmatpush1.msra.mxu0 %v1037
        %1045 = vmatprep.subr.mxu0 0.0
        %1046 = vmatpush1.msra.mxu0 %v1038
        %1047 = vmatprep.subr.mxu0 0.0
        %1048 = vmatpush1.msra.mxu0 0.0
        %1049 = vmatprep.subr.mxu0 0.0
        %1050 = vmatpush1.msra.mxu0 0.0
        %1051 = vmatprep.subr.mxu0 0.0
        %1052 = vmatpush1.msra.mxu0 0.0
        %1053 = vmatprep.subr.mxu0 0.0
        %1054 = vmatpush1.msra.mxu0 0.0
        %1055 = vmatprep.subr.mxu0 0.0
        %1056 = vmatpush1.msra.mxu0 0.0
        %1057 = vmatprep.subr.mxu0 0.0
        %1058 = vmatpush1.msra.mxu0 0.0
        %1059 = vmatprep.subr.mxu0 0.0
        %1060 = vmatpush1.msra.mxu0 0.0
        %1061 = vmatprep.subr.mxu0 0.0
        %1062 = vmatpush1.msra.mxu0 0.0
        %1063 = vmatprep.subr.mxu0 0.0
        %1064 = vmatpush1.msra.mxu0 0.0
        %1065 = vmatprep.subr.mxu0 0.0
        %1066 = vmatpush1.msra.mxu0 0.0
        %1067 = vmatprep.subr.mxu0 0.0
        %1068 = vmatpush1.msra.mxu0 0.0
        %1069 = vmatprep.subr.mxu0 0.0
        %1070 = vmatpush1.msra.mxu0 0.0
        %1071 = vmatprep.subr.mxu0 0.0
        %1072 = vmatpush1.msra.mxu0 0.0
        %1073 = vmatprep.subr.mxu0 0.0
        %1074 = vmatpush1.msra.mxu0 0.0
        %1075 = vmatprep.subr.mxu0 0.0
        %1076 = vmatpush1.msra.mxu0 0.0
        %1077 = vmatprep.subr.mxu0 0.0
        %1078 = vmatpush1.msra.mxu0 0.0
        %1079 = vmatprep.subr.mxu0 0.0
        %1080 = vmatpush1.msra.mxu0 0.0
        %1081 = vmatprep.subr.mxu0 0.0
        %1082 = vmatpush1.msra.mxu0 0.0
        %1083 = vmatprep.subr.mxu0 0.0
        %1084 = vmatpush1.msra.mxu0 0.0
        %1085 = vmatprep.subr.mxu0 0.0
        %1086 = vmatpush1.msra.mxu0 0.0
        %1087 = vmatprep.subr.mxu0 0.0
        %1088 = vmatpush1.msra.mxu0 0.0
        %1089 = vmatprep.subr.mxu0 0.0
        %1090 = vmatpush1.msra.mxu0 0.0
        %1091 = vmatprep.subr.mxu0 0.0
        %1092 = vmatpush1.msra.mxu0 0.0
        %1093 = vmatprep.subr.mxu0 0.0
        %1094 = vmatpush1.msra.mxu0 0.0
        %1095 = vmatprep.subr.mxu0 0.0
        %1096 = vmatpush1.msra.mxu0 0.0
        %1097 = vmatprep.subr.mxu0 0.0
        %1098 = vmatpush1.msra.mxu0 0.0
        %1099 = vmatprep.subr.mxu0 0.0
        %1100 = vmatpush1.msra.mxu0 0.0
        %1101 = vmatprep.subr.mxu0 0.0
        %1102 = vmatpush1.msra.mxu0 0.0
        %1103 = vmatprep.mubr.f32.mxu0 0.0
        %1104 = vmatmul.mubr.f32.gmra.mrb[0].mxu0 %v500
        %v1105 = vpop.f32.mrb[0].mxu0
        %v1106 = vadd.f32 0.0, %v1105
        %v1107 = vpop.f32.mrb[0].mxu0
        %1108 = vdwg.mxu0
        %v1110 = vsel %vm720, %v956, 0
        %v1113 = vsel %vm720, %v1031, 0
        %1115 = vmatprep.subr.mxu0 0.0
        %1116 = vmatpush1.xpose.msra.mxu0 %v1113
        %1117 = vmatprep.subr.mxu0 0.0
        %1118 = vmatpush1.xpose.msra.mxu0 0.0
        %1119 = vmatprep.subr.mxu0 0.0
        %1120 = vmatpush1.xpose.msra.mxu0 0.0
        %1121 = vmatprep.subr.mxu0 0.0
        %1122 = vmatpush1.xpose.msra.mxu0 0.0
        %1123 = vmatprep.subr.mxu0 0.0
        %1124 = vmatpush1.xpose.msra.mxu0 0.0
        %1125 = vmatprep.subr.mxu0 0.0
        %1126 = vmatpush1.xpose.msra.mxu0 0.0
        %1127 = vmatprep.subr.mxu0 0.0
        %1128 = vmatpush1.xpose.msra.mxu0 0.0
        %1129 = vmatprep.subr.mxu0 0.0
        %1130 = vmatpush1.xpose.msra.mxu0 0.0
        %1131 = vmatprep.subr.mxu0 0.0
        %1132 = vmatpush1.xpose.msra.mxu0 0.0
        %1133 = vmatprep.subr.mxu0 0.0
        %1134 = vmatpush1.xpose.msra.mxu0 0.0
        %1135 = vmatprep.subr.mxu0 0.0
        %1136 = vmatpush1.xpose.msra.mxu0 0.0
        %1137 = vmatprep.subr.mxu0 0.0
        %1138 = vmatpush1.xpose.msra.mxu0 0.0
        %1139 = vmatprep.subr.mxu0 0.0
        %1140 = vmatpush1.xpose.msra.mxu0 0.0
        %1141 = vmatprep.subr.mxu0 0.0
        %1142 = vmatpush1.xpose.msra.mxu0 0.0
        %1143 = vmatprep.subr.mxu0 0.0
        %1144 = vmatpush1.xpose.msra.mxu0 0.0
        %1145 = vmatprep.subr.mxu0 0.0
        %1146 = vmatpush1.xpose.msra.mxu0 0.0
        %1147 = vmatprep.subr.mxu0 0.0
        %1148 = vmatpush1.xpose.msra.mxu0 0.0
        %1149 = vmatprep.subr.mxu0 0.0
        %1150 = vmatpush1.xpose.msra.mxu0 0.0
        %1151 = vmatprep.subr.mxu0 0.0
        %1152 = vmatpush1.xpose.msra.mxu0 0.0
        %1153 = vmatprep.subr.mxu0 0.0
        %1154 = vmatpush1.xpose.msra.mxu0 0.0
        %1155 = vmatprep.subr.mxu0 0.0
        %1156 = vmatpush1.xpose.msra.mxu0 0.0
        %1157 = vmatprep.subr.mxu0 0.0
        %1158 = vmatpush1.xpose.msra.mxu0 0.0
        %1159 = vmatprep.subr.mxu0 0.0
        %1160 = vmatpush1.xpose.msra.mxu0 0.0
        %1161 = vmatprep.subr.mxu0 0.0
        %1162 = vmatpush1.xpose.msra.mxu0 0.0
        %1163 = vmatprep.subr.mxu0 0.0
        %1164 = vmatpush1.xpose.msra.mxu0 0.0
        %1165 = vmatprep.subr.mxu0 0.0
        %1166 = vmatpush1.xpose.msra.mxu0 0.0
        %1167 = vmatprep.subr.mxu0 0.0
        %1168 = vmatpush1.xpose.msra.mxu0 0.0
        %1169 = vmatprep.subr.mxu0 0.0
        %1170 = vmatpush1.xpose.msra.mxu0 0.0
        %1171 = vmatprep.subr.mxu0 0.0
        %1172 = vmatpush1.xpose.msra.mxu0 0.0
        %1173 = vmatprep.subr.mxu0 0.0
        %1174 = vmatpush1.xpose.msra.mxu0 0.0
        %1175 = vmatprep.subr.mxu0 0.0
        %1176 = vmatpush1.xpose.msra.mxu0 0.0
        %1177 = vmatprep.subr.mxu0 0.0
        %1178 = vmatpush1.xpose.msra.mxu0 0.0
        %1179 = vmatprep.mubr.f32.mxu0 0.0
        %1180 = vmatmul.mubr.f32.gmra.mrb[0].mxu0 %v1110
        %v1181 = vpop.f32.mrb[0].mxu0
        %v1182 = vadd.f32 0.0, %v1181
        %v1183 = vpop.f32.mrb[0].mxu0
        %1184 = vdwg.mxu0
        %v1185 = vsel %vm797, %v1182, -inf
        %1186 = vmax.xlane.f32.xlu0 %v1185
        %v1187 = vpop.xlane.xlu0 %1186
        %v1188 = vsub.f32 %v1182, %v1187
        %v1189 = vmul.f32 %v1188, 1.442695
        %v1190 = vpow.pop %v1189
        %v1191 = vsel %vm797, %v1190, 0.0
        %1192 = vadd.xlane.f32.xlu0 %v1191
        %v1193 = vpop.xlane.xlu0 %1192
        %v1194 = vrcp.pop %v1193
        %v1195 = vmul.f32 %v1190, %v1194
        %v1197 = vsel %vm797, %v1195, 0
        %1199 = vmatprep.subr.mxu0 0.0
        %1200 = vmatpush1.msra.mxu0 %v1106
        %1201 = vmatprep.subr.mxu0 0.0
        %1202 = vmatpush1.msra.mxu0 0.0
        %1203 = vmatprep.subr.mxu0 0.0
        %1204 = vmatpush1.msra.mxu0 0.0
        %1205 = vmatprep.subr.mxu0 0.0
        %1206 = vmatpush1.msra.mxu0 0.0
        %1207 = vmatprep.subr.mxu0 0.0
        %1208 = vmatpush1.msra.mxu0 0.0
        %1209 = vmatprep.subr.mxu0 0.0
        %1210 = vmatpush1.msra.mxu0 0.0
        %1211 = vmatprep.subr.mxu0 0.0
        %1212 = vmatpush1.msra.mxu0 0.0
        %1213 = vmatprep.subr.mxu0 0.0
        %1214 = vmatpush1.msra.mxu0 0.0
        %1215 = vmatprep.subr.mxu0 0.0
        %1216 = vmatpush1.msra.mxu0 0.0
        %1217 = vmatprep.subr.mxu0 0.0
        %1218 = vmatpush1.msra.mxu0 0.0
        %1219 = vmatprep.subr.mxu0 0.0
        %1220 = vmatpush1.msra.mxu0 0.0
        %1221 = vmatprep.subr.mxu0 0.0
        %1222 = vmatpush1.msra.mxu0 0.0
        %1223 = vmatprep.subr.mxu0 0.0
        %1224 = vmatpush1.msra.mxu0 0.0
        %1225 = vmatprep.subr.mxu0 0.0
        %1226 = vmatpush1.msra.mxu0 0.0
        %1227 = vmatprep.subr.mxu0 0.0
        %1228 = vmatpush1.msra.mxu0 0.0
        %1229 = vmatprep.subr.mxu0 0.0
        %1230 = vmatpush1.msra.mxu0 0.0
        %1231 = vmatprep.subr.mxu0 0.0
        %1232 = vmatpush1.msra.mxu0 0.0
        %1233 = vmatprep.subr.mxu0 0.0
        %1234 = vmatpush1.msra.mxu0 0.0
        %1235 = vmatprep.subr.mxu0 0.0
        %1236 = vmatpush1.msra.mxu0 0.0
        %1237 = vmatprep.subr.mxu0 0.0
        %1238 = vmatpush1.msra.mxu0 0.0
        %1239 = vmatprep.subr.mxu0 0.0
        %1240 = vmatpush1.msra.mxu0 0.0
        %1241 = vmatprep.subr.mxu0 0.0
        %1242 = vmatpush1.msra.mxu0 0.0
        %1243 = vmatprep.subr.mxu0 0.0
        %1244 = vmatpush1.msra.mxu0 0.0
        %1245 = vmatprep.subr.mxu0 0.0
        %1246 = vmatpush1.msra.mxu0 0.0
        %1247 = vmatprep.subr.mxu0 0.0
        %1248 = vmatpush1.msra.mxu0 0.0
        %1249 = vmatprep.subr.mxu0 0.0
        %1250 = vmatpush1.msra.mxu0 0.0
        %1251 = vmatprep.subr.mxu0 0.0
        %1252 = vmatpush1.msra.mxu0 0.0
        %1253 = vmatprep.subr.mxu0 0.0
        %1254 = vmatpush1.msra.mxu0 0.0
        %1255 = vmatprep.subr.mxu0 0.0
        %1256 = vmatpush1.msra.mxu0 0.0
        %1257 = vmatprep.subr.mxu0 0.0
        %1258 = vmatpush1.msra.mxu0 0.0
        %1259 = vmatprep.subr.mxu0 0.0
        %1260 = vmatpush1.msra.mxu0 0.0
        %1261 = vmatprep.subr.mxu0 0.0
        %1262 = vmatpush1.msra.mxu0 0.0
        %1263 = vmatprep.mubr.f32.mxu0 0.0
        %1264 = vmatmul.mubr.f32.gmra.mrb[0].mxu0 %v1197
        %v1265 = vpop.f32.mrb[0].mxu0
        %v1266 = vadd.f32 0.0, %v1265
        %v1267 = vpop.f32.mrb[0].mxu0
        %1268 = vdwg.mxu0
        %s1269 = scalar_lea.vmem %s6, 16
        %v1270 = vld [vmem:[%s1269] sm:$0xff]
        %v1271 = vld [vmem:[%s1269 + $0x8] sm:$0xff]
        %v1273 = vsel %vm720, %v1266, 0
        %1275 = vmatprep.subr.mxu0 0.0
        %1276 = vmatpush1.msra.mxu0 %v1270
        %1277 = vmatprep.subr.mxu0 0.0
        %1278 = vmatpush1.msra.mxu0 %v1271
        %1279 = vmatprep.subr.mxu0 0.0
        %1280 = vmatpush1.msra.mxu0 0.0
        %1281 = vmatprep.subr.mxu0 0.0
        %1282 = vmatpush1.msra.mxu0 0.0
        %1283 = vmatprep.subr.mxu0 0.0
        %1284 = vmatpush1.msra.mxu0 0.0
        %1285 = vmatprep.subr.mxu0 0.0
        %1286 = vmatpush1.msra.mxu0 0.0
        %1287 = vmatprep.subr.mxu0 0.0
        %1288 = vmatpush1.msra.mxu0 0.0
        %1289 = vmatprep.subr.mxu0 0.0
        %1290 = vmatpush1.msra.mxu0 0.0
        %1291 = vmatprep.subr.mxu0 0.0
        %1292 = vmatpush1.msra.mxu0 0.0
        %1293 = vmatprep.subr.mxu0 0.0
        %1294 = vmatpush1.msra.mxu0 0.0
        %1295 = vmatprep.subr.mxu0 0.0
        %1296 = vmatpush1.msra.mxu0 0.0
        %1297 = vmatprep.subr.mxu0 0.0
        %1298 = vmatpush1.msra.mxu0 0.0
        %1299 = vmatprep.subr.mxu0 0.0
        %1300 = vmatpush1.msra.mxu0 0.0
        %1301 = vmatprep.subr.mxu0 0.0
        %1302 = vmatpush1.msra.mxu0 0.0
        %1303 = vmatprep.subr.mxu0 0.0
        %1304 = vmatpush1.msra.mxu0 0.0
        %1305 = vmatprep.subr.mxu0 0.0
        %1306 = vmatpush1.msra.mxu0 0.0
        %1307 = vmatprep.subr.mxu0 0.0
        %1308 = vmatpush1.msra.mxu0 0.0
        %1309 = vmatprep.subr.mxu0 0.0
        %1310 = vmatpush1.msra.mxu0 0.0
        %1311 = vmatprep.subr.mxu0 0.0
        %1312 = vmatpush1.msra.mxu0 0.0
        %1313 = vmatprep.subr.mxu0 0.0
        %1314 = vmatpush1.msra.mxu0 0.0
        %1315 = vmatprep.subr.mxu0 0.0
        %1316 = vmatpush1.msra.mxu0 0.0
        %1317 = vmatprep.subr.mxu0 0.0
        %1318 = vmatpush1.msra.mxu0 0.0
        %1319 = vmatprep.subr.mxu0 0.0
        %1320 = vmatpush1.msra.mxu0 0.0
        %1321 = vmatprep.subr.mxu0 0.0
        %1322 = vmatpush1.msra.mxu0 0.0
        %1323 = vmatprep.subr.mxu0 0.0
        %1324 = vmatpush1.msra.mxu0 0.0
        %1325 = vmatprep.subr.mxu0 0.0
        %1326 = vmatpush1.msra.mxu0 0.0
        %1327 = vmatprep.subr.mxu0 0.0
        %1328 = vmatpush1.msra.mxu0 0.0
        %1329 = vmatprep.subr.mxu0 0.0
        %1330 = vmatpush1.msra.mxu0 0.0
        %1331 = vmatprep.subr.mxu0 0.0
        %1332 = vmatpush1.msra.mxu0 0.0
        %1333 = vmatprep.subr.mxu0 0.0
        %1334 = vmatpush1.msra.mxu0 0.0
        %1335 = vmatprep.subr.mxu0 0.0
        %1336 = vmatpush1.msra.mxu0 0.0
        %1337 = vmatprep.subr.mxu0 0.0
        %1338 = vmatpush1.msra.mxu0 0.0
        %1339 = vmatprep.mubr.f32.mxu0 0.0
        %1340 = vmatmul.mubr.f32.gmra.mrb[0].mxu0 %v1273
        %v1341 = vpop.f32.mrb[0].mxu0
        %v1342 = vadd.f32 0.0, %v1341
        %v1343 = vpop.f32.mrb[0].mxu0
        %1344 = vdwg.mxu0
        %v1346 = vsel %vm720, %v879, 0
        %1348 = vmatprep.subr.mxu0 0.0
        %1349 = vmatpush1.msra.mxu0 %v882
        %1350 = vmatprep.subr.mxu0 0.0
        %1351 = vmatpush1.msra.mxu0 %v883
        %1352 = vmatprep.subr.mxu0 0.0
        %1353 = vmatpush1.msra.mxu0 0.0
        %1354 = vmatprep.subr.mxu0 0.0
        %1355 = vmatpush1.msra.mxu0 0.0
        %1356 = vmatprep.subr.mxu0 0.0
        %1357 = vmatpush1.msra.mxu0 0.0
        %1358 = vmatprep.subr.mxu0 0.0
        %1359 = vmatpush1.msra.mxu0 0.0
        %1360 = vmatprep.subr.mxu0 0.0
        %1361 = vmatpush1.msra.mxu0 0.0
        %1362 = vmatprep.subr.mxu0 0.0
        %1363 = vmatpush1.msra.mxu0 0.0
        %1364 = vmatprep.subr.mxu0 0.0
        %1365 = vmatpush1.msra.mxu0 0.0
        %1366 = vmatprep.subr.mxu0 0.0
        %1367 = vmatpush1.msra.mxu0 0.0
        %1368 = vmatprep.subr.mxu0 0.0
        %1369 = vmatpush1.msra.mxu0 0.0
        %1370 = vmatprep.subr.mxu0 0.0
        %1371 = vmatpush1.msra.mxu0 0.0
        %1372 = vmatprep.subr.mxu0 0.0
        %1373 = vmatpush1.msra.mxu0 0.0
        %1374 = vmatprep.subr.mxu0 0.0
        %1375 = vmatpush1.msra.mxu0 0.0
        %1376 = vmatprep.subr.mxu0 0.0
        %1377 = vmatpush1.msra.mxu0 0.0
        %1378 = vmatprep.subr.mxu0 0.0
        %1379 = vmatpush1.msra.mxu0 0.0
        %1380 = vmatprep.subr.mxu0 0.0
        %1381 = vmatpush1.msra.mxu0 0.0
        %1382 = vmatprep.subr.mxu0 0.0
        %1383 = vmatpush1.msra.mxu0 0.0
        %1384 = vmatprep.subr.mxu0 0.0
        %1385 = vmatpush1.msra.mxu0 0.0
        %1386 = vmatprep.subr.mxu0 0.0
        %1387 = vmatpush1.msra.mxu0 0.0
        %1388 = vmatprep.subr.mxu0 0.0
        %1389 = vmatpush1.msra.mxu0 0.0
        %1390 = vmatprep.subr.mxu0 0.0
        %1391 = vmatpush1.msra.mxu0 0.0
        %1392 = vmatprep.subr.mxu0 0.0
        %1393 = vmatpush1.msra.mxu0 0.0
        %1394 = vmatprep.subr.mxu0 0.0
        %1395 = vmatpush1.msra.mxu0 0.0
        %1396 = vmatprep.subr.mxu0 0.0
        %1397 = vmatpush1.msra.mxu0 0.0
        %1398 = vmatprep.subr.mxu0 0.0
        %1399 = vmatpush1.msra.mxu0 0.0
        %1400 = vmatprep.subr.mxu0 0.0
        %1401 = vmatpush1.msra.mxu0 0.0
        %1402 = vmatprep.subr.mxu0 0.0
        %1403 = vmatpush1.msra.mxu0 0.0
        %1404 = vmatprep.subr.mxu0 0.0
        %1405 = vmatpush1.msra.mxu0 0.0
        %1406 = vmatprep.subr.mxu0 0.0
        %1407 = vmatpush1.msra.mxu0 0.0
        %1408 = vmatprep.subr.mxu0 0.0
        %1409 = vmatpush1.msra.mxu0 0.0
        %1410 = vmatprep.subr.mxu0 0.0
        %1411 = vmatpush1.msra.mxu0 0.0
        %1412 = vmatprep.mubr.f32.mxu0 0.0
        %1413 = vmatmul.mubr.f32.gmra.mrb[0].mxu0 %v1346
        %v1414 = vpop.f32.mrb[0].mxu0
        %v1415 = vadd.f32 %v1342, %v1414
        %v1416 = vpop.f32.mrb[0].mxu0
        %1417 = vdwg.mxu0
        %s1418 = scalar_lea.vmem %s3, 64
        %v1419 = vld [vmem:[%s1418] sm:$0xff]
        %v1420 = vld [vmem:[%s1418 + $0x8] sm:$0xff]
        %v1421 = vld [vmem:[%s1418 + $0x10] sm:$0xff]
        %v1422 = vld [vmem:[%s1418 + $0x18] sm:$0xff]
        %1423 = vmatprep.subr.mxu0 0.0
        %1424 = vmatpush1.msra.mxu0 %v1419
        %1425 = vmatprep.subr.mxu0 0.0
        %1426 = vmatpush1.msra.mxu0 %v1420
        %1427 = vmatprep.subr.mxu0 0.0
        %1428 = vmatpush1.msra.mxu0 %v1421
        %1429 = vmatprep.subr.mxu0 0.0
        %1430 = vmatpush1.msra.mxu0 %v1422
        %1431 = vmatprep.subr.mxu0 0.0
        %1432 = vmatpush1.msra.mxu0 0.0
        %1433 = vmatprep.subr.mxu0 0.0
        %1434 = vmatpush1.msra.mxu0 0.0
        %1435 = vmatprep.subr.mxu0 0.0
        %1436 = vmatpush1.msra.mxu0 0.0
        %1437 = vmatprep.subr.mxu0 0.0
        %1438 = vmatpush1.msra.mxu0 0.0
        %1439 = vmatprep.subr.mxu0 0.0
        %1440 = vmatpush1.msra.mxu0 0.0
        %1441 = vmatprep.subr.mxu0 0.0
        %1442 = vmatpush1.msra.mxu0 0.0
        %1443 = vmatprep.subr.mxu0 0.0
        %1444 = vmatpush1.msra.mxu0 0.0
        %1445 = vmatprep.subr.mxu0 0.0
        %1446 = vmatpush1.msra.mxu0 0.0
        %1447 = vmatprep.subr.mxu0 0.0
        %1448 = vmatpush1.msra.mxu0 0.0
        %1449 = vmatprep.subr.mxu0 0.0
        %1450 = vmatpush1.msra.mxu0 0.0
        %1451 = vmatprep.subr.mxu0 0.0
        %1452 = vmatpush1.msra.mxu0 0.0
        %1453 = vmatprep.subr.mxu0 0.0
        %1454 = vmatpush1.msra.mxu0 0.0
        %1455 = vmatprep.subr.mxu0 0.0
        %1456 = vmatpush1.msra.mxu0 0.0
        %1457 = vmatprep.subr.mxu0 0.0
        %1458 = vmatpush1.msra.mxu0 0.0
        %1459 = vmatprep.subr.mxu0 0.0
        %1460 = vmatpush1.msra.mxu0 0.0
        %1461 = vmatprep.subr.mxu0 0.0
        %1462 = vmatpush1.msra.mxu0 0.0
        %1463 = vmatprep.subr.mxu0 0.0
        %1464 = vmatpush1.msra.mxu0 0.0
        %1465 = vmatprep.subr.mxu0 0.0
        %1466 = vmatpush1.msra.mxu0 0.0
        %1467 = vmatprep.subr.mxu0 0.0
        %1468 = vmatpush1.msra.mxu0 0.0
        %1469 = vmatprep.subr.mxu0 0.0
        %1470 = vmatpush1.msra.mxu0 0.0
        %1471 = vmatprep.subr.mxu0 0.0
        %1472 = vmatpush1.msra.mxu0 0.0
        %1473 = vmatprep.subr.mxu0 0.0
        %1474 = vmatpush1.msra.mxu0 0.0
        %1475 = vmatprep.subr.mxu0 0.0
        %1476 = vmatpush1.msra.mxu0 0.0
        %1477 = vmatprep.subr.mxu0 0.0
        %1478 = vmatpush1.msra.mxu0 0.0
        %1479 = vmatprep.subr.mxu0 0.0
        %1480 = vmatpush1.msra.mxu0 0.0
        %1481 = vmatprep.subr.mxu0 0.0
        %1482 = vmatpush1.msra.mxu0 0.0
        %1483 = vmatprep.subr.mxu0 0.0
        %1484 = vmatpush1.msra.mxu0 0.0
        %1485 = vmatprep.subr.mxu0 0.0
        %1486 = vmatpush1.msra.mxu0 0.0
        %1487 = vmatprep.mubr.f32.mxu0 0.0
        %1488 = vmatmul.mubr.f32.gmra.mrb[0].mxu0 %v500
        %v1489 = vpop.f32.mrb[0].mxu0
        %v1490 = vadd.f32 0.0, %v1489
        %v1491 = vpop.f32.mrb[0].mxu0
        %1492 = vdwg.mxu0
        %s1493 = scalar_lea.vmem %s4, 64
        %v1494 = vld [vmem:[%s1493] sm:$0xff]
        %v1495 = vld [vmem:[%s1493 + $0x8] sm:$0xff]
        %v1496 = vld [vmem:[%s1493 + $0x10] sm:$0xff]
        %v1497 = vld [vmem:[%s1493 + $0x18] sm:$0xff]
        %1498 = vmatprep.subr.mxu0 0.0
        %1499 = vmatpush1.msra.mxu0 %v1494
        %1500 = vmatprep.subr.mxu0 0.0
        %1501 = vmatpush1.msra.mxu0 %v1495
        %1502 = vmatprep.subr.mxu0 0.0
        %1503 = vmatpush1.msra.mxu0 %v1496
        %1504 = vmatprep.subr.mxu0 0.0
        %1505 = vmatpush1.msra.mxu0 %v1497
        %1506 = vmatprep.subr.mxu0 0.0
        %1507 = vmatpush1.msra.mxu0 0.0
        %1508 = vmatprep.subr.mxu0 0.0
        %1509 = vmatpush1.msra.mxu0 0.0
        %1510 = vmatprep.subr.mxu0 0.0
        %1511 = vmatpush1.msra.mxu0 0.0
        %1512 = vmatprep.subr.mxu0 0.0
        %1513 = vmatpush1.msra.mxu0 0.0
        %1514 = vmatprep.subr.mxu0 0.0
        %1515 = vmatpush1.msra.mxu0 0.0
        %1516 = vmatprep.subr.mxu0 0.0
        %1517 = vmatpush1.msra.mxu0 0.0
        %1518 = vmatprep.subr.mxu0 0.0
        %1519 = vmatpush1.msra.mxu0 0.0
        %1520 = vmatprep.subr.mxu0 0.0
        %1521 = vmatpush1.msra.mxu0 0.0
        %1522 = vmatprep.subr.mxu0 0.0
        %1523 = vmatpush1.msra.mxu0 0.0
        %1524 = vmatprep.subr.mxu0 0.0
        %1525 = vmatpush1.msra.mxu0 0.0
        %1526 = vmatprep.subr.mxu0 0.0
        %1527 = vmatpush1.msra.mxu0 0.0
        %1528 = vmatprep.subr.mxu0 0.0
        %1529 = vmatpush1.msra.mxu0 0.0
        %1530 = vmatprep.subr.mxu0 0.0
        %1531 = vmatpush1.msra.mxu0 0.0
        %1532 = vmatprep.subr.mxu0 0.0
        %1533 = vmatpush1.msra.mxu0 0.0
        %1534 = vmatprep.subr.mxu0 0.0
        %1535 = vmatpush1.msra.mxu0 0.0
        %1536 = vmatprep.subr.mxu0 0.0
        %1537 = vmatpush1.msra.mxu0 0.0
        %1538 = vmatprep.subr.mxu0 0.0
        %1539 = vmatpush1.msra.mxu0 0.0
        %1540 = vmatprep.subr.mxu0 0.0
        %1541 = vmatpush1.msra.mxu0 0.0
        %1542 = vmatprep.subr.mxu0 0.0
        %1543 = vmatpush1.msra.mxu0 0.0
        %1544 = vmatprep.subr.mxu0 0.0
        %1545 = vmatpush1.msra.mxu0 0.0
        %1546 = vmatprep.subr.mxu0 0.0
        %1547 = vmatpush1.msra.mxu0 0.0
        %1548 = vmatprep.subr.mxu0 0.0
        %1549 = vmatpush1.msra.mxu0 0.0
        %1550 = vmatprep.subr.mxu0 0.0
        %1551 = vmatpush1.msra.mxu0 0.0
        %1552 = vmatprep.subr.mxu0 0.0
        %1553 = vmatpush1.msra.mxu0 0.0
        %1554 = vmatprep.subr.mxu0 0.0
        %1555 = vmatpush1.msra.mxu0 0.0
        %1556 = vmatprep.subr.mxu0 0.0
        %1557 = vmatpush1.msra.mxu0 0.0
        %1558 = vmatprep.subr.mxu0 0.0
        %1559 = vmatpush1.msra.mxu0 0.0
        %1560 = vmatprep.subr.mxu0 0.0
        %1561 = vmatpush1.msra.mxu0 0.0
        %1562 = vmatprep.mubr.f32.mxu0 0.0
        %1563 = vmatmul.mubr.f32.gmra.mrb[0].mxu0 %v500
        %v1564 = vpop.f32.mrb[0].mxu0
        %v1565 = vadd.f32 0.0, %v1564
        %v1566 = vpop.f32.mrb[0].mxu0
        %1567 = vdwg.mxu0
        %s1568 = scalar_lea.vmem %s5, 64
        %v1569 = vld [vmem:[%s1568] sm:$0xff]
        %v1570 = vld [vmem:[%s1568 + $0x8] sm:$0xff]
        %v1571 = vld [vmem:[%s1568 + $0x10] sm:$0xff]
        %v1572 = vld [vmem:[%s1568 + $0x18] sm:$0xff]
        %1573 = vmatprep.subr.mxu0 0.0
        %1574 = vmatpush1.msra.mxu0 %v1569
        %1575 = vmatprep.subr.mxu0 0.0
        %1576 = vmatpush1.msra.mxu0 %v1570
        %1577 = vmatprep.subr.mxu0 0.0
        %1578 = vmatpush1.msra.mxu0 %v1571
        %1579 = vmatprep.subr.mxu0 0.0
        %1580 = vmatpush1.msra.mxu0 %v1572
        %1581 = vmatprep.subr.mxu0 0.0
        %1582 = vmatpush1.msra.mxu0 0.0
        %1583 = vmatprep.subr.mxu0 0.0
        %1584 = vmatpush1.msra.mxu0 0.0
        %1585 = vmatprep.subr.mxu0 0.0
        %1586 = vmatpush1.msra.mxu0 0.0
        %1587 = vmatprep.subr.mxu0 0.0
        %1588 = vmatpush1.msra.mxu0 0.0
        %1589 = vmatprep.subr.mxu0 0.0
        %1590 = vmatpush1.msra.mxu0 0.0
        %1591 = vmatprep.subr.mxu0 0.0
        %1592 = vmatpush1.msra.mxu0 0.0
        %1593 = vmatprep.subr.mxu0 0.0
        %1594 = vmatpush1.msra.mxu0 0.0
        %1595 = vmatprep.subr.mxu0 0.0
        %1596 = vmatpush1.msra.mxu0 0.0
        %1597 = vmatprep.subr.mxu0 0.0
        %1598 = vmatpush1.msra.mxu0 0.0
        %1599 = vmatprep.subr.mxu0 0.0
        %1600 = vmatpush1.msra.mxu0 0.0
        %1601 = vmatprep.subr.mxu0 0.0
        %1602 = vmatpush1.msra.mxu0 0.0
        %1603 = vmatprep.subr.mxu0 0.0
        %1604 = vmatpush1.msra.mxu0 0.0
        %1605 = vmatprep.subr.mxu0 0.0
        %1606 = vmatpush1.msra.mxu0 0.0
        %1607 = vmatprep.subr.mxu0 0.0
        %1608 = vmatpush1.msra.mxu0 0.0
        %1609 = vmatprep.subr.mxu0 0.0
        %1610 = vmatpush1.msra.mxu0 0.0
        %1611 = vmatprep.subr.mxu0 0.0
        %1612 = vmatpush1.msra.mxu0 0.0
        %1613 = vmatprep.subr.mxu0 0.0
        %1614 = vmatpush1.msra.mxu0 0.0
        %1615 = vmatprep.subr.mxu0 0.0
        %1616 = vmatpush1.msra.mxu0 0.0
        %1617 = vmatprep.subr.mxu0 0.0
        %1618 = vmatpush1.msra.mxu0 0.0
        %1619 = vmatprep.subr.mxu0 0.0
        %1620 = vmatpush1.msra.mxu0 0.0
        %1621 = vmatprep.subr.mxu0 0.0
        %1622 = vmatpush1.msra.mxu0 0.0
        %1623 = vmatprep.subr.mxu0 0.0
        %1624 = vmatpush1.msra.mxu0 0.0
        %1625 = vmatprep.subr.mxu0 0.0
        %1626 = vmatpush1.msra.mxu0 0.0
        %1627 = vmatprep.subr.mxu0 0.0
        %1628 = vmatpush1.msra.mxu0 0.0
        %1629 = vmatprep.subr.mxu0 0.0
        %1630 = vmatpush1.msra.mxu0 0.0
        %1631 = vmatprep.subr.mxu0 0.0
        %1632 = vmatpush1.msra.mxu0 0.0
        %1633 = vmatprep.subr.mxu0 0.0
        %1634 = vmatpush1.msra.mxu0 0.0
        %1635 = vmatprep.subr.mxu0 0.0
        %1636 = vmatpush1.msra.mxu0 0.0
        %1637 = vmatprep.mubr.f32.mxu0 0.0
        %1638 = vmatmul.mubr.f32.gmra.mrb[0].mxu0 %v500
        %v1639 = vpop.f32.mrb[0].mxu0
        %v1640 = vadd.f32 0.0, %v1639
        %v1641 = vpop.f32.mrb[0].mxu0
        %1642 = vdwg.mxu0
        %v1644 = vsel %vm720, %v1490, 0
        %v1647 = vsel %vm720, %v1565, 0
        %1649 = vmatprep.subr.mxu0 0.0
        %1650 = vmatpush1.xpose.msra.mxu0 %v1647
        %1651 = vmatprep.subr.mxu0 0.0
        %1652 = vmatpush1.xpose.msra.mxu0 0.0
        %1653 = vmatprep.subr.mxu0 0.0
        %1654 = vmatpush1.xpose.msra.mxu0 0.0
        %1655 = vmatprep.subr.mxu0 0.0
        %1656 = vmatpush1.xpose.msra.mxu0 0.0
        %1657 = vmatprep.subr.mxu0 0.0
        %1658 = vmatpush1.xpose.msra.mxu0 0.0
        %1659 = vmatprep.subr.mxu0 0.0
        %1660 = vmatpush1.xpose.msra.mxu0 0.0
        %1661 = vmatprep.subr.mxu0 0.0
        %1662 = vmatpush1.xpose.msra.mxu0 0.0
        %1663 = vmatprep.subr.mxu0 0.0
        %1664 = vmatpush1.xpose.msra.mxu0 0.0
        %1665 = vmatprep.subr.mxu0 0.0
        %1666 = vmatpush1.xpose.msra.mxu0 0.0
        %1667 = vmatprep.subr.mxu0 0.0
        %1668 = vmatpush1.xpose.msra.mxu0 0.0
        %1669 = vmatprep.subr.mxu0 0.0
        %1670 = vmatpush1.xpose.msra.mxu0 0.0
        %1671 = vmatprep.subr.mxu0 0.0
        %1672 = vmatpush1.xpose.msra.mxu0 0.0
        %1673 = vmatprep.subr.mxu0 0.0
        %1674 = vmatpush1.xpose.msra.mxu0 0.0
        %1675 = vmatprep.subr.mxu0 0.0
        %1676 = vmatpush1.xpose.msra.mxu0 0.0
        %1677 = vmatprep.subr.mxu0 0.0
        %1678 = vmatpush1.xpose.msra.mxu0 0.0
        %1679 = vmatprep.subr.mxu0 0.0
        %1680 = vmatpush1.xpose.msra.mxu0 0.0
        %1681 = vmatprep.subr.mxu0 0.0
        %1682 = vmatpush1.xpose.msra.mxu0 0.0
        %1683 = vmatprep.subr.mxu0 0.0
        %1684 = vmatpush1.xpose.msra.mxu0 0.0
        %1685 = vmatprep.subr.mxu0 0.0
        %1686 = vmatpush1.xpose.msra.mxu0 0.0
        %1687 = vmatprep.subr.mxu0 0.0
        %1688 = vmatpush1.xpose.msra.mxu0 0.0
        %1689 = vmatprep.subr.mxu0 0.0
        %1690 = vmatpush1.xpose.msra.mxu0 0.0
        %1691 = vmatprep.subr.mxu0 0.0
        %1692 = vmatpush1.xpose.msra.mxu0 0.0
        %1693 = vmatprep.subr.mxu0 0.0
        %1694 = vmatpush1.xpose.msra.mxu0 0.0
        %1695 = vmatprep.subr.mxu0 0.0
        %1696 = vmatpush1.xpose.msra.mxu0 0.0
        %1697 = vmatprep.subr.mxu0 0.0
        %1698 = vmatpush1.xpose.msra.mxu0 0.0
        %1699 = vmatprep.subr.mxu0 0.0
        %1700 = vmatpush1.xpose.msra.mxu0 0.0
        %1701 = vmatprep.subr.mxu0 0.0
        %1702 = vmatpush1.xpose.msra.mxu0 0.0
        %1703 = vmatprep.subr.mxu0 0.0
        %1704 = vmatpush1.xpose.msra.mxu0 0.0
        %1705 = vmatprep.subr.mxu0 0.0
        %1706 = vmatpush1.xpose.msra.mxu0 0.0
        %1707 = vmatprep.subr.mxu0 0.0
        %1708 = vmatpush1.xpose.msra.mxu0 0.0
        %1709 = vmatprep.subr.mxu0 0.0
        %1710 = vmatpush1.xpose.msra.mxu0 0.0
        %1711 = vmatprep.subr.mxu0 0.0
        %1712 = vmatpush1.xpose.msra.mxu0 0.0
        %1713 = vmatprep.mubr.f32.mxu0 0.0
        %1714 = vmatmul.mubr.f32.gmra.mrb[0].mxu0 %v1644
        %v1715 = vpop.f32.mrb[0].mxu0
        %v1716 = vadd.f32 0.0, %v1715
        %v1717 = vpop.f32.mrb[0].mxu0
        %1718 = vdwg.mxu0
        %v1719 = vsel %vm797, %v1716, -inf
        %1720 = vmax.xlane.f32.xlu0 %v1719
        %v1721 = vpop.xlane.xlu0 %1720
        %v1722 = vsub.f32 %v1716, %v1721
        %v1723 = vmul.f32 %v1722, 1.442695
        %v1724 = vpow.pop %v1723
        %v1725 = vsel %vm797, %v1724, 0.0
        %1726 = vadd.xlane.f32.xlu0 %v1725
        %v1727 = vpop.xlane.xlu0 %1726
        %v1728 = vrcp.pop %v1727
        %v1729 = vmul.f32 %v1724, %v1728
        %v1731 = vsel %vm797, %v1729, 0
        %1733 = vmatprep.subr.mxu0 0.0
        %1734 = vmatpush1.msra.mxu0 %v1640
        %1735 = vmatprep.subr.mxu0 0.0
        %1736 = vmatpush1.msra.mxu0 0.0
        %1737 = vmatprep.subr.mxu0 0.0
        %1738 = vmatpush1.msra.mxu0 0.0
        %1739 = vmatprep.subr.mxu0 0.0
        %1740 = vmatpush1.msra.mxu0 0.0
        %1741 = vmatprep.subr.mxu0 0.0
        %1742 = vmatpush1.msra.mxu0 0.0
        %1743 = vmatprep.subr.mxu0 0.0
        %1744 = vmatpush1.msra.mxu0 0.0
        %1745 = vmatprep.subr.mxu0 0.0
        %1746 = vmatpush1.msra.mxu0 0.0
        %1747 = vmatprep.subr.mxu0 0.0
        %1748 = vmatpush1.msra.mxu0 0.0
        %1749 = vmatprep.subr.mxu0 0.0
        %1750 = vmatpush1.msra.mxu0 0.0
        %1751 = vmatprep.subr.mxu0 0.0
        %1752 = vmatpush1.msra.mxu0 0.0
        %1753 = vmatprep.subr.mxu0 0.0
        %1754 = vmatpush1.msra.mxu0 0.0
        %1755 = vmatprep.subr.mxu0 0.0
        %1756 = vmatpush1.msra.mxu0 0.0
        %1757 = vmatprep.subr.mxu0 0.0
        %1758 = vmatpush1.msra.mxu0 0.0
        %1759 = vmatprep.subr.mxu0 0.0
        %1760 = vmatpush1.msra.mxu0 0.0
        %1761 = vmatprep.subr.mxu0 0.0
        %1762 = vmatpush1.msra.mxu0 0.0
        %1763 = vmatprep.subr.mxu0 0.0
        %1764 = vmatpush1.msra.mxu0 0.0
        %1765 = vmatprep.subr.mxu0 0.0
        %1766 = vmatpush1.msra.mxu0 0.0
        %1767 = vmatprep.subr.mxu0 0.0
        %1768 = vmatpush1.msra.mxu0 0.0
        %1769 = vmatprep.subr.mxu0 0.0
        %1770 = vmatpush1.msra.mxu0 0.0
        %1771 = vmatprep.subr.mxu0 0.0
        %1772 = vmatpush1.msra.mxu0 0.0
        %1773 = vmatprep.subr.mxu0 0.0
        %1774 = vmatpush1.msra.mxu0 0.0
        %1775 = vmatprep.subr.mxu0 0.0
        %1776 = vmatpush1.msra.mxu0 0.0
        %1777 = vmatprep.subr.mxu0 0.0
        %1778 = vmatpush1.msra.mxu0 0.0
        %1779 = vmatprep.subr.mxu0 0.0
        %1780 = vmatpush1.msra.mxu0 0.0
        %1781 = vmatprep.subr.mxu0 0.0
        %1782 = vmatpush1.msra.mxu0 0.0
        %1783 = vmatprep.subr.mxu0 0.0
        %1784 = vmatpush1.msra.mxu0 0.0
        %1785 = vmatprep.subr.mxu0 0.0
        %1786 = vmatpush1.msra.mxu0 0.0
        %1787 = vmatprep.subr.mxu0 0.0
        %1788 = vmatpush1.msra.mxu0 0.0
        %1789 = vmatprep.subr.mxu0 0.0
        %1790 = vmatpush1.msra.mxu0 0.0
        %1791 = vmatprep.subr.mxu0 0.0
        %1792 = vmatpush1.msra.mxu0 0.0
        %1793 = vmatprep.subr.mxu0 0.0
        %1794 = vmatpush1.msra.mxu0 0.0
        %1795 = vmatprep.subr.mxu0 0.0
        %1796 = vmatpush1.msra.mxu0 0.0
        %1797 = vmatprep.mubr.f32.mxu0 0.0
        %1798 = vmatmul.mubr.f32.gmra.mrb[0].mxu0 %v1731
        %v1799 = vpop.f32.mrb[0].mxu0
        %v1800 = vadd.f32 0.0, %v1799
        %v1801 = vpop.f32.mrb[0].mxu0
        %1802 = vdwg.mxu0
        %s1803 = scalar_lea.vmem %s6, 32
        %v1804 = vld [vmem:[%s1803] sm:$0xff]
        %v1805 = vld [vmem:[%s1803 + $0x8] sm:$0xff]
        %v1807 = vsel %vm720, %v1800, 0
        %1809 = vmatprep.subr.mxu0 0.0
        %1810 = vmatpush1.msra.mxu0 %v1804
        %1811 = vmatprep.subr.mxu0 0.0
        %1812 = vmatpush1.msra.mxu0 %v1805
        %1813 = vmatprep.subr.mxu0 0.0
        %1814 = vmatpush1.msra.mxu0 0.0
        %1815 = vmatprep.subr.mxu0 0.0
        %1816 = vmatpush1.msra.mxu0 0.0
        %1817 = vmatprep.subr.mxu0 0.0
        %1818 = vmatpush1.msra.mxu0 0.0
        %1819 = vmatprep.subr.mxu0 0.0
        %1820 = vmatpush1.msra.mxu0 0.0
        %1821 = vmatprep.subr.mxu0 0.0
        %1822 = vmatpush1.msra.mxu0 0.0
        %1823 = vmatprep.subr.mxu0 0.0
        %1824 = vmatpush1.msra.mxu0 0.0
        %1825 = vmatprep.subr.mxu0 0.0
        %1826 = vmatpush1.msra.mxu0 0.0
        %1827 = vmatprep.subr.mxu0 0.0
        %1828 = vmatpush1.msra.mxu0 0.0
        %1829 = vmatprep.subr.mxu0 0.0
        %1830 = vmatpush1.msra.mxu0 0.0
        %1831 = vmatprep.subr.mxu0 0.0
        %1832 = vmatpush1.msra.mxu0 0.0
        %1833 = vmatprep.subr.mxu0 0.0
        %1834 = vmatpush1.msra.mxu0 0.0
        %1835 = vmatprep.subr.mxu0 0.0
        %1836 = vmatpush1.msra.mxu0 0.0
        %1837 = vmatprep.subr.mxu0 0.0
        %1838 = vmatpush1.msra.mxu0 0.0
        %1839 = vmatprep.subr.mxu0 0.0
        %1840 = vmatpush1.msra.mxu0 0.0
        %1841 = vmatprep.subr.mxu0 0.0
        %1842 = vmatpush1.msra.mxu0 0.0
        %1843 = vmatprep.subr.mxu0 0.0
        %1844 = vmatpush1.msra.mxu0 0.0
        %1845 = vmatprep.subr.mxu0 0.0
        %1846 = vmatpush1.msra.mxu0 0.0
        %1847 = vmatprep.subr.mxu0 0.0
        %1848 = vmatpush1.msra.mxu0 0.0
        %1849 = vmatprep.subr.mxu0 0.0
        %1850 = vmatpush1.msra.mxu0 0.0
        %1851 = vmatprep.subr.mxu0 0.0
        %1852 = vmatpush1.msra.mxu0 0.0
        %1853 = vmatprep.subr.mxu0 0.0
        %1854 = vmatpush1.msra.mxu0 0.0
        %1855 = vmatprep.subr.mxu0 0.0
        %1856 = vmatpush1.msra.mxu0 0.0
        %1857 = vmatprep.subr.mxu0 0.0
        %1858 = vmatpush1.msra.mxu0 0.0
        %1859 = vmatprep.subr.mxu0 0.0
        %1860 = vmatpush1.msra.mxu0 0.0
        %1861 = vmatprep.subr.mxu0 0.0
        %1862 = vmatpush1.msra.mxu0 0.0
        %1863 = vmatprep.subr.mxu0 0.0
        %1864 = vmatpush1.msra.mxu0 0.0
        %1865 = vmatprep.subr.mxu0 0.0
        %1866 = vmatpush1.msra.mxu0 0.0
        %1867 = vmatprep.subr.mxu0 0.0
        %1868 = vmatpush1.msra.mxu0 0.0
        %1869 = vmatprep.subr.mxu0 0.0
        %1870 = vmatpush1.msra.mxu0 0.0
        %1871 = vmatprep.subr.mxu0 0.0
        %1872 = vmatpush1.msra.mxu0 0.0
        %1873 = vmatprep.mubr.f32.mxu0 0.0
        %1874 = vmatmul.mubr.f32.gmra.mrb[0].mxu0 %v1807
        %v1875 = vpop.f32.mrb[0].mxu0
        %v1876 = vadd.f32 0.0, %v1875
        %v1877 = vpop.f32.mrb[0].mxu0
        %1878 = vdwg.mxu0
        %v1879 = vadd.f32 %v1415, %v1876
        %s1880 = scalar_lea.vmem %s3, 96
        %v1881 = vld [vmem:[%s1880] sm:$0xff]
        %v1882 = vld [vmem:[%s1880 + $0x8] sm:$0xff]
        %v1883 = vld [vmem:[%s1880 + $0x10] sm:$0xff]
        %v1884 = vld [vmem:[%s1880 + $0x18] sm:$0xff]
        %1885 = vmatprep.subr.mxu0 0.0
        %1886 = vmatpush1.msra.mxu0 %v1881
        %1887 = vmatprep.subr.mxu0 0.0
        %1888 = vmatpush1.msra.mxu0 %v1882
        %1889 = vmatprep.subr.mxu0 0.0
        %1890 = vmatpush1.msra.mxu0 %v1883
        %1891 = vmatprep.subr.mxu0 0.0
        %1892 = vmatpush1.msra.mxu0 %v1884
        %1893 = vmatprep.subr.mxu0 0.0
        %1894 = vmatpush1.msra.mxu0 0.0
        %1895 = vmatprep.subr.mxu0 0.0
        %1896 = vmatpush1.msra.mxu0 0.0
        %1897 = vmatprep.subr.mxu0 0.0
        %1898 = vmatpush1.msra.mxu0 0.0
        %1899 = vmatprep.subr.mxu0 0.0
        %1900 = vmatpush1.msra.mxu0 0.0
        %1901 = vmatprep.subr.mxu0 0.0
        %1902 = vmatpush1.msra.mxu0 0.0
        %1903 = vmatprep.subr.mxu0 0.0
        %1904 = vmatpush1.msra.mxu0 0.0
        %1905 = vmatprep.subr.mxu0 0.0
        %1906 = vmatpush1.msra.mxu0 0.0
        %1907 = vmatprep.subr.mxu0 0.0
        %1908 = vmatpush1.msra.mxu0 0.0
        %1909 = vmatprep.subr.mxu0 0.0
        %1910 = vmatpush1.msra.mxu0 0.0
        %1911 = vmatprep.subr.mxu0 0.0
        %1912 = vmatpush1.msra.mxu0 0.0
        %1913 = vmatprep.subr.mxu0 0.0
        %1914 = vmatpush1.msra.mxu0 0.0
        %1915 = vmatprep.subr.mxu0 0.0
        %1916 = vmatpush1.msra.mxu0 0.0
        %1917 = vmatprep.subr.mxu0 0.0
        %1918 = vmatpush1.msra.mxu0 0.0
        %1919 = vmatprep.subr.mxu0 0.0
        %1920 = vmatpush1.msra.mxu0 0.0
        %1921 = vmatprep.subr.mxu0 0.0
        %1922 = vmatpush1.msra.mxu0 0.0
        %1923 = vmatprep.subr.mxu0 0.0
        %1924 = vmatpush1.msra.mxu0 0.0
        %1925 = vmatprep.subr.mxu0 0.0
        %1926 = vmatpush1.msra.mxu0 0.0
        %1927 = vmatprep.subr.mxu0 0.0
        %1928 = vmatpush1.msra.mxu0 0.0
        %1929 = vmatprep.subr.mxu0 0.0
        %1930 = vmatpush1.msra.mxu0 0.0
        %1931 = vmatprep.subr.mxu0 0.0
        %1932 = vmatpush1.msra.mxu0 0.0
        %1933 = vmatprep.subr.mxu0 0.0
        %1934 = vmatpush1.msra.mxu0 0.0
        %1935 = vmatprep.subr.mxu0 0.0
        %1936 = vmatpush1.msra.mxu0 0.0
        %1937 = vmatprep.subr.mxu0 0.0
        %1938 = vmatpush1.msra.mxu0 0.0
        %1939 = vmatprep.subr.mxu0 0.0
        %1940 = vmatpush1.msra.mxu0 0.0
        %1941 = vmatprep.subr.mxu0 0.0
        %1942 = vmatpush1.msra.mxu0 0.0
        %1943 = vmatprep.subr.mxu0 0.0
        %1944 = vmatpush1.msra.mxu0 0.0
        %1945 = vmatprep.subr.mxu0 0.0
        %1946 = vmatpush1.msra.mxu0 0.0
        %1947 = vmatprep.subr.mxu0 0.0
        %1948 = vmatpush1.msra.mxu0 0.0
        %1949 = vmatprep.mubr.f32.mxu0 0.0
        %1950 = vmatmul.mubr.f32.gmra.mrb[0].mxu0 %v500
        %v1951 = vpop.f32.mrb[0].mxu0
        %v1952 = vadd.f32 0.0, %v1951
        %v1953 = vpop.f32.mrb[0].mxu0
        %1954 = vdwg.mxu0
        %s1955 = scalar_lea.vmem %s4, 96
        %v1956 = vld [vmem:[%s1955] sm:$0xff]
        %v1957 = vld [vmem:[%s1955 + $0x8] sm:$0xff]
        %v1958 = vld [vmem:[%s1955 + $0x10] sm:$0xff]
        %v1959 = vld [vmem:[%s1955 + $0x18] sm:$0xff]
        %1960 = vmatprep.subr.mxu0 0.0
        %1961 = vmatpush1.msra.mxu0 %v1956
        %1962 = vmatprep.subr.mxu0 0.0
        %1963 = vmatpush1.msra.mxu0 %v1957
        %1964 = vmatprep.subr.mxu0 0.0
        %1965 = vmatpush1.msra.mxu0 %v1958
        %1966 = vmatprep.subr.mxu0 0.0
        %1967 = vmatpush1.msra.mxu0 %v1959
        %1968 = vmatprep.subr.mxu0 0.0
        %1969 = vmatpush1.msra.mxu0 0.0
        %1970 = vmatprep.subr.mxu0 0.0
        %1971 = vmatpush1.msra.mxu0 0.0
        %1972 = vmatprep.subr.mxu0 0.0
        %1973 = vmatpush1.msra.mxu0 0.0
        %1974 = vmatprep.subr.mxu0 0.0
        %1975 = vmatpush1.msra.mxu0 0.0
        %1976 = vmatprep.subr.mxu0 0.0
        %1977 = vmatpush1.msra.mxu0 0.0
        %1978 = vmatprep.subr.mxu0 0.0
        %1979 = vmatpush1.msra.mxu0 0.0
        %1980 = vmatprep.subr.mxu0 0.0
        %1981 = vmatpush1.msra.mxu0 0.0
        %1982 = vmatprep.subr.mxu0 0.0
        %1983 = vmatpush1.msra.mxu0 0.0
        %1984 = vmatprep.subr.mxu0 0.0
        %1985 = vmatpush1.msra.mxu0 0.0
        %1986 = vmatprep.subr.mxu0 0.0
        %1987 = vmatpush1.msra.mxu0 0.0
        %1988 = vmatprep.subr.mxu0 0.0
        %1989 = vmatpush1.msra.mxu0 0.0
        %1990 = vmatprep.subr.mxu0 0.0
        %1991 = vmatpush1.msra.mxu0 0.0
        %1992 = vmatprep.subr.mxu0 0.0
        %1993 = vmatpush1.msra.mxu0 0.0
        %1994 = vmatprep.subr.mxu0 0.0
        %1995 = vmatpush1.msra.mxu0 0.0
        %1996 = vmatprep.subr.mxu0 0.0
        %1997 = vmatpush1.msra.mxu0 0.0
        %1998 = vmatprep.subr.mxu0 0.0
        %1999 = vmatpush1.msra.mxu0 0.0
        %2000 = vmatprep.subr.mxu0 0.0
        %2001 = vmatpush1.msra.mxu0 0.0
        %2002 = vmatprep.subr.mxu0 0.0
        %2003 = vmatpush1.msra.mxu0 0.0
        %2004 = vmatprep.subr.mxu0 0.0
        %2005 = vmatpush1.msra.mxu0 0.0
        %2006 = vmatprep.subr.mxu0 0.0
        %2007 = vmatpush1.msra.mxu0 0.0
        %2008 = vmatprep.subr.mxu0 0.0
        %2009 = vmatpush1.msra.mxu0 0.0
        %2010 = vmatprep.subr.mxu0 0.0
        %2011 = vmatpush1.msra.mxu0 0.0
        %2012 = vmatprep.subr.mxu0 0.0
        %2013 = vmatpush1.msra.mxu0 0.0
        %2014 = vmatprep.subr.mxu0 0.0
        %2015 = vmatpush1.msra.mxu0 0.0
        %2016 = vmatprep.subr.mxu0 0.0
        %2017 = vmatpush1.msra.mxu0 0.0
        %2018 = vmatprep.subr.mxu0 0.0
        %2019 = vmatpush1.msra.mxu0 0.0
        %2020 = vmatprep.subr.mxu0 0.0
        %2021 = vmatpush1.msra.mxu0 0.0
        %2022 = vmatprep.subr.mxu0 0.0
        %2023 = vmatpush1.msra.mxu0 0.0
        %2024 = vmatprep.mubr.f32.mxu0 0.0
        %2025 = vmatmul.mubr.f32.gmra.mrb[0].mxu0 %v500
        %v2026 = vpop.f32.mrb[0].mxu0
        %v2027 = vadd.f32 0.0, %v2026
        %v2028 = vpop.f32.mrb[0].mxu0
        %2029 = vdwg.mxu0
        %s2030 = scalar_lea.vmem %s5, 96
        %v2031 = vld [vmem:[%s2030] sm:$0xff]
        %v2032 = vld [vmem:[%s2030 + $0x8] sm:$0xff]
        %v2033 = vld [vmem:[%s2030 + $0x10] sm:$0xff]
        %v2034 = vld [vmem:[%s2030 + $0x18] sm:$0xff]
        %2035 = vmatprep.subr.mxu0 0.0
        %2036 = vmatpush1.msra.mxu0 %v2031
        %2037 = vmatprep.subr.mxu0 0.0
        %2038 = vmatpush1.msra.mxu0 %v2032
        %2039 = vmatprep.subr.mxu0 0.0
        %2040 = vmatpush1.msra.mxu0 %v2033
        %2041 = vmatprep.subr.mxu0 0.0
        %2042 = vmatpush1.msra.mxu0 %v2034
        %2043 = vmatprep.subr.mxu0 0.0
        %2044 = vmatpush1.msra.mxu0 0.0
        %2045 = vmatprep.subr.mxu0 0.0
        %2046 = vmatpush1.msra.mxu0 0.0
        %2047 = vmatprep.subr.mxu0 0.0
        %2048 = vmatpush1.msra.mxu0 0.0
        %2049 = vmatprep.subr.mxu0 0.0
        %2050 = vmatpush1.msra.mxu0 0.0
        %2051 = vmatprep.subr.mxu0 0.0
        %2052 = vmatpush1.msra.mxu0 0.0
        %2053 = vmatprep.subr.mxu0 0.0
        %2054 = vmatpush1.msra.mxu0 0.0
        %2055 = vmatprep.subr.mxu0 0.0
        %2056 = vmatpush1.msra.mxu0 0.0
        %2057 = vmatprep.subr.mxu0 0.0
        %2058 = vmatpush1.msra.mxu0 0.0
        %2059 = vmatprep.subr.mxu0 0.0
        %2060 = vmatpush1.msra.mxu0 0.0
        %2061 = vmatprep.subr.mxu0 0.0
        %2062 = vmatpush1.msra.mxu0 0.0
        %2063 = vmatprep.subr.mxu0 0.0
        %2064 = vmatpush1.msra.mxu0 0.0
        %2065 = vmatprep.subr.mxu0 0.0
        %2066 = vmatpush1.msra.mxu0 0.0
        %2067 = vmatprep.subr.mxu0 0.0
        %2068 = vmatpush1.msra.mxu0 0.0
        %2069 = vmatprep.subr.mxu0 0.0
        %2070 = vmatpush1.msra.mxu0 0.0
        %2071 = vmatprep.subr.mxu0 0.0
        %2072 = vmatpush1.msra.mxu0 0.0
        %2073 = vmatprep.subr.mxu0 0.0
        %2074 = vmatpush1.msra.mxu0 0.0
        %2075 = vmatprep.subr.mxu0 0.0
        %2076 = vmatpush1.msra.mxu0 0.0
        %2077 = vmatprep.subr.mxu0 0.0
        %2078 = vmatpush1.msra.mxu0 0.0
        %2079 = vmatprep.subr.mxu0 0.0
        %2080 = vmatpush1.msra.mxu0 0.0
        %2081 = vmatprep.subr.mxu0 0.0
        %2082 = vmatpush1.msra.mxu0 0.0
        %2083 = vmatprep.subr.mxu0 0.0
        %2084 = vmatpush1.msra.mxu0 0.0
        %2085 = vmatprep.subr.mxu0 0.0
        %2086 = vmatpush1.msra.mxu0 0.0
        %2087 = vmatprep.subr.mxu0 0.0
        %2088 = vmatpush1.msra.mxu0 0.0
        %2089 = vmatprep.subr.mxu0 0.0
        %2090 = vmatpush1.msra.mxu0 0.0
        %2091 = vmatprep.subr.mxu0 0.0
        %2092 = vmatpush1.msra.mxu0 0.0
        %2093 = vmatprep.subr.mxu0 0.0
        %2094 = vmatpush1.msra.mxu0 0.0
        %2095 = vmatprep.subr.mxu0 0.0
        %2096 = vmatpush1.msra.mxu0 0.0
        %2097 = vmatprep.subr.mxu0 0.0
        %2098 = vmatpush1.msra.mxu0 0.0
        %2099 = vmatprep.mubr.f32.mxu0 0.0
        %2100 = vmatmul.mubr.f32.gmra.mrb[0].mxu0 %v500
        %v2101 = vpop.f32.mrb[0].mxu0
        %v2102 = vadd.f32 0.0, %v2101
        %v2103 = vpop.f32.mrb[0].mxu0
        %2104 = vdwg.mxu0
        %v2106 = vsel %vm720, %v1952, 0
        %v2109 = vsel %vm720, %v2027, 0
        %2111 = vmatprep.subr.mxu0 0.0
        %2112 = vmatpush1.xpose.msra.mxu0 %v2109
        %2113 = vmatprep.subr.mxu0 0.0
        %2114 = vmatpush1.xpose.msra.mxu0 0.0
        %2115 = vmatprep.subr.mxu0 0.0
        %2116 = vmatpush1.xpose.msra.mxu0 0.0
        %2117 = vmatprep.subr.mxu0 0.0
        %2118 = vmatpush1.xpose.msra.mxu0 0.0
        %2119 = vmatprep.subr.mxu0 0.0
        %2120 = vmatpush1.xpose.msra.mxu0 0.0
        %2121 = vmatprep.subr.mxu0 0.0
        %2122 = vmatpush1.xpose.msra.mxu0 0.0
        %2123 = vmatprep.subr.mxu0 0.0
        %2124 = vmatpush1.xpose.msra.mxu0 0.0
        %2125 = vmatprep.subr.mxu0 0.0
        %2126 = vmatpush1.xpose.msra.mxu0 0.0
        %2127 = vmatprep.subr.mxu0 0.0
        %2128 = vmatpush1.xpose.msra.mxu0 0.0
        %2129 = vmatprep.subr.mxu0 0.0
        %2130 = vmatpush1.xpose.msra.mxu0 0.0
        %2131 = vmatprep.subr.mxu0 0.0
        %2132 = vmatpush1.xpose.msra.mxu0 0.0
        %2133 = vmatprep.subr.mxu0 0.0
        %2134 = vmatpush1.xpose.msra.mxu0 0.0
        %2135 = vmatprep.subr.mxu0 0.0
        %2136 = vmatpush1.xpose.msra.mxu0 0.0
        %2137 = vmatprep.subr.mxu0 0.0
        %2138 = vmatpush1.xpose.msra.mxu0 0.0
        %2139 = vmatprep.subr.mxu0 0.0
        %2140 = vmatpush1.xpose.msra.mxu0 0.0
        %2141 = vmatprep.subr.mxu0 0.0
        %2142 = vmatpush1.xpose.msra.mxu0 0.0
        %2143 = vmatprep.subr.mxu0 0.0
        %2144 = vmatpush1.xpose.msra.mxu0 0.0
        %2145 = vmatprep.subr.mxu0 0.0
        %2146 = vmatpush1.xpose.msra.mxu0 0.0
        %2147 = vmatprep.subr.mxu0 0.0
        %2148 = vmatpush1.xpose.msra.mxu0 0.0
        %2149 = vmatprep.subr.mxu0 0.0
        %2150 = vmatpush1.xpose.msra.mxu0 0.0
        %2151 = vmatprep.subr.mxu0 0.0
        %2152 = vmatpush1.xpose.msra.mxu0 0.0
        %2153 = vmatprep.subr.mxu0 0.0
        %2154 = vmatpush1.xpose.msra.mxu0 0.0
        %2155 = vmatprep.subr.mxu0 0.0
        %2156 = vmatpush1.xpose.msra.mxu0 0.0
        %2157 = vmatprep.subr.mxu0 0.0
        %2158 = vmatpush1.xpose.msra.mxu0 0.0
        %2159 = vmatprep.subr.mxu0 0.0
        %2160 = vmatpush1.xpose.msra.mxu0 0.0
        %2161 = vmatprep.subr.mxu0 0.0
        %2162 = vmatpush1.xpose.msra.mxu0 0.0
        %2163 = vmatprep.subr.mxu0 0.0
        %2164 = vmatpush1.xpose.msra.mxu0 0.0
        %2165 = vmatprep.subr.mxu0 0.0
        %2166 = vmatpush1.xpose.msra.mxu0 0.0
        %2167 = vmatprep.subr.mxu0 0.0
        %2168 = vmatpush1.xpose.msra.mxu0 0.0
        %2169 = vmatprep.subr.mxu0 0.0
        %2170 = vmatpush1.xpose.msra.mxu0 0.0
        %2171 = vmatprep.subr.mxu0 0.0
        %2172 = vmatpush1.xpose.msra.mxu0 0.0
        %2173 = vmatprep.subr.mxu0 0.0
        %2174 = vmatpush1.xpose.msra.mxu0 0.0
        %2175 = vmatprep.mubr.f32.mxu0 0.0
        %2176 = vmatmul.mubr.f32.gmra.mrb[0].mxu0 %v2106
        %v2177 = vpop.f32.mrb[0].mxu0
        %v2178 = vadd.f32 0.0, %v2177
        %v2179 = vpop.f32.mrb[0].mxu0
        %2180 = vdwg.mxu0
        %v2181 = vsel %vm797, %v2178, -inf
        %2182 = vmax.xlane.f32.xlu0 %v2181
        %v2183 = vpop.xlane.xlu0 %2182
        %v2184 = vsub.f32 %v2178, %v2183
        %v2185 = vmul.f32 %v2184, 1.442695
        %v2186 = vpow.pop %v2185
        %v2187 = vsel %vm797, %v2186, 0.0
        %2188 = vadd.xlane.f32.xlu0 %v2187
        %v2189 = vpop.xlane.xlu0 %2188
        %v2190 = vrcp.pop %v2189
        %v2191 = vmul.f32 %v2186, %v2190
        %v2193 = vsel %vm797, %v2191, 0
        %2195 = vmatprep.subr.mxu0 0.0
        %2196 = vmatpush1.msra.mxu0 %v2102
        %2197 = vmatprep.subr.mxu0 0.0
        %2198 = vmatpush1.msra.mxu0 0.0
        %2199 = vmatprep.subr.mxu0 0.0
        %2200 = vmatpush1.msra.mxu0 0.0
        %2201 = vmatprep.subr.mxu0 0.0
        %2202 = vmatpush1.msra.mxu0 0.0
        %2203 = vmatprep.subr.mxu0 0.0
        %2204 = vmatpush1.msra.mxu0 0.0
        %2205 = vmatprep.subr.mxu0 0.0
        %2206 = vmatpush1.msra.mxu0 0.0
        %2207 = vmatprep.subr.mxu0 0.0
        %2208 = vmatpush1.msra.mxu0 0.0
        %2209 = vmatprep.subr.mxu0 0.0
        %2210 = vmatpush1.msra.mxu0 0.0
        %2211 = vmatprep.subr.mxu0 0.0
        %2212 = vmatpush1.msra.mxu0 0.0
        %2213 = vmatprep.subr.mxu0 0.0
        %2214 = vmatpush1.msra.mxu0 0.0
        %2215 = vmatprep.subr.mxu0 0.0
        %2216 = vmatpush1.msra.mxu0 0.0
        %2217 = vmatprep.subr.mxu0 0.0
        %2218 = vmatpush1.msra.mxu0 0.0
        %2219 = vmatprep.subr.mxu0 0.0
        %2220 = vmatpush1.msra.mxu0 0.0
        %2221 = vmatprep.subr.mxu0 0.0
        %2222 = vmatpush1.msra.mxu0 0.0
        %2223 = vmatprep.subr.mxu0 0.0
        %2224 = vmatpush1.msra.mxu0 0.0
        %2225 = vmatprep.subr.mxu0 0.0
        %2226 = vmatpush1.msra.mxu0 0.0
        %2227 = vmatprep.subr.mxu0 0.0
        %2228 = vmatpush1.msra.mxu0 0.0
        %2229 = vmatprep.subr.mxu0 0.0
        %2230 = vmatpush1.msra.mxu0 0.0
        %2231 = vmatprep.subr.mxu0 0.0
        %2232 = vmatpush1.msra.mxu0 0.0
        %2233 = vmatprep.subr.mxu0 0.0
        %2234 = vmatpush1.msra.mxu0 0.0
        %2235 = vmatprep.subr.mxu0 0.0
        %2236 = vmatpush1.msra.mxu0 0.0
        %2237 = vmatprep.subr.mxu0 0.0
        %2238 = vmatpush1.msra.mxu0 0.0
        %2239 = vmatprep.subr.mxu0 0.0
        %2240 = vmatpush1.msra.mxu0 0.0
        %2241 = vmatprep.subr.mxu0 0.0
        %2242 = vmatpush1.msra.mxu0 0.0
        %2243 = vmatprep.subr.mxu0 0.0
        %2244 = vmatpush1.msra.mxu0 0.0
        %2245 = vmatprep.subr.mxu0 0.0
        %2246 = vmatpush1.msra.mxu0 0.0
        %2247 = vmatprep.subr.mxu0 0.0
        %2248 = vmatpush1.msra.mxu0 0.0
        %2249 = vmatprep.subr.mxu0 0.0
        %2250 = vmatpush1.msra.mxu0 0.0
        %2251 = vmatprep.subr.mxu0 0.0
        %2252 = vmatpush1.msra.mxu0 0.0
        %2253 = vmatprep.subr.mxu0 0.0
        %2254 = vmatpush1.msra.mxu0 0.0
        %2255 = vmatprep.subr.mxu0 0.0
        %2256 = vmatpush1.msra.mxu0 0.0
        %2257 = vmatprep.subr.mxu0 0.0
        %2258 = vmatpush1.msra.mxu0 0.0
        %2259 = vmatprep.mubr.f32.mxu0 0.0
        %2260 = vmatmul.mubr.f32.gmra.mrb[0].mxu0 %v2193
        %v2261 = vpop.f32.mrb[0].mxu0
        %v2262 = vadd.f32 0.0, %v2261
        %v2263 = vpop.f32.mrb[0].mxu0
        %2264 = vdwg.mxu0
        %s2265 = scalar_lea.vmem %s6, 48
        %v2266 = vld [vmem:[%s2265] sm:$0xff]
        %v2267 = vld [vmem:[%s2265 + $0x8] sm:$0xff]
        %v2269 = vsel %vm720, %v2262, 0
        %2271 = vmatprep.subr.mxu0 0.0
        %2272 = vmatpush1.msra.mxu0 %v2266
        %2273 = vmatprep.subr.mxu0 0.0
        %2274 = vmatpush1.msra.mxu0 %v2267
        %2275 = vmatprep.subr.mxu0 0.0
        %2276 = vmatpush1.msra.mxu0 0.0
        %2277 = vmatprep.subr.mxu0 0.0
        %2278 = vmatpush1.msra.mxu0 0.0
        %2279 = vmatprep.subr.mxu0 0.0
        %2280 = vmatpush1.msra.mxu0 0.0
        %2281 = vmatprep.subr.mxu0 0.0
        %2282 = vmatpush1.msra.mxu0 0.0
        %2283 = vmatprep.subr.mxu0 0.0
        %2284 = vmatpush1.msra.mxu0 0.0
        %2285 = vmatprep.subr.mxu0 0.0
        %2286 = vmatpush1.msra.mxu0 0.0
        %2287 = vmatprep.subr.mxu0 0.0
        %2288 = vmatpush1.msra.mxu0 0.0
        %2289 = vmatprep.subr.mxu0 0.0
        %2290 = vmatpush1.msra.mxu0 0.0
        %2291 = vmatprep.subr.mxu0 0.0
        %2292 = vmatpush1.msra.mxu0 0.0
        %2293 = vmatprep.subr.mxu0 0.0
        %2294 = vmatpush1.msra.mxu0 0.0
        %2295 = vmatprep.subr.mxu0 0.0
        %2296 = vmatpush1.msra.mxu0 0.0
        %2297 = vmatprep.subr.mxu0 0.0
        %2298 = vmatpush1.msra.mxu0 0.0
        %2299 = vmatprep.subr.mxu0 0.0
        %2300 = vmatpush1.msra.mxu0 0.0
        %2301 = vmatprep.subr.mxu0 0.0
        %2302 = vmatpush1.msra.mxu0 0.0
        %2303 = vmatprep.subr.mxu0 0.0
        %2304 = vmatpush1.msra.mxu0 0.0
        %2305 = vmatprep.subr.mxu0 0.0
        %2306 = vmatpush1.msra.mxu0 0.0
        %2307 = vmatprep.subr.mxu0 0.0
        %2308 = vmatpush1.msra.mxu0 0.0
        %2309 = vmatprep.subr.mxu0 0.0
        %2310 = vmatpush1.msra.mxu0 0.0
        %2311 = vmatprep.subr.mxu0 0.0
        %2312 = vmatpush1.msra.mxu0 0.0
        %2313 = vmatprep.subr.mxu0 0.0
        %2314 = vmatpush1.msra.mxu0 0.0
        %2315 = vmatprep.subr.mxu0 0.0
        %2316 = vmatpush1.msra.mxu0 0.0
        %2317 = vmatprep.subr.mxu0 0.0
        %2318 = vmatpush1.msra.mxu0 0.0
        %2319 = vmatprep.subr.mxu0 0.0
        %2320 = vmatpush1.msra.mxu0 0.0
        %2321 = vmatprep.subr.mxu0 0.0
        %2322 = vmatpush1.msra.mxu0 0.0
        %2323 = vmatprep.subr.mxu0 0.0
        %2324 = vmatpush1.msra.mxu0 0.0
        %2325 = vmatprep.subr.mxu0 0.0
        %2326 = vmatpush1.msra.mxu0 0.0
        %2327 = vmatprep.subr.mxu0 0.0
        %2328 = vmatpush1.msra.mxu0 0.0
        %2329 = vmatprep.subr.mxu0 0.0
        %2330 = vmatpush1.msra.mxu0 0.0
        %2331 = vmatprep.subr.mxu0 0.0
        %2332 = vmatpush1.msra.mxu0 0.0
        %2333 = vmatprep.subr.mxu0 0.0
        %2334 = vmatpush1.msra.mxu0 0.0
        %2335 = vmatprep.mubr.f32.mxu0 0.0
        %2336 = vmatmul.mubr.f32.gmra.mrb[0].mxu0 %v2269
        %v2337 = vpop.f32.mrb[0].mxu0
        %v2338 = vadd.f32 0.0, %v2337
        %v2339 = vpop.f32.mrb[0].mxu0
        %2340 = vdwg.mxu0
        %v2341 = vadd.f32 %v1879, %v2338
        %v2342 = vld [vmem:[%s7] sm:$0x1]
        %v2344 = vlaneseq
        %v2345 = vshrl.u32 %v2344, 7
        %v2346 = vsub.s32 0, %v2345
        %v2347 = vrot.slane %v2342, %v2346
        %v2349 = vadd.f32 %v2341, %v2347
        %v2350 = vadd.f32 %v2349, %v463
        %v2351 = vld [vmem:[%s8] sm:$0x1]
        %v2352 = vld [vmem:[%s9] sm:$0x1]
        %v2353 = vsel %vm466, %v2350, 0.0
        %2354 = vadd.xlane.f32.xlu0 %v2353
        %v2355 = vpop.xlane.xlu0 %2354
        %v2356 = vmul.f32 %v2355, %v470
        %v2357 = vsub.f32 %v2350, %v2356
        %v2358 = vmul.f32 %v2357, %v2357
        %v2359 = vsel %vm466, %v2358, 0.0
        %2360 = vadd.xlane.f32.xlu0 %v2359
        %v2361 = vpop.xlane.xlu0 %2360
        %v2362 = vmul.f32 %v2361, %v470
        %v2363 = vadd.f32 %v2362, 1e-05
        %v2364 = vrsqrt.pop %v2363
        %v2365 = vmul.f32 %v2357, %v2364
        %v2367 = vlaneseq
        %v2368 = vshrl.u32 %v2367, 7
        %v2369 = vsub.s32 0, %v2368
        %v2370 = vrot.slane %v2351, %v2369
        %v2372 = vmul.f32 %v2365, %v2370
        %v2374 = vlaneseq
        %v2375 = vshrl.u32 %v2374, 7
        %v2376 = vsub.s32 0, %v2375
        %v2377 = vrot.slane %v2352, %v2376
        %v2379 = vadd.f32 %v2372, %v2377
        %v2380 = vld [vmem:[%s10] sm:$0xff]
        %v2381 = vld [vmem:[%s10 + $0x8] sm:$0xff]
        %v2382 = vld [vmem:[%s10 + $0x10] sm:$0xff]
        %v2383 = vld [vmem:[%s10 + $0x18] sm:$0xff]
        %v2384 = vld [vmem:[%s11] sm:$0x1]
        %v2386 = vlaneseq
        %v2387 = vshrl.u32 %v2386, 7
        %v2388 = vsub.s32 0, %v2387
        %v2389 = vrot.slane %v2384, %v2388
        %v2392 = vsel %vm466, %v2379, 0
        %2394 = vmatprep.subr.mxu0 0.0
        %2395 = vmatpush1.msra.mxu0 %v2380
        %2396 = vmatprep.subr.mxu0 0.0
        %2397 = vmatpush1.msra.mxu0 %v2381
        %2398 = vmatprep.subr.mxu0 0.0
        %2399 = vmatpush1.msra.mxu0 %v2382
        %2400 = vmatprep.subr.mxu0 0.0
        %2401 = vmatpush1.msra.mxu0 %v2383
        %2402 = vmatprep.subr.mxu0 0.0
        %2403 = vmatpush1.msra.mxu0 0.0
        %2404 = vmatprep.subr.mxu0 0.0
        %2405 = vmatpush1.msra.mxu0 0.0
        %2406 = vmatprep.subr.mxu0 0.0
        %2407 = vmatpush1.msra.mxu0 0.0
        %2408 = vmatprep.subr.mxu0 0.0
        %2409 = vmatpush1.msra.mxu0 0.0
        %2410 = vmatprep.subr.mxu0 0.0
        %2411 = vmatpush1.msra.mxu0 0.0
        %2412 = vmatprep.subr.mxu0 0.0
        %2413 = vmatpush1.msra.mxu0 0.0
        %2414 = vmatprep.subr.mxu0 0.0
        %2415 = vmatpush1.msra.mxu0 0.0
        %2416 = vmatprep.subr.mxu0 0.0
        %2417 = vmatpush1.msra.mxu0 0.0
        %2418 = vmatprep.subr.mxu0 0.0
        %2419 = vmatpush1.msra.mxu0 0.0
        %2420 = vmatprep.subr.mxu0 0.0
        %2421 = vmatpush1.msra.mxu0 0.0
        %2422 = vmatprep.subr.mxu0 0.0
        %2423 = vmatpush1.msra.mxu0 0.0
        %2424 = vmatprep.subr.mxu0 0.0
        %2425 = vmatpush1.msra.mxu0 0.0
        %2426 = vmatprep.subr.mxu0 0.0
        %2427 = vmatpush1.msra.mxu0 0.0
        %2428 = vmatprep.subr.mxu0 0.0
        %2429 = vmatpush1.msra.mxu0 0.0
        %2430 = vmatprep.subr.mxu0 0.0
        %2431 = vmatpush1.msra.mxu0 0.0
        %2432 = vmatprep.subr.mxu0 0.0
        %2433 = vmatpush1.msra.mxu0 0.0
        %2434 = vmatprep.subr.mxu0 0.0
        %2435 = vmatpush1.msra.mxu0 0.0
        %2436 = vmatprep.subr.mxu0 0.0
        %2437 = vmatpush1.msra.mxu0 0.0
        %2438 = vmatprep.subr.mxu0 0.0
        %2439 = vmatpush1.msra.mxu0 0.0
        %2440 = vmatprep.subr.mxu0 0.0
        %2441 = vmatpush1.msra.mxu0 0.0
        %2442 = vmatprep.subr.mxu0 0.0
        %2443 = vmatpush1.msra.mxu0 0.0
        %2444 = vmatprep.subr.mxu0 0.0
        %2445 = vmatpush1.msra.mxu0 0.0
        %2446 = vmatprep.subr.mxu0 0.0
        %2447 = vmatpush1.msra.mxu0 0.0
        %2448 = vmatprep.subr.mxu0 0.0
        %2449 = vmatpush1.msra.mxu0 0.0
        %2450 = vmatprep.subr.mxu0 0.0
        %2451 = vmatpush1.msra.mxu0 0.0
        %2452 = vmatprep.subr.mxu0 0.0
        %2453 = vmatpush1.msra.mxu0 0.0
        %2454 = vmatprep.subr.mxu0 0.0
        %2455 = vmatpush1.msra.mxu0 0.0
        %2456 = vmatprep.subr.mxu0 0.0
        %2457 = vmatpush1.msra.mxu0 0.0
        %2458 = vmatprep.mubr.f32.mxu0 0.0
        %2459 = vmatmul.mubr.f32.gmra.mrb[0].mxu0 %v2392
        %v2460 = vpop.f32.mrb[0].mxu0
        %v2461 = vadd.f32 %v2389, %v2460
        %v2462 = vpop.f32.mrb[0].mxu0
        %2463 = vdwg.mxu0
        %v2464 = vmul.f32 %v2461, 0.5
        %v2465 = vmul.f32 %v2461, 0.70710677
        %vm2466 = vcmp.ge.f32.partialorder %v2465, 0.0
        %v2467 = vsel %vm2466, 1.0, -1.0
        %v2468 = vand.u32 2147483647, %v2465
        %v2469 = vmul.f32 %v2468, 0.3275911
        %v2470 = vadd.f32 %v2469, 1.0
        %v2471 = vrcp.pop %v2470
        %v2472 = vmul.f32 1.0, %v2471
        %v2473 = vmul.f32 %v2472, 1.0614054
        %v2474 = vadd.f32 %v2473, -1.4531521
        %v2475 = vmul.f32 %v2474, %v2472
        %v2476 = vadd.f32 %v2475, 1.4214138
        %v2477 = vmul.f32 %v2476, %v2472
        %v2478 = vadd.f32 %v2477, -0.28449672
        %v2479 = vmul.f32 %v2478, %v2472
        %v2480 = vadd.f32 %v2479, 0.2548296
        %v2481 = vmul.f32 %v2480, %v2472
        %v2482 = vsub.f32 0.0, %v2468
        %v2483 = vmul.f32 %v2482, %v2468
        %v2484 = vmul.f32 %v2483, 1.442695
        %v2485 = vpow.pop %v2484
        %v2486 = vmul.f32 %v2481, %v2485
        %v2487 = vsub.f32 1.0, %v2486
        %v2488 = vmul.f32 %v2467, %v2487
        %v2489 = vadd.f32 %v2488, 1.0
        %v2490 = vmul.f32 %v2464, %v2489
        %v2491 = vld [vmem:[%s12] sm:$0xff]
        %v2492 = vld [vmem:[%s12 + $0x8] sm:$0xff]
        %v2493 = vld [vmem:[%s12 + $0x10] sm:$0xff]
        %v2494 = vld [vmem:[%s12 + $0x18] sm:$0xff]
        %v2495 = vld [vmem:[%s12 + $0x20] sm:$0xff]
        %v2496 = vld [vmem:[%s12 + $0x28] sm:$0xff]
        %v2497 = vld [vmem:[%s12 + $0x30] sm:$0xff]
        %v2498 = vld [vmem:[%s12 + $0x38] sm:$0xff]
        %v2499 = vld [vmem:[%s13] sm:$0x1]
        %v2501 = vlaneseq
        %v2502 = vshrl.u32 %v2501, 7
        %v2503 = vsub.s32 0, %v2502
        %v2504 = vrot.slane %v2499, %v2503
        %vm2506 = vcmask 523264
        %v2508 = vsel %vm2506, %v2490, 0
        %2510 = vmatprep.subr.mxu0 0.0
        %2511 = vmatpush1.msra.mxu0 %v2491
        %2512 = vmatprep.subr.mxu0 0.0
        %2513 = vmatpush1.msra.mxu0 %v2492
        %2514 = vmatprep.subr.mxu0 0.0
        %2515 = vmatpush1.msra.mxu0 %v2493
        %2516 = vmatprep.subr.mxu0 0.0
        %2517 = vmatpush1.msra.mxu0 %v2494
        %2518 = vmatprep.subr.mxu0 0.0
        %2519 = vmatpush1.msra.mxu0 %v2495
        %2520 = vmatprep.subr.mxu0 0.0
        %2521 = vmatpush1.msra.mxu0 %v2496
        %2522 = vmatprep.subr.mxu0 0.0
        %2523 = vmatpush1.msra.mxu0 %v2497
        %2524 = vmatprep.subr.mxu0 0.0
        %2525 = vmatpush1.msra.mxu0 %v2498
        %2526 = vmatprep.subr.mxu0 0.0
        %2527 = vmatpush1.msra.mxu0 0.0
        %2528 = vmatprep.subr.mxu0 0.0
        %2529 = vmatpush1.msra.mxu0 0.0
        %2530 = vmatprep.subr.mxu0 0.0
        %2531 = vmatpush1.msra.mxu0 0.0
        %2532 = vmatprep.subr.mxu0 0.0
        %2533 = vmatpush1.msra.mxu0 0.0
        %2534 = vmatprep.subr.mxu0 0.0
        %2535 = vmatpush1.msra.mxu0 0.0
        %2536 = vmatprep.subr.mxu0 0.0
        %2537 = vmatpush1.msra.mxu0 0.0
        %2538 = vmatprep.subr.mxu0 0.0
        %2539 = vmatpush1.msra.mxu0 0.0
        %2540 = vmatprep.subr.mxu0 0.0
        %2541 = vmatpush1.msra.mxu0 0.0
        %2542 = vmatprep.subr.mxu0 0.0
        %2543 = vmatpush1.msra.mxu0 0.0
        %2544 = vmatprep.subr.mxu0 0.0
        %2545 = vmatpush1.msra.mxu0 0.0
        %2546 = vmatprep.subr.mxu0 0.0
        %2547 = vmatpush1.msra.mxu0 0.0
        %2548 = vmatprep.subr.mxu0 0.0
        %2549 = vmatpush1.msra.mxu0 0.0
        %2550 = vmatprep.subr.mxu0 0.0
        %2551 = vmatpush1.msra.mxu0 0.0
        %2552 = vmatprep.subr.mxu0 0.0
        %2553 = vmatpush1.msra.mxu0 0.0
        %2554 = vmatprep.subr.mxu0 0.0
        %2555 = vmatpush1.msra.mxu0 0.0
        %2556 = vmatprep.subr.mxu0 0.0
        %2557 = vmatpush1.msra.mxu0 0.0
        %2558 = vmatprep.subr.mxu0 0.0
        %2559 = vmatpush1.msra.mxu0 0.0
        %2560 = vmatprep.subr.mxu0 0.0
        %2561 = vmatpush1.msra.mxu0 0.0
        %2562 = vmatprep.subr.mxu0 0.0
        %2563 = vmatpush1.msra.mxu0 0.0
        %2564 = vmatprep.subr.mxu0 0.0
        %2565 = vmatpush1.msra.mxu0 0.0
        %2566 = vmatprep.subr.mxu0 0.0
        %2567 = vmatpush1.msra.mxu0 0.0
        %2568 = vmatprep.subr.mxu0 0.0
        %2569 = vmatpush1.msra.mxu0 0.0
        %2570 = vmatprep.subr.mxu0 0.0
        %2571 = vmatpush1.msra.mxu0 0.0
        %2572 = vmatprep.subr.mxu0 0.0
        %2573 = vmatpush1.msra.mxu0 0.0
        %2574 = vmatprep.mubr.f32.mxu0 0.0
        %2575 = vmatmul.mubr.f32.gmra.mrb[0].mxu0 %v2508
        %v2576 = vpop.f32.mrb[0].mxu0
        %v2577 = vadd.f32 %v2504, %v2576
        %v2578 = vpop.f32.mrb[0].mxu0
        %2579 = vdwg.mxu0
        %v2580 = vadd.f32 %v2577, %v2350
        %2581 = vst.msk [vmem:[%s458] sm:$0xff] %vm466, %v2580
        %s2582 = sand.u32 %s335, 1
        %s2583 = scalar_lea.sflag [#allocation3], %s2582
        %s2584 = sand.u32 %s335, 1
        %s2585 = smul.addr %s2584, 8
        %s2586 = scalar_lea.vmem [#allocation2], %s2585
        // Predicated region
        $region77: #{transformer_forward.3} parent=75 // pred_check
          %p2587 = pneg %p345
        $region78: #{transformer_forward.3} parent=75 // pred_check_branch
          %2589 = sbr.rel (%p2587) target = $region80
        $region79: #{transformer_forward.3} parent=75 // pred_region
          %s2591 = ssub.s32 128, 128
          %2592 = vsyncadd %s2583, %s2591
          %s2593 = smul.addr %s28, 128
          %s2594 = scalar_lea.hbm %s14, %s2593
          %s2596 = sshll.u32 %s2586, 4
          %s2597 = int_to_ptr.vmem [resolvable:$true] %s2596
          %2599 = dma.vmem_to_hbm [thread:$0]  %s2597, 128, %s2594, %s2583
        $region80: #{transformer_forward.3} parent=75 // pred_fallthru
          _
      $region76: #{transformer_forward.3} parent=5 // pred_fallthru
        _
      %p2600 = scmp.le.s32.totalorder 2, %s23
      // Predicated region
      $region81: #{transformer_forward.3} parent=5 // pred_check
        %p2601 = pneg %p2600
      $region82: #{transformer_forward.3} parent=5 // pred_check_branch
        %2603 = sbr.rel (%p2601) target = $region84
      $region83: #{transformer_forward.3} parent=5 // pred_region
        %s2604 = ssub.s32 %s23, 2
        // Predicated region
        $region85: #{transformer_forward.3} parent=83 // pred_check
          %p2605 = pneg %p351
        $region86: #{transformer_forward.3} parent=83 // pred_check_branch
          %2607 = sbr.rel (%p2605) target = $region88
        $region87: #{transformer_forward.3} parent=83 // pred_region
          %s2608 = sand.u32 %s336, 1
          %s2609 = scalar_lea.sflag [#allocation3], %s2608
          %s2610 = sand.u32 %s336, 1
          %s2611 = smul.addr %s2610, 8
          %s2612 = scalar_lea.vmem [#allocation2], %s2611
          %2613 = dma.done %s2609, 128
        $region88: #{transformer_forward.3} parent=83 // pred_fallthru
          _
      $region84: #{transformer_forward.3} parent=5 // pred_fallthru
        _
    $region6: #{transformer_forward.3} parent=1 // loop_footer
      %s27 = sadd.s32 1, %s23
    $region7: #{transformer_forward.3} parent=1 // loop_footer_branch
      %22 = sbr.rel target = $region3
    $region8: #{transformer_forward.3} parent=1 // loop_exit
      _
    %2614 = vsyncpa [#allocation3], 1
    %s2615 = scalar_lea.sflag [#allocation3], 1
    %2616 = vsyncpa %s2615, 1

</llo_original>
